<compile_context>
chip_gen: v7x
topology: tpu7x:2x2x1
jax: 0.10.0
libtpu: 0.0.40
codegen_flags: <defaults>
</compile_context>

<pallas_src>
import functools

import numpy as np
import jax
import jax.numpy as jnp
from jax import lax
from jax.experimental import pallas as pl
from jax.experimental.pallas import tpu as pltpu

KERNEL_SIZE = 3
NUM_CONV_LAYERS = 4
NUM_HIDDEN_CHANNELS = 64
NUM_INPUT_CHANNELS = 1
BN_EPS = 1e-5

_C = NUM_HIDDEN_CHANNELS
# Tap k = (dy+1)*3 + (dx+1) -- matches a row-major reshape of a (3,3,cin,cout) weight.
_TAPS = tuple((dy, dx) for dy in (-1, 0, 1) for dx in (-1, 0, 1))


def _round_up(x, m):
    return (x + m - 1) // m * m


# ----------------------------------- kernel ------------------------------------

def protonet_fused_kernel(x_ref,
                          w1_ref, w2_ref, w3_ref, w4_ref,
                          gb1_ref, gb2_ref, gb3_ref, gb4_ref,
                          m1_ref, m2_ref, m3_ref, m4_ref,
                          o_ref,
                          l1p_ref, patch_ref, pa_ref, pb_ref,
                          in2_ref, in3_ref, in4_ref,
                          *, N, H, W, pad1, halos):

    def bn_relu(z, gb_ref, rows):
        # Transductive BatchNorm (batch stats, biased variance, centered two-pass) + ReLU.
        inv_m = 1.0 / float(rows)
        mean = jnp.sum(z, axis=0, keepdims=True) * inv_m
        d = z - mean
        var = jnp.sum(d * d, axis=0, keepdims=True) * inv_m
        scale = gb_ref[0:1, :] * lax.rsqrt(var + BN_EPS)
        return jnp.maximum(d * scale + gb_ref[1:2, :], 0.0)

    def pool_into(a, rows, w_cols, h_rows, dst_ref, dst_off):
        # 2x2 max pool of a (rows, C) activation (rows ordered n*h*w + y*w + x),
        # written contiguously into dst_ref starting at row dst_off.
        pa_ref[0:rows, :] = a
        half = rows // 2
        ev = pa_ref[pl.ds(0, half, 2), :]             # x even
        od = pa_ref[pl.ds(1, half, 2), :]             # x odd
        pb_ref[0:half, :] = jnp.maximum(ev, od)       # rows ordered n*h*(w/2) + y*(w/2) + xo
        w2 = w_cols // 2
        for j in range(N * (h_rows // 2)):            # static, small (<= N*H/2 lines)
            top = pb_ref[(2 * j) * w2:(2 * j + 1) * w2, :]
            bot = pb_ref[(2 * j + 1) * w2:(2 * j + 2) * w2, :]
            dst_ref[dst_off + j * w2:dst_off + (j + 1) * w2, :] = jnp.maximum(top, bot)

    # Zero the conv-input scratches once so their halo rows are exactly 0.0 (out-of-image
    # taps are masked too, but mask * NaN-garbage from stale VMEM would poison z).
    in2_ref[...] = jnp.zeros(in2_ref.shape, jnp.float32)
    in3_ref[...] = jnp.zeros(in3_ref.shape, jnp.float32)
    in4_ref[...] = jnp.zeros(in4_ref.shape, jnp.float32)

    # ------------- layer 1: Cin = 1 -> a single (M, 9) @ (9, 64) MXU dot -------------
    rows1 = N * H * W
    for k, (dy, dx) in enumerate(_TAPS):
        d = dy * W + dx
        l1p_ref[:, k:k + 1] = x_ref[pad1 + d:pad1 + d + rows1, :]
    p1 = (l1p_ref[...] * m1_ref[...]).astype(jnp.bfloat16)
    z = jnp.dot(p1, w1_ref[...], preferred_element_type=jnp.float32)
    # Conv bias omitted on purpose: batch-stat BN cancels it exactly.
    a = bn_relu(z, gb1_ref, rows1)
    pool_into(a, rows1, W, H, in2_ref, halos[0])

    # ------------- layers 2..4: one (M, 576) @ (576, 64) MXU dot per layer -------------
    layers = (
        (H // 2, W // 2, in2_ref, halos[0], m2_ref, w2_ref, gb2_ref),
        (H // 4, W // 4, in3_ref, halos[1], m3_ref, w3_ref, gb3_ref),
        (H // 8, W // 8, in4_ref, halos[2], m4_ref, w4_ref, gb4_ref),
    )
    for li, (hh, ww, in_ref, halo, msk_ref, w_ref, gb_ref) in enumerate(layers):
        rows = N * hh * ww
        for k, (dy, dx) in enumerate(_TAPS):
            d = dy * ww + dx
            v = in_ref[halo + d:halo + d + rows, :]          # shifted read (vld, no roll)
            if (dy, dx) != (0, 0):
                v = v * msk_ref[:, k:k + 1]                  # zero out-of-image taps
            patch_ref[0:rows, k * _C:(k + 1) * _C] = v.astype(jnp.bfloat16)
        z = jnp.dot(patch_ref[0:rows, :], w_ref[...],
                    preferred_element_type=jnp.float32)
        a = bn_relu(z, gb_ref, rows)
        if li + 1 < len(layers):
            nxt = layers[li + 1]
            pool_into(a, rows, ww, hh, nxt[2], nxt[3])
        else:
            pool_into(a, rows, ww, hh, o_ref, 0)


# ------------------------- host-side (trace-time) tables ------------------------

def _tap_masks(N, H, W):
    """(N*H*W, 9) f32: mask[m, k] = 1 iff the k-th 3x3 tap of pixel m is in-bounds."""
    yy, xx = np.meshgrid(np.arange(H), np.arange(W), indexing="ij")
    cols = []
    for dy, dx in _TAPS:
        ok = (yy + dy >= 0) & (yy + dy < H) & (xx + dx >= 0) & (xx + dx < W)
        cols.append(np.tile(ok.reshape(-1), N))
    return np.stack(cols, axis=1).astype(np.float32)


# ----------------------------------- wrapper ------------------------------------

def protonet_forward(images_nchw, params):
    """images: (num_images, 1, H, W) -> (num_images, latents). One fused Pallas call."""
    N, Cin, H, W = images_nchw.shape
    assert Cin == NUM_INPUT_CHANNELS == 1
    assert H % (2 ** NUM_CONV_LAYERS) == 0 and W % (2 ** NUM_CONV_LAYERS) == 0
    assert len(params) == NUM_CONV_LAYERS

    rows = [N * H * W // (4 ** l) for l in range(NUM_CONV_LAYERS)]
    pad1 = _round_up(W + 1, 8)
    halos = tuple(_round_up(W // (2 ** l) + 1, 8) for l in (1, 2, 3))
    Hf, Wf = H // 2 ** NUM_CONV_LAYERS, W // 2 ** NUM_CONV_LAYERS

    # Cin == 1: NCHW -> rows (m = n*H*W + y*W + x) is a pure reshape; zero-pad the row
    # axis so in-kernel shifted tap reads never leave the array.
    x = images_nchw.astype(jnp.float32).reshape(N * H * W, 1)
    x = jnp.pad(x, ((pad1, pad1), (0, 0)))

    # Pre-stacked bf16 MXU operands (accumulation stays f32 in-kernel).
    w1 = params[0][0].reshape(KERNEL_SIZE * KERNEL_SIZE, _C).astype(jnp.bfloat16)
    w_hi = [p[0].reshape(KERNEL_SIZE * KERNEL_SIZE * _C, _C).astype(jnp.bfloat16)
            for p in params[1:]]
    gbs = [jnp.stack([p[2], p[3]], axis=0).astype(jnp.float32) for p in params]
    # NOTE: params[l][1] (conv bias) is intentionally unused -- with batch-statistics
    # BatchNorm the per-channel bias is exactly cancelled by the mean subtraction.

    masks = []
    h, w = H, W
    for _ in range(NUM_CONV_LAYERS):
        masks.append(jnp.asarray(_tap_masks(N, h, w)))
        h, w = h // 2, w // 2

    scratch_shapes = [
        pltpu.VMEM((rows[0], KERNEL_SIZE * KERNEL_SIZE), jnp.float32),        # layer-1 patch
        pltpu.VMEM((rows[1], KERNEL_SIZE * KERNEL_SIZE * _C), jnp.bfloat16),  # layers 2-4 patch
        pltpu.VMEM((rows[0], _C), jnp.float32),                               # pool source
        pltpu.VMEM((rows[0] // 2, _C), jnp.float32),                          # x-pooled rows
        pltpu.VMEM((rows[1] + 2 * halos[0], _C), jnp.float32),                # layer-2 input (+halo)
        pltpu.VMEM((rows[2] + 2 * halos[1], _C), jnp.float32),                # layer-3 input (+halo)
        pltpu.VMEM((rows[3] + 2 * halos[2], _C), jnp.float32),                # layer-4 input (+halo)
    ]

    vmem = pl.BlockSpec(memory_space=pltpu.MemorySpace.VMEM)
    out = pl.pallas_call(
        functools.partial(protonet_fused_kernel,
                          N=N, H=H, W=W, pad1=pad1, halos=halos),
        out_shape=jax.ShapeDtypeStruct((N * Hf * Wf, _C), jnp.float32),
        in_specs=[vmem] * 13,
        out_specs=vmem,
        scratch_shapes=scratch_shapes,
        compiler_params=pltpu.CompilerParams(vmem_limit_bytes=64 * 1024 * 1024),
    )(x, w1, w_hi[0], w_hi[1], w_hi[2],
      gbs[0], gbs[1], gbs[2], gbs[3],
      masks[0], masks[1], masks[2], masks[3])

    # Flatten exactly like nn.Flatten on a (N, C, Hf, Wf) tensor.
    return out.reshape(N, Hf, Wf, _C).transpose(0, 3, 1, 2).reshape(N, -1)


# ----------------------------- params / pure-JAX reference ----------------------

def init_params(key):
    params = []
    cin = NUM_INPUT_CHANNELS
    for _ in range(NUM_CONV_LAYERS):
        key, kw, kb = jax.random.split(key, 3)
        fan_in = KERNEL_SIZE * KERNEL_SIZE * cin
        w = jax.random.normal(
            kw, (KERNEL_SIZE, KERNEL_SIZE, cin, NUM_HIDDEN_CHANNELS),
            jnp.float32) * jnp.sqrt(2.0 / fan_in)
        b = jax.random.normal(kb, (NUM_HIDDEN_CHANNELS,), jnp.float32) * 0.01
        g = jnp.ones((NUM_HIDDEN_CHANNELS,), jnp.float32)    # BN weight init
        bt = jnp.zeros((NUM_HIDDEN_CHANNELS,), jnp.float32)  # BN bias init
        params.append((w, b, g, bt))
        cin = NUM_HIDDEN_CHANNELS
    return params


def _im2col_ref(x_nhwc):
    N, H, W, Cin = x_nhwc.shape
    xp = jnp.pad(x_nhwc, ((0, 0), (1, 1), (1, 1), (0, 0)))
    cols = [xp[:, dy:dy + H, dx:dx + W, :]
            for dy in range(KERNEL_SIZE) for dx in range(KERNEL_SIZE)]
    return jnp.concatenate(cols, axis=-1).reshape(N * H * W, -1)


def ref_forward(images_nchw, params):
    """Pure-JAX reference with the module's exact semantics (conv bias included)."""
    x = jnp.transpose(images_nchw, (0, 2, 3, 1)).astype(jnp.float32)
    for (w, b, g, bt) in params:
        N, H, W, Cin = x.shape
        Cout = w.shape[-1]
        z = jnp.dot(_im2col_ref(x), w.reshape(-1, Cout),
                    precision=jax.lax.Precision.HIGHEST) + b[None, :]
        mean = jnp.mean(z, axis=0, keepdims=True)
        var = jnp.mean((z - mean) ** 2, axis=0, keepdims=True)
        y = (z - mean) / jnp.sqrt(var + BN_EPS) * g[None, :] + bt[None, :]
        y = jnp.maximum(y, 0.0).reshape(N, H, W, Cout)
        x = y.reshape(N, H // 2, 2, W // 2, 2, Cout).max(axis=(2, 4))
    n = x.shape[0]
    return jnp.transpose(x, (0, 3, 1, 2)).reshape(n, -1)


# ------------------------------------- main --------------------------------------

if __name__ == "__main__":
    key = jax.random.PRNGKey(0)
    kp, kx = jax.random.split(key)
    params = init_params(kp)
    # Small Omniglot-like batch: (num_images=2, channels=1, 16, 16).
    images = jax.random.normal(kx, (2, NUM_INPUT_CHANNELS, 16, 16), jnp.float32)

    fwd = jax.jit(protonet_forward)
    out = jax.block_until_ready(fwd(images, params))
    assert out.shape == (2, NUM_HIDDEN_CHANNELS), out.shape

    ref = jax.block_until_ready(ref_forward(images, params))
    max_err = float(jnp.max(jnp.abs(out - ref)))
    # bf16 MXU operands (f32 accumulation) bound the error; BN renormalizes each layer.
    assert jnp.allclose(out, ref, atol=5e-2, rtol=5e-2), f"max_err={max_err}"

    print("KERNEL_OK")
</pallas_src>

<mosaic_0001>
module attributes {stable_mosaic.version = 11 : i64} {
  func.func @protonet_fused_kernel(%arg0: memref<560x1xf32, #tpu.memory_space<vmem>>, %arg1: memref<9x64xbf16, #tpu.memory_space<vmem>>, %arg2: memref<576x64xbf16, #tpu.memory_space<vmem>>, %arg3: memref<576x64xbf16, #tpu.memory_space<vmem>>, %arg4: memref<576x64xbf16, #tpu.memory_space<vmem>>, %arg5: memref<2x64xf32, #tpu.memory_space<vmem>>, %arg6: memref<2x64xf32, #tpu.memory_space<vmem>>, %arg7: memref<2x64xf32, #tpu.memory_space<vmem>>, %arg8: memref<2x64xf32, #tpu.memory_space<vmem>>, %arg9: memref<512x9xf32, #tpu.memory_space<vmem>>, %arg10: memref<128x9xf32, #tpu.memory_space<vmem>>, %arg11: memref<32x9xf32, #tpu.memory_space<vmem>>, %arg12: memref<8x9xf32, #tpu.memory_space<vmem>>, %arg13: memref<2x64xf32, #tpu.memory_space<vmem>>, %arg14: memref<512x9xf32, #tpu.memory_space<vmem>>, %arg15: memref<128x576xbf16, #tpu.memory_space<vmem>>, %arg16: memref<512x64xf32, #tpu.memory_space<vmem>>, %arg17: memref<256x64xf32, #tpu.memory_space<vmem>>, %arg18: memref<160x64xf32, #tpu.memory_space<vmem>>, %arg19: memref<48x64xf32, #tpu.memory_space<vmem>>, %arg20: memref<24x64xf32, #tpu.memory_space<vmem>>) attributes {dimension_semantics = [], scalar_prefetch = 0 : i64, scratch_operands = 7 : i64, tpu.core_type = #tpu.core_type<tc>} {
    %cst = arith.constant 0.000000e+00 : f32
    %0 = vector.broadcast %cst : f32 to vector<160x64xf32>
    %c0 = arith.constant 0 : index
    %c0_0 = arith.constant 0 : index
    %1 = vector.load %arg18[%c0, %c0_0] : memref<160x64xf32, #tpu.memory_space<vmem>>, vector<160x64xf32>
    tpu.vector_store %arg18[%c0, %c0_0], %0 {strides = array<i32>} : memref<160x64xf32, #tpu.memory_space<vmem>>, vector<160x64xf32>,
    %cst_1 = arith.constant 0.000000e+00 : f32
    %2 = vector.broadcast %cst_1 : f32 to vector<48x64xf32>
    %c0_2 = arith.constant 0 : index
    %c0_3 = arith.constant 0 : index
    %3 = vector.load %arg19[%c0_2, %c0_3] : memref<48x64xf32, #tpu.memory_space<vmem>>, vector<48x64xf32>
    tpu.vector_store %arg19[%c0_2, %c0_3], %2 {strides = array<i32>} : memref<48x64xf32, #tpu.memory_space<vmem>>, vector<48x64xf32>,
    %cst_4 = arith.constant 0.000000e+00 : f32
    %4 = vector.broadcast %cst_4 : f32 to vector<24x64xf32>
    %c0_5 = arith.constant 0 : index
    %c0_6 = arith.constant 0 : index
    %5 = vector.load %arg20[%c0_5, %c0_6] : memref<24x64xf32, #tpu.memory_space<vmem>>, vector<24x64xf32>
    tpu.vector_store %arg20[%c0_5, %c0_6], %4 {strides = array<i32>} : memref<24x64xf32, #tpu.memory_space<vmem>>, vector<24x64xf32>,
    %c7 = arith.constant 7 : index
    %c0_7 = arith.constant 0 : index
    %6 = vector.load %arg0[%c7, %c0_7] : memref<560x1xf32, #tpu.memory_space<vmem>>, vector<512x1xf32>
    %c0_8 = arith.constant 0 : index
    %c0_9 = arith.constant 0 : index
    %7 = vector.load %arg14[%c0_8, %c0_9] : memref<512x9xf32, #tpu.memory_space<vmem>>, vector<512x1xf32>
    tpu.vector_store %arg14[%c0_8, %c0_9], %6 {strides = array<i32>} : memref<512x9xf32, #tpu.memory_space<vmem>>, vector<512x1xf32>,
    %c8 = arith.constant 8 : index
    %c0_10 = arith.constant 0 : index
    %8 = vector.load %arg0[%c8, %c0_10] : memref<560x1xf32, #tpu.memory_space<vmem>>, vector<512x1xf32>
    %c0_11 = arith.constant 0 : index
    %c1 = arith.constant 1 : index
    %9 = vector.load %arg14[%c0_11, %c1] : memref<512x9xf32, #tpu.memory_space<vmem>>, vector<512x1xf32>
    tpu.vector_store %arg14[%c0_11, %c1], %8 {strides = array<i32>} : memref<512x9xf32, #tpu.memory_space<vmem>>, vector<512x1xf32>,
    %c9 = arith.constant 9 : index
    %c0_12 = arith.constant 0 : index
    %10 = vector.load %arg0[%c9, %c0_12] : memref<560x1xf32, #tpu.memory_space<vmem>>, vector<512x1xf32>
    %c0_13 = arith.constant 0 : index
    %c2 = arith.constant 2 : index
    %11 = vector.load %arg14[%c0_13, %c2] : memref<512x9xf32, #tpu.memory_space<vmem>>, vector<512x1xf32>
    tpu.vector_store %arg14[%c0_13, %c2], %10 {strides = array<i32>} : memref<512x9xf32, #tpu.memory_space<vmem>>, vector<512x1xf32>,
    %c23 = arith.constant 23 : index
    %c0_14 = arith.constant 0 : index
    %12 = vector.load %arg0[%c23, %c0_14] : memref<560x1xf32, #tpu.memory_space<vmem>>, vector<512x1xf32>
    %c0_15 = arith.constant 0 : index
    %c3 = arith.constant 3 : index
    %13 = vector.load %arg14[%c0_15, %c3] : memref<512x9xf32, #tpu.memory_space<vmem>>, vector<512x1xf32>
    tpu.vector_store %arg14[%c0_15, %c3], %12 {strides = array<i32>} : memref<512x9xf32, #tpu.memory_space<vmem>>, vector<512x1xf32>,
    %c24 = arith.constant 24 : index
    %c0_16 = arith.constant 0 : index
    %14 = vector.load %arg0[%c24, %c0_16] : memref<560x1xf32, #tpu.memory_space<vmem>>, vector<512x1xf32>
    %c0_17 = arith.constant 0 : index
    %c4 = arith.constant 4 : index
    %15 = vector.load %arg14[%c0_17, %c4] : memref<512x9xf32, #tpu.memory_space<vmem>>, vector<512x1xf32>
    tpu.vector_store %arg14[%c0_17, %c4], %14 {strides = array<i32>} : memref<512x9xf32, #tpu.memory_space<vmem>>, vector<512x1xf32>,
    %c25 = arith.constant 25 : index
    %c0_18 = arith.constant 0 : index
    %16 = vector.load %arg0[%c25, %c0_18] : memref<560x1xf32, #tpu.memory_space<vmem>>, vector<512x1xf32>
    %c0_19 = arith.constant 0 : index
    %c5 = arith.constant 5 : index
    %17 = vector.load %arg14[%c0_19, %c5] : memref<512x9xf32, #tpu.memory_space<vmem>>, vector<512x1xf32>
    tpu.vector_store %arg14[%c0_19, %c5], %16 {strides = array<i32>} : memref<512x9xf32, #tpu.memory_space<vmem>>, vector<512x1xf32>,
    %c39 = arith.constant 39 : index
    %c0_20 = arith.constant 0 : index
    %18 = vector.load %arg0[%c39, %c0_20] : memref<560x1xf32, #tpu.memory_space<vmem>>, vector<512x1xf32>
    %c0_21 = arith.constant 0 : index
    %c6 = arith.constant 6 : index
    %19 = vector.load %arg14[%c0_21, %c6] : memref<512x9xf32, #tpu.memory_space<vmem>>, vector<512x1xf32>
    tpu.vector_store %arg14[%c0_21, %c6], %18 {strides = array<i32>} : memref<512x9xf32, #tpu.memory_space<vmem>>, vector<512x1xf32>,
    %c40 = arith.constant 40 : index
    %c0_22 = arith.constant 0 : index
    %20 = vector.load %arg0[%c40, %c0_22] : memref<560x1xf32, #tpu.memory_space<vmem>>, vector<512x1xf32>
    %c0_23 = arith.constant 0 : index
    %c7_24 = arith.constant 7 : index
    %21 = vector.load %arg14[%c0_23, %c7_24] : memref<512x9xf32, #tpu.memory_space<vmem>>, vector<512x1xf32>
    tpu.vector_store %arg14[%c0_23, %c7_24], %20 {strides = array<i32>} : memref<512x9xf32, #tpu.memory_space<vmem>>, vector<512x1xf32>,
    %c41 = arith.constant 41 : index
    %c0_25 = arith.constant 0 : index
    %22 = vector.load %arg0[%c41, %c0_25] : memref<560x1xf32, #tpu.memory_space<vmem>>, vector<512x1xf32>
    %c0_26 = arith.constant 0 : index
    %c8_27 = arith.constant 8 : index
    %23 = vector.load %arg14[%c0_26, %c8_27] : memref<512x9xf32, #tpu.memory_space<vmem>>, vector<512x1xf32>
    tpu.vector_store %arg14[%c0_26, %c8_27], %22 {strides = array<i32>} : memref<512x9xf32, #tpu.memory_space<vmem>>, vector<512x1xf32>,
    %c0_28 = arith.constant 0 : index
    %c0_29 = arith.constant 0 : index
    %24 = vector.load %arg14[%c0_28, %c0_29] : memref<512x9xf32, #tpu.memory_space<vmem>>, vector<512x9xf32>
    %c0_30 = arith.constant 0 : index
    %c0_31 = arith.constant 0 : index
    %25 = vector.load %arg9[%c0_30, %c0_31] : memref<512x9xf32, #tpu.memory_space<vmem>>, vector<512x9xf32>
    %26 = arith.mulf %24, %25 : vector<512x9xf32>
    %27 = arith.truncf %26 : vector<512x9xf32> to vector<512x9xbf16>
    %c0_32 = arith.constant 0 : index
    %c0_33 = arith.constant 0 : index
    %28 = vector.load %arg1[%c0_32, %c0_33] : memref<9x64xbf16, #tpu.memory_space<vmem>>, vector<9x64xbf16>
    %cst_34 = arith.constant dense<0.000000e+00> : vector<512x64xf32>
    %29 = tpu.matmul %27, %28, %cst_34 {dimension_numbers = #tpu.dot_dimension_numbers<[1], [0], [0], [1], [0, 0, 1, 1], [], []>} : vector<512x9xbf16>, vector<9x64xbf16>, vector<512x64xf32> -> vector<512x64xf32>
    %cst_35 = arith.constant dense<0.000000e+00> : vector<64xf32>
    %30 = vector.multi_reduction <add>, %29, %cst_35 [0] : vector<512x64xf32> to vector<64xf32>
    %31 = vector.shape_cast %30 : vector<64xf32> to vector<1x64xf32>
    %cst_36 = arith.constant 0.001953125 : f32
    %32 = vector.broadcast %cst_36 : f32 to vector<1x64xf32>
    %33 = arith.mulf %31, %32 : vector<1x64xf32>
    %34 = vector.broadcast %33 : vector<1x64xf32> to vector<512x64xf32>
    %35 = arith.subf %29, %34 : vector<512x64xf32>
    %36 = arith.mulf %35, %35 : vector<512x64xf32>
    %cst_37 = arith.constant dense<0.000000e+00> : vector<64xf32>
    %37 = vector.multi_reduction <add>, %36, %cst_37 [0] : vector<512x64xf32> to vector<64xf32>
    %38 = vector.shape_cast %37 : vector<64xf32> to vector<1x64xf32>
    %cst_38 = arith.constant 0.001953125 : f32
    %39 = vector.broadcast %cst_38 : f32 to vector<1x64xf32>
    %40 = arith.mulf %38, %39 : vector<1x64xf32>
    %c0_39 = arith.constant 0 : index
    %c0_40 = arith.constant 0 : index
    %41 = vector.load %arg5[%c0_39, %c0_40] : memref<2x64xf32, #tpu.memory_space<vmem>>, vector<1x64xf32>
    %cst_41 = arith.constant 9.99999974E-6 : f32
    %42 = vector.broadcast %cst_41 : f32 to vector<1x64xf32>
    %43 = arith.addf %40, %42 : vector<1x64xf32>
    %44 = math.rsqrt %43 : vector<1x64xf32>
    %45 = arith.mulf %41, %44 : vector<1x64xf32>
    %46 = vector.broadcast %45 : vector<1x64xf32> to vector<512x64xf32>
    %47 = arith.mulf %35, %46 : vector<512x64xf32>
    %c1_42 = arith.constant 1 : index
    %c0_43 = arith.constant 0 : index
    %48 = vector.load %arg5[%c1_42, %c0_43] : memref<2x64xf32, #tpu.memory_space<vmem>>, vector<1x64xf32>
    %49 = vector.broadcast %48 : vector<1x64xf32> to vector<512x64xf32>
    %50 = arith.addf %47, %49 : vector<512x64xf32>
    %cst_44 = arith.constant 0.000000e+00 : f32
    %51 = vector.broadcast %cst_44 : f32 to vector<512x64xf32>
    %52 = arith.maximumf %50, %51 : vector<512x64xf32>
    %c0_45 = arith.constant 0 : index
    %c0_46 = arith.constant 0 : index
    %53 = vector.load %arg16[%c0_45, %c0_46] : memref<512x64xf32, #tpu.memory_space<vmem>>, vector<512x64xf32>
    tpu.vector_store %arg16[%c0_45, %c0_46], %52 {strides = array<i32>} : memref<512x64xf32, #tpu.memory_space<vmem>>, vector<512x64xf32>,
    %c0_47 = arith.constant 0 : index
    %c0_48 = arith.constant 0 : index
    %54 = tpu.strided_load %arg16[%c0_47, %c0_48] {strides = array<i32: 2, 1>} : memref<512x64xf32, #tpu.memory_space<vmem>>, vector<256x64xf32>
    %c1_49 = arith.constant 1 : index
    %c0_50 = arith.constant 0 : index
    %55 = tpu.strided_load %arg16[%c1_49, %c0_50] {strides = array<i32: 2, 1>} : memref<512x64xf32, #tpu.memory_space<vmem>>, vector<256x64xf32>
    %56 = arith.maximumf %54, %55 : vector<256x64xf32>
    %c0_51 = arith.constant 0 : index
    %c0_52 = arith.constant 0 : index
    %57 = vector.load %arg17[%c0_51, %c0_52] : memref<256x64xf32, #tpu.memory_space<vmem>>, vector<256x64xf32>
    tpu.vector_store %arg17[%c0_51, %c0_52], %56 {strides = array<i32>} : memref<256x64xf32, #tpu.memory_space<vmem>>, vector<256x64xf32>,
    %c0_53 = arith.constant 0 : index
    %c0_54 = arith.constant 0 : index
    %58 = vector.load %arg17[%c0_53, %c0_54] : memref<256x64xf32, #tpu.memory_space<vmem>>, vector<8x64xf32>
    %c8_55 = arith.constant 8 : index
    %c0_56 = arith.constant 0 : index
    %59 = vector.load %arg17[%c8_55, %c0_56] : memref<256x64xf32, #tpu.memory_space<vmem>>, vector<8x64xf32>
    %60 = arith.maximumf %58, %59 : vector<8x64xf32>
    %c16 = arith.constant 16 : index
    %c0_57 = arith.constant 0 : index
    %61 = vector.load %arg18[%c16, %c0_57] : memref<160x64xf32, #tpu.memory_space<vmem>>, vector<8x64xf32>
    tpu.vector_store %arg18[%c16, %c0_57], %60 {strides = array<i32>} : memref<160x64xf32, #tpu.memory_space<vmem>>, vector<8x64xf32>,
    %c16_58 = arith.constant 16 : index
    %c0_59 = arith.constant 0 : index
    %62 = vector.load %arg17[%c16_58, %c0_59] : memref<256x64xf32, #tpu.memory_space<vmem>>, vector<8x64xf32>
    %c24_60 = arith.constant 24 : index
    %c0_61 = arith.constant 0 : index
    %63 = vector.load %arg17[%c24_60, %c0_61] : memref<256x64xf32, #tpu.memory_space<vmem>>, vector<8x64xf32>
    %64 = arith.maximumf %62, %63 : vector<8x64xf32>
    %c24_62 = arith.constant 24 : index
    %c0_63 = arith.constant 0 : index
    %65 = vector.load %arg18[%c24_62, %c0_63] : memref<160x64xf32, #tpu.memory_space<vmem>>, vector<8x64xf32>
    tpu.vector_store %arg18[%c24_62, %c0_63], %64 {strides = array<i32>} : memref<160x64xf32, #tpu.memory_space<vmem>>, vector<8x64xf32>,
    %c32 = arith.constant 32 : index
    %c0_64 = arith.constant 0 : index
    %66 = vector.load %arg17[%c32, %c0_64] : memref<256x64xf32, #tpu.memory_space<vmem>>, vector<8x64xf32>
    %c40_65 = arith.constant 40 : index
    %c0_66 = arith.constant 0 : index
    %67 = vector.load %arg17[%c40_65, %c0_66] : memref<256x64xf32, #tpu.memory_space<vmem>>, vector<8x64xf32>
    %68 = arith.maximumf %66, %67 : vector<8x64xf32>
    %c32_67 = arith.constant 32 : index
    %c0_68 = arith.constant 0 : index
    %69 = vector.load %arg18[%c32_67, %c0_68] : memref<160x64xf32, #tpu.memory_space<vmem>>, vector<8x64xf32>
    tpu.vector_store %arg18[%c32_67, %c0_68], %68 {strides = array<i32>} : memref<160x64xf32, #tpu.memory_space<vmem>>, vector<8x64xf32>,
    %c48 = arith.constant 48 : index
    %c0_69 = arith.constant 0 : index
    %70 = vector.load %arg17[%c48, %c0_69] : memref<256x64xf32, #tpu.memory_space<vmem>>, vector<8x64xf32>
    %c56 = arith.constant 56 : index
    %c0_70 = arith.constant 0 : index
    %71 = vector.load %arg17[%c56, %c0_70] : memref<256x64xf32, #tpu.memory_space<vmem>>, vector<8x64xf32>
    %72 = arith.maximumf %70, %71 : vector<8x64xf32>
    %c40_71 = arith.constant 40 : index
    %c0_72 = arith.constant 0 : index
    %73 = vector.load %arg18[%c40_71, %c0_72] : memref<160x64xf32, #tpu.memory_space<vmem>>, vector<8x64xf32>
    tpu.vector_store %arg18[%c40_71, %c0_72], %72 {strides = array<i32>} : memref<160x64xf32, #tpu.memory_space<vmem>>, vector<8x64xf32>,
    %c64 = arith.constant 64 : index
    %c0_73 = arith.constant 0 : index
    %74 = vector.load %arg17[%c64, %c0_73] : memref<256x64xf32, #tpu.memory_space<vmem>>, vector<8x64xf32>
    %c72 = arith.constant 72 : index
    %c0_74 = arith.constant 0 : index
    %75 = vector.load %arg17[%c72, %c0_74] : memref<256x64xf32, #tpu.memory_space<vmem>>, vector<8x64xf32>
    %76 = arith.maximumf %74, %75 : vector<8x64xf32>
    %c48_75 = arith.constant 48 : index
    %c0_76 = arith.constant 0 : index
    %77 = vector.load %arg18[%c48_75, %c0_76] : memref<160x64xf32, #tpu.memory_space<vmem>>, vector<8x64xf32>
    tpu.vector_store %arg18[%c48_75, %c0_76], %76 {strides = array<i32>} : memref<160x64xf32, #tpu.memory_space<vmem>>, vector<8x64xf32>,
    %c80 = arith.constant 80 : index
    %c0_77 = arith.constant 0 : index
    %78 = vector.load %arg17[%c80, %c0_77] : memref<256x64xf32, #tpu.memory_space<vmem>>, vector<8x64xf32>
    %c88 = arith.constant 88 : index
    %c0_78 = arith.constant 0 : index
    %79 = vector.load %arg17[%c88, %c0_78] : memref<256x64xf32, #tpu.memory_space<vmem>>, vector<8x64xf32>
    %80 = arith.maximumf %78, %79 : vector<8x64xf32>
    %c56_79 = arith.constant 56 : index
    %c0_80 = arith.constant 0 : index
    %81 = vector.load %arg18[%c56_79, %c0_80] : memref<160x64xf32, #tpu.memory_space<vmem>>, vector<8x64xf32>
    tpu.vector_store %arg18[%c56_79, %c0_80], %80 {strides = array<i32>} : memref<160x64xf32, #tpu.memory_space<vmem>>, vector<8x64xf32>,
    %c96 = arith.constant 96 : index
    %c0_81 = arith.constant 0 : index
    %82 = vector.load %arg17[%c96, %c0_81] : memref<256x64xf32, #tpu.memory_space<vmem>>, vector<8x64xf32>
    %c104 = arith.constant 104 : index
    %c0_82 = arith.constant 0 : index
    %83 = vector.load %arg17[%c104, %c0_82] : memref<256x64xf32, #tpu.memory_space<vmem>>, vector<8x64xf32>
    %84 = arith.maximumf %82, %83 : vector<8x64xf32>
    %c64_83 = arith.constant 64 : index
    %c0_84 = arith.constant 0 : index
    %85 = vector.load %arg18[%c64_83, %c0_84] : memref<160x64xf32, #tpu.memory_space<vmem>>, vector<8x64xf32>
    tpu.vector_store %arg18[%c64_83, %c0_84], %84 {strides = array<i32>} : memref<160x64xf32, #tpu.memory_space<vmem>>, vector<8x64xf32>,
    %c112 = arith.constant 112 : index
    %c0_85 = arith.constant 0 : index
    %86 = vector.load %arg17[%c112, %c0_85] : memref<256x64xf32, #tpu.memory_space<vmem>>, vector<8x64xf32>
    %c120 = arith.constant 120 : index
    %c0_86 = arith.constant 0 : index
    %87 = vector.load %arg17[%c120, %c0_86] : memref<256x64xf32, #tpu.memory_space<vmem>>, vector<8x64xf32>
    %88 = arith.maximumf %86, %87 : vector<8x64xf32>
    %c72_87 = arith.constant 72 : index
    %c0_88 = arith.constant 0 : index
    %89 = vector.load %arg18[%c72_87, %c0_88] : memref<160x64xf32, #tpu.memory_space<vmem>>, vector<8x64xf32>
    tpu.vector_store %arg18[%c72_87, %c0_88], %88 {strides = array<i32>} : memref<160x64xf32, #tpu.memory_space<vmem>>, vector<8x64xf32>,
    %c128 = arith.constant 128 : index
    %c0_89 = arith.constant 0 : index
    %90 = vector.load %arg17[%c128, %c0_89] : memref<256x64xf32, #tpu.memory_space<vmem>>, vector<8x64xf32>
    %c136 = arith.constant 136 : index
    %c0_90 = arith.constant 0 : index
    %91 = vector.load %arg17[%c136, %c0_90] : memref<256x64xf32, #tpu.memory_space<vmem>>, vector<8x64xf32>
    %92 = arith.maximumf %90, %91 : vector<8x64xf32>
    %c80_91 = arith.constant 80 : index
    %c0_92 = arith.constant 0 : index
    %93 = vector.load %arg18[%c80_91, %c0_92] : memref<160x64xf32, #tpu.memory_space<vmem>>, vector<8x64xf32>
    tpu.vector_store %arg18[%c80_91, %c0_92], %92 {strides = array<i32>} : memref<160x64xf32, #tpu.memory_space<vmem>>, vector<8x64xf32>,
    %c144 = arith.constant 144 : index
    %c0_93 = arith.constant 0 : index
    %94 = vector.load %arg17[%c144, %c0_93] : memref<256x64xf32, #tpu.memory_space<vmem>>, vector<8x64xf32>
    %c152 = arith.constant 152 : index
    %c0_94 = arith.constant 0 : index
    %95 = vector.load %arg17[%c152, %c0_94] : memref<256x64xf32, #tpu.memory_space<vmem>>, vector<8x64xf32>
    %96 = arith.maximumf %94, %95 : vector<8x64xf32>
    %c88_95 = arith.constant 88 : index
    %c0_96 = arith.constant 0 : index
    %97 = vector.load %arg18[%c88_95, %c0_96] : memref<160x64xf32, #tpu.memory_space<vmem>>, vector<8x64xf32>
    tpu.vector_store %arg18[%c88_95, %c0_96], %96 {strides = array<i32>} : memref<160x64xf32, #tpu.memory_space<vmem>>, vector<8x64xf32>,
    %c160 = arith.constant 160 : index
    %c0_97 = arith.constant 0 : index
    %98 = vector.load %arg17[%c160, %c0_97] : memref<256x64xf32, #tpu.memory_space<vmem>>, vector<8x64xf32>
    %c168 = arith.constant 168 : index
    %c0_98 = arith.constant 0 : index
    %99 = vector.load %arg17[%c168, %c0_98] : memref<256x64xf32, #tpu.memory_space<vmem>>, vector<8x64xf32>
    %100 = arith.maximumf %98, %99 : vector<8x64xf32>
    %c96_99 = arith.constant 96 : index
    %c0_100 = arith.constant 0 : index
    %101 = vector.load %arg18[%c96_99, %c0_100] : memref<160x64xf32, #tpu.memory_space<vmem>>, vector<8x64xf32>
    tpu.vector_store %arg18[%c96_99, %c0_100], %100 {strides = array<i32>} : memref<160x64xf32, #tpu.memory_space<vmem>>, vector<8x64xf32>,
    %c176 = arith.constant 176 : index
    %c0_101 = arith.constant 0 : index
    %102 = vector.load %arg17[%c176, %c0_101] : memref<256x64xf32, #tpu.memory_space<vmem>>, vector<8x64xf32>
    %c184 = arith.constant 184 : index
    %c0_102 = arith.constant 0 : index
    %103 = vector.load %arg17[%c184, %c0_102] : memref<256x64xf32, #tpu.memory_space<vmem>>, vector<8x64xf32>
    %104 = arith.maximumf %102, %103 : vector<8x64xf32>
    %c104_103 = arith.constant 104 : index
    %c0_104 = arith.constant 0 : index
    %105 = vector.load %arg18[%c104_103, %c0_104] : memref<160x64xf32, #tpu.memory_space<vmem>>, vector<8x64xf32>
    tpu.vector_store %arg18[%c104_103, %c0_104], %104 {strides = array<i32>} : memref<160x64xf32, #tpu.memory_space<vmem>>, vector<8x64xf32>,
    %c192 = arith.constant 192 : index
    %c0_105 = arith.constant 0 : index
    %106 = vector.load %arg17[%c192, %c0_105] : memref<256x64xf32, #tpu.memory_space<vmem>>, vector<8x64xf32>
    %c200 = arith.constant 200 : index
    %c0_106 = arith.constant 0 : index
    %107 = vector.load %arg17[%c200, %c0_106] : memref<256x64xf32, #tpu.memory_space<vmem>>, vector<8x64xf32>
    %108 = arith.maximumf %106, %107 : vector<8x64xf32>
    %c112_107 = arith.constant 112 : index
    %c0_108 = arith.constant 0 : index
    %109 = vector.load %arg18[%c112_107, %c0_108] : memref<160x64xf32, #tpu.memory_space<vmem>>, vector<8x64xf32>
    tpu.vector_store %arg18[%c112_107, %c0_108], %108 {strides = array<i32>} : memref<160x64xf32, #tpu.memory_space<vmem>>, vector<8x64xf32>,
    %c208 = arith.constant 208 : index
    %c0_109 = arith.constant 0 : index
    %110 = vector.load %arg17[%c208, %c0_109] : memref<256x64xf32, #tpu.memory_space<vmem>>, vector<8x64xf32>
    %c216 = arith.constant 216 : index
    %c0_110 = arith.constant 0 : index
    %111 = vector.load %arg17[%c216, %c0_110] : memref<256x64xf32, #tpu.memory_space<vmem>>, vector<8x64xf32>
    %112 = arith.maximumf %110, %111 : vector<8x64xf32>
    %c120_111 = arith.constant 120 : index
    %c0_112 = arith.constant 0 : index
    %113 = vector.load %arg18[%c120_111, %c0_112] : memref<160x64xf32, #tpu.memory_space<vmem>>, vector<8x64xf32>
    tpu.vector_store %arg18[%c120_111, %c0_112], %112 {strides = array<i32>} : memref<160x64xf32, #tpu.memory_space<vmem>>, vector<8x64xf32>,
    %c224 = arith.constant 224 : index
    %c0_113 = arith.constant 0 : index
    %114 = vector.load %arg17[%c224, %c0_113] : memref<256x64xf32, #tpu.memory_space<vmem>>, vector<8x64xf32>
    %c232 = arith.constant 232 : index
    %c0_114 = arith.constant 0 : index
    %115 = vector.load %arg17[%c232, %c0_114] : memref<256x64xf32, #tpu.memory_space<vmem>>, vector<8x64xf32>
    %116 = arith.maximumf %114, %115 : vector<8x64xf32>
    %c128_115 = arith.constant 128 : index
    %c0_116 = arith.constant 0 : index
    %117 = vector.load %arg18[%c128_115, %c0_116] : memref<160x64xf32, #tpu.memory_space<vmem>>, vector<8x64xf32>
    tpu.vector_store %arg18[%c128_115, %c0_116], %116 {strides = array<i32>} : memref<160x64xf32, #tpu.memory_space<vmem>>, vector<8x64xf32>,
    %c240 = arith.constant 240 : index
    %c0_117 = arith.constant 0 : index
    %118 = vector.load %arg17[%c240, %c0_117] : memref<256x64xf32, #tpu.memory_space<vmem>>, vector<8x64xf32>
    %c248 = arith.constant 248 : index
    %c0_118 = arith.constant 0 : index
    %119 = vector.load %arg17[%c248, %c0_118] : memref<256x64xf32, #tpu.memory_space<vmem>>, vector<8x64xf32>
    %120 = arith.maximumf %118, %119 : vector<8x64xf32>
    %c136_119 = arith.constant 136 : index
    %c0_120 = arith.constant 0 : index
    %121 = vector.load %arg18[%c136_119, %c0_120] : memref<160x64xf32, #tpu.memory_space<vmem>>, vector<8x64xf32>
    tpu.vector_store %arg18[%c136_119, %c0_120], %120 {strides = array<i32>} : memref<160x64xf32, #tpu.memory_space<vmem>>, vector<8x64xf32>,
    %c7_121 = arith.constant 7 : index
    %c0_122 = arith.constant 0 : index
    %122 = vector.load %arg18[%c7_121, %c0_122] : memref<160x64xf32, #tpu.memory_space<vmem>>, vector<128x64xf32>
    %c0_123 = arith.constant 0 : index
    %c0_124 = arith.constant 0 : index
    %123 = vector.load %arg10[%c0_123, %c0_124] : memref<128x9xf32, #tpu.memory_space<vmem>>, vector<128x1xf32>
    %124 = vector.broadcast %123 : vector<128x1xf32> to vector<128x64xf32>
    %125 = arith.mulf %122, %124 : vector<128x64xf32>
    %126 = arith.truncf %125 : vector<128x64xf32> to vector<128x64xbf16>
    %c0_125 = arith.constant 0 : index
    %c0_126 = arith.constant 0 : index
    %127 = vector.load %arg15[%c0_125, %c0_126] : memref<128x576xbf16, #tpu.memory_space<vmem>>, vector<128x64xbf16>
    tpu.vector_store %arg15[%c0_125, %c0_126], %126 {strides = array<i32>} : memref<128x576xbf16, #tpu.memory_space<vmem>>, vector<128x64xbf16>,
    %c8_127 = arith.constant 8 : index
    %c0_128 = arith.constant 0 : index
    %128 = vector.load %arg18[%c8_127, %c0_128] : memref<160x64xf32, #tpu.memory_space<vmem>>, vector<128x64xf32>
    %c0_129 = arith.constant 0 : index
    %c1_130 = arith.constant 1 : index
    %129 = vector.load %arg10[%c0_129, %c1_130] : memref<128x9xf32, #tpu.memory_space<vmem>>, vector<128x1xf32>
    %130 = vector.broadcast %129 : vector<128x1xf32> to vector<128x64xf32>
    %131 = arith.mulf %128, %130 : vector<128x64xf32>
    %132 = arith.truncf %131 : vector<128x64xf32> to vector<128x64xbf16>
    %c0_131 = arith.constant 0 : index
    %c64_132 = arith.constant 64 : index
    %133 = vector.load %arg15[%c0_131, %c64_132] : memref<128x576xbf16, #tpu.memory_space<vmem>>, vector<128x64xbf16>
    tpu.vector_store %arg15[%c0_131, %c64_132], %132 {strides = array<i32>} : memref<128x576xbf16, #tpu.memory_space<vmem>>, vector<128x64xbf16>,
    %c9_133 = arith.constant 9 : index
    %c0_134 = arith.constant 0 : index
    %134 = vector.load %arg18[%c9_133, %c0_134] : memref<160x64xf32, #tpu.memory_space<vmem>>, vector<128x64xf32>
    %c0_135 = arith.constant 0 : index
    %c2_136 = arith.constant 2 : index
    %135 = vector.load %arg10[%c0_135, %c2_136] : memref<128x9xf32, #tpu.memory_space<vmem>>, vector<128x1xf32>
    %136 = vector.broadcast %135 : vector<128x1xf32> to vector<128x64xf32>
    %137 = arith.mulf %134, %136 : vector<128x64xf32>
    %138 = arith.truncf %137 : vector<128x64xf32> to vector<128x64xbf16>
    %c0_137 = arith.constant 0 : index
    %c128_138 = arith.constant 128 : index
    %139 = vector.load %arg15[%c0_137, %c128_138] : memref<128x576xbf16, #tpu.memory_space<vmem>>, vector<128x64xbf16>
    tpu.vector_store %arg15[%c0_137, %c128_138], %138 {strides = array<i32>} : memref<128x576xbf16, #tpu.memory_space<vmem>>, vector<128x64xbf16>,
    %c15 = arith.constant 15 : index
    %c0_139 = arith.constant 0 : index
    %140 = vector.load %arg18[%c15, %c0_139] : memref<160x64xf32, #tpu.memory_space<vmem>>, vector<128x64xf32>
    %c0_140 = arith.constant 0 : index
    %c3_141 = arith.constant 3 : index
    %141 = vector.load %arg10[%c0_140, %c3_141] : memref<128x9xf32, #tpu.memory_space<vmem>>, vector<128x1xf32>
    %142 = vector.broadcast %141 : vector<128x1xf32> to vector<128x64xf32>
    %143 = arith.mulf %140, %142 : vector<128x64xf32>
    %144 = arith.truncf %143 : vector<128x64xf32> to vector<128x64xbf16>
    %c0_142 = arith.constant 0 : index
    %c192_143 = arith.constant 192 : index
    %145 = vector.load %arg15[%c0_142, %c192_143] : memref<128x576xbf16, #tpu.memory_space<vmem>>, vector<128x64xbf16>
    tpu.vector_store %arg15[%c0_142, %c192_143], %144 {strides = array<i32>} : memref<128x576xbf16, #tpu.memory_space<vmem>>, vector<128x64xbf16>,
    %c16_144 = arith.constant 16 : index
    %c0_145 = arith.constant 0 : index
    %146 = vector.load %arg18[%c16_144, %c0_145] : memref<160x64xf32, #tpu.memory_space<vmem>>, vector<128x64xf32>
    %147 = arith.truncf %146 : vector<128x64xf32> to vector<128x64xbf16>
    %c0_146 = arith.constant 0 : index
    %c256 = arith.constant 256 : index
    %148 = vector.load %arg15[%c0_146, %c256] : memref<128x576xbf16, #tpu.memory_space<vmem>>, vector<128x64xbf16>
    tpu.vector_store %arg15[%c0_146, %c256], %147 {strides = array<i32>} : memref<128x576xbf16, #tpu.memory_space<vmem>>, vector<128x64xbf16>,
    %c17 = arith.constant 17 : index
    %c0_147 = arith.constant 0 : index
    %149 = vector.load %arg18[%c17, %c0_147] : memref<160x64xf32, #tpu.memory_space<vmem>>, vector<128x64xf32>
    %c0_148 = arith.constant 0 : index
    %c5_149 = arith.constant 5 : index
    %150 = vector.load %arg10[%c0_148, %c5_149] : memref<128x9xf32, #tpu.memory_space<vmem>>, vector<128x1xf32>
    %151 = vector.broadcast %150 : vector<128x1xf32> to vector<128x64xf32>
    %152 = arith.mulf %149, %151 : vector<128x64xf32>
    %153 = arith.truncf %152 : vector<128x64xf32> to vector<128x64xbf16>
    %c0_150 = arith.constant 0 : index
    %c320 = arith.constant 320 : index
    %154 = vector.load %arg15[%c0_150, %c320] : memref<128x576xbf16, #tpu.memory_space<vmem>>, vector<128x64xbf16>
    tpu.vector_store %arg15[%c0_150, %c320], %153 {strides = array<i32>} : memref<128x576xbf16, #tpu.memory_space<vmem>>, vector<128x64xbf16>,
    %c23_151 = arith.constant 23 : index
    %c0_152 = arith.constant 0 : index
    %155 = vector.load %arg18[%c23_151, %c0_152] : memref<160x64xf32, #tpu.memory_space<vmem>>, vector<128x64xf32>
    %c0_153 = arith.constant 0 : index
    %c6_154 = arith.constant 6 : index
    %156 = vector.load %arg10[%c0_153, %c6_154] : memref<128x9xf32, #tpu.memory_space<vmem>>, vector<128x1xf32>
    %157 = vector.broadcast %156 : vector<128x1xf32> to vector<128x64xf32>
    %158 = arith.mulf %155, %157 : vector<128x64xf32>
    %159 = arith.truncf %158 : vector<128x64xf32> to vector<128x64xbf16>
    %c0_155 = arith.constant 0 : index
    %c384 = arith.constant 384 : index
    %160 = vector.load %arg15[%c0_155, %c384] : memref<128x576xbf16, #tpu.memory_space<vmem>>, vector<128x64xbf16>
    tpu.vector_store %arg15[%c0_155, %c384], %159 {strides = array<i32>} : memref<128x576xbf16, #tpu.memory_space<vmem>>, vector<128x64xbf16>,
    %c24_156 = arith.constant 24 : index
    %c0_157 = arith.constant 0 : index
    %161 = vector.load %arg18[%c24_156, %c0_157] : memref<160x64xf32, #tpu.memory_space<vmem>>, vector<128x64xf32>
    %c0_158 = arith.constant 0 : index
    %c7_159 = arith.constant 7 : index
    %162 = vector.load %arg10[%c0_158, %c7_159] : memref<128x9xf32, #tpu.memory_space<vmem>>, vector<128x1xf32>
    %163 = vector.broadcast %162 : vector<128x1xf32> to vector<128x64xf32>
    %164 = arith.mulf %161, %163 : vector<128x64xf32>
    %165 = arith.truncf %164 : vector<128x64xf32> to vector<128x64xbf16>
    %c0_160 = arith.constant 0 : index
    %c448 = arith.constant 448 : index
    %166 = vector.load %arg15[%c0_160, %c448] : memref<128x576xbf16, #tpu.memory_space<vmem>>, vector<128x64xbf16>
    tpu.vector_store %arg15[%c0_160, %c448], %165 {strides = array<i32>} : memref<128x576xbf16, #tpu.memory_space<vmem>>, vector<128x64xbf16>,
    %c25_161 = arith.constant 25 : index
    %c0_162 = arith.constant 0 : index
    %167 = vector.load %arg18[%c25_161, %c0_162] : memref<160x64xf32, #tpu.memory_space<vmem>>, vector<128x64xf32>
    %c0_163 = arith.constant 0 : index
    %c8_164 = arith.constant 8 : index
    %168 = vector.load %arg10[%c0_163, %c8_164] : memref<128x9xf32, #tpu.memory_space<vmem>>, vector<128x1xf32>
    %169 = vector.broadcast %168 : vector<128x1xf32> to vector<128x64xf32>
    %170 = arith.mulf %167, %169 : vector<128x64xf32>
    %171 = arith.truncf %170 : vector<128x64xf32> to vector<128x64xbf16>
    %c0_165 = arith.constant 0 : index
    %c512 = arith.constant 512 : index
    %172 = vector.load %arg15[%c0_165, %c512] : memref<128x576xbf16, #tpu.memory_space<vmem>>, vector<128x64xbf16>
    tpu.vector_store %arg15[%c0_165, %c512], %171 {strides = array<i32>} : memref<128x576xbf16, #tpu.memory_space<vmem>>, vector<128x64xbf16>,
    %c0_166 = arith.constant 0 : index
    %c0_167 = arith.constant 0 : index
    %173 = vector.load %arg15[%c0_166, %c0_167] : memref<128x576xbf16, #tpu.memory_space<vmem>>, vector<128x576xbf16>
    %c0_168 = arith.constant 0 : index
    %c0_169 = arith.constant 0 : index
    %174 = vector.load %arg2[%c0_168, %c0_169] : memref<576x64xbf16, #tpu.memory_space<vmem>>, vector<576x64xbf16>
    %cst_170 = arith.constant dense<0.000000e+00> : vector<128x64xf32>
    %175 = tpu.matmul %173, %174, %cst_170 {dimension_numbers = #tpu.dot_dimension_numbers<[1], [0], [0], [1], [0, 0, 1, 1], [], []>} : vector<128x576xbf16>, vector<576x64xbf16>, vector<128x64xf32> -> vector<128x64xf32>
    %cst_171 = arith.constant dense<0.000000e+00> : vector<64xf32>
    %176 = vector.multi_reduction <add>, %175, %cst_171 [0] : vector<128x64xf32> to vector<64xf32>
    %177 = vector.shape_cast %176 : vector<64xf32> to vector<1x64xf32>
    %cst_172 = arith.constant 7.812500e-03 : f32
    %178 = vector.broadcast %cst_172 : f32 to vector<1x64xf32>
    %179 = arith.mulf %177, %178 : vector<1x64xf32>
    %180 = vector.broadcast %179 : vector<1x64xf32> to vector<128x64xf32>
    %181 = arith.subf %175, %180 : vector<128x64xf32>
    %182 = arith.mulf %181, %181 : vector<128x64xf32>
    %cst_173 = arith.constant dense<0.000000e+00> : vector<64xf32>
    %183 = vector.multi_reduction <add>, %182, %cst_173 [0] : vector<128x64xf32> to vector<64xf32>
    %184 = vector.shape_cast %183 : vector<64xf32> to vector<1x64xf32>
    %cst_174 = arith.constant 7.812500e-03 : f32
    %185 = vector.broadcast %cst_174 : f32 to vector<1x64xf32>
    %186 = arith.mulf %184, %185 : vector<1x64xf32>
    %c0_175 = arith.constant 0 : index
    %c0_176 = arith.constant 0 : index
    %187 = vector.load %arg6[%c0_175, %c0_176] : memref<2x64xf32, #tpu.memory_space<vmem>>, vector<1x64xf32>
    %cst_177 = arith.constant 9.99999974E-6 : f32
    %188 = vector.broadcast %cst_177 : f32 to vector<1x64xf32>
    %189 = arith.addf %186, %188 : vector<1x64xf32>
    %190 = math.rsqrt %189 : vector<1x64xf32>
    %191 = arith.mulf %187, %190 : vector<1x64xf32>
    %192 = vector.broadcast %191 : vector<1x64xf32> to vector<128x64xf32>
    %193 = arith.mulf %181, %192 : vector<128x64xf32>
    %c1_178 = arith.constant 1 : index
    %c0_179 = arith.constant 0 : index
    %194 = vector.load %arg6[%c1_178, %c0_179] : memref<2x64xf32, #tpu.memory_space<vmem>>, vector<1x64xf32>
    %195 = vector.broadcast %194 : vector<1x64xf32> to vector<128x64xf32>
    %196 = arith.addf %193, %195 : vector<128x64xf32>
    %cst_180 = arith.constant 0.000000e+00 : f32
    %197 = vector.broadcast %cst_180 : f32 to vector<128x64xf32>
    %198 = arith.maximumf %196, %197 : vector<128x64xf32>
    %c0_181 = arith.constant 0 : index
    %c0_182 = arith.constant 0 : index
    %199 = vector.load %arg16[%c0_181, %c0_182] : memref<512x64xf32, #tpu.memory_space<vmem>>, vector<128x64xf32>
    tpu.vector_store %arg16[%c0_181, %c0_182], %198 {strides = array<i32>} : memref<512x64xf32, #tpu.memory_space<vmem>>, vector<128x64xf32>,
    %c0_183 = arith.constant 0 : index
    %c0_184 = arith.constant 0 : index
    %200 = tpu.strided_load %arg16[%c0_183, %c0_184] {strides = array<i32: 2, 1>} : memref<512x64xf32, #tpu.memory_space<vmem>>, vector<64x64xf32>
    %c1_185 = arith.constant 1 : index
    %c0_186 = arith.constant 0 : index
    %201 = tpu.strided_load %arg16[%c1_185, %c0_186] {strides = array<i32: 2, 1>} : memref<512x64xf32, #tpu.memory_space<vmem>>, vector<64x64xf32>
    %202 = arith.maximumf %200, %201 : vector<64x64xf32>
    %c0_187 = arith.constant 0 : index
    %c0_188 = arith.constant 0 : index
    %203 = vector.load %arg17[%c0_187, %c0_188] : memref<256x64xf32, #tpu.memory_space<vmem>>, vector<64x64xf32>
    tpu.vector_store %arg17[%c0_187, %c0_188], %202 {strides = array<i32>} : memref<256x64xf32, #tpu.memory_space<vmem>>, vector<64x64xf32>,
    %c0_189 = arith.constant 0 : index
    %c0_190 = arith.constant 0 : index
    %204 = vector.load %arg17[%c0_189, %c0_190] : memref<256x64xf32, #tpu.memory_space<vmem>>, vector<4x64xf32>
    %c4_191 = arith.constant 4 : index
    %c0_192 = arith.constant 0 : index
    %205 = vector.load %arg17[%c4_191, %c0_192] : memref<256x64xf32, #tpu.memory_space<vmem>>, vector<4x64xf32>
    %206 = arith.maximumf %204, %205 : vector<4x64xf32>
    %c8_193 = arith.constant 8 : index
    %c0_194 = arith.constant 0 : index
    %207 = vector.load %arg19[%c8_193, %c0_194] : memref<48x64xf32, #tpu.memory_space<vmem>>, vector<4x64xf32>
    tpu.vector_store %arg19[%c8_193, %c0_194], %206 {strides = array<i32>} : memref<48x64xf32, #tpu.memory_space<vmem>>, vector<4x64xf32>,
    %c8_195 = arith.constant 8 : index
    %c0_196 = arith.constant 0 : index
    %208 = vector.load %arg17[%c8_195, %c0_196] : memref<256x64xf32, #tpu.memory_space<vmem>>, vector<4x64xf32>
    %c12 = arith.constant 12 : index
    %c0_197 = arith.constant 0 : index
    %209 = vector.load %arg17[%c12, %c0_197] : memref<256x64xf32, #tpu.memory_space<vmem>>, vector<4x64xf32>
    %210 = arith.maximumf %208, %209 : vector<4x64xf32>
    %c12_198 = arith.constant 12 : index
    %c0_199 = arith.constant 0 : index
    %211 = vector.load %arg19[%c12_198, %c0_199] : memref<48x64xf32, #tpu.memory_space<vmem>>, vector<4x64xf32>
    tpu.vector_store %arg19[%c12_198, %c0_199], %210 {strides = array<i32>} : memref<48x64xf32, #tpu.memory_space<vmem>>, vector<4x64xf32>,
    %c16_200 = arith.constant 16 : index
    %c0_201 = arith.constant 0 : index
    %212 = vector.load %arg17[%c16_200, %c0_201] : memref<256x64xf32, #tpu.memory_space<vmem>>, vector<4x64xf32>
    %c20 = arith.constant 20 : index
    %c0_202 = arith.constant 0 : index
    %213 = vector.load %arg17[%c20, %c0_202] : memref<256x64xf32, #tpu.memory_space<vmem>>, vector<4x64xf32>
    %214 = arith.maximumf %212, %213 : vector<4x64xf32>
    %c16_203 = arith.constant 16 : index
    %c0_204 = arith.constant 0 : index
    %215 = vector.load %arg19[%c16_203, %c0_204] : memref<48x64xf32, #tpu.memory_space<vmem>>, vector<4x64xf32>
    tpu.vector_store %arg19[%c16_203, %c0_204], %214 {strides = array<i32>} : memref<48x64xf32, #tpu.memory_space<vmem>>, vector<4x64xf32>,
    %c24_205 = arith.constant 24 : index
    %c0_206 = arith.constant 0 : index
    %216 = vector.load %arg17[%c24_205, %c0_206] : memref<256x64xf32, #tpu.memory_space<vmem>>, vector<4x64xf32>
    %c28 = arith.constant 28 : index
    %c0_207 = arith.constant 0 : index
    %217 = vector.load %arg17[%c28, %c0_207] : memref<256x64xf32, #tpu.memory_space<vmem>>, vector<4x64xf32>
    %218 = arith.maximumf %216, %217 : vector<4x64xf32>
    %c20_208 = arith.constant 20 : index
    %c0_209 = arith.constant 0 : index
    %219 = vector.load %arg19[%c20_208, %c0_209] : memref<48x64xf32, #tpu.memory_space<vmem>>, vector<4x64xf32>
    tpu.vector_store %arg19[%c20_208, %c0_209], %218 {strides = array<i32>} : memref<48x64xf32, #tpu.memory_space<vmem>>, vector<4x64xf32>,
    %c32_210 = arith.constant 32 : index
    %c0_211 = arith.constant 0 : index
    %220 = vector.load %arg17[%c32_210, %c0_211] : memref<256x64xf32, #tpu.memory_space<vmem>>, vector<4x64xf32>
    %c36 = arith.constant 36 : index
    %c0_212 = arith.constant 0 : index
    %221 = vector.load %arg17[%c36, %c0_212] : memref<256x64xf32, #tpu.memory_space<vmem>>, vector<4x64xf32>
    %222 = arith.maximumf %220, %221 : vector<4x64xf32>
    %c24_213 = arith.constant 24 : index
    %c0_214 = arith.constant 0 : index
    %223 = vector.load %arg19[%c24_213, %c0_214] : memref<48x64xf32, #tpu.memory_space<vmem>>, vector<4x64xf32>
    tpu.vector_store %arg19[%c24_213, %c0_214], %222 {strides = array<i32>} : memref<48x64xf32, #tpu.memory_space<vmem>>, vector<4x64xf32>,
    %c40_215 = arith.constant 40 : index
    %c0_216 = arith.constant 0 : index
    %224 = vector.load %arg17[%c40_215, %c0_216] : memref<256x64xf32, #tpu.memory_space<vmem>>, vector<4x64xf32>
    %c44 = arith.constant 44 : index
    %c0_217 = arith.constant 0 : index
    %225 = vector.load %arg17[%c44, %c0_217] : memref<256x64xf32, #tpu.memory_space<vmem>>, vector<4x64xf32>
    %226 = arith.maximumf %224, %225 : vector<4x64xf32>
    %c28_218 = arith.constant 28 : index
    %c0_219 = arith.constant 0 : index
    %227 = vector.load %arg19[%c28_218, %c0_219] : memref<48x64xf32, #tpu.memory_space<vmem>>, vector<4x64xf32>
    tpu.vector_store %arg19[%c28_218, %c0_219], %226 {strides = array<i32>} : memref<48x64xf32, #tpu.memory_space<vmem>>, vector<4x64xf32>,
    %c48_220 = arith.constant 48 : index
    %c0_221 = arith.constant 0 : index
    %228 = vector.load %arg17[%c48_220, %c0_221] : memref<256x64xf32, #tpu.memory_space<vmem>>, vector<4x64xf32>
    %c52 = arith.constant 52 : index
    %c0_222 = arith.constant 0 : index
    %229 = vector.load %arg17[%c52, %c0_222] : memref<256x64xf32, #tpu.memory_space<vmem>>, vector<4x64xf32>
    %230 = arith.maximumf %228, %229 : vector<4x64xf32>
    %c32_223 = arith.constant 32 : index
    %c0_224 = arith.constant 0 : index
    %231 = vector.load %arg19[%c32_223, %c0_224] : memref<48x64xf32, #tpu.memory_space<vmem>>, vector<4x64xf32>
    tpu.vector_store %arg19[%c32_223, %c0_224], %230 {strides = array<i32>} : memref<48x64xf32, #tpu.memory_space<vmem>>, vector<4x64xf32>,
    %c56_225 = arith.constant 56 : index
    %c0_226 = arith.constant 0 : index
    %232 = vector.load %arg17[%c56_225, %c0_226] : memref<256x64xf32, #tpu.memory_space<vmem>>, vector<4x64xf32>
    %c60 = arith.constant 60 : index
    %c0_227 = arith.constant 0 : index
    %233 = vector.load %arg17[%c60, %c0_227] : memref<256x64xf32, #tpu.memory_space<vmem>>, vector<4x64xf32>
    %234 = arith.maximumf %232, %233 : vector<4x64xf32>
    %c36_228 = arith.constant 36 : index
    %c0_229 = arith.constant 0 : index
    %235 = vector.load %arg19[%c36_228, %c0_229] : memref<48x64xf32, #tpu.memory_space<vmem>>, vector<4x64xf32>
    tpu.vector_store %arg19[%c36_228, %c0_229], %234 {strides = array<i32>} : memref<48x64xf32, #tpu.memory_space<vmem>>, vector<4x64xf32>,
    %c3_230 = arith.constant 3 : index
    %c0_231 = arith.constant 0 : index
    %236 = vector.load %arg19[%c3_230, %c0_231] : memref<48x64xf32, #tpu.memory_space<vmem>>, vector<32x64xf32>
    %c0_232 = arith.constant 0 : index
    %c0_233 = arith.constant 0 : index
    %237 = vector.load %arg11[%c0_232, %c0_233] : memref<32x9xf32, #tpu.memory_space<vmem>>, vector<32x1xf32>
    %238 = vector.broadcast %237 : vector<32x1xf32> to vector<32x64xf32>
    %239 = arith.mulf %236, %238 : vector<32x64xf32>
    %240 = arith.truncf %239 : vector<32x64xf32> to vector<32x64xbf16>
    %c0_234 = arith.constant 0 : index
    %c0_235 = arith.constant 0 : index
    %241 = vector.load %arg15[%c0_234, %c0_235] : memref<128x576xbf16, #tpu.memory_space<vmem>>, vector<32x64xbf16>
    tpu.vector_store %arg15[%c0_234, %c0_235], %240 {strides = array<i32>} : memref<128x576xbf16, #tpu.memory_space<vmem>>, vector<32x64xbf16>,
    %c4_236 = arith.constant 4 : index
    %c0_237 = arith.constant 0 : index
    %242 = vector.load %arg19[%c4_236, %c0_237] : memref<48x64xf32, #tpu.memory_space<vmem>>, vector<32x64xf32>
    %c0_238 = arith.constant 0 : index
    %c1_239 = arith.constant 1 : index
    %243 = vector.load %arg11[%c0_238, %c1_239] : memref<32x9xf32, #tpu.memory_space<vmem>>, vector<32x1xf32>
    %244 = vector.broadcast %243 : vector<32x1xf32> to vector<32x64xf32>
    %245 = arith.mulf %242, %244 : vector<32x64xf32>
    %246 = arith.truncf %245 : vector<32x64xf32> to vector<32x64xbf16>
    %c0_240 = arith.constant 0 : index
    %c64_241 = arith.constant 64 : index
    %247 = vector.load %arg15[%c0_240, %c64_241] : memref<128x576xbf16, #tpu.memory_space<vmem>>, vector<32x64xbf16>
    tpu.vector_store %arg15[%c0_240, %c64_241], %246 {strides = array<i32>} : memref<128x576xbf16, #tpu.memory_space<vmem>>, vector<32x64xbf16>,
    %c5_242 = arith.constant 5 : index
    %c0_243 = arith.constant 0 : index
    %248 = vector.load %arg19[%c5_242, %c0_243] : memref<48x64xf32, #tpu.memory_space<vmem>>, vector<32x64xf32>
    %c0_244 = arith.constant 0 : index
    %c2_245 = arith.constant 2 : index
    %249 = vector.load %arg11[%c0_244, %c2_245] : memref<32x9xf32, #tpu.memory_space<vmem>>, vector<32x1xf32>
    %250 = vector.broadcast %249 : vector<32x1xf32> to vector<32x64xf32>
    %251 = arith.mulf %248, %250 : vector<32x64xf32>
    %252 = arith.truncf %251 : vector<32x64xf32> to vector<32x64xbf16>
    %c0_246 = arith.constant 0 : index
    %c128_247 = arith.constant 128 : index
    %253 = vector.load %arg15[%c0_246, %c128_247] : memref<128x576xbf16, #tpu.memory_space<vmem>>, vector<32x64xbf16>
    tpu.vector_store %arg15[%c0_246, %c128_247], %252 {strides = array<i32>} : memref<128x576xbf16, #tpu.memory_space<vmem>>, vector<32x64xbf16>,
    %c7_248 = arith.constant 7 : index
    %c0_249 = arith.constant 0 : index
    %254 = vector.load %arg19[%c7_248, %c0_249] : memref<48x64xf32, #tpu.memory_space<vmem>>, vector<32x64xf32>
    %c0_250 = arith.constant 0 : index
    %c3_251 = arith.constant 3 : index
    %255 = vector.load %arg11[%c0_250, %c3_251] : memref<32x9xf32, #tpu.memory_space<vmem>>, vector<32x1xf32>
    %256 = vector.broadcast %255 : vector<32x1xf32> to vector<32x64xf32>
    %257 = arith.mulf %254, %256 : vector<32x64xf32>
    %258 = arith.truncf %257 : vector<32x64xf32> to vector<32x64xbf16>
    %c0_252 = arith.constant 0 : index
    %c192_253 = arith.constant 192 : index
    %259 = vector.load %arg15[%c0_252, %c192_253] : memref<128x576xbf16, #tpu.memory_space<vmem>>, vector<32x64xbf16>
    tpu.vector_store %arg15[%c0_252, %c192_253], %258 {strides = array<i32>} : memref<128x576xbf16, #tpu.memory_space<vmem>>, vector<32x64xbf16>,
    %c8_254 = arith.constant 8 : index
    %c0_255 = arith.constant 0 : index
    %260 = vector.load %arg19[%c8_254, %c0_255] : memref<48x64xf32, #tpu.memory_space<vmem>>, vector<32x64xf32>
    %261 = arith.truncf %260 : vector<32x64xf32> to vector<32x64xbf16>
    %c0_256 = arith.constant 0 : index
    %c256_257 = arith.constant 256 : index
    %262 = vector.load %arg15[%c0_256, %c256_257] : memref<128x576xbf16, #tpu.memory_space<vmem>>, vector<32x64xbf16>
    tpu.vector_store %arg15[%c0_256, %c256_257], %261 {strides = array<i32>} : memref<128x576xbf16, #tpu.memory_space<vmem>>, vector<32x64xbf16>,
    %c9_258 = arith.constant 9 : index
    %c0_259 = arith.constant 0 : index
    %263 = vector.load %arg19[%c9_258, %c0_259] : memref<48x64xf32, #tpu.memory_space<vmem>>, vector<32x64xf32>
    %c0_260 = arith.constant 0 : index
    %c5_261 = arith.constant 5 : index
    %264 = vector.load %arg11[%c0_260, %c5_261] : memref<32x9xf32, #tpu.memory_space<vmem>>, vector<32x1xf32>
    %265 = vector.broadcast %264 : vector<32x1xf32> to vector<32x64xf32>
    %266 = arith.mulf %263, %265 : vector<32x64xf32>
    %267 = arith.truncf %266 : vector<32x64xf32> to vector<32x64xbf16>
    %c0_262 = arith.constant 0 : index
    %c320_263 = arith.constant 320 : index
    %268 = vector.load %arg15[%c0_262, %c320_263] : memref<128x576xbf16, #tpu.memory_space<vmem>>, vector<32x64xbf16>
    tpu.vector_store %arg15[%c0_262, %c320_263], %267 {strides = array<i32>} : memref<128x576xbf16, #tpu.memory_space<vmem>>, vector<32x64xbf16>,
    %c11 = arith.constant 11 : index
    %c0_264 = arith.constant 0 : index
    %269 = vector.load %arg19[%c11, %c0_264] : memref<48x64xf32, #tpu.memory_space<vmem>>, vector<32x64xf32>
    %c0_265 = arith.constant 0 : index
    %c6_266 = arith.constant 6 : index
    %270 = vector.load %arg11[%c0_265, %c6_266] : memref<32x9xf32, #tpu.memory_space<vmem>>, vector<32x1xf32>
    %271 = vector.broadcast %270 : vector<32x1xf32> to vector<32x64xf32>
    %272 = arith.mulf %269, %271 : vector<32x64xf32>
    %273 = arith.truncf %272 : vector<32x64xf32> to vector<32x64xbf16>
    %c0_267 = arith.constant 0 : index
    %c384_268 = arith.constant 384 : index
    %274 = vector.load %arg15[%c0_267, %c384_268] : memref<128x576xbf16, #tpu.memory_space<vmem>>, vector<32x64xbf16>
    tpu.vector_store %arg15[%c0_267, %c384_268], %273 {strides = array<i32>} : memref<128x576xbf16, #tpu.memory_space<vmem>>, vector<32x64xbf16>,
    %c12_269 = arith.constant 12 : index
    %c0_270 = arith.constant 0 : index
    %275 = vector.load %arg19[%c12_269, %c0_270] : memref<48x64xf32, #tpu.memory_space<vmem>>, vector<32x64xf32>
    %c0_271 = arith.constant 0 : index
    %c7_272 = arith.constant 7 : index
    %276 = vector.load %arg11[%c0_271, %c7_272] : memref<32x9xf32, #tpu.memory_space<vmem>>, vector<32x1xf32>
    %277 = vector.broadcast %276 : vector<32x1xf32> to vector<32x64xf32>
    %278 = arith.mulf %275, %277 : vector<32x64xf32>
    %279 = arith.truncf %278 : vector<32x64xf32> to vector<32x64xbf16>
    %c0_273 = arith.constant 0 : index
    %c448_274 = arith.constant 448 : index
    %280 = vector.load %arg15[%c0_273, %c448_274] : memref<128x576xbf16, #tpu.memory_space<vmem>>, vector<32x64xbf16>
    tpu.vector_store %arg15[%c0_273, %c448_274], %279 {strides = array<i32>} : memref<128x576xbf16, #tpu.memory_space<vmem>>, vector<32x64xbf16>,
    %c13 = arith.constant 13 : index
    %c0_275 = arith.constant 0 : index
    %281 = vector.load %arg19[%c13, %c0_275] : memref<48x64xf32, #tpu.memory_space<vmem>>, vector<32x64xf32>
    %c0_276 = arith.constant 0 : index
    %c8_277 = arith.constant 8 : index
    %282 = vector.load %arg11[%c0_276, %c8_277] : memref<32x9xf32, #tpu.memory_space<vmem>>, vector<32x1xf32>
    %283 = vector.broadcast %282 : vector<32x1xf32> to vector<32x64xf32>
    %284 = arith.mulf %281, %283 : vector<32x64xf32>
    %285 = arith.truncf %284 : vector<32x64xf32> to vector<32x64xbf16>
    %c0_278 = arith.constant 0 : index
    %c512_279 = arith.constant 512 : index
    %286 = vector.load %arg15[%c0_278, %c512_279] : memref<128x576xbf16, #tpu.memory_space<vmem>>, vector<32x64xbf16>
    tpu.vector_store %arg15[%c0_278, %c512_279], %285 {strides = array<i32>} : memref<128x576xbf16, #tpu.memory_space<vmem>>, vector<32x64xbf16>,
    %c0_280 = arith.constant 0 : index
    %c0_281 = arith.constant 0 : index
    %287 = vector.load %arg15[%c0_280, %c0_281] : memref<128x576xbf16, #tpu.memory_space<vmem>>, vector<32x576xbf16>
    %c0_282 = arith.constant 0 : index
    %c0_283 = arith.constant 0 : index
    %288 = vector.load %arg3[%c0_282, %c0_283] : memref<576x64xbf16, #tpu.memory_space<vmem>>, vector<576x64xbf16>
    %cst_284 = arith.constant dense<0.000000e+00> : vector<32x64xf32>
    %289 = tpu.matmul %287, %288, %cst_284 {dimension_numbers = #tpu.dot_dimension_numbers<[1], [0], [0], [1], [0, 0, 1, 1], [], []>} : vector<32x576xbf16>, vector<576x64xbf16>, vector<32x64xf32> -> vector<32x64xf32>
    %cst_285 = arith.constant dense<0.000000e+00> : vector<64xf32>
    %290 = vector.multi_reduction <add>, %289, %cst_285 [0] : vector<32x64xf32> to vector<64xf32>
    %291 = vector.shape_cast %290 : vector<64xf32> to vector<1x64xf32>
    %cst_286 = arith.constant 3.125000e-02 : f32
    %292 = vector.broadcast %cst_286 : f32 to vector<1x64xf32>
    %293 = arith.mulf %291, %292 : vector<1x64xf32>
    %294 = vector.broadcast %293 : vector<1x64xf32> to vector<32x64xf32>
    %295 = arith.subf %289, %294 : vector<32x64xf32>
    %296 = arith.mulf %295, %295 : vector<32x64xf32>
    %cst_287 = arith.constant dense<0.000000e+00> : vector<64xf32>
    %297 = vector.multi_reduction <add>, %296, %cst_287 [0] : vector<32x64xf32> to vector<64xf32>
    %298 = vector.shape_cast %297 : vector<64xf32> to vector<1x64xf32>
    %cst_288 = arith.constant 3.125000e-02 : f32
    %299 = vector.broadcast %cst_288 : f32 to vector<1x64xf32>
    %300 = arith.mulf %298, %299 : vector<1x64xf32>
    %c0_289 = arith.constant 0 : index
    %c0_290 = arith.constant 0 : index
    %301 = vector.load %arg7[%c0_289, %c0_290] : memref<2x64xf32, #tpu.memory_space<vmem>>, vector<1x64xf32>
    %cst_291 = arith.constant 9.99999974E-6 : f32
    %302 = vector.broadcast %cst_291 : f32 to vector<1x64xf32>
    %303 = arith.addf %300, %302 : vector<1x64xf32>
    %304 = math.rsqrt %303 : vector<1x64xf32>
    %305 = arith.mulf %301, %304 : vector<1x64xf32>
    %306 = vector.broadcast %305 : vector<1x64xf32> to vector<32x64xf32>
    %307 = arith.mulf %295, %306 : vector<32x64xf32>
    %c1_292 = arith.constant 1 : index
    %c0_293 = arith.constant 0 : index
    %308 = vector.load %arg7[%c1_292, %c0_293] : memref<2x64xf32, #tpu.memory_space<vmem>>, vector<1x64xf32>
    %309 = vector.broadcast %308 : vector<1x64xf32> to vector<32x64xf32>
    %310 = arith.addf %307, %309 : vector<32x64xf32>
    %cst_294 = arith.constant 0.000000e+00 : f32
    %311 = vector.broadcast %cst_294 : f32 to vector<32x64xf32>
    %312 = arith.maximumf %310, %311 : vector<32x64xf32>
    %c0_295 = arith.constant 0 : index
    %c0_296 = arith.constant 0 : index
    %313 = vector.load %arg16[%c0_295, %c0_296] : memref<512x64xf32, #tpu.memory_space<vmem>>, vector<32x64xf32>
    tpu.vector_store %arg16[%c0_295, %c0_296], %312 {strides = array<i32>} : memref<512x64xf32, #tpu.memory_space<vmem>>, vector<32x64xf32>,
    %c0_297 = arith.constant 0 : index
    %c0_298 = arith.constant 0 : index
    %314 = tpu.strided_load %arg16[%c0_297, %c0_298] {strides = array<i32: 2, 1>} : memref<512x64xf32, #tpu.memory_space<vmem>>, vector<16x64xf32>
    %c1_299 = arith.constant 1 : index
    %c0_300 = arith.constant 0 : index
    %315 = tpu.strided_load %arg16[%c1_299, %c0_300] {strides = array<i32: 2, 1>} : memref<512x64xf32, #tpu.memory_space<vmem>>, vector<16x64xf32>
    %316 = arith.maximumf %314, %315 : vector<16x64xf32>
    %c0_301 = arith.constant 0 : index
    %c0_302 = arith.constant 0 : index
    %317 = vector.load %arg17[%c0_301, %c0_302] : memref<256x64xf32, #tpu.memory_space<vmem>>, vector<16x64xf32>
    tpu.vector_store %arg17[%c0_301, %c0_302], %316 {strides = array<i32>} : memref<256x64xf32, #tpu.memory_space<vmem>>, vector<16x64xf32>,
    %c0_303 = arith.constant 0 : index
    %c0_304 = arith.constant 0 : index
    %318 = vector.load %arg17[%c0_303, %c0_304] : memref<256x64xf32, #tpu.memory_space<vmem>>, vector<2x64xf32>
    %c2_305 = arith.constant 2 : index
    %c0_306 = arith.constant 0 : index
    %319 = vector.load %arg17[%c2_305, %c0_306] : memref<256x64xf32, #tpu.memory_space<vmem>>, vector<2x64xf32>
    %320 = arith.maximumf %318, %319 : vector<2x64xf32>
    %c8_307 = arith.constant 8 : index
    %c0_308 = arith.constant 0 : index
    %321 = vector.load %arg20[%c8_307, %c0_308] : memref<24x64xf32, #tpu.memory_space<vmem>>, vector<2x64xf32>
    tpu.vector_store %arg20[%c8_307, %c0_308], %320 {strides = array<i32>} : memref<24x64xf32, #tpu.memory_space<vmem>>, vector<2x64xf32>,
    %c4_309 = arith.constant 4 : index
    %c0_310 = arith.constant 0 : index
    %322 = vector.load %arg17[%c4_309, %c0_310] : memref<256x64xf32, #tpu.memory_space<vmem>>, vector<2x64xf32>
    %c6_311 = arith.constant 6 : index
    %c0_312 = arith.constant 0 : index
    %323 = vector.load %arg17[%c6_311, %c0_312] : memref<256x64xf32, #tpu.memory_space<vmem>>, vector<2x64xf32>
    %324 = arith.maximumf %322, %323 : vector<2x64xf32>
    %c10 = arith.constant 10 : index
    %c0_313 = arith.constant 0 : index
    %325 = vector.load %arg20[%c10, %c0_313] : memref<24x64xf32, #tpu.memory_space<vmem>>, vector<2x64xf32>
    tpu.vector_store %arg20[%c10, %c0_313], %324 {strides = array<i32>} : memref<24x64xf32, #tpu.memory_space<vmem>>, vector<2x64xf32>,
    %c8_314 = arith.constant 8 : index
    %c0_315 = arith.constant 0 : index
    %326 = vector.load %arg17[%c8_314, %c0_315] : memref<256x64xf32, #tpu.memory_space<vmem>>, vector<2x64xf32>
    %c10_316 = arith.constant 10 : index
    %c0_317 = arith.constant 0 : index
    %327 = vector.load %arg17[%c10_316, %c0_317] : memref<256x64xf32, #tpu.memory_space<vmem>>, vector<2x64xf32>
    %328 = arith.maximumf %326, %327 : vector<2x64xf32>
    %c12_318 = arith.constant 12 : index
    %c0_319 = arith.constant 0 : index
    %329 = vector.load %arg20[%c12_318, %c0_319] : memref<24x64xf32, #tpu.memory_space<vmem>>, vector<2x64xf32>
    tpu.vector_store %arg20[%c12_318, %c0_319], %328 {strides = array<i32>} : memref<24x64xf32, #tpu.memory_space<vmem>>, vector<2x64xf32>,
    %c12_320 = arith.constant 12 : index
    %c0_321 = arith.constant 0 : index
    %330 = vector.load %arg17[%c12_320, %c0_321] : memref<256x64xf32, #tpu.memory_space<vmem>>, vector<2x64xf32>
    %c14 = arith.constant 14 : index
    %c0_322 = arith.constant 0 : index
    %331 = vector.load %arg17[%c14, %c0_322] : memref<256x64xf32, #tpu.memory_space<vmem>>, vector<2x64xf32>
    %332 = arith.maximumf %330, %331 : vector<2x64xf32>
    %c14_323 = arith.constant 14 : index
    %c0_324 = arith.constant 0 : index
    %333 = vector.load %arg20[%c14_323, %c0_324] : memref<24x64xf32, #tpu.memory_space<vmem>>, vector<2x64xf32>
    tpu.vector_store %arg20[%c14_323, %c0_324], %332 {strides = array<i32>} : memref<24x64xf32, #tpu.memory_space<vmem>>, vector<2x64xf32>,
    %c5_325 = arith.constant 5 : index
    %c0_326 = arith.constant 0 : index
    %334 = vector.load %arg20[%c5_325, %c0_326] : memref<24x64xf32, #tpu.memory_space<vmem>>, vector<8x64xf32>
    %c0_327 = arith.constant 0 : index
    %c0_328 = arith.constant 0 : index
    %335 = vector.load %arg12[%c0_327, %c0_328] : memref<8x9xf32, #tpu.memory_space<vmem>>, vector<8x1xf32>
    %336 = vector.broadcast %335 : vector<8x1xf32> to vector<8x64xf32>
    %337 = arith.mulf %334, %336 : vector<8x64xf32>
    %338 = arith.truncf %337 : vector<8x64xf32> to vector<8x64xbf16>
    %c0_329 = arith.constant 0 : index
    %c0_330 = arith.constant 0 : index
    %339 = vector.load %arg15[%c0_329, %c0_330] : memref<128x576xbf16, #tpu.memory_space<vmem>>, vector<8x64xbf16>
    tpu.vector_store %arg15[%c0_329, %c0_330], %338 {strides = array<i32>} : memref<128x576xbf16, #tpu.memory_space<vmem>>, vector<8x64xbf16>,
    %c6_331 = arith.constant 6 : index
    %c0_332 = arith.constant 0 : index
    %340 = vector.load %arg20[%c6_331, %c0_332] : memref<24x64xf32, #tpu.memory_space<vmem>>, vector<8x64xf32>
    %c0_333 = arith.constant 0 : index
    %c1_334 = arith.constant 1 : index
    %341 = vector.load %arg12[%c0_333, %c1_334] : memref<8x9xf32, #tpu.memory_space<vmem>>, vector<8x1xf32>
    %342 = vector.broadcast %341 : vector<8x1xf32> to vector<8x64xf32>
    %343 = arith.mulf %340, %342 : vector<8x64xf32>
    %344 = arith.truncf %343 : vector<8x64xf32> to vector<8x64xbf16>
    %c0_335 = arith.constant 0 : index
    %c64_336 = arith.constant 64 : index
    %345 = vector.load %arg15[%c0_335, %c64_336] : memref<128x576xbf16, #tpu.memory_space<vmem>>, vector<8x64xbf16>
    tpu.vector_store %arg15[%c0_335, %c64_336], %344 {strides = array<i32>} : memref<128x576xbf16, #tpu.memory_space<vmem>>, vector<8x64xbf16>,
    %c7_337 = arith.constant 7 : index
    %c0_338 = arith.constant 0 : index
    %346 = vector.load %arg20[%c7_337, %c0_338] : memref<24x64xf32, #tpu.memory_space<vmem>>, vector<8x64xf32>
    %c0_339 = arith.constant 0 : index
    %c2_340 = arith.constant 2 : index
    %347 = vector.load %arg12[%c0_339, %c2_340] : memref<8x9xf32, #tpu.memory_space<vmem>>, vector<8x1xf32>
    %348 = vector.broadcast %347 : vector<8x1xf32> to vector<8x64xf32>
    %349 = arith.mulf %346, %348 : vector<8x64xf32>
    %350 = arith.truncf %349 : vector<8x64xf32> to vector<8x64xbf16>
    %c0_341 = arith.constant 0 : index
    %c128_342 = arith.constant 128 : index
    %351 = vector.load %arg15[%c0_341, %c128_342] : memref<128x576xbf16, #tpu.memory_space<vmem>>, vector<8x64xbf16>
    tpu.vector_store %arg15[%c0_341, %c128_342], %350 {strides = array<i32>} : memref<128x576xbf16, #tpu.memory_space<vmem>>, vector<8x64xbf16>,
    %c7_343 = arith.constant 7 : index
    %c0_344 = arith.constant 0 : index
    %352 = vector.load %arg20[%c7_343, %c0_344] : memref<24x64xf32, #tpu.memory_space<vmem>>, vector<8x64xf32>
    %c0_345 = arith.constant 0 : index
    %c3_346 = arith.constant 3 : index
    %353 = vector.load %arg12[%c0_345, %c3_346] : memref<8x9xf32, #tpu.memory_space<vmem>>, vector<8x1xf32>
    %354 = vector.broadcast %353 : vector<8x1xf32> to vector<8x64xf32>
    %355 = arith.mulf %352, %354 : vector<8x64xf32>
    %356 = arith.truncf %355 : vector<8x64xf32> to vector<8x64xbf16>
    %c0_347 = arith.constant 0 : index
    %c192_348 = arith.constant 192 : index
    %357 = vector.load %arg15[%c0_347, %c192_348] : memref<128x576xbf16, #tpu.memory_space<vmem>>, vector<8x64xbf16>
    tpu.vector_store %arg15[%c0_347, %c192_348], %356 {strides = array<i32>} : memref<128x576xbf16, #tpu.memory_space<vmem>>, vector<8x64xbf16>,
    %c8_349 = arith.constant 8 : index
    %c0_350 = arith.constant 0 : index
    %358 = vector.load %arg20[%c8_349, %c0_350] : memref<24x64xf32, #tpu.memory_space<vmem>>, vector<8x64xf32>
    %359 = arith.truncf %358 : vector<8x64xf32> to vector<8x64xbf16>
    %c0_351 = arith.constant 0 : index
    %c256_352 = arith.constant 256 : index
    %360 = vector.load %arg15[%c0_351, %c256_352] : memref<128x576xbf16, #tpu.memory_space<vmem>>, vector<8x64xbf16>
    tpu.vector_store %arg15[%c0_351, %c256_352], %359 {strides = array<i32>} : memref<128x576xbf16, #tpu.memory_space<vmem>>, vector<8x64xbf16>,
    %c9_353 = arith.constant 9 : index
    %c0_354 = arith.constant 0 : index
    %361 = vector.load %arg20[%c9_353, %c0_354] : memref<24x64xf32, #tpu.memory_space<vmem>>, vector<8x64xf32>
    %c0_355 = arith.constant 0 : index
    %c5_356 = arith.constant 5 : index
    %362 = vector.load %arg12[%c0_355, %c5_356] : memref<8x9xf32, #tpu.memory_space<vmem>>, vector<8x1xf32>
    %363 = vector.broadcast %362 : vector<8x1xf32> to vector<8x64xf32>
    %364 = arith.mulf %361, %363 : vector<8x64xf32>
    %365 = arith.truncf %364 : vector<8x64xf32> to vector<8x64xbf16>
    %c0_357 = arith.constant 0 : index
    %c320_358 = arith.constant 320 : index
    %366 = vector.load %arg15[%c0_357, %c320_358] : memref<128x576xbf16, #tpu.memory_space<vmem>>, vector<8x64xbf16>
    tpu.vector_store %arg15[%c0_357, %c320_358], %365 {strides = array<i32>} : memref<128x576xbf16, #tpu.memory_space<vmem>>, vector<8x64xbf16>,
    %c9_359 = arith.constant 9 : index
    %c0_360 = arith.constant 0 : index
    %367 = vector.load %arg20[%c9_359, %c0_360] : memref<24x64xf32, #tpu.memory_space<vmem>>, vector<8x64xf32>
    %c0_361 = arith.constant 0 : index
    %c6_362 = arith.constant 6 : index
    %368 = vector.load %arg12[%c0_361, %c6_362] : memref<8x9xf32, #tpu.memory_space<vmem>>, vector<8x1xf32>
    %369 = vector.broadcast %368 : vector<8x1xf32> to vector<8x64xf32>
    %370 = arith.mulf %367, %369 : vector<8x64xf32>
    %371 = arith.truncf %370 : vector<8x64xf32> to vector<8x64xbf16>
    %c0_363 = arith.constant 0 : index
    %c384_364 = arith.constant 384 : index
    %372 = vector.load %arg15[%c0_363, %c384_364] : memref<128x576xbf16, #tpu.memory_space<vmem>>, vector<8x64xbf16>
    tpu.vector_store %arg15[%c0_363, %c384_364], %371 {strides = array<i32>} : memref<128x576xbf16, #tpu.memory_space<vmem>>, vector<8x64xbf16>,
    %c10_365 = arith.constant 10 : index
    %c0_366 = arith.constant 0 : index
    %373 = vector.load %arg20[%c10_365, %c0_366] : memref<24x64xf32, #tpu.memory_space<vmem>>, vector<8x64xf32>
    %c0_367 = arith.constant 0 : index
    %c7_368 = arith.constant 7 : index
    %374 = vector.load %arg12[%c0_367, %c7_368] : memref<8x9xf32, #tpu.memory_space<vmem>>, vector<8x1xf32>
    %375 = vector.broadcast %374 : vector<8x1xf32> to vector<8x64xf32>
    %376 = arith.mulf %373, %375 : vector<8x64xf32>
    %377 = arith.truncf %376 : vector<8x64xf32> to vector<8x64xbf16>
    %c0_369 = arith.constant 0 : index
    %c448_370 = arith.constant 448 : index
    %378 = vector.load %arg15[%c0_369, %c448_370] : memref<128x576xbf16, #tpu.memory_space<vmem>>, vector<8x64xbf16>
    tpu.vector_store %arg15[%c0_369, %c448_370], %377 {strides = array<i32>} : memref<128x576xbf16, #tpu.memory_space<vmem>>, vector<8x64xbf16>,
    %c11_371 = arith.constant 11 : index
    %c0_372 = arith.constant 0 : index
    %379 = vector.load %arg20[%c11_371, %c0_372] : memref<24x64xf32, #tpu.memory_space<vmem>>, vector<8x64xf32>
    %c0_373 = arith.constant 0 : index
    %c8_374 = arith.constant 8 : index
    %380 = vector.load %arg12[%c0_373, %c8_374] : memref<8x9xf32, #tpu.memory_space<vmem>>, vector<8x1xf32>
    %381 = vector.broadcast %380 : vector<8x1xf32> to vector<8x64xf32>
    %382 = arith.mulf %379, %381 : vector<8x64xf32>
    %383 = arith.truncf %382 : vector<8x64xf32> to vector<8x64xbf16>
    %c0_375 = arith.constant 0 : index
    %c512_376 = arith.constant 512 : index
    %384 = vector.load %arg15[%c0_375, %c512_376] : memref<128x576xbf16, #tpu.memory_space<vmem>>, vector<8x64xbf16>
    tpu.vector_store %arg15[%c0_375, %c512_376], %383 {strides = array<i32>} : memref<128x576xbf16, #tpu.memory_space<vmem>>, vector<8x64xbf16>,
    %c0_377 = arith.constant 0 : index
    %c0_378 = arith.constant 0 : index
    %385 = vector.load %arg15[%c0_377, %c0_378] : memref<128x576xbf16, #tpu.memory_space<vmem>>, vector<8x576xbf16>
    %c0_379 = arith.constant 0 : index
    %c0_380 = arith.constant 0 : index
    %386 = vector.load %arg4[%c0_379, %c0_380] : memref<576x64xbf16, #tpu.memory_space<vmem>>, vector<576x64xbf16>
    %cst_381 = arith.constant dense<0.000000e+00> : vector<8x64xf32>
    %387 = tpu.matmul %385, %386, %cst_381 {dimension_numbers = #tpu.dot_dimension_numbers<[1], [0], [0], [1], [0, 0, 1, 1], [], []>} : vector<8x576xbf16>, vector<576x64xbf16>, vector<8x64xf32> -> vector<8x64xf32>
    %cst_382 = arith.constant dense<0.000000e+00> : vector<64xf32>
    %388 = vector.multi_reduction <add>, %387, %cst_382 [0] : vector<8x64xf32> to vector<64xf32>
    %389 = vector.shape_cast %388 : vector<64xf32> to vector<1x64xf32>
    %cst_383 = arith.constant 1.250000e-01 : f32
    %390 = vector.broadcast %cst_383 : f32 to vector<1x64xf32>
    %391 = arith.mulf %389, %390 : vector<1x64xf32>
    %392 = vector.broadcast %391 : vector<1x64xf32> to vector<8x64xf32>
    %393 = arith.subf %387, %392 : vector<8x64xf32>
    %394 = arith.mulf %393, %393 : vector<8x64xf32>
    %cst_384 = arith.constant dense<0.000000e+00> : vector<64xf32>
    %395 = vector.multi_reduction <add>, %394, %cst_384 [0] : vector<8x64xf32> to vector<64xf32>
    %396 = vector.shape_cast %395 : vector<64xf32> to vector<1x64xf32>
    %cst_385 = arith.constant 1.250000e-01 : f32
    %397 = vector.broadcast %cst_385 : f32 to vector<1x64xf32>
    %398 = arith.mulf %396, %397 : vector<1x64xf32>
    %c0_386 = arith.constant 0 : index
    %c0_387 = arith.constant 0 : index
    %399 = vector.load %arg8[%c0_386, %c0_387] : memref<2x64xf32, #tpu.memory_space<vmem>>, vector<1x64xf32>
    %cst_388 = arith.constant 9.99999974E-6 : f32
    %400 = vector.broadcast %cst_388 : f32 to vector<1x64xf32>
    %401 = arith.addf %398, %400 : vector<1x64xf32>
    %402 = math.rsqrt %401 : vector<1x64xf32>
    %403 = arith.mulf %399, %402 : vector<1x64xf32>
    %404 = vector.broadcast %403 : vector<1x64xf32> to vector<8x64xf32>
    %405 = arith.mulf %393, %404 : vector<8x64xf32>
    %c1_389 = arith.constant 1 : index
    %c0_390 = arith.constant 0 : index
    %406 = vector.load %arg8[%c1_389, %c0_390] : memref<2x64xf32, #tpu.memory_space<vmem>>, vector<1x64xf32>
    %407 = vector.broadcast %406 : vector<1x64xf32> to vector<8x64xf32>
    %408 = arith.addf %405, %407 : vector<8x64xf32>
    %cst_391 = arith.constant 0.000000e+00 : f32
    %409 = vector.broadcast %cst_391 : f32 to vector<8x64xf32>
    %410 = arith.maximumf %408, %409 : vector<8x64xf32>
    %c0_392 = arith.constant 0 : index
    %c0_393 = arith.constant 0 : index
    %411 = vector.load %arg16[%c0_392, %c0_393] : memref<512x64xf32, #tpu.memory_space<vmem>>, vector<8x64xf32>
    tpu.vector_store %arg16[%c0_392, %c0_393], %410 {strides = array<i32>} : memref<512x64xf32, #tpu.memory_space<vmem>>, vector<8x64xf32>,
    %c0_394 = arith.constant 0 : index
    %c0_395 = arith.constant 0 : index
    %412 = tpu.strided_load %arg16[%c0_394, %c0_395] {strides = array<i32: 2, 1>} : memref<512x64xf32, #tpu.memory_space<vmem>>, vector<4x64xf32>
    %c1_396 = arith.constant 1 : index
    %c0_397 = arith.constant 0 : index
    %413 = tpu.strided_load %arg16[%c1_396, %c0_397] {strides = array<i32: 2, 1>} : memref<512x64xf32, #tpu.memory_space<vmem>>, vector<4x64xf32>
    %414 = arith.maximumf %412, %413 : vector<4x64xf32>
    %c0_398 = arith.constant 0 : index
    %c0_399 = arith.constant 0 : index
    %415 = vector.load %arg17[%c0_398, %c0_399] : memref<256x64xf32, #tpu.memory_space<vmem>>, vector<4x64xf32>
    tpu.vector_store %arg17[%c0_398, %c0_399], %414 {strides = array<i32>} : memref<256x64xf32, #tpu.memory_space<vmem>>, vector<4x64xf32>,
    %c0_400 = arith.constant 0 : index
    %c0_401 = arith.constant 0 : index
    %416 = vector.load %arg17[%c0_400, %c0_401] : memref<256x64xf32, #tpu.memory_space<vmem>>, vector<1x64xf32>
    %c1_402 = arith.constant 1 : index
    %c0_403 = arith.constant 0 : index
    %417 = vector.load %arg17[%c1_402, %c0_403] : memref<256x64xf32, #tpu.memory_space<vmem>>, vector<1x64xf32>
    %418 = arith.maximumf %416, %417 : vector<1x64xf32>
    %c0_404 = arith.constant 0 : index
    %c0_405 = arith.constant 0 : index
    %419 = vector.load %arg13[%c0_404, %c0_405] : memref<2x64xf32, #tpu.memory_space<vmem>>, vector<1x64xf32>
    tpu.vector_store %arg13[%c0_404, %c0_405], %418 {strides = array<i32>} : memref<2x64xf32, #tpu.memory_space<vmem>>, vector<1x64xf32>,
    %c2_406 = arith.constant 2 : index
    %c0_407 = arith.constant 0 : index
    %420 = vector.load %arg17[%c2_406, %c0_407] : memref<256x64xf32, #tpu.memory_space<vmem>>, vector<1x64xf32>
    %c3_408 = arith.constant 3 : index
    %c0_409 = arith.constant 0 : index
    %421 = vector.load %arg17[%c3_408, %c0_409] : memref<256x64xf32, #tpu.memory_space<vmem>>, vector<1x64xf32>
    %422 = arith.maximumf %420, %421 : vector<1x64xf32>
    %c1_410 = arith.constant 1 : index
    %c0_411 = arith.constant 0 : index
    %423 = vector.load %arg13[%c1_410, %c0_411] : memref<2x64xf32, #tpu.memory_space<vmem>>, vector<1x64xf32>
    tpu.vector_store %arg13[%c1_410, %c0_411], %422 {strides = array<i32>} : memref<2x64xf32, #tpu.memory_space<vmem>>, vector<1x64xf32>,
    return
  }
}

</mosaic_0001>

<llo_original>
// kernel: protonet_forward.1
$region0: #{protonet_forward.1}
  #allocation0 [shape = 'u32[]', space=smem, size = 0x4, offset = 0x4, fixed_abs, tag = 'smem constant byte address 0x4 - core index']
  #allocation1 [shape = 'u32[144,128]{1,0:T(1,128)}', space=vmem, size = 0x12000, scoped, tag = 'internal scratch']
  #allocation2 [shape = 'f32[512,9]{1,0:T(8,128)}', space=vmem, size = 0x40000, scoped, tag = 'scratch operand']
  #allocation3 [shape = 'bf16[128,576]{1,0:T(16,128)(2,1)}', space=vmem, size = 0x28000, scoped, tag = 'scratch operand']
  #allocation4 [shape = 'f32[512,64]{1,0:T(8,128)}', space=vmem, size = 0x40000, scoped, tag = 'scratch operand']
  #allocation5 [shape = 'f32[256,64]{1,0:T(8,128)}', space=vmem, size = 0x20000, scoped, tag = 'scratch operand']
  #allocation6 [shape = 'f32[160,64]{1,0:T(8,128)}', space=vmem, size = 0x14000, scoped, tag = 'scratch operand']
  #allocation7 [shape = 'f32[48,64]{1,0:T(8,128)}', space=vmem, size = 0x6000, scoped, tag = 'scratch operand']
  #allocation8 [shape = 'f32[24,64]{1,0:T(8,128)}', space=vmem, size = 0x3000, scoped, tag = 'scratch operand']
  %s0 = inlined_call_operand.hbm [shape: f32[560,1], index: 0, kind: input, shape index: {}]
  %s1 = inlined_call_operand.hbm [shape: bf16[9,64], index: 1, kind: input, shape index: {}]
  %s2 = inlined_call_operand.hbm [shape: bf16[576,64], index: 2, kind: input, shape index: {}]
  %s3 = inlined_call_operand.hbm [shape: bf16[576,64], index: 3, kind: input, shape index: {}]
  %s4 = inlined_call_operand.hbm [shape: bf16[576,64], index: 4, kind: input, shape index: {}]
  %s5 = inlined_call_operand.hbm [shape: f32[2,64], index: 5, kind: input, shape index: {}]
  %s6 = inlined_call_operand.hbm [shape: f32[2,64], index: 6, kind: input, shape index: {}]
  %s7 = inlined_call_operand.hbm [shape: f32[2,64], index: 7, kind: input, shape index: {}]
  %s8 = inlined_call_operand.hbm [shape: f32[2,64], index: 8, kind: input, shape index: {}]
  %s9 = inlined_call_operand.hbm [shape: f32[512,9], index: 9, kind: input, shape index: {}]
  %s10 = inlined_call_operand.hbm [shape: f32[128,9], index: 10, kind: input, shape index: {}]
  %s11 = inlined_call_operand.hbm [shape: f32[32,9], index: 11, kind: input, shape index: {}]
  %s12 = inlined_call_operand.hbm [shape: f32[8,9], index: 12, kind: input, shape index: {}]
  %s13 = inlined_call_operand.hbm [shape: f32[2,64], index: 13, kind: output, shape index: {}]
  %s14 = sld [smem:[#allocation0]]
  $region114: #{protonet_forward.1} parent=0
    _
  %s16 = ssub.s32 1, %s14
  %s17 = scalar_select 0, %s16, %s14
  $region1: #{protonet_forward.1} parent=0
    #allocation9 [shape = 'u8[286720]{0}', space=vmem, size = 0x46000, scoped, tag = 'input window, operand 0, single buffered']
    #allocation10 [shape = 's32[1]{0}', space=sflag, size = 0x4, scoped, tag = 'scoped memory for protonet_forward.1']
    #allocation11 [shape = 's32[1]{0}', space=sflag, size = 0x4, scoped, tag = 'scoped memory for protonet_forward.1']
    #allocation12 [shape = 'u8[4096]{0}', space=vmem, size = 0x1000, scoped, tag = 'input window, operand 1, single buffered']
    #allocation13 [shape = 's32[1]{0}', space=sflag, size = 0x4, scoped, tag = 'scoped memory for protonet_forward.1']
    #allocation14 [shape = 'u8[147456]{0}', space=vmem, size = 0x24000, scoped, tag = 'input window, operand 2, single buffered']
    #allocation15 [shape = 'u8[147456]{0}', space=vmem, size = 0x24000, scoped, tag = 'input window, operand 3, single buffered']
    #allocation16 [shape = 's32[1]{0}', space=sflag, size = 0x4, scoped, tag = 'scoped memory for protonet_forward.1']
    #allocation17 [shape = 'u8[147456]{0}', space=vmem, size = 0x24000, scoped, tag = 'input window, operand 4, single buffered']
    #allocation18 [shape = 'u8[1024]{0}', space=vmem, size = 0x400, scoped, tag = 'input window, operand 5, single buffered']
    #allocation19 [shape = 's32[1]{0}', space=sflag, size = 0x4, scoped, tag = 'scoped memory for protonet_forward.1']
    #allocation20 [shape = 'u8[1024]{0}', space=vmem, size = 0x400, scoped, tag = 'input window, operand 6, single buffered']
    #allocation21 [shape = 'u8[1024]{0}', space=vmem, size = 0x400, scoped, tag = 'input window, operand 7, single buffered']
    #allocation22 [shape = 's32[1]{0}', space=sflag, size = 0x4, scoped, tag = 'scoped memory for protonet_forward.1']
    #allocation23 [shape = 'u8[1024]{0}', space=vmem, size = 0x400, scoped, tag = 'input window, operand 8, single buffered']
    #allocation24 [shape = 'u8[262144]{0}', space=vmem, size = 0x40000, scoped, tag = 'input window, operand 9, single buffered']
    #allocation25 [shape = 's32[1]{0}', space=sflag, size = 0x4, scoped, tag = 'scoped memory for protonet_forward.1']
    #allocation26 [shape = 'u8[65536]{0}', space=vmem, size = 0x10000, scoped, tag = 'input window, operand 10, single buffered']
    #allocation27 [shape = 'u8[16384]{0}', space=vmem, size = 0x4000, scoped, tag = 'input window, operand 11, single buffered']
    #allocation28 [shape = 's32[1]{0}', space=sflag, size = 0x4, scoped, tag = 'scoped memory for protonet_forward.1']
    #allocation29 [shape = 'u8[4096]{0}', space=vmem, size = 0x1000, scoped, tag = 'input window, operand 12, single buffered']
    #allocation30 [shape = 'u8[1024]{0}', space=vmem, size = 0x400, scoped, tag = 'output window, operand 0, single buffered']
    %18 = vsyncpa [#allocation10], 0
    %19 = vsyncpa [#allocation13], 0
    %20 = vsyncpa [#allocation16], 0
    %21 = vsyncpa [#allocation19], 0
    %22 = vsyncpa [#allocation22], 0
    %23 = vsyncpa [#allocation25], 0
    %24 = vsyncpa [#allocation28], 0
    %25 = vsyncpa [#allocation11], 0
    // Predicated region
    $region2: #{protonet_forward.1} parent=1 // pred_check
      _
    $region3: #{protonet_forward.1} parent=1 // pred_check_branch
      %27 = sbr.rel (0) target = $region5
    $region4: #{protonet_forward.1} parent=1 // pred_region
      %s29 = ssub.s32 8960, 8960
      %30 = vsyncadd [#allocation10], %s29
      %s31 = sshll.u32 [#allocation9], 4
      %s32 = int_to_ptr.vmem [resolvable:$true] %s31
      %37 = dma.hbm_to_vmem [thread:$0]  %s0, 8960, %s32, [#allocation10], 128, 128, 8
    $region5: #{protonet_forward.1} parent=1 // pred_fallthru
      _
    // Predicated region
    $region6: #{protonet_forward.1} parent=1 // pred_check
      _
    $region7: #{protonet_forward.1} parent=1 // pred_check_branch
      %39 = sbr.rel (0) target = $region9
    $region8: #{protonet_forward.1} parent=1 // pred_region
      %s41 = ssub.s32 128, 128
      %42 = vsyncadd [#allocation13], %s41
      %s43 = sshll.u32 [#allocation12], 4
      %s44 = int_to_ptr.vmem [resolvable:$true] %s43
      %49 = dma.hbm_to_vmem [thread:$0]  %s1, 128, %s44, [#allocation13], 64, 64, 4
    $region9: #{protonet_forward.1} parent=1 // pred_fallthru
      _
    // Predicated region
    $region10: #{protonet_forward.1} parent=1 // pred_check
      _
    $region11: #{protonet_forward.1} parent=1 // pred_check_branch
      %51 = sbr.rel (0) target = $region13
    $region12: #{protonet_forward.1} parent=1 // pred_region
      %s53 = ssub.s32 4608, 4608
      %54 = vsyncadd [#allocation13], %s53
      %s55 = sshll.u32 [#allocation14], 4
      %s56 = int_to_ptr.vmem [resolvable:$true] %s55
      %61 = dma.hbm_to_vmem [thread:$0]  %s2, 4608, %s56, [#allocation13], 64, 64, 4
    $region13: #{protonet_forward.1} parent=1 // pred_fallthru
      _
    // Predicated region
    $region14: #{protonet_forward.1} parent=1 // pred_check
      _
    $region15: #{protonet_forward.1} parent=1 // pred_check_branch
      %63 = sbr.rel (0) target = $region17
    $region16: #{protonet_forward.1} parent=1 // pred_region
      %s65 = ssub.s32 4608, 4608
      %66 = vsyncadd [#allocation16], %s65
      %s67 = sshll.u32 [#allocation15], 4
      %s68 = int_to_ptr.vmem [resolvable:$true] %s67
      %73 = dma.hbm_to_vmem [thread:$0]  %s3, 4608, %s68, [#allocation16], 64, 64, 4
    $region17: #{protonet_forward.1} parent=1 // pred_fallthru
      _
    // Predicated region
    $region18: #{protonet_forward.1} parent=1 // pred_check
      _
    $region19: #{protonet_forward.1} parent=1 // pred_check_branch
      %75 = sbr.rel (0) target = $region21
    $region20: #{protonet_forward.1} parent=1 // pred_region
      %s77 = ssub.s32 4608, 4608
      %78 = vsyncadd [#allocation16], %s77
      %s79 = sshll.u32 [#allocation17], 4
      %s80 = int_to_ptr.vmem [resolvable:$true] %s79
      %85 = dma.hbm_to_vmem [thread:$0]  %s4, 4608, %s80, [#allocation16], 64, 64, 4
    $region21: #{protonet_forward.1} parent=1 // pred_fallthru
      _
    // Predicated region
    $region22: #{protonet_forward.1} parent=1 // pred_check
      _
    $region23: #{protonet_forward.1} parent=1 // pred_check_branch
      %87 = sbr.rel (0) target = $region25
    $region24: #{protonet_forward.1} parent=1 // pred_region
      %s89 = ssub.s32 32, 32
      %90 = vsyncadd [#allocation19], %s89
      %s92 = sshll.u32 [#allocation18], 4
      %s93 = int_to_ptr.vmem [resolvable:$true] %s92
      %95 = dma.hbm_to_vmem [thread:$0]  %s5, 32, %s93, [#allocation19]
    $region25: #{protonet_forward.1} parent=1 // pred_fallthru
      _
    // Predicated region
    $region26: #{protonet_forward.1} parent=1 // pred_check
      _
    $region27: #{protonet_forward.1} parent=1 // pred_check_branch
      %97 = sbr.rel (0) target = $region29
    $region28: #{protonet_forward.1} parent=1 // pred_region
      %s99 = ssub.s32 32, 32
      %100 = vsyncadd [#allocation19], %s99
      %s102 = sshll.u32 [#allocation20], 4
      %s103 = int_to_ptr.vmem [resolvable:$true] %s102
      %105 = dma.hbm_to_vmem [thread:$0]  %s6, 32, %s103, [#allocation19]
    $region29: #{protonet_forward.1} parent=1 // pred_fallthru
      _
    // Predicated region
    $region30: #{protonet_forward.1} parent=1 // pred_check
      _
    $region31: #{protonet_forward.1} parent=1 // pred_check_branch
      %107 = sbr.rel (0) target = $region33
    $region32: #{protonet_forward.1} parent=1 // pred_region
      %s109 = ssub.s32 32, 32
      %110 = vsyncadd [#allocation22], %s109
      %s112 = sshll.u32 [#allocation21], 4
      %s113 = int_to_ptr.vmem [resolvable:$true] %s112
      %115 = dma.hbm_to_vmem [thread:$0]  %s7, 32, %s113, [#allocation22]
    $region33: #{protonet_forward.1} parent=1 // pred_fallthru
      _
    // Predicated region
    $region34: #{protonet_forward.1} parent=1 // pred_check
      _
    $region35: #{protonet_forward.1} parent=1 // pred_check_branch
      %117 = sbr.rel (0) target = $region37
    $region36: #{protonet_forward.1} parent=1 // pred_region
      %s119 = ssub.s32 32, 32
      %120 = vsyncadd [#allocation22], %s119
      %s122 = sshll.u32 [#allocation23], 4
      %s123 = int_to_ptr.vmem [resolvable:$true] %s122
      %125 = dma.hbm_to_vmem [thread:$0]  %s8, 32, %s123, [#allocation22]
    $region37: #{protonet_forward.1} parent=1 // pred_fallthru
      _
    // Predicated region
    $region38: #{protonet_forward.1} parent=1 // pred_check
      _
    $region39: #{protonet_forward.1} parent=1 // pred_check_branch
      %127 = sbr.rel (0) target = $region41
    $region40: #{protonet_forward.1} parent=1 // pred_region
      %s129 = ssub.s32 8192, 8192
      %130 = vsyncadd [#allocation25], %s129
      %s131 = sshll.u32 [#allocation24], 4
      %s132 = int_to_ptr.vmem [resolvable:$true] %s131
      %137 = dma.hbm_to_vmem [thread:$0]  %s9, 8192, %s132, [#allocation25], 128, 128, 8
    $region41: #{protonet_forward.1} parent=1 // pred_fallthru
      _
    // Predicated region
    $region42: #{protonet_forward.1} parent=1 // pred_check
      _
    $region43: #{protonet_forward.1} parent=1 // pred_check_branch
      %139 = sbr.rel (0) target = $region45
    $region44: #{protonet_forward.1} parent=1 // pred_region
      %s141 = ssub.s32 2048, 2048
      %142 = vsyncadd [#allocation25], %s141
      %s143 = sshll.u32 [#allocation26], 4
      %s144 = int_to_ptr.vmem [resolvable:$true] %s143
      %149 = dma.hbm_to_vmem [thread:$0]  %s10, 2048, %s144, [#allocation25], 128, 128, 8
    $region45: #{protonet_forward.1} parent=1 // pred_fallthru
      _
    // Predicated region
    $region46: #{protonet_forward.1} parent=1 // pred_check
      _
    $region47: #{protonet_forward.1} parent=1 // pred_check_branch
      %151 = sbr.rel (0) target = $region49
    $region48: #{protonet_forward.1} parent=1 // pred_region
      %s153 = ssub.s32 512, 512
      %154 = vsyncadd [#allocation28], %s153
      %s155 = sshll.u32 [#allocation27], 4
      %s156 = int_to_ptr.vmem [resolvable:$true] %s155
      %161 = dma.hbm_to_vmem [thread:$0]  %s11, 512, %s156, [#allocation28], 128, 128, 8
    $region49: #{protonet_forward.1} parent=1 // pred_fallthru
      _
    // Predicated region
    $region50: #{protonet_forward.1} parent=1 // pred_check
      _
    $region51: #{protonet_forward.1} parent=1 // pred_check_branch
      %163 = sbr.rel (0) target = $region53
    $region52: #{protonet_forward.1} parent=1 // pred_region
      %s165 = ssub.s32 128, 128
      %166 = vsyncadd [#allocation28], %s165
      %s168 = sshll.u32 [#allocation29], 4
      %s169 = int_to_ptr.vmem [resolvable:$true] %s168
      %171 = dma.hbm_to_vmem [thread:$0]  %s12, 128, %s169, [#allocation28]
    $region53: #{protonet_forward.1} parent=1 // pred_fallthru
      _
    // Predicated region
    $region54: #{protonet_forward.1} parent=1 // pred_check
      _
    $region55: #{protonet_forward.1} parent=1 // pred_check_branch
      %173 = sbr.rel (0) target = $region57
    $region56: #{protonet_forward.1} parent=1 // pred_region
      %174 = dma.done [#allocation10], 8960
    $region57: #{protonet_forward.1} parent=1 // pred_fallthru
      _
    // Predicated region
    $region58: #{protonet_forward.1} parent=1 // pred_check
      _
    $region59: #{protonet_forward.1} parent=1 // pred_check_branch
      %176 = sbr.rel (0) target = $region61
    $region60: #{protonet_forward.1} parent=1 // pred_region
      %177 = dma.done [#allocation13], 128
    $region61: #{protonet_forward.1} parent=1 // pred_fallthru
      _
    // Predicated region
    $region62: #{protonet_forward.1} parent=1 // pred_check
      _
    $region63: #{protonet_forward.1} parent=1 // pred_check_branch
      %179 = sbr.rel (0) target = $region65
    $region64: #{protonet_forward.1} parent=1 // pred_region
      %180 = dma.done [#allocation13], 4608
    $region65: #{protonet_forward.1} parent=1 // pred_fallthru
      _
    // Predicated region
    $region66: #{protonet_forward.1} parent=1 // pred_check
      _
    $region67: #{protonet_forward.1} parent=1 // pred_check_branch
      %182 = sbr.rel (0) target = $region69
    $region68: #{protonet_forward.1} parent=1 // pred_region
      %183 = dma.done [#allocation16], 4608
    $region69: #{protonet_forward.1} parent=1 // pred_fallthru
      _
    // Predicated region
    $region70: #{protonet_forward.1} parent=1 // pred_check
      _
    $region71: #{protonet_forward.1} parent=1 // pred_check_branch
      %185 = sbr.rel (0) target = $region73
    $region72: #{protonet_forward.1} parent=1 // pred_region
      %186 = dma.done [#allocation16], 4608
    $region73: #{protonet_forward.1} parent=1 // pred_fallthru
      _
    // Predicated region
    $region74: #{protonet_forward.1} parent=1 // pred_check
      _
    $region75: #{protonet_forward.1} parent=1 // pred_check_branch
      %188 = sbr.rel (0) target = $region77
    $region76: #{protonet_forward.1} parent=1 // pred_region
      %189 = dma.done [#allocation19], 32
    $region77: #{protonet_forward.1} parent=1 // pred_fallthru
      _
    // Predicated region
    $region78: #{protonet_forward.1} parent=1 // pred_check
      _
    $region79: #{protonet_forward.1} parent=1 // pred_check_branch
      %191 = sbr.rel (0) target = $region81
    $region80: #{protonet_forward.1} parent=1 // pred_region
      %192 = dma.done [#allocation19], 32
    $region81: #{protonet_forward.1} parent=1 // pred_fallthru
      _
    // Predicated region
    $region82: #{protonet_forward.1} parent=1 // pred_check
      _
    $region83: #{protonet_forward.1} parent=1 // pred_check_branch
      %194 = sbr.rel (0) target = $region85
    $region84: #{protonet_forward.1} parent=1 // pred_region
      %195 = dma.done [#allocation22], 32
    $region85: #{protonet_forward.1} parent=1 // pred_fallthru
      _
    // Predicated region
    $region86: #{protonet_forward.1} parent=1 // pred_check
      _
    $region87: #{protonet_forward.1} parent=1 // pred_check_branch
      %197 = sbr.rel (0) target = $region89
    $region88: #{protonet_forward.1} parent=1 // pred_region
      %198 = dma.done [#allocation22], 32
    $region89: #{protonet_forward.1} parent=1 // pred_fallthru
      _
    // Predicated region
    $region90: #{protonet_forward.1} parent=1 // pred_check
      _
    $region91: #{protonet_forward.1} parent=1 // pred_check_branch
      %200 = sbr.rel (0) target = $region93
    $region92: #{protonet_forward.1} parent=1 // pred_region
      %201 = dma.done [#allocation25], 8192
    $region93: #{protonet_forward.1} parent=1 // pred_fallthru
      _
    // Predicated region
    $region94: #{protonet_forward.1} parent=1 // pred_check
      _
    $region95: #{protonet_forward.1} parent=1 // pred_check_branch
      %203 = sbr.rel (0) target = $region97
    $region96: #{protonet_forward.1} parent=1 // pred_region
      %204 = dma.done [#allocation25], 2048
    $region97: #{protonet_forward.1} parent=1 // pred_fallthru
      _
    // Predicated region
    $region98: #{protonet_forward.1} parent=1 // pred_check
      _
    $region99: #{protonet_forward.1} parent=1 // pred_check_branch
      %206 = sbr.rel (0) target = $region101
    $region100: #{protonet_forward.1} parent=1 // pred_region
      %207 = dma.done [#allocation28], 512
    $region101: #{protonet_forward.1} parent=1 // pred_fallthru
      _
    // Predicated region
    $region102: #{protonet_forward.1} parent=1 // pred_check
      _
    $region103: #{protonet_forward.1} parent=1 // pred_check_branch
      %209 = sbr.rel (0) target = $region105
    $region104: #{protonet_forward.1} parent=1 // pred_region
      %210 = dma.done [#allocation28], 128
    $region105: #{protonet_forward.1} parent=1 // pred_fallthru
      _
    %vm212 = vcmask 523264
    %213 = vst.msk [vmem:[#allocation6] sm:$0xff] %vm212, 0.0
    %214 = vst.msk [vmem:[#allocation6 + $0x8] sm:$0xff] %vm212, 0.0
    %215 = vst.msk [vmem:[#allocation6 + $0x10] sm:$0xff] %vm212, 0.0
    %216 = vst.msk [vmem:[#allocation6 + $0x18] sm:$0xff] %vm212, 0.0
    %217 = vst.msk [vmem:[#allocation6 + $0x20] sm:$0xff] %vm212, 0.0
    %218 = vst.msk [vmem:[#allocation6 + $0x28] sm:$0xff] %vm212, 0.0
    %219 = vst.msk [vmem:[#allocation6 + $0x30] sm:$0xff] %vm212, 0.0
    %220 = vst.msk [vmem:[#allocation6 + $0x38] sm:$0xff] %vm212, 0.0
    %221 = vst.msk [vmem:[#allocation6 + $0x40] sm:$0xff] %vm212, 0.0
    %222 = vst.msk [vmem:[#allocation6 + $0x48] sm:$0xff] %vm212, 0.0
    %223 = vst.msk [vmem:[#allocation6 + $0x50] sm:$0xff] %vm212, 0.0
    %224 = vst.msk [vmem:[#allocation6 + $0x58] sm:$0xff] %vm212, 0.0
    %225 = vst.msk [vmem:[#allocation6 + $0x60] sm:$0xff] %vm212, 0.0
    %226 = vst.msk [vmem:[#allocation6 + $0x68] sm:$0xff] %vm212, 0.0
    %227 = vst.msk [vmem:[#allocation6 + $0x70] sm:$0xff] %vm212, 0.0
    %228 = vst.msk [vmem:[#allocation6 + $0x78] sm:$0xff] %vm212, 0.0
    %229 = vst.msk [vmem:[#allocation6 + $0x80] sm:$0xff] %vm212, 0.0
    %230 = vst.msk [vmem:[#allocation6 + $0x88] sm:$0xff] %vm212, 0.0
    %231 = vst.msk [vmem:[#allocation6 + $0x90] sm:$0xff] %vm212, 0.0
    %232 = vst.msk [vmem:[#allocation6 + $0x98] sm:$0xff] %vm212, 0.0
    %233 = vst.msk [vmem:[#allocation7] sm:$0xff] %vm212, 0.0
    %234 = vst.msk [vmem:[#allocation7 + $0x8] sm:$0xff] %vm212, 0.0
    %235 = vst.msk [vmem:[#allocation7 + $0x10] sm:$0xff] %vm212, 0.0
    %236 = vst.msk [vmem:[#allocation7 + $0x18] sm:$0xff] %vm212, 0.0
    %237 = vst.msk [vmem:[#allocation7 + $0x20] sm:$0xff] %vm212, 0.0
    %238 = vst.msk [vmem:[#allocation7 + $0x28] sm:$0xff] %vm212, 0.0
    %239 = vst.msk [vmem:[#allocation8] sm:$0xff] %vm212, 0.0
    %240 = vst.msk [vmem:[#allocation8 + $0x8] sm:$0xff] %vm212, 0.0
    %241 = vst.msk [vmem:[#allocation8 + $0x10] sm:$0xff] %vm212, 0.0
    %v242 = vld [vmem:[#allocation9 + $0x7] sm:$0xff]
    %v243 = vld [vmem:[#allocation9 + $0xf] sm:$0xff]
    %v244 = vld [vmem:[#allocation9 + $0x17] sm:$0xff]
    %v245 = vld [vmem:[#allocation9 + $0x1f] sm:$0xff]
    %v246 = vld [vmem:[#allocation9 + $0x27] sm:$0xff]
    %v247 = vld [vmem:[#allocation9 + $0x2f] sm:$0xff]
    %v248 = vld [vmem:[#allocation9 + $0x37] sm:$0xff]
    %v249 = vld [vmem:[#allocation9 + $0x3f] sm:$0xff]
    %v250 = vld [vmem:[#allocation9 + $0x47] sm:$0xff]
    %v251 = vld [vmem:[#allocation9 + $0x4f] sm:$0xff]
    %v252 = vld [vmem:[#allocation9 + $0x57] sm:$0xff]
    %v253 = vld [vmem:[#allocation9 + $0x5f] sm:$0xff]
    %v254 = vld [vmem:[#allocation9 + $0x67] sm:$0xff]
    %v255 = vld [vmem:[#allocation9 + $0x6f] sm:$0xff]
    %v256 = vld [vmem:[#allocation9 + $0x77] sm:$0xff]
    %v257 = vld [vmem:[#allocation9 + $0x7f] sm:$0xff]
    %v258 = vld [vmem:[#allocation9 + $0x87] sm:$0xff]
    %v259 = vld [vmem:[#allocation9 + $0x8f] sm:$0xff]
    %v260 = vld [vmem:[#allocation9 + $0x97] sm:$0xff]
    %v261 = vld [vmem:[#allocation9 + $0x9f] sm:$0xff]
    %v262 = vld [vmem:[#allocation9 + $0xa7] sm:$0xff]
    %v263 = vld [vmem:[#allocation9 + $0xaf] sm:$0xff]
    %v264 = vld [vmem:[#allocation9 + $0xb7] sm:$0xff]
    %v265 = vld [vmem:[#allocation9 + $0xbf] sm:$0xff]
    %v266 = vld [vmem:[#allocation9 + $0xc7] sm:$0xff]
    %v267 = vld [vmem:[#allocation9 + $0xcf] sm:$0xff]
    %v268 = vld [vmem:[#allocation9 + $0xd7] sm:$0xff]
    %v269 = vld [vmem:[#allocation9 + $0xdf] sm:$0xff]
    %v270 = vld [vmem:[#allocation9 + $0xe7] sm:$0xff]
    %v271 = vld [vmem:[#allocation9 + $0xef] sm:$0xff]
    %v272 = vld [vmem:[#allocation9 + $0xf7] sm:$0xff]
    %v273 = vld [vmem:[#allocation9 + $0xff] sm:$0xff]
    %v274 = vld [vmem:[#allocation9 + $0x107] sm:$0xff]
    %v275 = vld [vmem:[#allocation9 + $0x10f] sm:$0xff]
    %v276 = vld [vmem:[#allocation9 + $0x117] sm:$0xff]
    %v277 = vld [vmem:[#allocation9 + $0x11f] sm:$0xff]
    %v278 = vld [vmem:[#allocation9 + $0x127] sm:$0xff]
    %v279 = vld [vmem:[#allocation9 + $0x12f] sm:$0xff]
    %v280 = vld [vmem:[#allocation9 + $0x137] sm:$0xff]
    %v281 = vld [vmem:[#allocation9 + $0x13f] sm:$0xff]
    %v282 = vld [vmem:[#allocation9 + $0x147] sm:$0xff]
    %v283 = vld [vmem:[#allocation9 + $0x14f] sm:$0xff]
    %v284 = vld [vmem:[#allocation9 + $0x157] sm:$0xff]
    %v285 = vld [vmem:[#allocation9 + $0x15f] sm:$0xff]
    %v286 = vld [vmem:[#allocation9 + $0x167] sm:$0xff]
    %v287 = vld [vmem:[#allocation9 + $0x16f] sm:$0xff]
    %v288 = vld [vmem:[#allocation9 + $0x177] sm:$0xff]
    %v289 = vld [vmem:[#allocation9 + $0x17f] sm:$0xff]
    %v290 = vld [vmem:[#allocation9 + $0x187] sm:$0xff]
    %v291 = vld [vmem:[#allocation9 + $0x18f] sm:$0xff]
    %v292 = vld [vmem:[#allocation9 + $0x197] sm:$0xff]
    %v293 = vld [vmem:[#allocation9 + $0x19f] sm:$0xff]
    %v294 = vld [vmem:[#allocation9 + $0x1a7] sm:$0xff]
    %v295 = vld [vmem:[#allocation9 + $0x1af] sm:$0xff]
    %v296 = vld [vmem:[#allocation9 + $0x1b7] sm:$0xff]
    %v297 = vld [vmem:[#allocation9 + $0x1bf] sm:$0xff]
    %v298 = vld [vmem:[#allocation9 + $0x1c7] sm:$0xff]
    %v299 = vld [vmem:[#allocation9 + $0x1cf] sm:$0xff]
    %v300 = vld [vmem:[#allocation9 + $0x1d7] sm:$0xff]
    %v301 = vld [vmem:[#allocation9 + $0x1df] sm:$0xff]
    %v302 = vld [vmem:[#allocation9 + $0x1e7] sm:$0xff]
    %v303 = vld [vmem:[#allocation9 + $0x1ef] sm:$0xff]
    %v304 = vld [vmem:[#allocation9 + $0x1f7] sm:$0xff]
    %v305 = vld [vmem:[#allocation9 + $0x1ff] sm:$0xff]
    %vm306 = vcmask 7168
    %307 = vst.msk [vmem:[#allocation2] sm:$0xff] %vm306, %v242
    %308 = vst.msk [vmem:[#allocation2 + $0x8] sm:$0xff] %vm306, %v243
    %309 = vst.msk [vmem:[#allocation2 + $0x10] sm:$0xff] %vm306, %v244
    %310 = vst.msk [vmem:[#allocation2 + $0x18] sm:$0xff] %vm306, %v245
    %311 = vst.msk [vmem:[#allocation2 + $0x20] sm:$0xff] %vm306, %v246
    %312 = vst.msk [vmem:[#allocation2 + $0x28] sm:$0xff] %vm306, %v247
    %313 = vst.msk [vmem:[#allocation2 + $0x30] sm:$0xff] %vm306, %v248
    %314 = vst.msk [vmem:[#allocation2 + $0x38] sm:$0xff] %vm306, %v249
    %315 = vst.msk [vmem:[#allocation2 + $0x40] sm:$0xff] %vm306, %v250
    %316 = vst.msk [vmem:[#allocation2 + $0x48] sm:$0xff] %vm306, %v251
    %317 = vst.msk [vmem:[#allocation2 + $0x50] sm:$0xff] %vm306, %v252
    %318 = vst.msk [vmem:[#allocation2 + $0x58] sm:$0xff] %vm306, %v253
    %319 = vst.msk [vmem:[#allocation2 + $0x60] sm:$0xff] %vm306, %v254
    %320 = vst.msk [vmem:[#allocation2 + $0x68] sm:$0xff] %vm306, %v255
    %321 = vst.msk [vmem:[#allocation2 + $0x70] sm:$0xff] %vm306, %v256
    %322 = vst.msk [vmem:[#allocation2 + $0x78] sm:$0xff] %vm306, %v257
    %323 = vst.msk [vmem:[#allocation2 + $0x80] sm:$0xff] %vm306, %v258
    %324 = vst.msk [vmem:[#allocation2 + $0x88] sm:$0xff] %vm306, %v259
    %325 = vst.msk [vmem:[#allocation2 + $0x90] sm:$0xff] %vm306, %v260
    %326 = vst.msk [vmem:[#allocation2 + $0x98] sm:$0xff] %vm306, %v261
    %327 = vst.msk [vmem:[#allocation2 + $0xa0] sm:$0xff] %vm306, %v262
    %328 = vst.msk [vmem:[#allocation2 + $0xa8] sm:$0xff] %vm306, %v263
    %329 = vst.msk [vmem:[#allocation2 + $0xb0] sm:$0xff] %vm306, %v264
    %330 = vst.msk [vmem:[#allocation2 + $0xb8] sm:$0xff] %vm306, %v265
    %331 = vst.msk [vmem:[#allocation2 + $0xc0] sm:$0xff] %vm306, %v266
    %332 = vst.msk [vmem:[#allocation2 + $0xc8] sm:$0xff] %vm306, %v267
    %333 = vst.msk [vmem:[#allocation2 + $0xd0] sm:$0xff] %vm306, %v268
    %334 = vst.msk [vmem:[#allocation2 + $0xd8] sm:$0xff] %vm306, %v269
    %335 = vst.msk [vmem:[#allocation2 + $0xe0] sm:$0xff] %vm306, %v270
    %336 = vst.msk [vmem:[#allocation2 + $0xe8] sm:$0xff] %vm306, %v271
    %337 = vst.msk [vmem:[#allocation2 + $0xf0] sm:$0xff] %vm306, %v272
    %338 = vst.msk [vmem:[#allocation2 + $0xf8] sm:$0xff] %vm306, %v273
    %339 = vst.msk [vmem:[#allocation2 + $0x100] sm:$0xff] %vm306, %v274
    %340 = vst.msk [vmem:[#allocation2 + $0x108] sm:$0xff] %vm306, %v275
    %341 = vst.msk [vmem:[#allocation2 + $0x110] sm:$0xff] %vm306, %v276
    %342 = vst.msk [vmem:[#allocation2 + $0x118] sm:$0xff] %vm306, %v277
    %343 = vst.msk [vmem:[#allocation2 + $0x120] sm:$0xff] %vm306, %v278
    %344 = vst.msk [vmem:[#allocation2 + $0x128] sm:$0xff] %vm306, %v279
    %345 = vst.msk [vmem:[#allocation2 + $0x130] sm:$0xff] %vm306, %v280
    %346 = vst.msk [vmem:[#allocation2 + $0x138] sm:$0xff] %vm306, %v281
    %347 = vst.msk [vmem:[#allocation2 + $0x140] sm:$0xff] %vm306, %v282
    %348 = vst.msk [vmem:[#allocation2 + $0x148] sm:$0xff] %vm306, %v283
    %349 = vst.msk [vmem:[#allocation2 + $0x150] sm:$0xff] %vm306, %v284
    %350 = vst.msk [vmem:[#allocation2 + $0x158] sm:$0xff] %vm306, %v285
    %351 = vst.msk [vmem:[#allocation2 + $0x160] sm:$0xff] %vm306, %v286
    %352 = vst.msk [vmem:[#allocation2 + $0x168] sm:$0xff] %vm306, %v287
    %353 = vst.msk [vmem:[#allocation2 + $0x170] sm:$0xff] %vm306, %v288
    %354 = vst.msk [vmem:[#allocation2 + $0x178] sm:$0xff] %vm306, %v289
    %355 = vst.msk [vmem:[#allocation2 + $0x180] sm:$0xff] %vm306, %v290
    %356 = vst.msk [vmem:[#allocation2 + $0x188] sm:$0xff] %vm306, %v291
    %357 = vst.msk [vmem:[#allocation2 + $0x190] sm:$0xff] %vm306, %v292
    %358 = vst.msk [vmem:[#allocation2 + $0x198] sm:$0xff] %vm306, %v293
    %359 = vst.msk [vmem:[#allocation2 + $0x1a0] sm:$0xff] %vm306, %v294
    %360 = vst.msk [vmem:[#allocation2 + $0x1a8] sm:$0xff] %vm306, %v295
    %361 = vst.msk [vmem:[#allocation2 + $0x1b0] sm:$0xff] %vm306, %v296
    %362 = vst.msk [vmem:[#allocation2 + $0x1b8] sm:$0xff] %vm306, %v297
    %363 = vst.msk [vmem:[#allocation2 + $0x1c0] sm:$0xff] %vm306, %v298
    %364 = vst.msk [vmem:[#allocation2 + $0x1c8] sm:$0xff] %vm306, %v299
    %365 = vst.msk [vmem:[#allocation2 + $0x1d0] sm:$0xff] %vm306, %v300
    %366 = vst.msk [vmem:[#allocation2 + $0x1d8] sm:$0xff] %vm306, %v301
    %367 = vst.msk [vmem:[#allocation2 + $0x1e0] sm:$0xff] %vm306, %v302
    %368 = vst.msk [vmem:[#allocation2 + $0x1e8] sm:$0xff] %vm306, %v303
    %369 = vst.msk [vmem:[#allocation2 + $0x1f0] sm:$0xff] %vm306, %v304
    %370 = vst.msk [vmem:[#allocation2 + $0x1f8] sm:$0xff] %vm306, %v305
    %v371 = vld [vmem:[#allocation9 + $0x8] sm:$0xff]
    %v372 = vld [vmem:[#allocation9 + $0x10] sm:$0xff]
    %v373 = vld [vmem:[#allocation9 + $0x18] sm:$0xff]
    %v374 = vld [vmem:[#allocation9 + $0x20] sm:$0xff]
    %v375 = vld [vmem:[#allocation9 + $0x28] sm:$0xff]
    %v376 = vld [vmem:[#allocation9 + $0x30] sm:$0xff]
    %v377 = vld [vmem:[#allocation9 + $0x38] sm:$0xff]
    %v378 = vld [vmem:[#allocation9 + $0x40] sm:$0xff]
    %v379 = vld [vmem:[#allocation9 + $0x48] sm:$0xff]
    %v380 = vld [vmem:[#allocation9 + $0x50] sm:$0xff]
    %v381 = vld [vmem:[#allocation9 + $0x58] sm:$0xff]
    %v382 = vld [vmem:[#allocation9 + $0x60] sm:$0xff]
    %v383 = vld [vmem:[#allocation9 + $0x68] sm:$0xff]
    %v384 = vld [vmem:[#allocation9 + $0x70] sm:$0xff]
    %v385 = vld [vmem:[#allocation9 + $0x78] sm:$0xff]
    %v386 = vld [vmem:[#allocation9 + $0x80] sm:$0xff]
    %v387 = vld [vmem:[#allocation9 + $0x88] sm:$0xff]
    %v388 = vld [vmem:[#allocation9 + $0x90] sm:$0xff]
    %v389 = vld [vmem:[#allocation9 + $0x98] sm:$0xff]
    %v390 = vld [vmem:[#allocation9 + $0xa0] sm:$0xff]
    %v391 = vld [vmem:[#allocation9 + $0xa8] sm:$0xff]
    %v392 = vld [vmem:[#allocation9 + $0xb0] sm:$0xff]
    %v393 = vld [vmem:[#allocation9 + $0xb8] sm:$0xff]
    %v394 = vld [vmem:[#allocation9 + $0xc0] sm:$0xff]
    %v395 = vld [vmem:[#allocation9 + $0xc8] sm:$0xff]
    %v396 = vld [vmem:[#allocation9 + $0xd0] sm:$0xff]
    %v397 = vld [vmem:[#allocation9 + $0xd8] sm:$0xff]
    %v398 = vld [vmem:[#allocation9 + $0xe0] sm:$0xff]
    %v399 = vld [vmem:[#allocation9 + $0xe8] sm:$0xff]
    %v400 = vld [vmem:[#allocation9 + $0xf0] sm:$0xff]
    %v401 = vld [vmem:[#allocation9 + $0xf8] sm:$0xff]
    %v402 = vld [vmem:[#allocation9 + $0x100] sm:$0xff]
    %v403 = vld [vmem:[#allocation9 + $0x108] sm:$0xff]
    %v404 = vld [vmem:[#allocation9 + $0x110] sm:$0xff]
    %v405 = vld [vmem:[#allocation9 + $0x118] sm:$0xff]
    %v406 = vld [vmem:[#allocation9 + $0x120] sm:$0xff]
    %v407 = vld [vmem:[#allocation9 + $0x128] sm:$0xff]
    %v408 = vld [vmem:[#allocation9 + $0x130] sm:$0xff]
    %v409 = vld [vmem:[#allocation9 + $0x138] sm:$0xff]
    %v410 = vld [vmem:[#allocation9 + $0x140] sm:$0xff]
    %v411 = vld [vmem:[#allocation9 + $0x148] sm:$0xff]
    %v412 = vld [vmem:[#allocation9 + $0x150] sm:$0xff]
    %v413 = vld [vmem:[#allocation9 + $0x158] sm:$0xff]
    %v414 = vld [vmem:[#allocation9 + $0x160] sm:$0xff]
    %v415 = vld [vmem:[#allocation9 + $0x168] sm:$0xff]
    %v416 = vld [vmem:[#allocation9 + $0x170] sm:$0xff]
    %v417 = vld [vmem:[#allocation9 + $0x178] sm:$0xff]
    %v418 = vld [vmem:[#allocation9 + $0x180] sm:$0xff]
    %v419 = vld [vmem:[#allocation9 + $0x188] sm:$0xff]
    %v420 = vld [vmem:[#allocation9 + $0x190] sm:$0xff]
    %v421 = vld [vmem:[#allocation9 + $0x198] sm:$0xff]
    %v422 = vld [vmem:[#allocation9 + $0x1a0] sm:$0xff]
    %v423 = vld [vmem:[#allocation9 + $0x1a8] sm:$0xff]
    %v424 = vld [vmem:[#allocation9 + $0x1b0] sm:$0xff]
    %v425 = vld [vmem:[#allocation9 + $0x1b8] sm:$0xff]
    %v426 = vld [vmem:[#allocation9 + $0x1c0] sm:$0xff]
    %v427 = vld [vmem:[#allocation9 + $0x1c8] sm:$0xff]
    %v428 = vld [vmem:[#allocation9 + $0x1d0] sm:$0xff]
    %v429 = vld [vmem:[#allocation9 + $0x1d8] sm:$0xff]
    %v430 = vld [vmem:[#allocation9 + $0x1e0] sm:$0xff]
    %v431 = vld [vmem:[#allocation9 + $0x1e8] sm:$0xff]
    %v432 = vld [vmem:[#allocation9 + $0x1f0] sm:$0xff]
    %v433 = vld [vmem:[#allocation9 + $0x1f8] sm:$0xff]
    %v434 = vld [vmem:[#allocation9 + $0x200] sm:$0xff]
    %499 = vrot.lane.b32.xlu0 %v371, 1
    %v500 = vpop.permute.xlu0 %499
    %501 = vrot.lane.b32.xlu0 %v372, 1
    %v502 = vpop.permute.xlu0 %501
    %503 = vrot.lane.b32.xlu0 %v373, 1
    %v504 = vpop.permute.xlu0 %503
    %505 = vrot.lane.b32.xlu0 %v374, 1
    %v506 = vpop.permute.xlu0 %505
    %507 = vrot.lane.b32.xlu0 %v375, 1
    %v508 = vpop.permute.xlu0 %507
    %509 = vrot.lane.b32.xlu0 %v376, 1
    %v510 = vpop.permute.xlu0 %509
    %511 = vrot.lane.b32.xlu0 %v377, 1
    %v512 = vpop.permute.xlu0 %511
    %513 = vrot.lane.b32.xlu0 %v378, 1
    %v514 = vpop.permute.xlu0 %513
    %515 = vrot.lane.b32.xlu0 %v379, 1
    %v516 = vpop.permute.xlu0 %515
    %517 = vrot.lane.b32.xlu0 %v380, 1
    %v518 = vpop.permute.xlu0 %517
    %519 = vrot.lane.b32.xlu0 %v381, 1
    %v520 = vpop.permute.xlu0 %519
    %521 = vrot.lane.b32.xlu0 %v382, 1
    %v522 = vpop.permute.xlu0 %521
    %523 = vrot.lane.b32.xlu0 %v383, 1
    %v524 = vpop.permute.xlu0 %523
    %525 = vrot.lane.b32.xlu0 %v384, 1
    %v526 = vpop.permute.xlu0 %525
    %527 = vrot.lane.b32.xlu0 %v385, 1
    %v528 = vpop.permute.xlu0 %527
    %529 = vrot.lane.b32.xlu0 %v386, 1
    %v530 = vpop.permute.xlu0 %529
    %531 = vrot.lane.b32.xlu0 %v387, 1
    %v532 = vpop.permute.xlu0 %531
    %533 = vrot.lane.b32.xlu0 %v388, 1
    %v534 = vpop.permute.xlu0 %533
    %535 = vrot.lane.b32.xlu0 %v389, 1
    %v536 = vpop.permute.xlu0 %535
    %537 = vrot.lane.b32.xlu0 %v390, 1
    %v538 = vpop.permute.xlu0 %537
    %539 = vrot.lane.b32.xlu0 %v391, 1
    %v540 = vpop.permute.xlu0 %539
    %541 = vrot.lane.b32.xlu0 %v392, 1
    %v542 = vpop.permute.xlu0 %541
    %543 = vrot.lane.b32.xlu0 %v393, 1
    %v544 = vpop.permute.xlu0 %543
    %545 = vrot.lane.b32.xlu0 %v394, 1
    %v546 = vpop.permute.xlu0 %545
    %547 = vrot.lane.b32.xlu0 %v395, 1
    %v548 = vpop.permute.xlu0 %547
    %549 = vrot.lane.b32.xlu0 %v396, 1
    %v550 = vpop.permute.xlu0 %549
    %551 = vrot.lane.b32.xlu0 %v397, 1
    %v552 = vpop.permute.xlu0 %551
    %553 = vrot.lane.b32.xlu0 %v398, 1
    %v554 = vpop.permute.xlu0 %553
    %555 = vrot.lane.b32.xlu0 %v399, 1
    %v556 = vpop.permute.xlu0 %555
    %557 = vrot.lane.b32.xlu0 %v400, 1
    %v558 = vpop.permute.xlu0 %557
    %559 = vrot.lane.b32.xlu0 %v401, 1
    %v560 = vpop.permute.xlu0 %559
    %561 = vrot.lane.b32.xlu0 %v402, 1
    %v562 = vpop.permute.xlu0 %561
    %563 = vrot.lane.b32.xlu0 %v403, 1
    %v564 = vpop.permute.xlu0 %563
    %565 = vrot.lane.b32.xlu0 %v404, 1
    %v566 = vpop.permute.xlu0 %565
    %567 = vrot.lane.b32.xlu0 %v405, 1
    %v568 = vpop.permute.xlu0 %567
    %569 = vrot.lane.b32.xlu0 %v406, 1
    %v570 = vpop.permute.xlu0 %569
    %571 = vrot.lane.b32.xlu0 %v407, 1
    %v572 = vpop.permute.xlu0 %571
    %573 = vrot.lane.b32.xlu0 %v408, 1
    %v574 = vpop.permute.xlu0 %573
    %575 = vrot.lane.b32.xlu0 %v409, 1
    %v576 = vpop.permute.xlu0 %575
    %577 = vrot.lane.b32.xlu0 %v410, 1
    %v578 = vpop.permute.xlu0 %577
    %579 = vrot.lane.b32.xlu0 %v411, 1
    %v580 = vpop.permute.xlu0 %579
    %581 = vrot.lane.b32.xlu0 %v412, 1
    %v582 = vpop.permute.xlu0 %581
    %583 = vrot.lane.b32.xlu0 %v413, 1
    %v584 = vpop.permute.xlu0 %583
    %585 = vrot.lane.b32.xlu0 %v414, 1
    %v586 = vpop.permute.xlu0 %585
    %587 = vrot.lane.b32.xlu0 %v415, 1
    %v588 = vpop.permute.xlu0 %587
    %589 = vrot.lane.b32.xlu0 %v416, 1
    %v590 = vpop.permute.xlu0 %589
    %591 = vrot.lane.b32.xlu0 %v417, 1
    %v592 = vpop.permute.xlu0 %591
    %593 = vrot.lane.b32.xlu0 %v418, 1
    %v594 = vpop.permute.xlu0 %593
    %595 = vrot.lane.b32.xlu0 %v419, 1
    %v596 = vpop.permute.xlu0 %595
    %597 = vrot.lane.b32.xlu0 %v420, 1
    %v598 = vpop.permute.xlu0 %597
    %599 = vrot.lane.b32.xlu0 %v421, 1
    %v600 = vpop.permute.xlu0 %599
    %601 = vrot.lane.b32.xlu0 %v422, 1
    %v602 = vpop.permute.xlu0 %601
    %603 = vrot.lane.b32.xlu0 %v423, 1
    %v604 = vpop.permute.xlu0 %603
    %605 = vrot.lane.b32.xlu0 %v424, 1
    %v606 = vpop.permute.xlu0 %605
    %607 = vrot.lane.b32.xlu0 %v425, 1
    %v608 = vpop.permute.xlu0 %607
    %609 = vrot.lane.b32.xlu0 %v426, 1
    %v610 = vpop.permute.xlu0 %609
    %611 = vrot.lane.b32.xlu0 %v427, 1
    %v612 = vpop.permute.xlu0 %611
    %613 = vrot.lane.b32.xlu0 %v428, 1
    %v614 = vpop.permute.xlu0 %613
    %615 = vrot.lane.b32.xlu0 %v429, 1
    %v616 = vpop.permute.xlu0 %615
    %617 = vrot.lane.b32.xlu0 %v430, 1
    %v618 = vpop.permute.xlu0 %617
    %619 = vrot.lane.b32.xlu0 %v431, 1
    %v620 = vpop.permute.xlu0 %619
    %621 = vrot.lane.b32.xlu0 %v432, 1
    %v622 = vpop.permute.xlu0 %621
    %623 = vrot.lane.b32.xlu0 %v433, 1
    %v624 = vpop.permute.xlu0 %623
    %625 = vrot.lane.b32.xlu0 %v434, 1
    %v626 = vpop.permute.xlu0 %625
    %vm691 = vcmask 15368
    %692 = vst.msk [vmem:[#allocation2] sm:$0xff] %vm691, %v500
    %693 = vst.msk [vmem:[#allocation2 + $0x8] sm:$0xff] %vm691, %v502
    %694 = vst.msk [vmem:[#allocation2 + $0x10] sm:$0xff] %vm691, %v504
    %695 = vst.msk [vmem:[#allocation2 + $0x18] sm:$0xff] %vm691, %v506
    %696 = vst.msk [vmem:[#allocation2 + $0x20] sm:$0xff] %vm691, %v508
    %697 = vst.msk [vmem:[#allocation2 + $0x28] sm:$0xff] %vm691, %v510
    %698 = vst.msk [vmem:[#allocation2 + $0x30] sm:$0xff] %vm691, %v512
    %699 = vst.msk [vmem:[#allocation2 + $0x38] sm:$0xff] %vm691, %v514
    %700 = vst.msk [vmem:[#allocation2 + $0x40] sm:$0xff] %vm691, %v516
    %701 = vst.msk [vmem:[#allocation2 + $0x48] sm:$0xff] %vm691, %v518
    %702 = vst.msk [vmem:[#allocation2 + $0x50] sm:$0xff] %vm691, %v520
    %703 = vst.msk [vmem:[#allocation2 + $0x58] sm:$0xff] %vm691, %v522
    %704 = vst.msk [vmem:[#allocation2 + $0x60] sm:$0xff] %vm691, %v524
    %705 = vst.msk [vmem:[#allocation2 + $0x68] sm:$0xff] %vm691, %v526
    %706 = vst.msk [vmem:[#allocation2 + $0x70] sm:$0xff] %vm691, %v528
    %707 = vst.msk [vmem:[#allocation2 + $0x78] sm:$0xff] %vm691, %v530
    %708 = vst.msk [vmem:[#allocation2 + $0x80] sm:$0xff] %vm691, %v532
    %709 = vst.msk [vmem:[#allocation2 + $0x88] sm:$0xff] %vm691, %v534
    %710 = vst.msk [vmem:[#allocation2 + $0x90] sm:$0xff] %vm691, %v536
    %711 = vst.msk [vmem:[#allocation2 + $0x98] sm:$0xff] %vm691, %v538
    %712 = vst.msk [vmem:[#allocation2 + $0xa0] sm:$0xff] %vm691, %v540
    %713 = vst.msk [vmem:[#allocation2 + $0xa8] sm:$0xff] %vm691, %v542
    %714 = vst.msk [vmem:[#allocation2 + $0xb0] sm:$0xff] %vm691, %v544
    %715 = vst.msk [vmem:[#allocation2 + $0xb8] sm:$0xff] %vm691, %v546
    %716 = vst.msk [vmem:[#allocation2 + $0xc0] sm:$0xff] %vm691, %v548
    %717 = vst.msk [vmem:[#allocation2 + $0xc8] sm:$0xff] %vm691, %v550
    %718 = vst.msk [vmem:[#allocation2 + $0xd0] sm:$0xff] %vm691, %v552
    %719 = vst.msk [vmem:[#allocation2 + $0xd8] sm:$0xff] %vm691, %v554
    %720 = vst.msk [vmem:[#allocation2 + $0xe0] sm:$0xff] %vm691, %v556
    %721 = vst.msk [vmem:[#allocation2 + $0xe8] sm:$0xff] %vm691, %v558
    %722 = vst.msk [vmem:[#allocation2 + $0xf0] sm:$0xff] %vm691, %v560
    %723 = vst.msk [vmem:[#allocation2 + $0xf8] sm:$0xff] %vm691, %v562
    %724 = vst.msk [vmem:[#allocation2 + $0x100] sm:$0xff] %vm691, %v564
    %725 = vst.msk [vmem:[#allocation2 + $0x108] sm:$0xff] %vm691, %v566
    %726 = vst.msk [vmem:[#allocation2 + $0x110] sm:$0xff] %vm691, %v568
    %727 = vst.msk [vmem:[#allocation2 + $0x118] sm:$0xff] %vm691, %v570
    %728 = vst.msk [vmem:[#allocation2 + $0x120] sm:$0xff] %vm691, %v572
    %729 = vst.msk [vmem:[#allocation2 + $0x128] sm:$0xff] %vm691, %v574
    %730 = vst.msk [vmem:[#allocation2 + $0x130] sm:$0xff] %vm691, %v576
    %731 = vst.msk [vmem:[#allocation2 + $0x138] sm:$0xff] %vm691, %v578
    %732 = vst.msk [vmem:[#allocation2 + $0x140] sm:$0xff] %vm691, %v580
    %733 = vst.msk [vmem:[#allocation2 + $0x148] sm:$0xff] %vm691, %v582
    %734 = vst.msk [vmem:[#allocation2 + $0x150] sm:$0xff] %vm691, %v584
    %735 = vst.msk [vmem:[#allocation2 + $0x158] sm:$0xff] %vm691, %v586
    %736 = vst.msk [vmem:[#allocation2 + $0x160] sm:$0xff] %vm691, %v588
    %737 = vst.msk [vmem:[#allocation2 + $0x168] sm:$0xff] %vm691, %v590
    %738 = vst.msk [vmem:[#allocation2 + $0x170] sm:$0xff] %vm691, %v592
    %739 = vst.msk [vmem:[#allocation2 + $0x178] sm:$0xff] %vm691, %v594
    %740 = vst.msk [vmem:[#allocation2 + $0x180] sm:$0xff] %vm691, %v596
    %741 = vst.msk [vmem:[#allocation2 + $0x188] sm:$0xff] %vm691, %v598
    %742 = vst.msk [vmem:[#allocation2 + $0x190] sm:$0xff] %vm691, %v600
    %743 = vst.msk [vmem:[#allocation2 + $0x198] sm:$0xff] %vm691, %v602
    %744 = vst.msk [vmem:[#allocation2 + $0x1a0] sm:$0xff] %vm691, %v604
    %745 = vst.msk [vmem:[#allocation2 + $0x1a8] sm:$0xff] %vm691, %v606
    %746 = vst.msk [vmem:[#allocation2 + $0x1b0] sm:$0xff] %vm691, %v608
    %747 = vst.msk [vmem:[#allocation2 + $0x1b8] sm:$0xff] %vm691, %v610
    %748 = vst.msk [vmem:[#allocation2 + $0x1c0] sm:$0xff] %vm691, %v612
    %749 = vst.msk [vmem:[#allocation2 + $0x1c8] sm:$0xff] %vm691, %v614
    %750 = vst.msk [vmem:[#allocation2 + $0x1d0] sm:$0xff] %vm691, %v616
    %751 = vst.msk [vmem:[#allocation2 + $0x1d8] sm:$0xff] %vm691, %v618
    %752 = vst.msk [vmem:[#allocation2 + $0x1e0] sm:$0xff] %vm691, %v620
    %753 = vst.msk [vmem:[#allocation2 + $0x1e8] sm:$0xff] %vm691, %v622
    %754 = vst.msk [vmem:[#allocation2 + $0x1f0] sm:$0xff] %vm691, %v624
    %755 = vst.msk [vmem:[#allocation2 + $0x1f8] sm:$0xff] %vm691, %v626
    %v756 = vld [vmem:[#allocation9 + $0x9] sm:$0xff]
    %v757 = vld [vmem:[#allocation9 + $0x11] sm:$0xff]
    %v758 = vld [vmem:[#allocation9 + $0x19] sm:$0xff]
    %v759 = vld [vmem:[#allocation9 + $0x21] sm:$0xff]
    %v760 = vld [vmem:[#allocation9 + $0x29] sm:$0xff]
    %v761 = vld [vmem:[#allocation9 + $0x31] sm:$0xff]
    %v762 = vld [vmem:[#allocation9 + $0x39] sm:$0xff]
    %v763 = vld [vmem:[#allocation9 + $0x41] sm:$0xff]
    %v764 = vld [vmem:[#allocation9 + $0x49] sm:$0xff]
    %v765 = vld [vmem:[#allocation9 + $0x51] sm:$0xff]
    %v766 = vld [vmem:[#allocation9 + $0x59] sm:$0xff]
    %v767 = vld [vmem:[#allocation9 + $0x61] sm:$0xff]
    %v768 = vld [vmem:[#allocation9 + $0x69] sm:$0xff]
    %v769 = vld [vmem:[#allocation9 + $0x71] sm:$0xff]
    %v770 = vld [vmem:[#allocation9 + $0x79] sm:$0xff]
    %v771 = vld [vmem:[#allocation9 + $0x81] sm:$0xff]
    %v772 = vld [vmem:[#allocation9 + $0x89] sm:$0xff]
    %v773 = vld [vmem:[#allocation9 + $0x91] sm:$0xff]
    %v774 = vld [vmem:[#allocation9 + $0x99] sm:$0xff]
    %v775 = vld [vmem:[#allocation9 + $0xa1] sm:$0xff]
    %v776 = vld [vmem:[#allocation9 + $0xa9] sm:$0xff]
    %v777 = vld [vmem:[#allocation9 + $0xb1] sm:$0xff]
    %v778 = vld [vmem:[#allocation9 + $0xb9] sm:$0xff]
    %v779 = vld [vmem:[#allocation9 + $0xc1] sm:$0xff]
    %v780 = vld [vmem:[#allocation9 + $0xc9] sm:$0xff]
    %v781 = vld [vmem:[#allocation9 + $0xd1] sm:$0xff]
    %v782 = vld [vmem:[#allocation9 + $0xd9] sm:$0xff]
    %v783 = vld [vmem:[#allocation9 + $0xe1] sm:$0xff]
    %v784 = vld [vmem:[#allocation9 + $0xe9] sm:$0xff]
    %v785 = vld [vmem:[#allocation9 + $0xf1] sm:$0xff]
    %v786 = vld [vmem:[#allocation9 + $0xf9] sm:$0xff]
    %v787 = vld [vmem:[#allocation9 + $0x101] sm:$0xff]
    %v788 = vld [vmem:[#allocation9 + $0x109] sm:$0xff]
    %v789 = vld [vmem:[#allocation9 + $0x111] sm:$0xff]
    %v790 = vld [vmem:[#allocation9 + $0x119] sm:$0xff]
    %v791 = vld [vmem:[#allocation9 + $0x121] sm:$0xff]
    %v792 = vld [vmem:[#allocation9 + $0x129] sm:$0xff]
    %v793 = vld [vmem:[#allocation9 + $0x131] sm:$0xff]
    %v794 = vld [vmem:[#allocation9 + $0x139] sm:$0xff]
    %v795 = vld [vmem:[#allocation9 + $0x141] sm:$0xff]
    %v796 = vld [vmem:[#allocation9 + $0x149] sm:$0xff]
    %v797 = vld [vmem:[#allocation9 + $0x151] sm:$0xff]
    %v798 = vld [vmem:[#allocation9 + $0x159] sm:$0xff]
    %v799 = vld [vmem:[#allocation9 + $0x161] sm:$0xff]
    %v800 = vld [vmem:[#allocation9 + $0x169] sm:$0xff]
    %v801 = vld [vmem:[#allocation9 + $0x171] sm:$0xff]
    %v802 = vld [vmem:[#allocation9 + $0x179] sm:$0xff]
    %v803 = vld [vmem:[#allocation9 + $0x181] sm:$0xff]
    %v804 = vld [vmem:[#allocation9 + $0x189] sm:$0xff]
    %v805 = vld [vmem:[#allocation9 + $0x191] sm:$0xff]
    %v806 = vld [vmem:[#allocation9 + $0x199] sm:$0xff]
    %v807 = vld [vmem:[#allocation9 + $0x1a1] sm:$0xff]
    %v808 = vld [vmem:[#allocation9 + $0x1a9] sm:$0xff]
    %v809 = vld [vmem:[#allocation9 + $0x1b1] sm:$0xff]
    %v810 = vld [vmem:[#allocation9 + $0x1b9] sm:$0xff]
    %v811 = vld [vmem:[#allocation9 + $0x1c1] sm:$0xff]
    %v812 = vld [vmem:[#allocation9 + $0x1c9] sm:$0xff]
    %v813 = vld [vmem:[#allocation9 + $0x1d1] sm:$0xff]
    %v814 = vld [vmem:[#allocation9 + $0x1d9] sm:$0xff]
    %v815 = vld [vmem:[#allocation9 + $0x1e1] sm:$0xff]
    %v816 = vld [vmem:[#allocation9 + $0x1e9] sm:$0xff]
    %v817 = vld [vmem:[#allocation9 + $0x1f1] sm:$0xff]
    %v818 = vld [vmem:[#allocation9 + $0x1f9] sm:$0xff]
    %v819 = vld [vmem:[#allocation9 + $0x201] sm:$0xff]
    %884 = vrot.lane.b32.xlu0 %v756, 2
    %v885 = vpop.permute.xlu0 %884
    %886 = vrot.lane.b32.xlu0 %v757, 2
    %v887 = vpop.permute.xlu0 %886
    %888 = vrot.lane.b32.xlu0 %v758, 2
    %v889 = vpop.permute.xlu0 %888
    %890 = vrot.lane.b32.xlu0 %v759, 2
    %v891 = vpop.permute.xlu0 %890
    %892 = vrot.lane.b32.xlu0 %v760, 2
    %v893 = vpop.permute.xlu0 %892
    %894 = vrot.lane.b32.xlu0 %v761, 2
    %v895 = vpop.permute.xlu0 %894
    %896 = vrot.lane.b32.xlu0 %v762, 2
    %v897 = vpop.permute.xlu0 %896
    %898 = vrot.lane.b32.xlu0 %v763, 2
    %v899 = vpop.permute.xlu0 %898
    %900 = vrot.lane.b32.xlu0 %v764, 2
    %v901 = vpop.permute.xlu0 %900
    %902 = vrot.lane.b32.xlu0 %v765, 2
    %v903 = vpop.permute.xlu0 %902
    %904 = vrot.lane.b32.xlu0 %v766, 2
    %v905 = vpop.permute.xlu0 %904
    %906 = vrot.lane.b32.xlu0 %v767, 2
    %v907 = vpop.permute.xlu0 %906
    %908 = vrot.lane.b32.xlu0 %v768, 2
    %v909 = vpop.permute.xlu0 %908
    %910 = vrot.lane.b32.xlu0 %v769, 2
    %v911 = vpop.permute.xlu0 %910
    %912 = vrot.lane.b32.xlu0 %v770, 2
    %v913 = vpop.permute.xlu0 %912
    %914 = vrot.lane.b32.xlu0 %v771, 2
    %v915 = vpop.permute.xlu0 %914
    %916 = vrot.lane.b32.xlu0 %v772, 2
    %v917 = vpop.permute.xlu0 %916
    %918 = vrot.lane.b32.xlu0 %v773, 2
    %v919 = vpop.permute.xlu0 %918
    %920 = vrot.lane.b32.xlu0 %v774, 2
    %v921 = vpop.permute.xlu0 %920
    %922 = vrot.lane.b32.xlu0 %v775, 2
    %v923 = vpop.permute.xlu0 %922
    %924 = vrot.lane.b32.xlu0 %v776, 2
    %v925 = vpop.permute.xlu0 %924
    %926 = vrot.lane.b32.xlu0 %v777, 2
    %v927 = vpop.permute.xlu0 %926
    %928 = vrot.lane.b32.xlu0 %v778, 2
    %v929 = vpop.permute.xlu0 %928
    %930 = vrot.lane.b32.xlu0 %v779, 2
    %v931 = vpop.permute.xlu0 %930
    %932 = vrot.lane.b32.xlu0 %v780, 2
    %v933 = vpop.permute.xlu0 %932
    %934 = vrot.lane.b32.xlu0 %v781, 2
    %v935 = vpop.permute.xlu0 %934
    %936 = vrot.lane.b32.xlu0 %v782, 2
    %v937 = vpop.permute.xlu0 %936
    %938 = vrot.lane.b32.xlu0 %v783, 2
    %v939 = vpop.permute.xlu0 %938
    %940 = vrot.lane.b32.xlu0 %v784, 2
    %v941 = vpop.permute.xlu0 %940
    %942 = vrot.lane.b32.xlu0 %v785, 2
    %v943 = vpop.permute.xlu0 %942
    %944 = vrot.lane.b32.xlu0 %v786, 2
    %v945 = vpop.permute.xlu0 %944
    %946 = vrot.lane.b32.xlu0 %v787, 2
    %v947 = vpop.permute.xlu0 %946
    %948 = vrot.lane.b32.xlu0 %v788, 2
    %v949 = vpop.permute.xlu0 %948
    %950 = vrot.lane.b32.xlu0 %v789, 2
    %v951 = vpop.permute.xlu0 %950
    %952 = vrot.lane.b32.xlu0 %v790, 2
    %v953 = vpop.permute.xlu0 %952
    %954 = vrot.lane.b32.xlu0 %v791, 2
    %v955 = vpop.permute.xlu0 %954
    %956 = vrot.lane.b32.xlu0 %v792, 2
    %v957 = vpop.permute.xlu0 %956
    %958 = vrot.lane.b32.xlu0 %v793, 2
    %v959 = vpop.permute.xlu0 %958
    %960 = vrot.lane.b32.xlu0 %v794, 2
    %v961 = vpop.permute.xlu0 %960
    %962 = vrot.lane.b32.xlu0 %v795, 2
    %v963 = vpop.permute.xlu0 %962
    %964 = vrot.lane.b32.xlu0 %v796, 2
    %v965 = vpop.permute.xlu0 %964
    %966 = vrot.lane.b32.xlu0 %v797, 2
    %v967 = vpop.permute.xlu0 %966
    %968 = vrot.lane.b32.xlu0 %v798, 2
    %v969 = vpop.permute.xlu0 %968
    %970 = vrot.lane.b32.xlu0 %v799, 2
    %v971 = vpop.permute.xlu0 %970
    %972 = vrot.lane.b32.xlu0 %v800, 2
    %v973 = vpop.permute.xlu0 %972
    %974 = vrot.lane.b32.xlu0 %v801, 2
    %v975 = vpop.permute.xlu0 %974
    %976 = vrot.lane.b32.xlu0 %v802, 2
    %v977 = vpop.permute.xlu0 %976
    %978 = vrot.lane.b32.xlu0 %v803, 2
    %v979 = vpop.permute.xlu0 %978
    %980 = vrot.lane.b32.xlu0 %v804, 2
    %v981 = vpop.permute.xlu0 %980
    %982 = vrot.lane.b32.xlu0 %v805, 2
    %v983 = vpop.permute.xlu0 %982
    %984 = vrot.lane.b32.xlu0 %v806, 2
    %v985 = vpop.permute.xlu0 %984
    %986 = vrot.lane.b32.xlu0 %v807, 2
    %v987 = vpop.permute.xlu0 %986
    %988 = vrot.lane.b32.xlu0 %v808, 2
    %v989 = vpop.permute.xlu0 %988
    %990 = vrot.lane.b32.xlu0 %v809, 2
    %v991 = vpop.permute.xlu0 %990
    %992 = vrot.lane.b32.xlu0 %v810, 2
    %v993 = vpop.permute.xlu0 %992
    %994 = vrot.lane.b32.xlu0 %v811, 2
    %v995 = vpop.permute.xlu0 %994
    %996 = vrot.lane.b32.xlu0 %v812, 2
    %v997 = vpop.permute.xlu0 %996
    %998 = vrot.lane.b32.xlu0 %v813, 2
    %v999 = vpop.permute.xlu0 %998
    %1000 = vrot.lane.b32.xlu0 %v814, 2
    %v1001 = vpop.permute.xlu0 %1000
    %1002 = vrot.lane.b32.xlu0 %v815, 2
    %v1003 = vpop.permute.xlu0 %1002
    %1004 = vrot.lane.b32.xlu0 %v816, 2
    %v1005 = vpop.permute.xlu0 %1004
    %1006 = vrot.lane.b32.xlu0 %v817, 2
    %v1007 = vpop.permute.xlu0 %1006
    %1008 = vrot.lane.b32.xlu0 %v818, 2
    %v1009 = vpop.permute.xlu0 %1008
    %1010 = vrot.lane.b32.xlu0 %v819, 2
    %v1011 = vpop.permute.xlu0 %1010
    %vm1076 = vcmask 23568
    %1077 = vst.msk [vmem:[#allocation2] sm:$0xff] %vm1076, %v885
    %1078 = vst.msk [vmem:[#allocation2 + $0x8] sm:$0xff] %vm1076, %v887
    %1079 = vst.msk [vmem:[#allocation2 + $0x10] sm:$0xff] %vm1076, %v889
    %1080 = vst.msk [vmem:[#allocation2 + $0x18] sm:$0xff] %vm1076, %v891
    %1081 = vst.msk [vmem:[#allocation2 + $0x20] sm:$0xff] %vm1076, %v893
    %1082 = vst.msk [vmem:[#allocation2 + $0x28] sm:$0xff] %vm1076, %v895
    %1083 = vst.msk [vmem:[#allocation2 + $0x30] sm:$0xff] %vm1076, %v897
    %1084 = vst.msk [vmem:[#allocation2 + $0x38] sm:$0xff] %vm1076, %v899
    %1085 = vst.msk [vmem:[#allocation2 + $0x40] sm:$0xff] %vm1076, %v901
    %1086 = vst.msk [vmem:[#allocation2 + $0x48] sm:$0xff] %vm1076, %v903
    %1087 = vst.msk [vmem:[#allocation2 + $0x50] sm:$0xff] %vm1076, %v905
    %1088 = vst.msk [vmem:[#allocation2 + $0x58] sm:$0xff] %vm1076, %v907
    %1089 = vst.msk [vmem:[#allocation2 + $0x60] sm:$0xff] %vm1076, %v909
    %1090 = vst.msk [vmem:[#allocation2 + $0x68] sm:$0xff] %vm1076, %v911
    %1091 = vst.msk [vmem:[#allocation2 + $0x70] sm:$0xff] %vm1076, %v913
    %1092 = vst.msk [vmem:[#allocation2 + $0x78] sm:$0xff] %vm1076, %v915
    %1093 = vst.msk [vmem:[#allocation2 + $0x80] sm:$0xff] %vm1076, %v917
    %1094 = vst.msk [vmem:[#allocation2 + $0x88] sm:$0xff] %vm1076, %v919
    %1095 = vst.msk [vmem:[#allocation2 + $0x90] sm:$0xff] %vm1076, %v921
    %1096 = vst.msk [vmem:[#allocation2 + $0x98] sm:$0xff] %vm1076, %v923
    %1097 = vst.msk [vmem:[#allocation2 + $0xa0] sm:$0xff] %vm1076, %v925
    %1098 = vst.msk [vmem:[#allocation2 + $0xa8] sm:$0xff] %vm1076, %v927
    %1099 = vst.msk [vmem:[#allocation2 + $0xb0] sm:$0xff] %vm1076, %v929
    %1100 = vst.msk [vmem:[#allocation2 + $0xb8] sm:$0xff] %vm1076, %v931
    %1101 = vst.msk [vmem:[#allocation2 + $0xc0] sm:$0xff] %vm1076, %v933
    %1102 = vst.msk [vmem:[#allocation2 + $0xc8] sm:$0xff] %vm1076, %v935
    %1103 = vst.msk [vmem:[#allocation2 + $0xd0] sm:$0xff] %vm1076, %v937
    %1104 = vst.msk [vmem:[#allocation2 + $0xd8] sm:$0xff] %vm1076, %v939
    %1105 = vst.msk [vmem:[#allocation2 + $0xe0] sm:$0xff] %vm1076, %v941
    %1106 = vst.msk [vmem:[#allocation2 + $0xe8] sm:$0xff] %vm1076, %v943
    %1107 = vst.msk [vmem:[#allocation2 + $0xf0] sm:$0xff] %vm1076, %v945
    %1108 = vst.msk [vmem:[#allocation2 + $0xf8] sm:$0xff] %vm1076, %v947
    %1109 = vst.msk [vmem:[#allocation2 + $0x100] sm:$0xff] %vm1076, %v949
    %1110 = vst.msk [vmem:[#allocation2 + $0x108] sm:$0xff] %vm1076, %v951
    %1111 = vst.msk [vmem:[#allocation2 + $0x110] sm:$0xff] %vm1076, %v953
    %1112 = vst.msk [vmem:[#allocation2 + $0x118] sm:$0xff] %vm1076, %v955
    %1113 = vst.msk [vmem:[#allocation2 + $0x120] sm:$0xff] %vm1076, %v957
    %1114 = vst.msk [vmem:[#allocation2 + $0x128] sm:$0xff] %vm1076, %v959
    %1115 = vst.msk [vmem:[#allocation2 + $0x130] sm:$0xff] %vm1076, %v961
    %1116 = vst.msk [vmem:[#allocation2 + $0x138] sm:$0xff] %vm1076, %v963
    %1117 = vst.msk [vmem:[#allocation2 + $0x140] sm:$0xff] %vm1076, %v965
    %1118 = vst.msk [vmem:[#allocation2 + $0x148] sm:$0xff] %vm1076, %v967
    %1119 = vst.msk [vmem:[#allocation2 + $0x150] sm:$0xff] %vm1076, %v969
    %1120 = vst.msk [vmem:[#allocation2 + $0x158] sm:$0xff] %vm1076, %v971
    %1121 = vst.msk [vmem:[#allocation2 + $0x160] sm:$0xff] %vm1076, %v973
    %1122 = vst.msk [vmem:[#allocation2 + $0x168] sm:$0xff] %vm1076, %v975
    %1123 = vst.msk [vmem:[#allocation2 + $0x170] sm:$0xff] %vm1076, %v977
    %1124 = vst.msk [vmem:[#allocation2 + $0x178] sm:$0xff] %vm1076, %v979
    %1125 = vst.msk [vmem:[#allocation2 + $0x180] sm:$0xff] %vm1076, %v981
    %1126 = vst.msk [vmem:[#allocation2 + $0x188] sm:$0xff] %vm1076, %v983
    %1127 = vst.msk [vmem:[#allocation2 + $0x190] sm:$0xff] %vm1076, %v985
    %1128 = vst.msk [vmem:[#allocation2 + $0x198] sm:$0xff] %vm1076, %v987
    %1129 = vst.msk [vmem:[#allocation2 + $0x1a0] sm:$0xff] %vm1076, %v989
    %1130 = vst.msk [vmem:[#allocation2 + $0x1a8] sm:$0xff] %vm1076, %v991
    %1131 = vst.msk [vmem:[#allocation2 + $0x1b0] sm:$0xff] %vm1076, %v993
    %1132 = vst.msk [vmem:[#allocation2 + $0x1b8] sm:$0xff] %vm1076, %v995
    %1133 = vst.msk [vmem:[#allocation2 + $0x1c0] sm:$0xff] %vm1076, %v997
    %1134 = vst.msk [vmem:[#allocation2 + $0x1c8] sm:$0xff] %vm1076, %v999
    %1135 = vst.msk [vmem:[#allocation2 + $0x1d0] sm:$0xff] %vm1076, %v1001
    %1136 = vst.msk [vmem:[#allocation2 + $0x1d8] sm:$0xff] %vm1076, %v1003
    %1137 = vst.msk [vmem:[#allocation2 + $0x1e0] sm:$0xff] %vm1076, %v1005
    %1138 = vst.msk [vmem:[#allocation2 + $0x1e8] sm:$0xff] %vm1076, %v1007
    %1139 = vst.msk [vmem:[#allocation2 + $0x1f0] sm:$0xff] %vm1076, %v1009
    %1140 = vst.msk [vmem:[#allocation2 + $0x1f8] sm:$0xff] %vm1076, %v1011
    %v1141 = vld [vmem:[#allocation9 + $0x17] sm:$0xff]
    %v1142 = vld [vmem:[#allocation9 + $0x1f] sm:$0xff]
    %v1143 = vld [vmem:[#allocation9 + $0x27] sm:$0xff]
    %v1144 = vld [vmem:[#allocation9 + $0x2f] sm:$0xff]
    %v1145 = vld [vmem:[#allocation9 + $0x37] sm:$0xff]
    %v1146 = vld [vmem:[#allocation9 + $0x3f] sm:$0xff]
    %v1147 = vld [vmem:[#allocation9 + $0x47] sm:$0xff]
    %v1148 = vld [vmem:[#allocation9 + $0x4f] sm:$0xff]
    %v1149 = vld [vmem:[#allocation9 + $0x57] sm:$0xff]
    %v1150 = vld [vmem:[#allocation9 + $0x5f] sm:$0xff]
    %v1151 = vld [vmem:[#allocation9 + $0x67] sm:$0xff]
    %v1152 = vld [vmem:[#allocation9 + $0x6f] sm:$0xff]
    %v1153 = vld [vmem:[#allocation9 + $0x77] sm:$0xff]
    %v1154 = vld [vmem:[#allocation9 + $0x7f] sm:$0xff]
    %v1155 = vld [vmem:[#allocation9 + $0x87] sm:$0xff]
    %v1156 = vld [vmem:[#allocation9 + $0x8f] sm:$0xff]
    %v1157 = vld [vmem:[#allocation9 + $0x97] sm:$0xff]
    %v1158 = vld [vmem:[#allocation9 + $0x9f] sm:$0xff]
    %v1159 = vld [vmem:[#allocation9 + $0xa7] sm:$0xff]
    %v1160 = vld [vmem:[#allocation9 + $0xaf] sm:$0xff]
    %v1161 = vld [vmem:[#allocation9 + $0xb7] sm:$0xff]
    %v1162 = vld [vmem:[#allocation9 + $0xbf] sm:$0xff]
    %v1163 = vld [vmem:[#allocation9 + $0xc7] sm:$0xff]
    %v1164 = vld [vmem:[#allocation9 + $0xcf] sm:$0xff]
    %v1165 = vld [vmem:[#allocation9 + $0xd7] sm:$0xff]
    %v1166 = vld [vmem:[#allocation9 + $0xdf] sm:$0xff]
    %v1167 = vld [vmem:[#allocation9 + $0xe7] sm:$0xff]
    %v1168 = vld [vmem:[#allocation9 + $0xef] sm:$0xff]
    %v1169 = vld [vmem:[#allocation9 + $0xf7] sm:$0xff]
    %v1170 = vld [vmem:[#allocation9 + $0xff] sm:$0xff]
    %v1171 = vld [vmem:[#allocation9 + $0x107] sm:$0xff]
    %v1172 = vld [vmem:[#allocation9 + $0x10f] sm:$0xff]
    %v1173 = vld [vmem:[#allocation9 + $0x117] sm:$0xff]
    %v1174 = vld [vmem:[#allocation9 + $0x11f] sm:$0xff]
    %v1175 = vld [vmem:[#allocation9 + $0x127] sm:$0xff]
    %v1176 = vld [vmem:[#allocation9 + $0x12f] sm:$0xff]
    %v1177 = vld [vmem:[#allocation9 + $0x137] sm:$0xff]
    %v1178 = vld [vmem:[#allocation9 + $0x13f] sm:$0xff]
    %v1179 = vld [vmem:[#allocation9 + $0x147] sm:$0xff]
    %v1180 = vld [vmem:[#allocation9 + $0x14f] sm:$0xff]
    %v1181 = vld [vmem:[#allocation9 + $0x157] sm:$0xff]
    %v1182 = vld [vmem:[#allocation9 + $0x15f] sm:$0xff]
    %v1183 = vld [vmem:[#allocation9 + $0x167] sm:$0xff]
    %v1184 = vld [vmem:[#allocation9 + $0x16f] sm:$0xff]
    %v1185 = vld [vmem:[#allocation9 + $0x177] sm:$0xff]
    %v1186 = vld [vmem:[#allocation9 + $0x17f] sm:$0xff]
    %v1187 = vld [vmem:[#allocation9 + $0x187] sm:$0xff]
    %v1188 = vld [vmem:[#allocation9 + $0x18f] sm:$0xff]
    %v1189 = vld [vmem:[#allocation9 + $0x197] sm:$0xff]
    %v1190 = vld [vmem:[#allocation9 + $0x19f] sm:$0xff]
    %v1191 = vld [vmem:[#allocation9 + $0x1a7] sm:$0xff]
    %v1192 = vld [vmem:[#allocation9 + $0x1af] sm:$0xff]
    %v1193 = vld [vmem:[#allocation9 + $0x1b7] sm:$0xff]
    %v1194 = vld [vmem:[#allocation9 + $0x1bf] sm:$0xff]
    %v1195 = vld [vmem:[#allocation9 + $0x1c7] sm:$0xff]
    %v1196 = vld [vmem:[#allocation9 + $0x1cf] sm:$0xff]
    %v1197 = vld [vmem:[#allocation9 + $0x1d7] sm:$0xff]
    %v1198 = vld [vmem:[#allocation9 + $0x1df] sm:$0xff]
    %v1199 = vld [vmem:[#allocation9 + $0x1e7] sm:$0xff]
    %v1200 = vld [vmem:[#allocation9 + $0x1ef] sm:$0xff]
    %v1201 = vld [vmem:[#allocation9 + $0x1f7] sm:$0xff]
    %v1202 = vld [vmem:[#allocation9 + $0x1ff] sm:$0xff]
    %v1203 = vld [vmem:[#allocation9 + $0x207] sm:$0xff]
    %v1204 = vld [vmem:[#allocation9 + $0x20f] sm:$0xff]
    %1269 = vrot.lane.b32.xlu0 %v1141, 3
    %v1270 = vpop.permute.xlu0 %1269
    %1271 = vrot.lane.b32.xlu0 %v1142, 3
    %v1272 = vpop.permute.xlu0 %1271
    %1273 = vrot.lane.b32.xlu0 %v1143, 3
    %v1274 = vpop.permute.xlu0 %1273
    %1275 = vrot.lane.b32.xlu0 %v1144, 3
    %v1276 = vpop.permute.xlu0 %1275
    %1277 = vrot.lane.b32.xlu0 %v1145, 3
    %v1278 = vpop.permute.xlu0 %1277
    %1279 = vrot.lane.b32.xlu0 %v1146, 3
    %v1280 = vpop.permute.xlu0 %1279
    %1281 = vrot.lane.b32.xlu0 %v1147, 3
    %v1282 = vpop.permute.xlu0 %1281
    %1283 = vrot.lane.b32.xlu0 %v1148, 3
    %v1284 = vpop.permute.xlu0 %1283
    %1285 = vrot.lane.b32.xlu0 %v1149, 3
    %v1286 = vpop.permute.xlu0 %1285
    %1287 = vrot.lane.b32.xlu0 %v1150, 3
    %v1288 = vpop.permute.xlu0 %1287
    %1289 = vrot.lane.b32.xlu0 %v1151, 3
    %v1290 = vpop.permute.xlu0 %1289
    %1291 = vrot.lane.b32.xlu0 %v1152, 3
    %v1292 = vpop.permute.xlu0 %1291
    %1293 = vrot.lane.b32.xlu0 %v1153, 3
    %v1294 = vpop.permute.xlu0 %1293
    %1295 = vrot.lane.b32.xlu0 %v1154, 3
    %v1296 = vpop.permute.xlu0 %1295
    %1297 = vrot.lane.b32.xlu0 %v1155, 3
    %v1298 = vpop.permute.xlu0 %1297
    %1299 = vrot.lane.b32.xlu0 %v1156, 3
    %v1300 = vpop.permute.xlu0 %1299
    %1301 = vrot.lane.b32.xlu0 %v1157, 3
    %v1302 = vpop.permute.xlu0 %1301
    %1303 = vrot.lane.b32.xlu0 %v1158, 3
    %v1304 = vpop.permute.xlu0 %1303
    %1305 = vrot.lane.b32.xlu0 %v1159, 3
    %v1306 = vpop.permute.xlu0 %1305
    %1307 = vrot.lane.b32.xlu0 %v1160, 3
    %v1308 = vpop.permute.xlu0 %1307
    %1309 = vrot.lane.b32.xlu0 %v1161, 3
    %v1310 = vpop.permute.xlu0 %1309
    %1311 = vrot.lane.b32.xlu0 %v1162, 3
    %v1312 = vpop.permute.xlu0 %1311
    %1313 = vrot.lane.b32.xlu0 %v1163, 3
    %v1314 = vpop.permute.xlu0 %1313
    %1315 = vrot.lane.b32.xlu0 %v1164, 3
    %v1316 = vpop.permute.xlu0 %1315
    %1317 = vrot.lane.b32.xlu0 %v1165, 3
    %v1318 = vpop.permute.xlu0 %1317
    %1319 = vrot.lane.b32.xlu0 %v1166, 3
    %v1320 = vpop.permute.xlu0 %1319
    %1321 = vrot.lane.b32.xlu0 %v1167, 3
    %v1322 = vpop.permute.xlu0 %1321
    %1323 = vrot.lane.b32.xlu0 %v1168, 3
    %v1324 = vpop.permute.xlu0 %1323
    %1325 = vrot.lane.b32.xlu0 %v1169, 3
    %v1326 = vpop.permute.xlu0 %1325
    %1327 = vrot.lane.b32.xlu0 %v1170, 3
    %v1328 = vpop.permute.xlu0 %1327
    %1329 = vrot.lane.b32.xlu0 %v1171, 3
    %v1330 = vpop.permute.xlu0 %1329
    %1331 = vrot.lane.b32.xlu0 %v1172, 3
    %v1332 = vpop.permute.xlu0 %1331
    %1333 = vrot.lane.b32.xlu0 %v1173, 3
    %v1334 = vpop.permute.xlu0 %1333
    %1335 = vrot.lane.b32.xlu0 %v1174, 3
    %v1336 = vpop.permute.xlu0 %1335
    %1337 = vrot.lane.b32.xlu0 %v1175, 3
    %v1338 = vpop.permute.xlu0 %1337
    %1339 = vrot.lane.b32.xlu0 %v1176, 3
    %v1340 = vpop.permute.xlu0 %1339
    %1341 = vrot.lane.b32.xlu0 %v1177, 3
    %v1342 = vpop.permute.xlu0 %1341
    %1343 = vrot.lane.b32.xlu0 %v1178, 3
    %v1344 = vpop.permute.xlu0 %1343
    %1345 = vrot.lane.b32.xlu0 %v1179, 3
    %v1346 = vpop.permute.xlu0 %1345
    %1347 = vrot.lane.b32.xlu0 %v1180, 3
    %v1348 = vpop.permute.xlu0 %1347
    %1349 = vrot.lane.b32.xlu0 %v1181, 3
    %v1350 = vpop.permute.xlu0 %1349
    %1351 = vrot.lane.b32.xlu0 %v1182, 3
    %v1352 = vpop.permute.xlu0 %1351
    %1353 = vrot.lane.b32.xlu0 %v1183, 3
    %v1354 = vpop.permute.xlu0 %1353
    %1355 = vrot.lane.b32.xlu0 %v1184, 3
    %v1356 = vpop.permute.xlu0 %1355
    %1357 = vrot.lane.b32.xlu0 %v1185, 3
    %v1358 = vpop.permute.xlu0 %1357
    %1359 = vrot.lane.b32.xlu0 %v1186, 3
    %v1360 = vpop.permute.xlu0 %1359
    %1361 = vrot.lane.b32.xlu0 %v1187, 3
    %v1362 = vpop.permute.xlu0 %1361
    %1363 = vrot.lane.b32.xlu0 %v1188, 3
    %v1364 = vpop.permute.xlu0 %1363
    %1365 = vrot.lane.b32.xlu0 %v1189, 3
    %v1366 = vpop.permute.xlu0 %1365
    %1367 = vrot.lane.b32.xlu0 %v1190, 3
    %v1368 = vpop.permute.xlu0 %1367
    %1369 = vrot.lane.b32.xlu0 %v1191, 3
    %v1370 = vpop.permute.xlu0 %1369
    %1371 = vrot.lane.b32.xlu0 %v1192, 3
    %v1372 = vpop.permute.xlu0 %1371
    %1373 = vrot.lane.b32.xlu0 %v1193, 3
    %v1374 = vpop.permute.xlu0 %1373
    %1375 = vrot.lane.b32.xlu0 %v1194, 3
    %v1376 = vpop.permute.xlu0 %1375
    %1377 = vrot.lane.b32.xlu0 %v1195, 3
    %v1378 = vpop.permute.xlu0 %1377
    %1379 = vrot.lane.b32.xlu0 %v1196, 3
    %v1380 = vpop.permute.xlu0 %1379
    %1381 = vrot.lane.b32.xlu0 %v1197, 3
    %v1382 = vpop.permute.xlu0 %1381
    %1383 = vrot.lane.b32.xlu0 %v1198, 3
    %v1384 = vpop.permute.xlu0 %1383
    %1385 = vrot.lane.b32.xlu0 %v1199, 3
    %v1386 = vpop.permute.xlu0 %1385
    %1387 = vrot.lane.b32.xlu0 %v1200, 3
    %v1388 = vpop.permute.xlu0 %1387
    %1389 = vrot.lane.b32.xlu0 %v1201, 3
    %v1390 = vpop.permute.xlu0 %1389
    %1391 = vrot.lane.b32.xlu0 %v1202, 3
    %v1392 = vpop.permute.xlu0 %1391
    %1393 = vrot.lane.b32.xlu0 %v1203, 3
    %v1394 = vpop.permute.xlu0 %1393
    %1395 = vrot.lane.b32.xlu0 %v1204, 3
    %v1396 = vpop.permute.xlu0 %1395
    %vm1461 = vcmask 31768
    %1462 = vst.msk [vmem:[#allocation2] sm:$0xff] %vm1461, %v1270
    %1463 = vst.msk [vmem:[#allocation2 + $0x8] sm:$0xff] %vm1461, %v1272
    %1464 = vst.msk [vmem:[#allocation2 + $0x10] sm:$0xff] %vm1461, %v1274
    %1465 = vst.msk [vmem:[#allocation2 + $0x18] sm:$0xff] %vm1461, %v1276
    %1466 = vst.msk [vmem:[#allocation2 + $0x20] sm:$0xff] %vm1461, %v1278
    %1467 = vst.msk [vmem:[#allocation2 + $0x28] sm:$0xff] %vm1461, %v1280
    %1468 = vst.msk [vmem:[#allocation2 + $0x30] sm:$0xff] %vm1461, %v1282
    %1469 = vst.msk [vmem:[#allocation2 + $0x38] sm:$0xff] %vm1461, %v1284
    %1470 = vst.msk [vmem:[#allocation2 + $0x40] sm:$0xff] %vm1461, %v1286
    %1471 = vst.msk [vmem:[#allocation2 + $0x48] sm:$0xff] %vm1461, %v1288
    %1472 = vst.msk [vmem:[#allocation2 + $0x50] sm:$0xff] %vm1461, %v1290
    %1473 = vst.msk [vmem:[#allocation2 + $0x58] sm:$0xff] %vm1461, %v1292
    %1474 = vst.msk [vmem:[#allocation2 + $0x60] sm:$0xff] %vm1461, %v1294
    %1475 = vst.msk [vmem:[#allocation2 + $0x68] sm:$0xff] %vm1461, %v1296
    %1476 = vst.msk [vmem:[#allocation2 + $0x70] sm:$0xff] %vm1461, %v1298
    %1477 = vst.msk [vmem:[#allocation2 + $0x78] sm:$0xff] %vm1461, %v1300
    %1478 = vst.msk [vmem:[#allocation2 + $0x80] sm:$0xff] %vm1461, %v1302
    %1479 = vst.msk [vmem:[#allocation2 + $0x88] sm:$0xff] %vm1461, %v1304
    %1480 = vst.msk [vmem:[#allocation2 + $0x90] sm:$0xff] %vm1461, %v1306
    %1481 = vst.msk [vmem:[#allocation2 + $0x98] sm:$0xff] %vm1461, %v1308
    %1482 = vst.msk [vmem:[#allocation2 + $0xa0] sm:$0xff] %vm1461, %v1310
    %1483 = vst.msk [vmem:[#allocation2 + $0xa8] sm:$0xff] %vm1461, %v1312
    %1484 = vst.msk [vmem:[#allocation2 + $0xb0] sm:$0xff] %vm1461, %v1314
    %1485 = vst.msk [vmem:[#allocation2 + $0xb8] sm:$0xff] %vm1461, %v1316
    %1486 = vst.msk [vmem:[#allocation2 + $0xc0] sm:$0xff] %vm1461, %v1318
    %1487 = vst.msk [vmem:[#allocation2 + $0xc8] sm:$0xff] %vm1461, %v1320
    %1488 = vst.msk [vmem:[#allocation2 + $0xd0] sm:$0xff] %vm1461, %v1322
    %1489 = vst.msk [vmem:[#allocation2 + $0xd8] sm:$0xff] %vm1461, %v1324
    %1490 = vst.msk [vmem:[#allocation2 + $0xe0] sm:$0xff] %vm1461, %v1326
    %1491 = vst.msk [vmem:[#allocation2 + $0xe8] sm:$0xff] %vm1461, %v1328
    %1492 = vst.msk [vmem:[#allocation2 + $0xf0] sm:$0xff] %vm1461, %v1330
    %1493 = vst.msk [vmem:[#allocation2 + $0xf8] sm:$0xff] %vm1461, %v1332
    %1494 = vst.msk [vmem:[#allocation2 + $0x100] sm:$0xff] %vm1461, %v1334
    %1495 = vst.msk [vmem:[#allocation2 + $0x108] sm:$0xff] %vm1461, %v1336
    %1496 = vst.msk [vmem:[#allocation2 + $0x110] sm:$0xff] %vm1461, %v1338
    %1497 = vst.msk [vmem:[#allocation2 + $0x118] sm:$0xff] %vm1461, %v1340
    %1498 = vst.msk [vmem:[#allocation2 + $0x120] sm:$0xff] %vm1461, %v1342
    %1499 = vst.msk [vmem:[#allocation2 + $0x128] sm:$0xff] %vm1461, %v1344
    %1500 = vst.msk [vmem:[#allocation2 + $0x130] sm:$0xff] %vm1461, %v1346
    %1501 = vst.msk [vmem:[#allocation2 + $0x138] sm:$0xff] %vm1461, %v1348
    %1502 = vst.msk [vmem:[#allocation2 + $0x140] sm:$0xff] %vm1461, %v1350
    %1503 = vst.msk [vmem:[#allocation2 + $0x148] sm:$0xff] %vm1461, %v1352
    %1504 = vst.msk [vmem:[#allocation2 + $0x150] sm:$0xff] %vm1461, %v1354
    %1505 = vst.msk [vmem:[#allocation2 + $0x158] sm:$0xff] %vm1461, %v1356
    %1506 = vst.msk [vmem:[#allocation2 + $0x160] sm:$0xff] %vm1461, %v1358
    %1507 = vst.msk [vmem:[#allocation2 + $0x168] sm:$0xff] %vm1461, %v1360
    %1508 = vst.msk [vmem:[#allocation2 + $0x170] sm:$0xff] %vm1461, %v1362
    %1509 = vst.msk [vmem:[#allocation2 + $0x178] sm:$0xff] %vm1461, %v1364
    %1510 = vst.msk [vmem:[#allocation2 + $0x180] sm:$0xff] %vm1461, %v1366
    %1511 = vst.msk [vmem:[#allocation2 + $0x188] sm:$0xff] %vm1461, %v1368
    %1512 = vst.msk [vmem:[#allocation2 + $0x190] sm:$0xff] %vm1461, %v1370
    %1513 = vst.msk [vmem:[#allocation2 + $0x198] sm:$0xff] %vm1461, %v1372
    %1514 = vst.msk [vmem:[#allocation2 + $0x1a0] sm:$0xff] %vm1461, %v1374
    %1515 = vst.msk [vmem:[#allocation2 + $0x1a8] sm:$0xff] %vm1461, %v1376
    %1516 = vst.msk [vmem:[#allocation2 + $0x1b0] sm:$0xff] %vm1461, %v1378
    %1517 = vst.msk [vmem:[#allocation2 + $0x1b8] sm:$0xff] %vm1461, %v1380
    %1518 = vst.msk [vmem:[#allocation2 + $0x1c0] sm:$0xff] %vm1461, %v1382
    %1519 = vst.msk [vmem:[#allocation2 + $0x1c8] sm:$0xff] %vm1461, %v1384
    %1520 = vst.msk [vmem:[#allocation2 + $0x1d0] sm:$0xff] %vm1461, %v1386
    %1521 = vst.msk [vmem:[#allocation2 + $0x1d8] sm:$0xff] %vm1461, %v1388
    %1522 = vst.msk [vmem:[#allocation2 + $0x1e0] sm:$0xff] %vm1461, %v1390
    %1523 = vst.msk [vmem:[#allocation2 + $0x1e8] sm:$0xff] %vm1461, %v1392
    %1524 = vst.msk [vmem:[#allocation2 + $0x1f0] sm:$0xff] %vm1461, %v1394
    %1525 = vst.msk [vmem:[#allocation2 + $0x1f8] sm:$0xff] %vm1461, %v1396
    %v1526 = vld [vmem:[#allocation9 + $0x18] sm:$0xff]
    %v1527 = vld [vmem:[#allocation9 + $0x20] sm:$0xff]
    %v1528 = vld [vmem:[#allocation9 + $0x28] sm:$0xff]
    %v1529 = vld [vmem:[#allocation9 + $0x30] sm:$0xff]
    %v1530 = vld [vmem:[#allocation9 + $0x38] sm:$0xff]
    %v1531 = vld [vmem:[#allocation9 + $0x40] sm:$0xff]
    %v1532 = vld [vmem:[#allocation9 + $0x48] sm:$0xff]
    %v1533 = vld [vmem:[#allocation9 + $0x50] sm:$0xff]
    %v1534 = vld [vmem:[#allocation9 + $0x58] sm:$0xff]
    %v1535 = vld [vmem:[#allocation9 + $0x60] sm:$0xff]
    %v1536 = vld [vmem:[#allocation9 + $0x68] sm:$0xff]
    %v1537 = vld [vmem:[#allocation9 + $0x70] sm:$0xff]
    %v1538 = vld [vmem:[#allocation9 + $0x78] sm:$0xff]
    %v1539 = vld [vmem:[#allocation9 + $0x80] sm:$0xff]
    %v1540 = vld [vmem:[#allocation9 + $0x88] sm:$0xff]
    %v1541 = vld [vmem:[#allocation9 + $0x90] sm:$0xff]
    %v1542 = vld [vmem:[#allocation9 + $0x98] sm:$0xff]
    %v1543 = vld [vmem:[#allocation9 + $0xa0] sm:$0xff]
    %v1544 = vld [vmem:[#allocation9 + $0xa8] sm:$0xff]
    %v1545 = vld [vmem:[#allocation9 + $0xb0] sm:$0xff]
    %v1546 = vld [vmem:[#allocation9 + $0xb8] sm:$0xff]
    %v1547 = vld [vmem:[#allocation9 + $0xc0] sm:$0xff]
    %v1548 = vld [vmem:[#allocation9 + $0xc8] sm:$0xff]
    %v1549 = vld [vmem:[#allocation9 + $0xd0] sm:$0xff]
    %v1550 = vld [vmem:[#allocation9 + $0xd8] sm:$0xff]
    %v1551 = vld [vmem:[#allocation9 + $0xe0] sm:$0xff]
    %v1552 = vld [vmem:[#allocation9 + $0xe8] sm:$0xff]
    %v1553 = vld [vmem:[#allocation9 + $0xf0] sm:$0xff]
    %v1554 = vld [vmem:[#allocation9 + $0xf8] sm:$0xff]
    %v1555 = vld [vmem:[#allocation9 + $0x100] sm:$0xff]
    %v1556 = vld [vmem:[#allocation9 + $0x108] sm:$0xff]
    %v1557 = vld [vmem:[#allocation9 + $0x110] sm:$0xff]
    %v1558 = vld [vmem:[#allocation9 + $0x118] sm:$0xff]
    %v1559 = vld [vmem:[#allocation9 + $0x120] sm:$0xff]
    %v1560 = vld [vmem:[#allocation9 + $0x128] sm:$0xff]
    %v1561 = vld [vmem:[#allocation9 + $0x130] sm:$0xff]
    %v1562 = vld [vmem:[#allocation9 + $0x138] sm:$0xff]
    %v1563 = vld [vmem:[#allocation9 + $0x140] sm:$0xff]
    %v1564 = vld [vmem:[#allocation9 + $0x148] sm:$0xff]
    %v1565 = vld [vmem:[#allocation9 + $0x150] sm:$0xff]
    %v1566 = vld [vmem:[#allocation9 + $0x158] sm:$0xff]
    %v1567 = vld [vmem:[#allocation9 + $0x160] sm:$0xff]
    %v1568 = vld [vmem:[#allocation9 + $0x168] sm:$0xff]
    %v1569 = vld [vmem:[#allocation9 + $0x170] sm:$0xff]
    %v1570 = vld [vmem:[#allocation9 + $0x178] sm:$0xff]
    %v1571 = vld [vmem:[#allocation9 + $0x180] sm:$0xff]
    %v1572 = vld [vmem:[#allocation9 + $0x188] sm:$0xff]
    %v1573 = vld [vmem:[#allocation9 + $0x190] sm:$0xff]
    %v1574 = vld [vmem:[#allocation9 + $0x198] sm:$0xff]
    %v1575 = vld [vmem:[#allocation9 + $0x1a0] sm:$0xff]
    %v1576 = vld [vmem:[#allocation9 + $0x1a8] sm:$0xff]
    %v1577 = vld [vmem:[#allocation9 + $0x1b0] sm:$0xff]
    %v1578 = vld [vmem:[#allocation9 + $0x1b8] sm:$0xff]
    %v1579 = vld [vmem:[#allocation9 + $0x1c0] sm:$0xff]
    %v1580 = vld [vmem:[#allocation9 + $0x1c8] sm:$0xff]
    %v1581 = vld [vmem:[#allocation9 + $0x1d0] sm:$0xff]
    %v1582 = vld [vmem:[#allocation9 + $0x1d8] sm:$0xff]
    %v1583 = vld [vmem:[#allocation9 + $0x1e0] sm:$0xff]
    %v1584 = vld [vmem:[#allocation9 + $0x1e8] sm:$0xff]
    %v1585 = vld [vmem:[#allocation9 + $0x1f0] sm:$0xff]
    %v1586 = vld [vmem:[#allocation9 + $0x1f8] sm:$0xff]
    %v1587 = vld [vmem:[#allocation9 + $0x200] sm:$0xff]
    %v1588 = vld [vmem:[#allocation9 + $0x208] sm:$0xff]
    %v1589 = vld [vmem:[#allocation9 + $0x210] sm:$0xff]
    %1654 = vrot.lane.b32.xlu0 %v1526, 4
    %v1655 = vpop.permute.xlu0 %1654
    %1656 = vrot.lane.b32.xlu0 %v1527, 4
    %v1657 = vpop.permute.xlu0 %1656
    %1658 = vrot.lane.b32.xlu0 %v1528, 4
    %v1659 = vpop.permute.xlu0 %1658
    %1660 = vrot.lane.b32.xlu0 %v1529, 4
    %v1661 = vpop.permute.xlu0 %1660
    %1662 = vrot.lane.b32.xlu0 %v1530, 4
    %v1663 = vpop.permute.xlu0 %1662
    %1664 = vrot.lane.b32.xlu0 %v1531, 4
    %v1665 = vpop.permute.xlu0 %1664
    %1666 = vrot.lane.b32.xlu0 %v1532, 4
    %v1667 = vpop.permute.xlu0 %1666
    %1668 = vrot.lane.b32.xlu0 %v1533, 4
    %v1669 = vpop.permute.xlu0 %1668
    %1670 = vrot.lane.b32.xlu0 %v1534, 4
    %v1671 = vpop.permute.xlu0 %1670
    %1672 = vrot.lane.b32.xlu0 %v1535, 4
    %v1673 = vpop.permute.xlu0 %1672
    %1674 = vrot.lane.b32.xlu0 %v1536, 4
    %v1675 = vpop.permute.xlu0 %1674
    %1676 = vrot.lane.b32.xlu0 %v1537, 4
    %v1677 = vpop.permute.xlu0 %1676
    %1678 = vrot.lane.b32.xlu0 %v1538, 4
    %v1679 = vpop.permute.xlu0 %1678
    %1680 = vrot.lane.b32.xlu0 %v1539, 4
    %v1681 = vpop.permute.xlu0 %1680
    %1682 = vrot.lane.b32.xlu0 %v1540, 4
    %v1683 = vpop.permute.xlu0 %1682
    %1684 = vrot.lane.b32.xlu0 %v1541, 4
    %v1685 = vpop.permute.xlu0 %1684
    %1686 = vrot.lane.b32.xlu0 %v1542, 4
    %v1687 = vpop.permute.xlu0 %1686
    %1688 = vrot.lane.b32.xlu0 %v1543, 4
    %v1689 = vpop.permute.xlu0 %1688
    %1690 = vrot.lane.b32.xlu0 %v1544, 4
    %v1691 = vpop.permute.xlu0 %1690
    %1692 = vrot.lane.b32.xlu0 %v1545, 4
    %v1693 = vpop.permute.xlu0 %1692
    %1694 = vrot.lane.b32.xlu0 %v1546, 4
    %v1695 = vpop.permute.xlu0 %1694
    %1696 = vrot.lane.b32.xlu0 %v1547, 4
    %v1697 = vpop.permute.xlu0 %1696
    %1698 = vrot.lane.b32.xlu0 %v1548, 4
    %v1699 = vpop.permute.xlu0 %1698
    %1700 = vrot.lane.b32.xlu0 %v1549, 4
    %v1701 = vpop.permute.xlu0 %1700
    %1702 = vrot.lane.b32.xlu0 %v1550, 4
    %v1703 = vpop.permute.xlu0 %1702
    %1704 = vrot.lane.b32.xlu0 %v1551, 4
    %v1705 = vpop.permute.xlu0 %1704
    %1706 = vrot.lane.b32.xlu0 %v1552, 4
    %v1707 = vpop.permute.xlu0 %1706
    %1708 = vrot.lane.b32.xlu0 %v1553, 4
    %v1709 = vpop.permute.xlu0 %1708
    %1710 = vrot.lane.b32.xlu0 %v1554, 4
    %v1711 = vpop.permute.xlu0 %1710
    %1712 = vrot.lane.b32.xlu0 %v1555, 4
    %v1713 = vpop.permute.xlu0 %1712
    %1714 = vrot.lane.b32.xlu0 %v1556, 4
    %v1715 = vpop.permute.xlu0 %1714
    %1716 = vrot.lane.b32.xlu0 %v1557, 4
    %v1717 = vpop.permute.xlu0 %1716
    %1718 = vrot.lane.b32.xlu0 %v1558, 4
    %v1719 = vpop.permute.xlu0 %1718
    %1720 = vrot.lane.b32.xlu0 %v1559, 4
    %v1721 = vpop.permute.xlu0 %1720
    %1722 = vrot.lane.b32.xlu0 %v1560, 4
    %v1723 = vpop.permute.xlu0 %1722
    %1724 = vrot.lane.b32.xlu0 %v1561, 4
    %v1725 = vpop.permute.xlu0 %1724
    %1726 = vrot.lane.b32.xlu0 %v1562, 4
    %v1727 = vpop.permute.xlu0 %1726
    %1728 = vrot.lane.b32.xlu0 %v1563, 4
    %v1729 = vpop.permute.xlu0 %1728
    %1730 = vrot.lane.b32.xlu0 %v1564, 4
    %v1731 = vpop.permute.xlu0 %1730
    %1732 = vrot.lane.b32.xlu0 %v1565, 4
    %v1733 = vpop.permute.xlu0 %1732
    %1734 = vrot.lane.b32.xlu0 %v1566, 4
    %v1735 = vpop.permute.xlu0 %1734
    %1736 = vrot.lane.b32.xlu0 %v1567, 4
    %v1737 = vpop.permute.xlu0 %1736
    %1738 = vrot.lane.b32.xlu0 %v1568, 4
    %v1739 = vpop.permute.xlu0 %1738
    %1740 = vrot.lane.b32.xlu0 %v1569, 4
    %v1741 = vpop.permute.xlu0 %1740
    %1742 = vrot.lane.b32.xlu0 %v1570, 4
    %v1743 = vpop.permute.xlu0 %1742
    %1744 = vrot.lane.b32.xlu0 %v1571, 4
    %v1745 = vpop.permute.xlu0 %1744
    %1746 = vrot.lane.b32.xlu0 %v1572, 4
    %v1747 = vpop.permute.xlu0 %1746
    %1748 = vrot.lane.b32.xlu0 %v1573, 4
    %v1749 = vpop.permute.xlu0 %1748
    %1750 = vrot.lane.b32.xlu0 %v1574, 4
    %v1751 = vpop.permute.xlu0 %1750
    %1752 = vrot.lane.b32.xlu0 %v1575, 4
    %v1753 = vpop.permute.xlu0 %1752
    %1754 = vrot.lane.b32.xlu0 %v1576, 4
    %v1755 = vpop.permute.xlu0 %1754
    %1756 = vrot.lane.b32.xlu0 %v1577, 4
    %v1757 = vpop.permute.xlu0 %1756
    %1758 = vrot.lane.b32.xlu0 %v1578, 4
    %v1759 = vpop.permute.xlu0 %1758
    %1760 = vrot.lane.b32.xlu0 %v1579, 4
    %v1761 = vpop.permute.xlu0 %1760
    %1762 = vrot.lane.b32.xlu0 %v1580, 4
    %v1763 = vpop.permute.xlu0 %1762
    %1764 = vrot.lane.b32.xlu0 %v1581, 4
    %v1765 = vpop.permute.xlu0 %1764
    %1766 = vrot.lane.b32.xlu0 %v1582, 4
    %v1767 = vpop.permute.xlu0 %1766
    %1768 = vrot.lane.b32.xlu0 %v1583, 4
    %v1769 = vpop.permute.xlu0 %1768
    %1770 = vrot.lane.b32.xlu0 %v1584, 4
    %v1771 = vpop.permute.xlu0 %1770
    %1772 = vrot.lane.b32.xlu0 %v1585, 4
    %v1773 = vpop.permute.xlu0 %1772
    %1774 = vrot.lane.b32.xlu0 %v1586, 4
    %v1775 = vpop.permute.xlu0 %1774
    %1776 = vrot.lane.b32.xlu0 %v1587, 4
    %v1777 = vpop.permute.xlu0 %1776
    %1778 = vrot.lane.b32.xlu0 %v1588, 4
    %v1779 = vpop.permute.xlu0 %1778
    %1780 = vrot.lane.b32.xlu0 %v1589, 4
    %v1781 = vpop.permute.xlu0 %1780
    %vm1846 = vcmask 39968
    %1847 = vst.msk [vmem:[#allocation2] sm:$0xff] %vm1846, %v1655
    %1848 = vst.msk [vmem:[#allocation2 + $0x8] sm:$0xff] %vm1846, %v1657
    %1849 = vst.msk [vmem:[#allocation2 + $0x10] sm:$0xff] %vm1846, %v1659
    %1850 = vst.msk [vmem:[#allocation2 + $0x18] sm:$0xff] %vm1846, %v1661
    %1851 = vst.msk [vmem:[#allocation2 + $0x20] sm:$0xff] %vm1846, %v1663
    %1852 = vst.msk [vmem:[#allocation2 + $0x28] sm:$0xff] %vm1846, %v1665
    %1853 = vst.msk [vmem:[#allocation2 + $0x30] sm:$0xff] %vm1846, %v1667
    %1854 = vst.msk [vmem:[#allocation2 + $0x38] sm:$0xff] %vm1846, %v1669
    %1855 = vst.msk [vmem:[#allocation2 + $0x40] sm:$0xff] %vm1846, %v1671
    %1856 = vst.msk [vmem:[#allocation2 + $0x48] sm:$0xff] %vm1846, %v1673
    %1857 = vst.msk [vmem:[#allocation2 + $0x50] sm:$0xff] %vm1846, %v1675
    %1858 = vst.msk [vmem:[#allocation2 + $0x58] sm:$0xff] %vm1846, %v1677
    %1859 = vst.msk [vmem:[#allocation2 + $0x60] sm:$0xff] %vm1846, %v1679
    %1860 = vst.msk [vmem:[#allocation2 + $0x68] sm:$0xff] %vm1846, %v1681
    %1861 = vst.msk [vmem:[#allocation2 + $0x70] sm:$0xff] %vm1846, %v1683
    %1862 = vst.msk [vmem:[#allocation2 + $0x78] sm:$0xff] %vm1846, %v1685
    %1863 = vst.msk [vmem:[#allocation2 + $0x80] sm:$0xff] %vm1846, %v1687
    %1864 = vst.msk [vmem:[#allocation2 + $0x88] sm:$0xff] %vm1846, %v1689
    %1865 = vst.msk [vmem:[#allocation2 + $0x90] sm:$0xff] %vm1846, %v1691
    %1866 = vst.msk [vmem:[#allocation2 + $0x98] sm:$0xff] %vm1846, %v1693
    %1867 = vst.msk [vmem:[#allocation2 + $0xa0] sm:$0xff] %vm1846, %v1695
    %1868 = vst.msk [vmem:[#allocation2 + $0xa8] sm:$0xff] %vm1846, %v1697
    %1869 = vst.msk [vmem:[#allocation2 + $0xb0] sm:$0xff] %vm1846, %v1699
    %1870 = vst.msk [vmem:[#allocation2 + $0xb8] sm:$0xff] %vm1846, %v1701
    %1871 = vst.msk [vmem:[#allocation2 + $0xc0] sm:$0xff] %vm1846, %v1703
    %1872 = vst.msk [vmem:[#allocation2 + $0xc8] sm:$0xff] %vm1846, %v1705
    %1873 = vst.msk [vmem:[#allocation2 + $0xd0] sm:$0xff] %vm1846, %v1707
    %1874 = vst.msk [vmem:[#allocation2 + $0xd8] sm:$0xff] %vm1846, %v1709
    %1875 = vst.msk [vmem:[#allocation2 + $0xe0] sm:$0xff] %vm1846, %v1711
    %1876 = vst.msk [vmem:[#allocation2 + $0xe8] sm:$0xff] %vm1846, %v1713
    %1877 = vst.msk [vmem:[#allocation2 + $0xf0] sm:$0xff] %vm1846, %v1715
    %1878 = vst.msk [vmem:[#allocation2 + $0xf8] sm:$0xff] %vm1846, %v1717
    %1879 = vst.msk [vmem:[#allocation2 + $0x100] sm:$0xff] %vm1846, %v1719
    %1880 = vst.msk [vmem:[#allocation2 + $0x108] sm:$0xff] %vm1846, %v1721
    %1881 = vst.msk [vmem:[#allocation2 + $0x110] sm:$0xff] %vm1846, %v1723
    %1882 = vst.msk [vmem:[#allocation2 + $0x118] sm:$0xff] %vm1846, %v1725
    %1883 = vst.msk [vmem:[#allocation2 + $0x120] sm:$0xff] %vm1846, %v1727
    %1884 = vst.msk [vmem:[#allocation2 + $0x128] sm:$0xff] %vm1846, %v1729
    %1885 = vst.msk [vmem:[#allocation2 + $0x130] sm:$0xff] %vm1846, %v1731
    %1886 = vst.msk [vmem:[#allocation2 + $0x138] sm:$0xff] %vm1846, %v1733
    %1887 = vst.msk [vmem:[#allocation2 + $0x140] sm:$0xff] %vm1846, %v1735
    %1888 = vst.msk [vmem:[#allocation2 + $0x148] sm:$0xff] %vm1846, %v1737
    %1889 = vst.msk [vmem:[#allocation2 + $0x150] sm:$0xff] %vm1846, %v1739
    %1890 = vst.msk [vmem:[#allocation2 + $0x158] sm:$0xff] %vm1846, %v1741
    %1891 = vst.msk [vmem:[#allocation2 + $0x160] sm:$0xff] %vm1846, %v1743
    %1892 = vst.msk [vmem:[#allocation2 + $0x168] sm:$0xff] %vm1846, %v1745
    %1893 = vst.msk [vmem:[#allocation2 + $0x170] sm:$0xff] %vm1846, %v1747
    %1894 = vst.msk [vmem:[#allocation2 + $0x178] sm:$0xff] %vm1846, %v1749
    %1895 = vst.msk [vmem:[#allocation2 + $0x180] sm:$0xff] %vm1846, %v1751
    %1896 = vst.msk [vmem:[#allocation2 + $0x188] sm:$0xff] %vm1846, %v1753
    %1897 = vst.msk [vmem:[#allocation2 + $0x190] sm:$0xff] %vm1846, %v1755
    %1898 = vst.msk [vmem:[#allocation2 + $0x198] sm:$0xff] %vm1846, %v1757
    %1899 = vst.msk [vmem:[#allocation2 + $0x1a0] sm:$0xff] %vm1846, %v1759
    %1900 = vst.msk [vmem:[#allocation2 + $0x1a8] sm:$0xff] %vm1846, %v1761
    %1901 = vst.msk [vmem:[#allocation2 + $0x1b0] sm:$0xff] %vm1846, %v1763
    %1902 = vst.msk [vmem:[#allocation2 + $0x1b8] sm:$0xff] %vm1846, %v1765
    %1903 = vst.msk [vmem:[#allocation2 + $0x1c0] sm:$0xff] %vm1846, %v1767
    %1904 = vst.msk [vmem:[#allocation2 + $0x1c8] sm:$0xff] %vm1846, %v1769
    %1905 = vst.msk [vmem:[#allocation2 + $0x1d0] sm:$0xff] %vm1846, %v1771
    %1906 = vst.msk [vmem:[#allocation2 + $0x1d8] sm:$0xff] %vm1846, %v1773
    %1907 = vst.msk [vmem:[#allocation2 + $0x1e0] sm:$0xff] %vm1846, %v1775
    %1908 = vst.msk [vmem:[#allocation2 + $0x1e8] sm:$0xff] %vm1846, %v1777
    %1909 = vst.msk [vmem:[#allocation2 + $0x1f0] sm:$0xff] %vm1846, %v1779
    %1910 = vst.msk [vmem:[#allocation2 + $0x1f8] sm:$0xff] %vm1846, %v1781
    %v1911 = vld [vmem:[#allocation9 + $0x19] sm:$0xff]
    %v1912 = vld [vmem:[#allocation9 + $0x21] sm:$0xff]
    %v1913 = vld [vmem:[#allocation9 + $0x29] sm:$0xff]
    %v1914 = vld [vmem:[#allocation9 + $0x31] sm:$0xff]
    %v1915 = vld [vmem:[#allocation9 + $0x39] sm:$0xff]
    %v1916 = vld [vmem:[#allocation9 + $0x41] sm:$0xff]
    %v1917 = vld [vmem:[#allocation9 + $0x49] sm:$0xff]
    %v1918 = vld [vmem:[#allocation9 + $0x51] sm:$0xff]
    %v1919 = vld [vmem:[#allocation9 + $0x59] sm:$0xff]
    %v1920 = vld [vmem:[#allocation9 + $0x61] sm:$0xff]
    %v1921 = vld [vmem:[#allocation9 + $0x69] sm:$0xff]
    %v1922 = vld [vmem:[#allocation9 + $0x71] sm:$0xff]
    %v1923 = vld [vmem:[#allocation9 + $0x79] sm:$0xff]
    %v1924 = vld [vmem:[#allocation9 + $0x81] sm:$0xff]
    %v1925 = vld [vmem:[#allocation9 + $0x89] sm:$0xff]
    %v1926 = vld [vmem:[#allocation9 + $0x91] sm:$0xff]
    %v1927 = vld [vmem:[#allocation9 + $0x99] sm:$0xff]
    %v1928 = vld [vmem:[#allocation9 + $0xa1] sm:$0xff]
    %v1929 = vld [vmem:[#allocation9 + $0xa9] sm:$0xff]
    %v1930 = vld [vmem:[#allocation9 + $0xb1] sm:$0xff]
    %v1931 = vld [vmem:[#allocation9 + $0xb9] sm:$0xff]
    %v1932 = vld [vmem:[#allocation9 + $0xc1] sm:$0xff]
    %v1933 = vld [vmem:[#allocation9 + $0xc9] sm:$0xff]
    %v1934 = vld [vmem:[#allocation9 + $0xd1] sm:$0xff]
    %v1935 = vld [vmem:[#allocation9 + $0xd9] sm:$0xff]
    %v1936 = vld [vmem:[#allocation9 + $0xe1] sm:$0xff]
    %v1937 = vld [vmem:[#allocation9 + $0xe9] sm:$0xff]
    %v1938 = vld [vmem:[#allocation9 + $0xf1] sm:$0xff]
    %v1939 = vld [vmem:[#allocation9 + $0xf9] sm:$0xff]
    %v1940 = vld [vmem:[#allocation9 + $0x101] sm:$0xff]
    %v1941 = vld [vmem:[#allocation9 + $0x109] sm:$0xff]
    %v1942 = vld [vmem:[#allocation9 + $0x111] sm:$0xff]
    %v1943 = vld [vmem:[#allocation9 + $0x119] sm:$0xff]
    %v1944 = vld [vmem:[#allocation9 + $0x121] sm:$0xff]
    %v1945 = vld [vmem:[#allocation9 + $0x129] sm:$0xff]
    %v1946 = vld [vmem:[#allocation9 + $0x131] sm:$0xff]
    %v1947 = vld [vmem:[#allocation9 + $0x139] sm:$0xff]
    %v1948 = vld [vmem:[#allocation9 + $0x141] sm:$0xff]
    %v1949 = vld [vmem:[#allocation9 + $0x149] sm:$0xff]
    %v1950 = vld [vmem:[#allocation9 + $0x151] sm:$0xff]
    %v1951 = vld [vmem:[#allocation9 + $0x159] sm:$0xff]
    %v1952 = vld [vmem:[#allocation9 + $0x161] sm:$0xff]
    %v1953 = vld [vmem:[#allocation9 + $0x169] sm:$0xff]
    %v1954 = vld [vmem:[#allocation9 + $0x171] sm:$0xff]
    %v1955 = vld [vmem:[#allocation9 + $0x179] sm:$0xff]
    %v1956 = vld [vmem:[#allocation9 + $0x181] sm:$0xff]
    %v1957 = vld [vmem:[#allocation9 + $0x189] sm:$0xff]
    %v1958 = vld [vmem:[#allocation9 + $0x191] sm:$0xff]
    %v1959 = vld [vmem:[#allocation9 + $0x199] sm:$0xff]
    %v1960 = vld [vmem:[#allocation9 + $0x1a1] sm:$0xff]
    %v1961 = vld [vmem:[#allocation9 + $0x1a9] sm:$0xff]
    %v1962 = vld [vmem:[#allocation9 + $0x1b1] sm:$0xff]
    %v1963 = vld [vmem:[#allocation9 + $0x1b9] sm:$0xff]
    %v1964 = vld [vmem:[#allocation9 + $0x1c1] sm:$0xff]
    %v1965 = vld [vmem:[#allocation9 + $0x1c9] sm:$0xff]
    %v1966 = vld [vmem:[#allocation9 + $0x1d1] sm:$0xff]
    %v1967 = vld [vmem:[#allocation9 + $0x1d9] sm:$0xff]
    %v1968 = vld [vmem:[#allocation9 + $0x1e1] sm:$0xff]
    %v1969 = vld [vmem:[#allocation9 + $0x1e9] sm:$0xff]
    %v1970 = vld [vmem:[#allocation9 + $0x1f1] sm:$0xff]
    %v1971 = vld [vmem:[#allocation9 + $0x1f9] sm:$0xff]
    %v1972 = vld [vmem:[#allocation9 + $0x201] sm:$0xff]
    %v1973 = vld [vmem:[#allocation9 + $0x209] sm:$0xff]
    %v1974 = vld [vmem:[#allocation9 + $0x211] sm:$0xff]
    %2039 = vrot.lane.b32.xlu0 %v1911, 5
    %v2040 = vpop.permute.xlu0 %2039
    %2041 = vrot.lane.b32.xlu0 %v1912, 5
    %v2042 = vpop.permute.xlu0 %2041
    %2043 = vrot.lane.b32.xlu0 %v1913, 5
    %v2044 = vpop.permute.xlu0 %2043
    %2045 = vrot.lane.b32.xlu0 %v1914, 5
    %v2046 = vpop.permute.xlu0 %2045
    %2047 = vrot.lane.b32.xlu0 %v1915, 5
    %v2048 = vpop.permute.xlu0 %2047
    %2049 = vrot.lane.b32.xlu0 %v1916, 5
    %v2050 = vpop.permute.xlu0 %2049
    %2051 = vrot.lane.b32.xlu0 %v1917, 5
    %v2052 = vpop.permute.xlu0 %2051
    %2053 = vrot.lane.b32.xlu0 %v1918, 5
    %v2054 = vpop.permute.xlu0 %2053
    %2055 = vrot.lane.b32.xlu0 %v1919, 5
    %v2056 = vpop.permute.xlu0 %2055
    %2057 = vrot.lane.b32.xlu0 %v1920, 5
    %v2058 = vpop.permute.xlu0 %2057
    %2059 = vrot.lane.b32.xlu0 %v1921, 5
    %v2060 = vpop.permute.xlu0 %2059
    %2061 = vrot.lane.b32.xlu0 %v1922, 5
    %v2062 = vpop.permute.xlu0 %2061
    %2063 = vrot.lane.b32.xlu0 %v1923, 5
    %v2064 = vpop.permute.xlu0 %2063
    %2065 = vrot.lane.b32.xlu0 %v1924, 5
    %v2066 = vpop.permute.xlu0 %2065
    %2067 = vrot.lane.b32.xlu0 %v1925, 5
    %v2068 = vpop.permute.xlu0 %2067
    %2069 = vrot.lane.b32.xlu0 %v1926, 5
    %v2070 = vpop.permute.xlu0 %2069
    %2071 = vrot.lane.b32.xlu0 %v1927, 5
    %v2072 = vpop.permute.xlu0 %2071
    %2073 = vrot.lane.b32.xlu0 %v1928, 5
    %v2074 = vpop.permute.xlu0 %2073
    %2075 = vrot.lane.b32.xlu0 %v1929, 5
    %v2076 = vpop.permute.xlu0 %2075
    %2077 = vrot.lane.b32.xlu0 %v1930, 5
    %v2078 = vpop.permute.xlu0 %2077
    %2079 = vrot.lane.b32.xlu0 %v1931, 5
    %v2080 = vpop.permute.xlu0 %2079
    %2081 = vrot.lane.b32.xlu0 %v1932, 5
    %v2082 = vpop.permute.xlu0 %2081
    %2083 = vrot.lane.b32.xlu0 %v1933, 5
    %v2084 = vpop.permute.xlu0 %2083
    %2085 = vrot.lane.b32.xlu0 %v1934, 5
    %v2086 = vpop.permute.xlu0 %2085
    %2087 = vrot.lane.b32.xlu0 %v1935, 5
    %v2088 = vpop.permute.xlu0 %2087
    %2089 = vrot.lane.b32.xlu0 %v1936, 5
    %v2090 = vpop.permute.xlu0 %2089
    %2091 = vrot.lane.b32.xlu0 %v1937, 5
    %v2092 = vpop.permute.xlu0 %2091
    %2093 = vrot.lane.b32.xlu0 %v1938, 5
    %v2094 = vpop.permute.xlu0 %2093
    %2095 = vrot.lane.b32.xlu0 %v1939, 5
    %v2096 = vpop.permute.xlu0 %2095
    %2097 = vrot.lane.b32.xlu0 %v1940, 5
    %v2098 = vpop.permute.xlu0 %2097
    %2099 = vrot.lane.b32.xlu0 %v1941, 5
    %v2100 = vpop.permute.xlu0 %2099
    %2101 = vrot.lane.b32.xlu0 %v1942, 5
    %v2102 = vpop.permute.xlu0 %2101
    %2103 = vrot.lane.b32.xlu0 %v1943, 5
    %v2104 = vpop.permute.xlu0 %2103
    %2105 = vrot.lane.b32.xlu0 %v1944, 5
    %v2106 = vpop.permute.xlu0 %2105
    %2107 = vrot.lane.b32.xlu0 %v1945, 5
    %v2108 = vpop.permute.xlu0 %2107
    %2109 = vrot.lane.b32.xlu0 %v1946, 5
    %v2110 = vpop.permute.xlu0 %2109
    %2111 = vrot.lane.b32.xlu0 %v1947, 5
    %v2112 = vpop.permute.xlu0 %2111
    %2113 = vrot.lane.b32.xlu0 %v1948, 5
    %v2114 = vpop.permute.xlu0 %2113
    %2115 = vrot.lane.b32.xlu0 %v1949, 5
    %v2116 = vpop.permute.xlu0 %2115
    %2117 = vrot.lane.b32.xlu0 %v1950, 5
    %v2118 = vpop.permute.xlu0 %2117
    %2119 = vrot.lane.b32.xlu0 %v1951, 5
    %v2120 = vpop.permute.xlu0 %2119
    %2121 = vrot.lane.b32.xlu0 %v1952, 5
    %v2122 = vpop.permute.xlu0 %2121
    %2123 = vrot.lane.b32.xlu0 %v1953, 5
    %v2124 = vpop.permute.xlu0 %2123
    %2125 = vrot.lane.b32.xlu0 %v1954, 5
    %v2126 = vpop.permute.xlu0 %2125
    %2127 = vrot.lane.b32.xlu0 %v1955, 5
    %v2128 = vpop.permute.xlu0 %2127
    %2129 = vrot.lane.b32.xlu0 %v1956, 5
    %v2130 = vpop.permute.xlu0 %2129
    %2131 = vrot.lane.b32.xlu0 %v1957, 5
    %v2132 = vpop.permute.xlu0 %2131
    %2133 = vrot.lane.b32.xlu0 %v1958, 5
    %v2134 = vpop.permute.xlu0 %2133
    %2135 = vrot.lane.b32.xlu0 %v1959, 5
    %v2136 = vpop.permute.xlu0 %2135
    %2137 = vrot.lane.b32.xlu0 %v1960, 5
    %v2138 = vpop.permute.xlu0 %2137
    %2139 = vrot.lane.b32.xlu0 %v1961, 5
    %v2140 = vpop.permute.xlu0 %2139
    %2141 = vrot.lane.b32.xlu0 %v1962, 5
    %v2142 = vpop.permute.xlu0 %2141
    %2143 = vrot.lane.b32.xlu0 %v1963, 5
    %v2144 = vpop.permute.xlu0 %2143
    %2145 = vrot.lane.b32.xlu0 %v1964, 5
    %v2146 = vpop.permute.xlu0 %2145
    %2147 = vrot.lane.b32.xlu0 %v1965, 5
    %v2148 = vpop.permute.xlu0 %2147
    %2149 = vrot.lane.b32.xlu0 %v1966, 5
    %v2150 = vpop.permute.xlu0 %2149
    %2151 = vrot.lane.b32.xlu0 %v1967, 5
    %v2152 = vpop.permute.xlu0 %2151
    %2153 = vrot.lane.b32.xlu0 %v1968, 5
    %v2154 = vpop.permute.xlu0 %2153
    %2155 = vrot.lane.b32.xlu0 %v1969, 5
    %v2156 = vpop.permute.xlu0 %2155
    %2157 = vrot.lane.b32.xlu0 %v1970, 5
    %v2158 = vpop.permute.xlu0 %2157
    %2159 = vrot.lane.b32.xlu0 %v1971, 5
    %v2160 = vpop.permute.xlu0 %2159
    %2161 = vrot.lane.b32.xlu0 %v1972, 5
    %v2162 = vpop.permute.xlu0 %2161
    %2163 = vrot.lane.b32.xlu0 %v1973, 5
    %v2164 = vpop.permute.xlu0 %2163
    %2165 = vrot.lane.b32.xlu0 %v1974, 5
    %v2166 = vpop.permute.xlu0 %2165
    %vm2231 = vcmask 48168
    %2232 = vst.msk [vmem:[#allocation2] sm:$0xff] %vm2231, %v2040
    %2233 = vst.msk [vmem:[#allocation2 + $0x8] sm:$0xff] %vm2231, %v2042
    %2234 = vst.msk [vmem:[#allocation2 + $0x10] sm:$0xff] %vm2231, %v2044
    %2235 = vst.msk [vmem:[#allocation2 + $0x18] sm:$0xff] %vm2231, %v2046
    %2236 = vst.msk [vmem:[#allocation2 + $0x20] sm:$0xff] %vm2231, %v2048
    %2237 = vst.msk [vmem:[#allocation2 + $0x28] sm:$0xff] %vm2231, %v2050
    %2238 = vst.msk [vmem:[#allocation2 + $0x30] sm:$0xff] %vm2231, %v2052
    %2239 = vst.msk [vmem:[#allocation2 + $0x38] sm:$0xff] %vm2231, %v2054
    %2240 = vst.msk [vmem:[#allocation2 + $0x40] sm:$0xff] %vm2231, %v2056
    %2241 = vst.msk [vmem:[#allocation2 + $0x48] sm:$0xff] %vm2231, %v2058
    %2242 = vst.msk [vmem:[#allocation2 + $0x50] sm:$0xff] %vm2231, %v2060
    %2243 = vst.msk [vmem:[#allocation2 + $0x58] sm:$0xff] %vm2231, %v2062
    %2244 = vst.msk [vmem:[#allocation2 + $0x60] sm:$0xff] %vm2231, %v2064
    %2245 = vst.msk [vmem:[#allocation2 + $0x68] sm:$0xff] %vm2231, %v2066
    %2246 = vst.msk [vmem:[#allocation2 + $0x70] sm:$0xff] %vm2231, %v2068
    %2247 = vst.msk [vmem:[#allocation2 + $0x78] sm:$0xff] %vm2231, %v2070
    %2248 = vst.msk [vmem:[#allocation2 + $0x80] sm:$0xff] %vm2231, %v2072
    %2249 = vst.msk [vmem:[#allocation2 + $0x88] sm:$0xff] %vm2231, %v2074
    %2250 = vst.msk [vmem:[#allocation2 + $0x90] sm:$0xff] %vm2231, %v2076
    %2251 = vst.msk [vmem:[#allocation2 + $0x98] sm:$0xff] %vm2231, %v2078
    %2252 = vst.msk [vmem:[#allocation2 + $0xa0] sm:$0xff] %vm2231, %v2080
    %2253 = vst.msk [vmem:[#allocation2 + $0xa8] sm:$0xff] %vm2231, %v2082
    %2254 = vst.msk [vmem:[#allocation2 + $0xb0] sm:$0xff] %vm2231, %v2084
    %2255 = vst.msk [vmem:[#allocation2 + $0xb8] sm:$0xff] %vm2231, %v2086
    %2256 = vst.msk [vmem:[#allocation2 + $0xc0] sm:$0xff] %vm2231, %v2088
    %2257 = vst.msk [vmem:[#allocation2 + $0xc8] sm:$0xff] %vm2231, %v2090
    %2258 = vst.msk [vmem:[#allocation2 + $0xd0] sm:$0xff] %vm2231, %v2092
    %2259 = vst.msk [vmem:[#allocation2 + $0xd8] sm:$0xff] %vm2231, %v2094
    %2260 = vst.msk [vmem:[#allocation2 + $0xe0] sm:$0xff] %vm2231, %v2096
    %2261 = vst.msk [vmem:[#allocation2 + $0xe8] sm:$0xff] %vm2231, %v2098
    %2262 = vst.msk [vmem:[#allocation2 + $0xf0] sm:$0xff] %vm2231, %v2100
    %2263 = vst.msk [vmem:[#allocation2 + $0xf8] sm:$0xff] %vm2231, %v2102
    %2264 = vst.msk [vmem:[#allocation2 + $0x100] sm:$0xff] %vm2231, %v2104
    %2265 = vst.msk [vmem:[#allocation2 + $0x108] sm:$0xff] %vm2231, %v2106
    %2266 = vst.msk [vmem:[#allocation2 + $0x110] sm:$0xff] %vm2231, %v2108
    %2267 = vst.msk [vmem:[#allocation2 + $0x118] sm:$0xff] %vm2231, %v2110
    %2268 = vst.msk [vmem:[#allocation2 + $0x120] sm:$0xff] %vm2231, %v2112
    %2269 = vst.msk [vmem:[#allocation2 + $0x128] sm:$0xff] %vm2231, %v2114
    %2270 = vst.msk [vmem:[#allocation2 + $0x130] sm:$0xff] %vm2231, %v2116
    %2271 = vst.msk [vmem:[#allocation2 + $0x138] sm:$0xff] %vm2231, %v2118
    %2272 = vst.msk [vmem:[#allocation2 + $0x140] sm:$0xff] %vm2231, %v2120
    %2273 = vst.msk [vmem:[#allocation2 + $0x148] sm:$0xff] %vm2231, %v2122
    %2274 = vst.msk [vmem:[#allocation2 + $0x150] sm:$0xff] %vm2231, %v2124
    %2275 = vst.msk [vmem:[#allocation2 + $0x158] sm:$0xff] %vm2231, %v2126
    %2276 = vst.msk [vmem:[#allocation2 + $0x160] sm:$0xff] %vm2231, %v2128
    %2277 = vst.msk [vmem:[#allocation2 + $0x168] sm:$0xff] %vm2231, %v2130
    %2278 = vst.msk [vmem:[#allocation2 + $0x170] sm:$0xff] %vm2231, %v2132
    %2279 = vst.msk [vmem:[#allocation2 + $0x178] sm:$0xff] %vm2231, %v2134
    %2280 = vst.msk [vmem:[#allocation2 + $0x180] sm:$0xff] %vm2231, %v2136
    %2281 = vst.msk [vmem:[#allocation2 + $0x188] sm:$0xff] %vm2231, %v2138
    %2282 = vst.msk [vmem:[#allocation2 + $0x190] sm:$0xff] %vm2231, %v2140
    %2283 = vst.msk [vmem:[#allocation2 + $0x198] sm:$0xff] %vm2231, %v2142
    %2284 = vst.msk [vmem:[#allocation2 + $0x1a0] sm:$0xff] %vm2231, %v2144
    %2285 = vst.msk [vmem:[#allocation2 + $0x1a8] sm:$0xff] %vm2231, %v2146
    %2286 = vst.msk [vmem:[#allocation2 + $0x1b0] sm:$0xff] %vm2231, %v2148
    %2287 = vst.msk [vmem:[#allocation2 + $0x1b8] sm:$0xff] %vm2231, %v2150
    %2288 = vst.msk [vmem:[#allocation2 + $0x1c0] sm:$0xff] %vm2231, %v2152
    %2289 = vst.msk [vmem:[#allocation2 + $0x1c8] sm:$0xff] %vm2231, %v2154
    %2290 = vst.msk [vmem:[#allocation2 + $0x1d0] sm:$0xff] %vm2231, %v2156
    %2291 = vst.msk [vmem:[#allocation2 + $0x1d8] sm:$0xff] %vm2231, %v2158
    %2292 = vst.msk [vmem:[#allocation2 + $0x1e0] sm:$0xff] %vm2231, %v2160
    %2293 = vst.msk [vmem:[#allocation2 + $0x1e8] sm:$0xff] %vm2231, %v2162
    %2294 = vst.msk [vmem:[#allocation2 + $0x1f0] sm:$0xff] %vm2231, %v2164
    %2295 = vst.msk [vmem:[#allocation2 + $0x1f8] sm:$0xff] %vm2231, %v2166
    %v2296 = vld [vmem:[#allocation9 + $0x27] sm:$0xff]
    %v2297 = vld [vmem:[#allocation9 + $0x2f] sm:$0xff]
    %v2298 = vld [vmem:[#allocation9 + $0x37] sm:$0xff]
    %v2299 = vld [vmem:[#allocation9 + $0x3f] sm:$0xff]
    %v2300 = vld [vmem:[#allocation9 + $0x47] sm:$0xff]
    %v2301 = vld [vmem:[#allocation9 + $0x4f] sm:$0xff]
    %v2302 = vld [vmem:[#allocation9 + $0x57] sm:$0xff]
    %v2303 = vld [vmem:[#allocation9 + $0x5f] sm:$0xff]
    %v2304 = vld [vmem:[#allocation9 + $0x67] sm:$0xff]
    %v2305 = vld [vmem:[#allocation9 + $0x6f] sm:$0xff]
    %v2306 = vld [vmem:[#allocation9 + $0x77] sm:$0xff]
    %v2307 = vld [vmem:[#allocation9 + $0x7f] sm:$0xff]
    %v2308 = vld [vmem:[#allocation9 + $0x87] sm:$0xff]
    %v2309 = vld [vmem:[#allocation9 + $0x8f] sm:$0xff]
    %v2310 = vld [vmem:[#allocation9 + $0x97] sm:$0xff]
    %v2311 = vld [vmem:[#allocation9 + $0x9f] sm:$0xff]
    %v2312 = vld [vmem:[#allocation9 + $0xa7] sm:$0xff]
    %v2313 = vld [vmem:[#allocation9 + $0xaf] sm:$0xff]
    %v2314 = vld [vmem:[#allocation9 + $0xb7] sm:$0xff]
    %v2315 = vld [vmem:[#allocation9 + $0xbf] sm:$0xff]
    %v2316 = vld [vmem:[#allocation9 + $0xc7] sm:$0xff]
    %v2317 = vld [vmem:[#allocation9 + $0xcf] sm:$0xff]
    %v2318 = vld [vmem:[#allocation9 + $0xd7] sm:$0xff]
    %v2319 = vld [vmem:[#allocation9 + $0xdf] sm:$0xff]
    %v2320 = vld [vmem:[#allocation9 + $0xe7] sm:$0xff]
    %v2321 = vld [vmem:[#allocation9 + $0xef] sm:$0xff]
    %v2322 = vld [vmem:[#allocation9 + $0xf7] sm:$0xff]
    %v2323 = vld [vmem:[#allocation9 + $0xff] sm:$0xff]
    %v2324 = vld [vmem:[#allocation9 + $0x107] sm:$0xff]
    %v2325 = vld [vmem:[#allocation9 + $0x10f] sm:$0xff]
    %v2326 = vld [vmem:[#allocation9 + $0x117] sm:$0xff]
    %v2327 = vld [vmem:[#allocation9 + $0x11f] sm:$0xff]
    %v2328 = vld [vmem:[#allocation9 + $0x127] sm:$0xff]
    %v2329 = vld [vmem:[#allocation9 + $0x12f] sm:$0xff]
    %v2330 = vld [vmem:[#allocation9 + $0x137] sm:$0xff]
    %v2331 = vld [vmem:[#allocation9 + $0x13f] sm:$0xff]
    %v2332 = vld [vmem:[#allocation9 + $0x147] sm:$0xff]
    %v2333 = vld [vmem:[#allocation9 + $0x14f] sm:$0xff]
    %v2334 = vld [vmem:[#allocation9 + $0x157] sm:$0xff]
    %v2335 = vld [vmem:[#allocation9 + $0x15f] sm:$0xff]
    %v2336 = vld [vmem:[#allocation9 + $0x167] sm:$0xff]
    %v2337 = vld [vmem:[#allocation9 + $0x16f] sm:$0xff]
    %v2338 = vld [vmem:[#allocation9 + $0x177] sm:$0xff]
    %v2339 = vld [vmem:[#allocation9 + $0x17f] sm:$0xff]
    %v2340 = vld [vmem:[#allocation9 + $0x187] sm:$0xff]
    %v2341 = vld [vmem:[#allocation9 + $0x18f] sm:$0xff]
    %v2342 = vld [vmem:[#allocation9 + $0x197] sm:$0xff]
    %v2343 = vld [vmem:[#allocation9 + $0x19f] sm:$0xff]
    %v2344 = vld [vmem:[#allocation9 + $0x1a7] sm:$0xff]
    %v2345 = vld [vmem:[#allocation9 + $0x1af] sm:$0xff]
    %v2346 = vld [vmem:[#allocation9 + $0x1b7] sm:$0xff]
    %v2347 = vld [vmem:[#allocation9 + $0x1bf] sm:$0xff]
    %v2348 = vld [vmem:[#allocation9 + $0x1c7] sm:$0xff]
    %v2349 = vld [vmem:[#allocation9 + $0x1cf] sm:$0xff]
    %v2350 = vld [vmem:[#allocation9 + $0x1d7] sm:$0xff]
    %v2351 = vld [vmem:[#allocation9 + $0x1df] sm:$0xff]
    %v2352 = vld [vmem:[#allocation9 + $0x1e7] sm:$0xff]
    %v2353 = vld [vmem:[#allocation9 + $0x1ef] sm:$0xff]
    %v2354 = vld [vmem:[#allocation9 + $0x1f7] sm:$0xff]
    %v2355 = vld [vmem:[#allocation9 + $0x1ff] sm:$0xff]
    %v2356 = vld [vmem:[#allocation9 + $0x207] sm:$0xff]
    %v2357 = vld [vmem:[#allocation9 + $0x20f] sm:$0xff]
    %v2358 = vld [vmem:[#allocation9 + $0x217] sm:$0xff]
    %v2359 = vld [vmem:[#allocation9 + $0x21f] sm:$0xff]
    %2424 = vrot.lane.b32.xlu0 %v2296, 6
    %v2425 = vpop.permute.xlu0 %2424
    %2426 = vrot.lane.b32.xlu0 %v2297, 6
    %v2427 = vpop.permute.xlu0 %2426
    %2428 = vrot.lane.b32.xlu0 %v2298, 6
    %v2429 = vpop.permute.xlu0 %2428
    %2430 = vrot.lane.b32.xlu0 %v2299, 6
    %v2431 = vpop.permute.xlu0 %2430
    %2432 = vrot.lane.b32.xlu0 %v2300, 6
    %v2433 = vpop.permute.xlu0 %2432
    %2434 = vrot.lane.b32.xlu0 %v2301, 6
    %v2435 = vpop.permute.xlu0 %2434
    %2436 = vrot.lane.b32.xlu0 %v2302, 6
    %v2437 = vpop.permute.xlu0 %2436
    %2438 = vrot.lane.b32.xlu0 %v2303, 6
    %v2439 = vpop.permute.xlu0 %2438
    %2440 = vrot.lane.b32.xlu0 %v2304, 6
    %v2441 = vpop.permute.xlu0 %2440
    %2442 = vrot.lane.b32.xlu0 %v2305, 6
    %v2443 = vpop.permute.xlu0 %2442
    %2444 = vrot.lane.b32.xlu0 %v2306, 6
    %v2445 = vpop.permute.xlu0 %2444
    %2446 = vrot.lane.b32.xlu0 %v2307, 6
    %v2447 = vpop.permute.xlu0 %2446
    %2448 = vrot.lane.b32.xlu0 %v2308, 6
    %v2449 = vpop.permute.xlu0 %2448
    %2450 = vrot.lane.b32.xlu0 %v2309, 6
    %v2451 = vpop.permute.xlu0 %2450
    %2452 = vrot.lane.b32.xlu0 %v2310, 6
    %v2453 = vpop.permute.xlu0 %2452
    %2454 = vrot.lane.b32.xlu0 %v2311, 6
    %v2455 = vpop.permute.xlu0 %2454
    %2456 = vrot.lane.b32.xlu0 %v2312, 6
    %v2457 = vpop.permute.xlu0 %2456
    %2458 = vrot.lane.b32.xlu0 %v2313, 6
    %v2459 = vpop.permute.xlu0 %2458
    %2460 = vrot.lane.b32.xlu0 %v2314, 6
    %v2461 = vpop.permute.xlu0 %2460
    %2462 = vrot.lane.b32.xlu0 %v2315, 6
    %v2463 = vpop.permute.xlu0 %2462
    %2464 = vrot.lane.b32.xlu0 %v2316, 6
    %v2465 = vpop.permute.xlu0 %2464
    %2466 = vrot.lane.b32.xlu0 %v2317, 6
    %v2467 = vpop.permute.xlu0 %2466
    %2468 = vrot.lane.b32.xlu0 %v2318, 6
    %v2469 = vpop.permute.xlu0 %2468
    %2470 = vrot.lane.b32.xlu0 %v2319, 6
    %v2471 = vpop.permute.xlu0 %2470
    %2472 = vrot.lane.b32.xlu0 %v2320, 6
    %v2473 = vpop.permute.xlu0 %2472
    %2474 = vrot.lane.b32.xlu0 %v2321, 6
    %v2475 = vpop.permute.xlu0 %2474
    %2476 = vrot.lane.b32.xlu0 %v2322, 6
    %v2477 = vpop.permute.xlu0 %2476
    %2478 = vrot.lane.b32.xlu0 %v2323, 6
    %v2479 = vpop.permute.xlu0 %2478
    %2480 = vrot.lane.b32.xlu0 %v2324, 6
    %v2481 = vpop.permute.xlu0 %2480
    %2482 = vrot.lane.b32.xlu0 %v2325, 6
    %v2483 = vpop.permute.xlu0 %2482
    %2484 = vrot.lane.b32.xlu0 %v2326, 6
    %v2485 = vpop.permute.xlu0 %2484
    %2486 = vrot.lane.b32.xlu0 %v2327, 6
    %v2487 = vpop.permute.xlu0 %2486
    %2488 = vrot.lane.b32.xlu0 %v2328, 6
    %v2489 = vpop.permute.xlu0 %2488
    %2490 = vrot.lane.b32.xlu0 %v2329, 6
    %v2491 = vpop.permute.xlu0 %2490
    %2492 = vrot.lane.b32.xlu0 %v2330, 6
    %v2493 = vpop.permute.xlu0 %2492
    %2494 = vrot.lane.b32.xlu0 %v2331, 6
    %v2495 = vpop.permute.xlu0 %2494
    %2496 = vrot.lane.b32.xlu0 %v2332, 6
    %v2497 = vpop.permute.xlu0 %2496
    %2498 = vrot.lane.b32.xlu0 %v2333, 6
    %v2499 = vpop.permute.xlu0 %2498
    %2500 = vrot.lane.b32.xlu0 %v2334, 6
    %v2501 = vpop.permute.xlu0 %2500
    %2502 = vrot.lane.b32.xlu0 %v2335, 6
    %v2503 = vpop.permute.xlu0 %2502
    %2504 = vrot.lane.b32.xlu0 %v2336, 6
    %v2505 = vpop.permute.xlu0 %2504
    %2506 = vrot.lane.b32.xlu0 %v2337, 6
    %v2507 = vpop.permute.xlu0 %2506
    %2508 = vrot.lane.b32.xlu0 %v2338, 6
    %v2509 = vpop.permute.xlu0 %2508
    %2510 = vrot.lane.b32.xlu0 %v2339, 6
    %v2511 = vpop.permute.xlu0 %2510
    %2512 = vrot.lane.b32.xlu0 %v2340, 6
    %v2513 = vpop.permute.xlu0 %2512
    %2514 = vrot.lane.b32.xlu0 %v2341, 6
    %v2515 = vpop.permute.xlu0 %2514
    %2516 = vrot.lane.b32.xlu0 %v2342, 6
    %v2517 = vpop.permute.xlu0 %2516
    %2518 = vrot.lane.b32.xlu0 %v2343, 6
    %v2519 = vpop.permute.xlu0 %2518
    %2520 = vrot.lane.b32.xlu0 %v2344, 6
    %v2521 = vpop.permute.xlu0 %2520
    %2522 = vrot.lane.b32.xlu0 %v2345, 6
    %v2523 = vpop.permute.xlu0 %2522
    %2524 = vrot.lane.b32.xlu0 %v2346, 6
    %v2525 = vpop.permute.xlu0 %2524
    %2526 = vrot.lane.b32.xlu0 %v2347, 6
    %v2527 = vpop.permute.xlu0 %2526
    %2528 = vrot.lane.b32.xlu0 %v2348, 6
    %v2529 = vpop.permute.xlu0 %2528
    %2530 = vrot.lane.b32.xlu0 %v2349, 6
    %v2531 = vpop.permute.xlu0 %2530
    %2532 = vrot.lane.b32.xlu0 %v2350, 6
    %v2533 = vpop.permute.xlu0 %2532
    %2534 = vrot.lane.b32.xlu0 %v2351, 6
    %v2535 = vpop.permute.xlu0 %2534
    %2536 = vrot.lane.b32.xlu0 %v2352, 6
    %v2537 = vpop.permute.xlu0 %2536
    %2538 = vrot.lane.b32.xlu0 %v2353, 6
    %v2539 = vpop.permute.xlu0 %2538
    %2540 = vrot.lane.b32.xlu0 %v2354, 6
    %v2541 = vpop.permute.xlu0 %2540
    %2542 = vrot.lane.b32.xlu0 %v2355, 6
    %v2543 = vpop.permute.xlu0 %2542
    %2544 = vrot.lane.b32.xlu0 %v2356, 6
    %v2545 = vpop.permute.xlu0 %2544
    %2546 = vrot.lane.b32.xlu0 %v2357, 6
    %v2547 = vpop.permute.xlu0 %2546
    %2548 = vrot.lane.b32.xlu0 %v2358, 6
    %v2549 = vpop.permute.xlu0 %2548
    %2550 = vrot.lane.b32.xlu0 %v2359, 6
    %v2551 = vpop.permute.xlu0 %2550
    %vm2616 = vcmask 56368
    %2617 = vst.msk [vmem:[#allocation2] sm:$0xff] %vm2616, %v2425
    %2618 = vst.msk [vmem:[#allocation2 + $0x8] sm:$0xff] %vm2616, %v2427
    %2619 = vst.msk [vmem:[#allocation2 + $0x10] sm:$0xff] %vm2616, %v2429
    %2620 = vst.msk [vmem:[#allocation2 + $0x18] sm:$0xff] %vm2616, %v2431
    %2621 = vst.msk [vmem:[#allocation2 + $0x20] sm:$0xff] %vm2616, %v2433
    %2622 = vst.msk [vmem:[#allocation2 + $0x28] sm:$0xff] %vm2616, %v2435
    %2623 = vst.msk [vmem:[#allocation2 + $0x30] sm:$0xff] %vm2616, %v2437
    %2624 = vst.msk [vmem:[#allocation2 + $0x38] sm:$0xff] %vm2616, %v2439
    %2625 = vst.msk [vmem:[#allocation2 + $0x40] sm:$0xff] %vm2616, %v2441
    %2626 = vst.msk [vmem:[#allocation2 + $0x48] sm:$0xff] %vm2616, %v2443
    %2627 = vst.msk [vmem:[#allocation2 + $0x50] sm:$0xff] %vm2616, %v2445
    %2628 = vst.msk [vmem:[#allocation2 + $0x58] sm:$0xff] %vm2616, %v2447
    %2629 = vst.msk [vmem:[#allocation2 + $0x60] sm:$0xff] %vm2616, %v2449
    %2630 = vst.msk [vmem:[#allocation2 + $0x68] sm:$0xff] %vm2616, %v2451
    %2631 = vst.msk [vmem:[#allocation2 + $0x70] sm:$0xff] %vm2616, %v2453
    %2632 = vst.msk [vmem:[#allocation2 + $0x78] sm:$0xff] %vm2616, %v2455
    %2633 = vst.msk [vmem:[#allocation2 + $0x80] sm:$0xff] %vm2616, %v2457
    %2634 = vst.msk [vmem:[#allocation2 + $0x88] sm:$0xff] %vm2616, %v2459
    %2635 = vst.msk [vmem:[#allocation2 + $0x90] sm:$0xff] %vm2616, %v2461
    %2636 = vst.msk [vmem:[#allocation2 + $0x98] sm:$0xff] %vm2616, %v2463
    %2637 = vst.msk [vmem:[#allocation2 + $0xa0] sm:$0xff] %vm2616, %v2465
    %2638 = vst.msk [vmem:[#allocation2 + $0xa8] sm:$0xff] %vm2616, %v2467
    %2639 = vst.msk [vmem:[#allocation2 + $0xb0] sm:$0xff] %vm2616, %v2469
    %2640 = vst.msk [vmem:[#allocation2 + $0xb8] sm:$0xff] %vm2616, %v2471
    %2641 = vst.msk [vmem:[#allocation2 + $0xc0] sm:$0xff] %vm2616, %v2473
    %2642 = vst.msk [vmem:[#allocation2 + $0xc8] sm:$0xff] %vm2616, %v2475
    %2643 = vst.msk [vmem:[#allocation2 + $0xd0] sm:$0xff] %vm2616, %v2477
    %2644 = vst.msk [vmem:[#allocation2 + $0xd8] sm:$0xff] %vm2616, %v2479
    %2645 = vst.msk [vmem:[#allocation2 + $0xe0] sm:$0xff] %vm2616, %v2481
    %2646 = vst.msk [vmem:[#allocation2 + $0xe8] sm:$0xff] %vm2616, %v2483
    %2647 = vst.msk [vmem:[#allocation2 + $0xf0] sm:$0xff] %vm2616, %v2485
    %2648 = vst.msk [vmem:[#allocation2 + $0xf8] sm:$0xff] %vm2616, %v2487
    %2649 = vst.msk [vmem:[#allocation2 + $0x100] sm:$0xff] %vm2616, %v2489
    %2650 = vst.msk [vmem:[#allocation2 + $0x108] sm:$0xff] %vm2616, %v2491
    %2651 = vst.msk [vmem:[#allocation2 + $0x110] sm:$0xff] %vm2616, %v2493
    %2652 = vst.msk [vmem:[#allocation2 + $0x118] sm:$0xff] %vm2616, %v2495
    %2653 = vst.msk [vmem:[#allocation2 + $0x120] sm:$0xff] %vm2616, %v2497
    %2654 = vst.msk [vmem:[#allocation2 + $0x128] sm:$0xff] %vm2616, %v2499
    %2655 = vst.msk [vmem:[#allocation2 + $0x130] sm:$0xff] %vm2616, %v2501
    %2656 = vst.msk [vmem:[#allocation2 + $0x138] sm:$0xff] %vm2616, %v2503
    %2657 = vst.msk [vmem:[#allocation2 + $0x140] sm:$0xff] %vm2616, %v2505
    %2658 = vst.msk [vmem:[#allocation2 + $0x148] sm:$0xff] %vm2616, %v2507
    %2659 = vst.msk [vmem:[#allocation2 + $0x150] sm:$0xff] %vm2616, %v2509
    %2660 = vst.msk [vmem:[#allocation2 + $0x158] sm:$0xff] %vm2616, %v2511
    %2661 = vst.msk [vmem:[#allocation2 + $0x160] sm:$0xff] %vm2616, %v2513
    %2662 = vst.msk [vmem:[#allocation2 + $0x168] sm:$0xff] %vm2616, %v2515
    %2663 = vst.msk [vmem:[#allocation2 + $0x170] sm:$0xff] %vm2616, %v2517
    %2664 = vst.msk [vmem:[#allocation2 + $0x178] sm:$0xff] %vm2616, %v2519
    %2665 = vst.msk [vmem:[#allocation2 + $0x180] sm:$0xff] %vm2616, %v2521
    %2666 = vst.msk [vmem:[#allocation2 + $0x188] sm:$0xff] %vm2616, %v2523
    %2667 = vst.msk [vmem:[#allocation2 + $0x190] sm:$0xff] %vm2616, %v2525
    %2668 = vst.msk [vmem:[#allocation2 + $0x198] sm:$0xff] %vm2616, %v2527
    %2669 = vst.msk [vmem:[#allocation2 + $0x1a0] sm:$0xff] %vm2616, %v2529
    %2670 = vst.msk [vmem:[#allocation2 + $0x1a8] sm:$0xff] %vm2616, %v2531
    %2671 = vst.msk [vmem:[#allocation2 + $0x1b0] sm:$0xff] %vm2616, %v2533
    %2672 = vst.msk [vmem:[#allocation2 + $0x1b8] sm:$0xff] %vm2616, %v2535
    %2673 = vst.msk [vmem:[#allocation2 + $0x1c0] sm:$0xff] %vm2616, %v2537
    %2674 = vst.msk [vmem:[#allocation2 + $0x1c8] sm:$0xff] %vm2616, %v2539
    %2675 = vst.msk [vmem:[#allocation2 + $0x1d0] sm:$0xff] %vm2616, %v2541
    %2676 = vst.msk [vmem:[#allocation2 + $0x1d8] sm:$0xff] %vm2616, %v2543
    %2677 = vst.msk [vmem:[#allocation2 + $0x1e0] sm:$0xff] %vm2616, %v2545
    %2678 = vst.msk [vmem:[#allocation2 + $0x1e8] sm:$0xff] %vm2616, %v2547
    %2679 = vst.msk [vmem:[#allocation2 + $0x1f0] sm:$0xff] %vm2616, %v2549
    %2680 = vst.msk [vmem:[#allocation2 + $0x1f8] sm:$0xff] %vm2616, %v2551
    %v2681 = vld [vmem:[#allocation9 + $0x28] sm:$0xff]
    %v2682 = vld [vmem:[#allocation9 + $0x30] sm:$0xff]
    %v2683 = vld [vmem:[#allocation9 + $0x38] sm:$0xff]
    %v2684 = vld [vmem:[#allocation9 + $0x40] sm:$0xff]
    %v2685 = vld [vmem:[#allocation9 + $0x48] sm:$0xff]
    %v2686 = vld [vmem:[#allocation9 + $0x50] sm:$0xff]
    %v2687 = vld [vmem:[#allocation9 + $0x58] sm:$0xff]
    %v2688 = vld [vmem:[#allocation9 + $0x60] sm:$0xff]
    %v2689 = vld [vmem:[#allocation9 + $0x68] sm:$0xff]
    %v2690 = vld [vmem:[#allocation9 + $0x70] sm:$0xff]
    %v2691 = vld [vmem:[#allocation9 + $0x78] sm:$0xff]
    %v2692 = vld [vmem:[#allocation9 + $0x80] sm:$0xff]
    %v2693 = vld [vmem:[#allocation9 + $0x88] sm:$0xff]
    %v2694 = vld [vmem:[#allocation9 + $0x90] sm:$0xff]
    %v2695 = vld [vmem:[#allocation9 + $0x98] sm:$0xff]
    %v2696 = vld [vmem:[#allocation9 + $0xa0] sm:$0xff]
    %v2697 = vld [vmem:[#allocation9 + $0xa8] sm:$0xff]
    %v2698 = vld [vmem:[#allocation9 + $0xb0] sm:$0xff]
    %v2699 = vld [vmem:[#allocation9 + $0xb8] sm:$0xff]
    %v2700 = vld [vmem:[#allocation9 + $0xc0] sm:$0xff]
    %v2701 = vld [vmem:[#allocation9 + $0xc8] sm:$0xff]
    %v2702 = vld [vmem:[#allocation9 + $0xd0] sm:$0xff]
    %v2703 = vld [vmem:[#allocation9 + $0xd8] sm:$0xff]
    %v2704 = vld [vmem:[#allocation9 + $0xe0] sm:$0xff]
    %v2705 = vld [vmem:[#allocation9 + $0xe8] sm:$0xff]
    %v2706 = vld [vmem:[#allocation9 + $0xf0] sm:$0xff]
    %v2707 = vld [vmem:[#allocation9 + $0xf8] sm:$0xff]
    %v2708 = vld [vmem:[#allocation9 + $0x100] sm:$0xff]
    %v2709 = vld [vmem:[#allocation9 + $0x108] sm:$0xff]
    %v2710 = vld [vmem:[#allocation9 + $0x110] sm:$0xff]
    %v2711 = vld [vmem:[#allocation9 + $0x118] sm:$0xff]
    %v2712 = vld [vmem:[#allocation9 + $0x120] sm:$0xff]
    %v2713 = vld [vmem:[#allocation9 + $0x128] sm:$0xff]
    %v2714 = vld [vmem:[#allocation9 + $0x130] sm:$0xff]
    %v2715 = vld [vmem:[#allocation9 + $0x138] sm:$0xff]
    %v2716 = vld [vmem:[#allocation9 + $0x140] sm:$0xff]
    %v2717 = vld [vmem:[#allocation9 + $0x148] sm:$0xff]
    %v2718 = vld [vmem:[#allocation9 + $0x150] sm:$0xff]
    %v2719 = vld [vmem:[#allocation9 + $0x158] sm:$0xff]
    %v2720 = vld [vmem:[#allocation9 + $0x160] sm:$0xff]
    %v2721 = vld [vmem:[#allocation9 + $0x168] sm:$0xff]
    %v2722 = vld [vmem:[#allocation9 + $0x170] sm:$0xff]
    %v2723 = vld [vmem:[#allocation9 + $0x178] sm:$0xff]
    %v2724 = vld [vmem:[#allocation9 + $0x180] sm:$0xff]
    %v2725 = vld [vmem:[#allocation9 + $0x188] sm:$0xff]
    %v2726 = vld [vmem:[#allocation9 + $0x190] sm:$0xff]
    %v2727 = vld [vmem:[#allocation9 + $0x198] sm:$0xff]
    %v2728 = vld [vmem:[#allocation9 + $0x1a0] sm:$0xff]
    %v2729 = vld [vmem:[#allocation9 + $0x1a8] sm:$0xff]
    %v2730 = vld [vmem:[#allocation9 + $0x1b0] sm:$0xff]
    %v2731 = vld [vmem:[#allocation9 + $0x1b8] sm:$0xff]
    %v2732 = vld [vmem:[#allocation9 + $0x1c0] sm:$0xff]
    %v2733 = vld [vmem:[#allocation9 + $0x1c8] sm:$0xff]
    %v2734 = vld [vmem:[#allocation9 + $0x1d0] sm:$0xff]
    %v2735 = vld [vmem:[#allocation9 + $0x1d8] sm:$0xff]
    %v2736 = vld [vmem:[#allocation9 + $0x1e0] sm:$0xff]
    %v2737 = vld [vmem:[#allocation9 + $0x1e8] sm:$0xff]
    %v2738 = vld [vmem:[#allocation9 + $0x1f0] sm:$0xff]
    %v2739 = vld [vmem:[#allocation9 + $0x1f8] sm:$0xff]
    %v2740 = vld [vmem:[#allocation9 + $0x200] sm:$0xff]
    %v2741 = vld [vmem:[#allocation9 + $0x208] sm:$0xff]
    %v2742 = vld [vmem:[#allocation9 + $0x210] sm:$0xff]
    %v2743 = vld [vmem:[#allocation9 + $0x218] sm:$0xff]
    %v2744 = vld [vmem:[#allocation9 + $0x220] sm:$0xff]
    %2809 = vrot.lane.b32.xlu0 %v2681, 7
    %v2810 = vpop.permute.xlu0 %2809
    %2811 = vrot.lane.b32.xlu0 %v2682, 7
    %v2812 = vpop.permute.xlu0 %2811
    %2813 = vrot.lane.b32.xlu0 %v2683, 7
    %v2814 = vpop.permute.xlu0 %2813
    %2815 = vrot.lane.b32.xlu0 %v2684, 7
    %v2816 = vpop.permute.xlu0 %2815
    %2817 = vrot.lane.b32.xlu0 %v2685, 7
    %v2818 = vpop.permute.xlu0 %2817
    %2819 = vrot.lane.b32.xlu0 %v2686, 7
    %v2820 = vpop.permute.xlu0 %2819
    %2821 = vrot.lane.b32.xlu0 %v2687, 7
    %v2822 = vpop.permute.xlu0 %2821
    %2823 = vrot.lane.b32.xlu0 %v2688, 7
    %v2824 = vpop.permute.xlu0 %2823
    %2825 = vrot.lane.b32.xlu0 %v2689, 7
    %v2826 = vpop.permute.xlu0 %2825
    %2827 = vrot.lane.b32.xlu0 %v2690, 7
    %v2828 = vpop.permute.xlu0 %2827
    %2829 = vrot.lane.b32.xlu0 %v2691, 7
    %v2830 = vpop.permute.xlu0 %2829
    %2831 = vrot.lane.b32.xlu0 %v2692, 7
    %v2832 = vpop.permute.xlu0 %2831
    %2833 = vrot.lane.b32.xlu0 %v2693, 7
    %v2834 = vpop.permute.xlu0 %2833
    %2835 = vrot.lane.b32.xlu0 %v2694, 7
    %v2836 = vpop.permute.xlu0 %2835
    %2837 = vrot.lane.b32.xlu0 %v2695, 7
    %v2838 = vpop.permute.xlu0 %2837
    %2839 = vrot.lane.b32.xlu0 %v2696, 7
    %v2840 = vpop.permute.xlu0 %2839
    %2841 = vrot.lane.b32.xlu0 %v2697, 7
    %v2842 = vpop.permute.xlu0 %2841
    %2843 = vrot.lane.b32.xlu0 %v2698, 7
    %v2844 = vpop.permute.xlu0 %2843
    %2845 = vrot.lane.b32.xlu0 %v2699, 7
    %v2846 = vpop.permute.xlu0 %2845
    %2847 = vrot.lane.b32.xlu0 %v2700, 7
    %v2848 = vpop.permute.xlu0 %2847
    %2849 = vrot.lane.b32.xlu0 %v2701, 7
    %v2850 = vpop.permute.xlu0 %2849
    %2851 = vrot.lane.b32.xlu0 %v2702, 7
    %v2852 = vpop.permute.xlu0 %2851
    %2853 = vrot.lane.b32.xlu0 %v2703, 7
    %v2854 = vpop.permute.xlu0 %2853
    %2855 = vrot.lane.b32.xlu0 %v2704, 7
    %v2856 = vpop.permute.xlu0 %2855
    %2857 = vrot.lane.b32.xlu0 %v2705, 7
    %v2858 = vpop.permute.xlu0 %2857
    %2859 = vrot.lane.b32.xlu0 %v2706, 7
    %v2860 = vpop.permute.xlu0 %2859
    %2861 = vrot.lane.b32.xlu0 %v2707, 7
    %v2862 = vpop.permute.xlu0 %2861
    %2863 = vrot.lane.b32.xlu0 %v2708, 7
    %v2864 = vpop.permute.xlu0 %2863
    %2865 = vrot.lane.b32.xlu0 %v2709, 7
    %v2866 = vpop.permute.xlu0 %2865
    %2867 = vrot.lane.b32.xlu0 %v2710, 7
    %v2868 = vpop.permute.xlu0 %2867
    %2869 = vrot.lane.b32.xlu0 %v2711, 7
    %v2870 = vpop.permute.xlu0 %2869
    %2871 = vrot.lane.b32.xlu0 %v2712, 7
    %v2872 = vpop.permute.xlu0 %2871
    %2873 = vrot.lane.b32.xlu0 %v2713, 7
    %v2874 = vpop.permute.xlu0 %2873
    %2875 = vrot.lane.b32.xlu0 %v2714, 7
    %v2876 = vpop.permute.xlu0 %2875
    %2877 = vrot.lane.b32.xlu0 %v2715, 7
    %v2878 = vpop.permute.xlu0 %2877
    %2879 = vrot.lane.b32.xlu0 %v2716, 7
    %v2880 = vpop.permute.xlu0 %2879
    %2881 = vrot.lane.b32.xlu0 %v2717, 7
    %v2882 = vpop.permute.xlu0 %2881
    %2883 = vrot.lane.b32.xlu0 %v2718, 7
    %v2884 = vpop.permute.xlu0 %2883
    %2885 = vrot.lane.b32.xlu0 %v2719, 7
    %v2886 = vpop.permute.xlu0 %2885
    %2887 = vrot.lane.b32.xlu0 %v2720, 7
    %v2888 = vpop.permute.xlu0 %2887
    %2889 = vrot.lane.b32.xlu0 %v2721, 7
    %v2890 = vpop.permute.xlu0 %2889
    %2891 = vrot.lane.b32.xlu0 %v2722, 7
    %v2892 = vpop.permute.xlu0 %2891
    %2893 = vrot.lane.b32.xlu0 %v2723, 7
    %v2894 = vpop.permute.xlu0 %2893
    %2895 = vrot.lane.b32.xlu0 %v2724, 7
    %v2896 = vpop.permute.xlu0 %2895
    %2897 = vrot.lane.b32.xlu0 %v2725, 7
    %v2898 = vpop.permute.xlu0 %2897
    %2899 = vrot.lane.b32.xlu0 %v2726, 7
    %v2900 = vpop.permute.xlu0 %2899
    %2901 = vrot.lane.b32.xlu0 %v2727, 7
    %v2902 = vpop.permute.xlu0 %2901
    %2903 = vrot.lane.b32.xlu0 %v2728, 7
    %v2904 = vpop.permute.xlu0 %2903
    %2905 = vrot.lane.b32.xlu0 %v2729, 7
    %v2906 = vpop.permute.xlu0 %2905
    %2907 = vrot.lane.b32.xlu0 %v2730, 7
    %v2908 = vpop.permute.xlu0 %2907
    %2909 = vrot.lane.b32.xlu0 %v2731, 7
    %v2910 = vpop.permute.xlu0 %2909
    %2911 = vrot.lane.b32.xlu0 %v2732, 7
    %v2912 = vpop.permute.xlu0 %2911
    %2913 = vrot.lane.b32.xlu0 %v2733, 7
    %v2914 = vpop.permute.xlu0 %2913
    %2915 = vrot.lane.b32.xlu0 %v2734, 7
    %v2916 = vpop.permute.xlu0 %2915
    %2917 = vrot.lane.b32.xlu0 %v2735, 7
    %v2918 = vpop.permute.xlu0 %2917
    %2919 = vrot.lane.b32.xlu0 %v2736, 7
    %v2920 = vpop.permute.xlu0 %2919
    %2921 = vrot.lane.b32.xlu0 %v2737, 7
    %v2922 = vpop.permute.xlu0 %2921
    %2923 = vrot.lane.b32.xlu0 %v2738, 7
    %v2924 = vpop.permute.xlu0 %2923
    %2925 = vrot.lane.b32.xlu0 %v2739, 7
    %v2926 = vpop.permute.xlu0 %2925
    %2927 = vrot.lane.b32.xlu0 %v2740, 7
    %v2928 = vpop.permute.xlu0 %2927
    %2929 = vrot.lane.b32.xlu0 %v2741, 7
    %v2930 = vpop.permute.xlu0 %2929
    %2931 = vrot.lane.b32.xlu0 %v2742, 7
    %v2932 = vpop.permute.xlu0 %2931
    %2933 = vrot.lane.b32.xlu0 %v2743, 7
    %v2934 = vpop.permute.xlu0 %2933
    %2935 = vrot.lane.b32.xlu0 %v2744, 7
    %v2936 = vpop.permute.xlu0 %2935
    %vm3001 = vcmask 64568
    %3002 = vst.msk [vmem:[#allocation2] sm:$0xff] %vm3001, %v2810
    %3003 = vst.msk [vmem:[#allocation2 + $0x8] sm:$0xff] %vm3001, %v2812
    %3004 = vst.msk [vmem:[#allocation2 + $0x10] sm:$0xff] %vm3001, %v2814
    %3005 = vst.msk [vmem:[#allocation2 + $0x18] sm:$0xff] %vm3001, %v2816
    %3006 = vst.msk [vmem:[#allocation2 + $0x20] sm:$0xff] %vm3001, %v2818
    %3007 = vst.msk [vmem:[#allocation2 + $0x28] sm:$0xff] %vm3001, %v2820
    %3008 = vst.msk [vmem:[#allocation2 + $0x30] sm:$0xff] %vm3001, %v2822
    %3009 = vst.msk [vmem:[#allocation2 + $0x38] sm:$0xff] %vm3001, %v2824
    %3010 = vst.msk [vmem:[#allocation2 + $0x40] sm:$0xff] %vm3001, %v2826
    %3011 = vst.msk [vmem:[#allocation2 + $0x48] sm:$0xff] %vm3001, %v2828
    %3012 = vst.msk [vmem:[#allocation2 + $0x50] sm:$0xff] %vm3001, %v2830
    %3013 = vst.msk [vmem:[#allocation2 + $0x58] sm:$0xff] %vm3001, %v2832
    %3014 = vst.msk [vmem:[#allocation2 + $0x60] sm:$0xff] %vm3001, %v2834
    %3015 = vst.msk [vmem:[#allocation2 + $0x68] sm:$0xff] %vm3001, %v2836
    %3016 = vst.msk [vmem:[#allocation2 + $0x70] sm:$0xff] %vm3001, %v2838
    %3017 = vst.msk [vmem:[#allocation2 + $0x78] sm:$0xff] %vm3001, %v2840
    %3018 = vst.msk [vmem:[#allocation2 + $0x80] sm:$0xff] %vm3001, %v2842
    %3019 = vst.msk [vmem:[#allocation2 + $0x88] sm:$0xff] %vm3001, %v2844
    %3020 = vst.msk [vmem:[#allocation2 + $0x90] sm:$0xff] %vm3001, %v2846
    %3021 = vst.msk [vmem:[#allocation2 + $0x98] sm:$0xff] %vm3001, %v2848
    %3022 = vst.msk [vmem:[#allocation2 + $0xa0] sm:$0xff] %vm3001, %v2850
    %3023 = vst.msk [vmem:[#allocation2 + $0xa8] sm:$0xff] %vm3001, %v2852
    %3024 = vst.msk [vmem:[#allocation2 + $0xb0] sm:$0xff] %vm3001, %v2854
    %3025 = vst.msk [vmem:[#allocation2 + $0xb8] sm:$0xff] %vm3001, %v2856
    %3026 = vst.msk [vmem:[#allocation2 + $0xc0] sm:$0xff] %vm3001, %v2858
    %3027 = vst.msk [vmem:[#allocation2 + $0xc8] sm:$0xff] %vm3001, %v2860
    %3028 = vst.msk [vmem:[#allocation2 + $0xd0] sm:$0xff] %vm3001, %v2862
    %3029 = vst.msk [vmem:[#allocation2 + $0xd8] sm:$0xff] %vm3001, %v2864
    %3030 = vst.msk [vmem:[#allocation2 + $0xe0] sm:$0xff] %vm3001, %v2866
    %3031 = vst.msk [vmem:[#allocation2 + $0xe8] sm:$0xff] %vm3001, %v2868
    %3032 = vst.msk [vmem:[#allocation2 + $0xf0] sm:$0xff] %vm3001, %v2870
    %3033 = vst.msk [vmem:[#allocation2 + $0xf8] sm:$0xff] %vm3001, %v2872
    %3034 = vst.msk [vmem:[#allocation2 + $0x100] sm:$0xff] %vm3001, %v2874
    %3035 = vst.msk [vmem:[#allocation2 + $0x108] sm:$0xff] %vm3001, %v2876
    %3036 = vst.msk [vmem:[#allocation2 + $0x110] sm:$0xff] %vm3001, %v2878
    %3037 = vst.msk [vmem:[#allocation2 + $0x118] sm:$0xff] %vm3001, %v2880
    %3038 = vst.msk [vmem:[#allocation2 + $0x120] sm:$0xff] %vm3001, %v2882
    %3039 = vst.msk [vmem:[#allocation2 + $0x128] sm:$0xff] %vm3001, %v2884
    %3040 = vst.msk [vmem:[#allocation2 + $0x130] sm:$0xff] %vm3001, %v2886
    %3041 = vst.msk [vmem:[#allocation2 + $0x138] sm:$0xff] %vm3001, %v2888
    %3042 = vst.msk [vmem:[#allocation2 + $0x140] sm:$0xff] %vm3001, %v2890
    %3043 = vst.msk [vmem:[#allocation2 + $0x148] sm:$0xff] %vm3001, %v2892
    %3044 = vst.msk [vmem:[#allocation2 + $0x150] sm:$0xff] %vm3001, %v2894
    %3045 = vst.msk [vmem:[#allocation2 + $0x158] sm:$0xff] %vm3001, %v2896
    %3046 = vst.msk [vmem:[#allocation2 + $0x160] sm:$0xff] %vm3001, %v2898
    %3047 = vst.msk [vmem:[#allocation2 + $0x168] sm:$0xff] %vm3001, %v2900
    %3048 = vst.msk [vmem:[#allocation2 + $0x170] sm:$0xff] %vm3001, %v2902
    %3049 = vst.msk [vmem:[#allocation2 + $0x178] sm:$0xff] %vm3001, %v2904
    %3050 = vst.msk [vmem:[#allocation2 + $0x180] sm:$0xff] %vm3001, %v2906
    %3051 = vst.msk [vmem:[#allocation2 + $0x188] sm:$0xff] %vm3001, %v2908
    %3052 = vst.msk [vmem:[#allocation2 + $0x190] sm:$0xff] %vm3001, %v2910
    %3053 = vst.msk [vmem:[#allocation2 + $0x198] sm:$0xff] %vm3001, %v2912
    %3054 = vst.msk [vmem:[#allocation2 + $0x1a0] sm:$0xff] %vm3001, %v2914
    %3055 = vst.msk [vmem:[#allocation2 + $0x1a8] sm:$0xff] %vm3001, %v2916
    %3056 = vst.msk [vmem:[#allocation2 + $0x1b0] sm:$0xff] %vm3001, %v2918
    %3057 = vst.msk [vmem:[#allocation2 + $0x1b8] sm:$0xff] %vm3001, %v2920
    %3058 = vst.msk [vmem:[#allocation2 + $0x1c0] sm:$0xff] %vm3001, %v2922
    %3059 = vst.msk [vmem:[#allocation2 + $0x1c8] sm:$0xff] %vm3001, %v2924
    %3060 = vst.msk [vmem:[#allocation2 + $0x1d0] sm:$0xff] %vm3001, %v2926
    %3061 = vst.msk [vmem:[#allocation2 + $0x1d8] sm:$0xff] %vm3001, %v2928
    %3062 = vst.msk [vmem:[#allocation2 + $0x1e0] sm:$0xff] %vm3001, %v2930
    %3063 = vst.msk [vmem:[#allocation2 + $0x1e8] sm:$0xff] %vm3001, %v2932
    %3064 = vst.msk [vmem:[#allocation2 + $0x1f0] sm:$0xff] %vm3001, %v2934
    %3065 = vst.msk [vmem:[#allocation2 + $0x1f8] sm:$0xff] %vm3001, %v2936
    %v3066 = vld [vmem:[#allocation9 + $0x29] sm:$0xff]
    %v3067 = vld [vmem:[#allocation9 + $0x31] sm:$0xff]
    %v3068 = vld [vmem:[#allocation9 + $0x39] sm:$0xff]
    %v3069 = vld [vmem:[#allocation9 + $0x41] sm:$0xff]
    %v3070 = vld [vmem:[#allocation9 + $0x49] sm:$0xff]
    %v3071 = vld [vmem:[#allocation9 + $0x51] sm:$0xff]
    %v3072 = vld [vmem:[#allocation9 + $0x59] sm:$0xff]
    %v3073 = vld [vmem:[#allocation9 + $0x61] sm:$0xff]
    %v3074 = vld [vmem:[#allocation9 + $0x69] sm:$0xff]
    %v3075 = vld [vmem:[#allocation9 + $0x71] sm:$0xff]
    %v3076 = vld [vmem:[#allocation9 + $0x79] sm:$0xff]
    %v3077 = vld [vmem:[#allocation9 + $0x81] sm:$0xff]
    %v3078 = vld [vmem:[#allocation9 + $0x89] sm:$0xff]
    %v3079 = vld [vmem:[#allocation9 + $0x91] sm:$0xff]
    %v3080 = vld [vmem:[#allocation9 + $0x99] sm:$0xff]
    %v3081 = vld [vmem:[#allocation9 + $0xa1] sm:$0xff]
    %v3082 = vld [vmem:[#allocation9 + $0xa9] sm:$0xff]
    %v3083 = vld [vmem:[#allocation9 + $0xb1] sm:$0xff]
    %v3084 = vld [vmem:[#allocation9 + $0xb9] sm:$0xff]
    %v3085 = vld [vmem:[#allocation9 + $0xc1] sm:$0xff]
    %v3086 = vld [vmem:[#allocation9 + $0xc9] sm:$0xff]
    %v3087 = vld [vmem:[#allocation9 + $0xd1] sm:$0xff]
    %v3088 = vld [vmem:[#allocation9 + $0xd9] sm:$0xff]
    %v3089 = vld [vmem:[#allocation9 + $0xe1] sm:$0xff]
    %v3090 = vld [vmem:[#allocation9 + $0xe9] sm:$0xff]
    %v3091 = vld [vmem:[#allocation9 + $0xf1] sm:$0xff]
    %v3092 = vld [vmem:[#allocation9 + $0xf9] sm:$0xff]
    %v3093 = vld [vmem:[#allocation9 + $0x101] sm:$0xff]
    %v3094 = vld [vmem:[#allocation9 + $0x109] sm:$0xff]
    %v3095 = vld [vmem:[#allocation9 + $0x111] sm:$0xff]
    %v3096 = vld [vmem:[#allocation9 + $0x119] sm:$0xff]
    %v3097 = vld [vmem:[#allocation9 + $0x121] sm:$0xff]
    %v3098 = vld [vmem:[#allocation9 + $0x129] sm:$0xff]
    %v3099 = vld [vmem:[#allocation9 + $0x131] sm:$0xff]
    %v3100 = vld [vmem:[#allocation9 + $0x139] sm:$0xff]
    %v3101 = vld [vmem:[#allocation9 + $0x141] sm:$0xff]
    %v3102 = vld [vmem:[#allocation9 + $0x149] sm:$0xff]
    %v3103 = vld [vmem:[#allocation9 + $0x151] sm:$0xff]
    %v3104 = vld [vmem:[#allocation9 + $0x159] sm:$0xff]
    %v3105 = vld [vmem:[#allocation9 + $0x161] sm:$0xff]
    %v3106 = vld [vmem:[#allocation9 + $0x169] sm:$0xff]
    %v3107 = vld [vmem:[#allocation9 + $0x171] sm:$0xff]
    %v3108 = vld [vmem:[#allocation9 + $0x179] sm:$0xff]
    %v3109 = vld [vmem:[#allocation9 + $0x181] sm:$0xff]
    %v3110 = vld [vmem:[#allocation9 + $0x189] sm:$0xff]
    %v3111 = vld [vmem:[#allocation9 + $0x191] sm:$0xff]
    %v3112 = vld [vmem:[#allocation9 + $0x199] sm:$0xff]
    %v3113 = vld [vmem:[#allocation9 + $0x1a1] sm:$0xff]
    %v3114 = vld [vmem:[#allocation9 + $0x1a9] sm:$0xff]
    %v3115 = vld [vmem:[#allocation9 + $0x1b1] sm:$0xff]
    %v3116 = vld [vmem:[#allocation9 + $0x1b9] sm:$0xff]
    %v3117 = vld [vmem:[#allocation9 + $0x1c1] sm:$0xff]
    %v3118 = vld [vmem:[#allocation9 + $0x1c9] sm:$0xff]
    %v3119 = vld [vmem:[#allocation9 + $0x1d1] sm:$0xff]
    %v3120 = vld [vmem:[#allocation9 + $0x1d9] sm:$0xff]
    %v3121 = vld [vmem:[#allocation9 + $0x1e1] sm:$0xff]
    %v3122 = vld [vmem:[#allocation9 + $0x1e9] sm:$0xff]
    %v3123 = vld [vmem:[#allocation9 + $0x1f1] sm:$0xff]
    %v3124 = vld [vmem:[#allocation9 + $0x1f9] sm:$0xff]
    %v3125 = vld [vmem:[#allocation9 + $0x201] sm:$0xff]
    %v3126 = vld [vmem:[#allocation9 + $0x209] sm:$0xff]
    %v3127 = vld [vmem:[#allocation9 + $0x211] sm:$0xff]
    %v3128 = vld [vmem:[#allocation9 + $0x219] sm:$0xff]
    %v3129 = vld [vmem:[#allocation9 + $0x221] sm:$0xff]
    %3194 = vrot.lane.b32.xlu0 %v3066, 8
    %v3195 = vpop.permute.xlu0 %3194
    %3196 = vrot.lane.b32.xlu0 %v3067, 8
    %v3197 = vpop.permute.xlu0 %3196
    %3198 = vrot.lane.b32.xlu0 %v3068, 8
    %v3199 = vpop.permute.xlu0 %3198
    %3200 = vrot.lane.b32.xlu0 %v3069, 8
    %v3201 = vpop.permute.xlu0 %3200
    %3202 = vrot.lane.b32.xlu0 %v3070, 8
    %v3203 = vpop.permute.xlu0 %3202
    %3204 = vrot.lane.b32.xlu0 %v3071, 8
    %v3205 = vpop.permute.xlu0 %3204
    %3206 = vrot.lane.b32.xlu0 %v3072, 8
    %v3207 = vpop.permute.xlu0 %3206
    %3208 = vrot.lane.b32.xlu0 %v3073, 8
    %v3209 = vpop.permute.xlu0 %3208
    %3210 = vrot.lane.b32.xlu0 %v3074, 8
    %v3211 = vpop.permute.xlu0 %3210
    %3212 = vrot.lane.b32.xlu0 %v3075, 8
    %v3213 = vpop.permute.xlu0 %3212
    %3214 = vrot.lane.b32.xlu0 %v3076, 8
    %v3215 = vpop.permute.xlu0 %3214
    %3216 = vrot.lane.b32.xlu0 %v3077, 8
    %v3217 = vpop.permute.xlu0 %3216
    %3218 = vrot.lane.b32.xlu0 %v3078, 8
    %v3219 = vpop.permute.xlu0 %3218
    %3220 = vrot.lane.b32.xlu0 %v3079, 8
    %v3221 = vpop.permute.xlu0 %3220
    %3222 = vrot.lane.b32.xlu0 %v3080, 8
    %v3223 = vpop.permute.xlu0 %3222
    %3224 = vrot.lane.b32.xlu0 %v3081, 8
    %v3225 = vpop.permute.xlu0 %3224
    %3226 = vrot.lane.b32.xlu0 %v3082, 8
    %v3227 = vpop.permute.xlu0 %3226
    %3228 = vrot.lane.b32.xlu0 %v3083, 8
    %v3229 = vpop.permute.xlu0 %3228
    %3230 = vrot.lane.b32.xlu0 %v3084, 8
    %v3231 = vpop.permute.xlu0 %3230
    %3232 = vrot.lane.b32.xlu0 %v3085, 8
    %v3233 = vpop.permute.xlu0 %3232
    %3234 = vrot.lane.b32.xlu0 %v3086, 8
    %v3235 = vpop.permute.xlu0 %3234
    %3236 = vrot.lane.b32.xlu0 %v3087, 8
    %v3237 = vpop.permute.xlu0 %3236
    %3238 = vrot.lane.b32.xlu0 %v3088, 8
    %v3239 = vpop.permute.xlu0 %3238
    %3240 = vrot.lane.b32.xlu0 %v3089, 8
    %v3241 = vpop.permute.xlu0 %3240
    %3242 = vrot.lane.b32.xlu0 %v3090, 8
    %v3243 = vpop.permute.xlu0 %3242
    %3244 = vrot.lane.b32.xlu0 %v3091, 8
    %v3245 = vpop.permute.xlu0 %3244
    %3246 = vrot.lane.b32.xlu0 %v3092, 8
    %v3247 = vpop.permute.xlu0 %3246
    %3248 = vrot.lane.b32.xlu0 %v3093, 8
    %v3249 = vpop.permute.xlu0 %3248
    %3250 = vrot.lane.b32.xlu0 %v3094, 8
    %v3251 = vpop.permute.xlu0 %3250
    %3252 = vrot.lane.b32.xlu0 %v3095, 8
    %v3253 = vpop.permute.xlu0 %3252
    %3254 = vrot.lane.b32.xlu0 %v3096, 8
    %v3255 = vpop.permute.xlu0 %3254
    %3256 = vrot.lane.b32.xlu0 %v3097, 8
    %v3257 = vpop.permute.xlu0 %3256
    %3258 = vrot.lane.b32.xlu0 %v3098, 8
    %v3259 = vpop.permute.xlu0 %3258
    %3260 = vrot.lane.b32.xlu0 %v3099, 8
    %v3261 = vpop.permute.xlu0 %3260
    %3262 = vrot.lane.b32.xlu0 %v3100, 8
    %v3263 = vpop.permute.xlu0 %3262
    %3264 = vrot.lane.b32.xlu0 %v3101, 8
    %v3265 = vpop.permute.xlu0 %3264
    %3266 = vrot.lane.b32.xlu0 %v3102, 8
    %v3267 = vpop.permute.xlu0 %3266
    %3268 = vrot.lane.b32.xlu0 %v3103, 8
    %v3269 = vpop.permute.xlu0 %3268
    %3270 = vrot.lane.b32.xlu0 %v3104, 8
    %v3271 = vpop.permute.xlu0 %3270
    %3272 = vrot.lane.b32.xlu0 %v3105, 8
    %v3273 = vpop.permute.xlu0 %3272
    %3274 = vrot.lane.b32.xlu0 %v3106, 8
    %v3275 = vpop.permute.xlu0 %3274
    %3276 = vrot.lane.b32.xlu0 %v3107, 8
    %v3277 = vpop.permute.xlu0 %3276
    %3278 = vrot.lane.b32.xlu0 %v3108, 8
    %v3279 = vpop.permute.xlu0 %3278
    %3280 = vrot.lane.b32.xlu0 %v3109, 8
    %v3281 = vpop.permute.xlu0 %3280
    %3282 = vrot.lane.b32.xlu0 %v3110, 8
    %v3283 = vpop.permute.xlu0 %3282
    %3284 = vrot.lane.b32.xlu0 %v3111, 8
    %v3285 = vpop.permute.xlu0 %3284
    %3286 = vrot.lane.b32.xlu0 %v3112, 8
    %v3287 = vpop.permute.xlu0 %3286
    %3288 = vrot.lane.b32.xlu0 %v3113, 8
    %v3289 = vpop.permute.xlu0 %3288
    %3290 = vrot.lane.b32.xlu0 %v3114, 8
    %v3291 = vpop.permute.xlu0 %3290
    %3292 = vrot.lane.b32.xlu0 %v3115, 8
    %v3293 = vpop.permute.xlu0 %3292
    %3294 = vrot.lane.b32.xlu0 %v3116, 8
    %v3295 = vpop.permute.xlu0 %3294
    %3296 = vrot.lane.b32.xlu0 %v3117, 8
    %v3297 = vpop.permute.xlu0 %3296
    %3298 = vrot.lane.b32.xlu0 %v3118, 8
    %v3299 = vpop.permute.xlu0 %3298
    %3300 = vrot.lane.b32.xlu0 %v3119, 8
    %v3301 = vpop.permute.xlu0 %3300
    %3302 = vrot.lane.b32.xlu0 %v3120, 8
    %v3303 = vpop.permute.xlu0 %3302
    %3304 = vrot.lane.b32.xlu0 %v3121, 8
    %v3305 = vpop.permute.xlu0 %3304
    %3306 = vrot.lane.b32.xlu0 %v3122, 8
    %v3307 = vpop.permute.xlu0 %3306
    %3308 = vrot.lane.b32.xlu0 %v3123, 8
    %v3309 = vpop.permute.xlu0 %3308
    %3310 = vrot.lane.b32.xlu0 %v3124, 8
    %v3311 = vpop.permute.xlu0 %3310
    %3312 = vrot.lane.b32.xlu0 %v3125, 8
    %v3313 = vpop.permute.xlu0 %3312
    %3314 = vrot.lane.b32.xlu0 %v3126, 8
    %v3315 = vpop.permute.xlu0 %3314
    %3316 = vrot.lane.b32.xlu0 %v3127, 8
    %v3317 = vpop.permute.xlu0 %3316
    %3318 = vrot.lane.b32.xlu0 %v3128, 8
    %v3319 = vpop.permute.xlu0 %3318
    %3320 = vrot.lane.b32.xlu0 %v3129, 8
    %v3321 = vpop.permute.xlu0 %3320
    %vm3386 = vcmask 72768
    %3387 = vst.msk [vmem:[#allocation2] sm:$0xff] %vm3386, %v3195
    %3388 = vst.msk [vmem:[#allocation2 + $0x8] sm:$0xff] %vm3386, %v3197
    %3389 = vst.msk [vmem:[#allocation2 + $0x10] sm:$0xff] %vm3386, %v3199
    %3390 = vst.msk [vmem:[#allocation2 + $0x18] sm:$0xff] %vm3386, %v3201
    %3391 = vst.msk [vmem:[#allocation2 + $0x20] sm:$0xff] %vm3386, %v3203
    %3392 = vst.msk [vmem:[#allocation2 + $0x28] sm:$0xff] %vm3386, %v3205
    %3393 = vst.msk [vmem:[#allocation2 + $0x30] sm:$0xff] %vm3386, %v3207
    %3394 = vst.msk [vmem:[#allocation2 + $0x38] sm:$0xff] %vm3386, %v3209
    %3395 = vst.msk [vmem:[#allocation2 + $0x40] sm:$0xff] %vm3386, %v3211
    %3396 = vst.msk [vmem:[#allocation2 + $0x48] sm:$0xff] %vm3386, %v3213
    %3397 = vst.msk [vmem:[#allocation2 + $0x50] sm:$0xff] %vm3386, %v3215
    %3398 = vst.msk [vmem:[#allocation2 + $0x58] sm:$0xff] %vm3386, %v3217
    %3399 = vst.msk [vmem:[#allocation2 + $0x60] sm:$0xff] %vm3386, %v3219
    %3400 = vst.msk [vmem:[#allocation2 + $0x68] sm:$0xff] %vm3386, %v3221
    %3401 = vst.msk [vmem:[#allocation2 + $0x70] sm:$0xff] %vm3386, %v3223
    %3402 = vst.msk [vmem:[#allocation2 + $0x78] sm:$0xff] %vm3386, %v3225
    %3403 = vst.msk [vmem:[#allocation2 + $0x80] sm:$0xff] %vm3386, %v3227
    %3404 = vst.msk [vmem:[#allocation2 + $0x88] sm:$0xff] %vm3386, %v3229
    %3405 = vst.msk [vmem:[#allocation2 + $0x90] sm:$0xff] %vm3386, %v3231
    %3406 = vst.msk [vmem:[#allocation2 + $0x98] sm:$0xff] %vm3386, %v3233
    %3407 = vst.msk [vmem:[#allocation2 + $0xa0] sm:$0xff] %vm3386, %v3235
    %3408 = vst.msk [vmem:[#allocation2 + $0xa8] sm:$0xff] %vm3386, %v3237
    %3409 = vst.msk [vmem:[#allocation2 + $0xb0] sm:$0xff] %vm3386, %v3239
    %3410 = vst.msk [vmem:[#allocation2 + $0xb8] sm:$0xff] %vm3386, %v3241
    %3411 = vst.msk [vmem:[#allocation2 + $0xc0] sm:$0xff] %vm3386, %v3243
    %3412 = vst.msk [vmem:[#allocation2 + $0xc8] sm:$0xff] %vm3386, %v3245
    %3413 = vst.msk [vmem:[#allocation2 + $0xd0] sm:$0xff] %vm3386, %v3247
    %3414 = vst.msk [vmem:[#allocation2 + $0xd8] sm:$0xff] %vm3386, %v3249
    %3415 = vst.msk [vmem:[#allocation2 + $0xe0] sm:$0xff] %vm3386, %v3251
    %3416 = vst.msk [vmem:[#allocation2 + $0xe8] sm:$0xff] %vm3386, %v3253
    %3417 = vst.msk [vmem:[#allocation2 + $0xf0] sm:$0xff] %vm3386, %v3255
    %3418 = vst.msk [vmem:[#allocation2 + $0xf8] sm:$0xff] %vm3386, %v3257
    %3419 = vst.msk [vmem:[#allocation2 + $0x100] sm:$0xff] %vm3386, %v3259
    %3420 = vst.msk [vmem:[#allocation2 + $0x108] sm:$0xff] %vm3386, %v3261
    %3421 = vst.msk [vmem:[#allocation2 + $0x110] sm:$0xff] %vm3386, %v3263
    %3422 = vst.msk [vmem:[#allocation2 + $0x118] sm:$0xff] %vm3386, %v3265
    %3423 = vst.msk [vmem:[#allocation2 + $0x120] sm:$0xff] %vm3386, %v3267
    %3424 = vst.msk [vmem:[#allocation2 + $0x128] sm:$0xff] %vm3386, %v3269
    %3425 = vst.msk [vmem:[#allocation2 + $0x130] sm:$0xff] %vm3386, %v3271
    %3426 = vst.msk [vmem:[#allocation2 + $0x138] sm:$0xff] %vm3386, %v3273
    %3427 = vst.msk [vmem:[#allocation2 + $0x140] sm:$0xff] %vm3386, %v3275
    %3428 = vst.msk [vmem:[#allocation2 + $0x148] sm:$0xff] %vm3386, %v3277
    %3429 = vst.msk [vmem:[#allocation2 + $0x150] sm:$0xff] %vm3386, %v3279
    %3430 = vst.msk [vmem:[#allocation2 + $0x158] sm:$0xff] %vm3386, %v3281
    %3431 = vst.msk [vmem:[#allocation2 + $0x160] sm:$0xff] %vm3386, %v3283
    %3432 = vst.msk [vmem:[#allocation2 + $0x168] sm:$0xff] %vm3386, %v3285
    %3433 = vst.msk [vmem:[#allocation2 + $0x170] sm:$0xff] %vm3386, %v3287
    %3434 = vst.msk [vmem:[#allocation2 + $0x178] sm:$0xff] %vm3386, %v3289
    %3435 = vst.msk [vmem:[#allocation2 + $0x180] sm:$0xff] %vm3386, %v3291
    %3436 = vst.msk [vmem:[#allocation2 + $0x188] sm:$0xff] %vm3386, %v3293
    %3437 = vst.msk [vmem:[#allocation2 + $0x190] sm:$0xff] %vm3386, %v3295
    %3438 = vst.msk [vmem:[#allocation2 + $0x198] sm:$0xff] %vm3386, %v3297
    %3439 = vst.msk [vmem:[#allocation2 + $0x1a0] sm:$0xff] %vm3386, %v3299
    %3440 = vst.msk [vmem:[#allocation2 + $0x1a8] sm:$0xff] %vm3386, %v3301
    %3441 = vst.msk [vmem:[#allocation2 + $0x1b0] sm:$0xff] %vm3386, %v3303
    %3442 = vst.msk [vmem:[#allocation2 + $0x1b8] sm:$0xff] %vm3386, %v3305
    %3443 = vst.msk [vmem:[#allocation2 + $0x1c0] sm:$0xff] %vm3386, %v3307
    %3444 = vst.msk [vmem:[#allocation2 + $0x1c8] sm:$0xff] %vm3386, %v3309
    %3445 = vst.msk [vmem:[#allocation2 + $0x1d0] sm:$0xff] %vm3386, %v3311
    %3446 = vst.msk [vmem:[#allocation2 + $0x1d8] sm:$0xff] %vm3386, %v3313
    %3447 = vst.msk [vmem:[#allocation2 + $0x1e0] sm:$0xff] %vm3386, %v3315
    %3448 = vst.msk [vmem:[#allocation2 + $0x1e8] sm:$0xff] %vm3386, %v3317
    %3449 = vst.msk [vmem:[#allocation2 + $0x1f0] sm:$0xff] %vm3386, %v3319
    %3450 = vst.msk [vmem:[#allocation2 + $0x1f8] sm:$0xff] %vm3386, %v3321
    %v3451 = vld [vmem:[#allocation2] sm:$0xff]
    %v3452 = vld [vmem:[#allocation2 + $0x8] sm:$0xff]
    %v3453 = vld [vmem:[#allocation2 + $0x10] sm:$0xff]
    %v3454 = vld [vmem:[#allocation2 + $0x18] sm:$0xff]
    %v3455 = vld [vmem:[#allocation2 + $0x20] sm:$0xff]
    %v3456 = vld [vmem:[#allocation2 + $0x28] sm:$0xff]
    %v3457 = vld [vmem:[#allocation2 + $0x30] sm:$0xff]
    %v3458 = vld [vmem:[#allocation2 + $0x38] sm:$0xff]
    %v3459 = vld [vmem:[#allocation2 + $0x40] sm:$0xff]
    %v3460 = vld [vmem:[#allocation2 + $0x48] sm:$0xff]
    %v3461 = vld [vmem:[#allocation2 + $0x50] sm:$0xff]
    %v3462 = vld [vmem:[#allocation2 + $0x58] sm:$0xff]
    %v3463 = vld [vmem:[#allocation2 + $0x60] sm:$0xff]
    %v3464 = vld [vmem:[#allocation2 + $0x68] sm:$0xff]
    %v3465 = vld [vmem:[#allocation2 + $0x70] sm:$0xff]
    %v3466 = vld [vmem:[#allocation2 + $0x78] sm:$0xff]
    %v3467 = vld [vmem:[#allocation2 + $0x80] sm:$0xff]
    %v3468 = vld [vmem:[#allocation2 + $0x88] sm:$0xff]
    %v3469 = vld [vmem:[#allocation2 + $0x90] sm:$0xff]
    %v3470 = vld [vmem:[#allocation2 + $0x98] sm:$0xff]
    %v3471 = vld [vmem:[#allocation2 + $0xa0] sm:$0xff]
    %v3472 = vld [vmem:[#allocation2 + $0xa8] sm:$0xff]
    %v3473 = vld [vmem:[#allocation2 + $0xb0] sm:$0xff]
    %v3474 = vld [vmem:[#allocation2 + $0xb8] sm:$0xff]
    %v3475 = vld [vmem:[#allocation2 + $0xc0] sm:$0xff]
    %v3476 = vld [vmem:[#allocation2 + $0xc8] sm:$0xff]
    %v3477 = vld [vmem:[#allocation2 + $0xd0] sm:$0xff]
    %v3478 = vld [vmem:[#allocation2 + $0xd8] sm:$0xff]
    %v3479 = vld [vmem:[#allocation2 + $0xe0] sm:$0xff]
    %v3480 = vld [vmem:[#allocation2 + $0xe8] sm:$0xff]
    %v3481 = vld [vmem:[#allocation2 + $0xf0] sm:$0xff]
    %v3482 = vld [vmem:[#allocation2 + $0xf8] sm:$0xff]
    %v3483 = vld [vmem:[#allocation2 + $0x100] sm:$0xff]
    %v3484 = vld [vmem:[#allocation2 + $0x108] sm:$0xff]
    %v3485 = vld [vmem:[#allocation2 + $0x110] sm:$0xff]
    %v3486 = vld [vmem:[#allocation2 + $0x118] sm:$0xff]
    %v3487 = vld [vmem:[#allocation2 + $0x120] sm:$0xff]
    %v3488 = vld [vmem:[#allocation2 + $0x128] sm:$0xff]
    %v3489 = vld [vmem:[#allocation2 + $0x130] sm:$0xff]
    %v3490 = vld [vmem:[#allocation2 + $0x138] sm:$0xff]
    %v3491 = vld [vmem:[#allocation2 + $0x140] sm:$0xff]
    %v3492 = vld [vmem:[#allocation2 + $0x148] sm:$0xff]
    %v3493 = vld [vmem:[#allocation2 + $0x150] sm:$0xff]
    %v3494 = vld [vmem:[#allocation2 + $0x158] sm:$0xff]
    %v3495 = vld [vmem:[#allocation2 + $0x160] sm:$0xff]
    %v3496 = vld [vmem:[#allocation2 + $0x168] sm:$0xff]
    %v3497 = vld [vmem:[#allocation2 + $0x170] sm:$0xff]
    %v3498 = vld [vmem:[#allocation2 + $0x178] sm:$0xff]
    %v3499 = vld [vmem:[#allocation2 + $0x180] sm:$0xff]
    %v3500 = vld [vmem:[#allocation2 + $0x188] sm:$0xff]
    %v3501 = vld [vmem:[#allocation2 + $0x190] sm:$0xff]
    %v3502 = vld [vmem:[#allocation2 + $0x198] sm:$0xff]
    %v3503 = vld [vmem:[#allocation2 + $0x1a0] sm:$0xff]
    %v3504 = vld [vmem:[#allocation2 + $0x1a8] sm:$0xff]
    %v3505 = vld [vmem:[#allocation2 + $0x1b0] sm:$0xff]
    %v3506 = vld [vmem:[#allocation2 + $0x1b8] sm:$0xff]
    %v3507 = vld [vmem:[#allocation2 + $0x1c0] sm:$0xff]
    %v3508 = vld [vmem:[#allocation2 + $0x1c8] sm:$0xff]
    %v3509 = vld [vmem:[#allocation2 + $0x1d0] sm:$0xff]
    %v3510 = vld [vmem:[#allocation2 + $0x1d8] sm:$0xff]
    %v3511 = vld [vmem:[#allocation2 + $0x1e0] sm:$0xff]
    %v3512 = vld [vmem:[#allocation2 + $0x1e8] sm:$0xff]
    %v3513 = vld [vmem:[#allocation2 + $0x1f0] sm:$0xff]
    %v3514 = vld [vmem:[#allocation2 + $0x1f8] sm:$0xff]
    %v3515 = vld [vmem:[#allocation24] sm:$0xff]
    %v3516 = vld [vmem:[#allocation24 + $0x8] sm:$0xff]
    %v3517 = vld [vmem:[#allocation24 + $0x10] sm:$0xff]
    %v3518 = vld [vmem:[#allocation24 + $0x18] sm:$0xff]
    %v3519 = vld [vmem:[#allocation24 + $0x20] sm:$0xff]
    %v3520 = vld [vmem:[#allocation24 + $0x28] sm:$0xff]
    %v3521 = vld [vmem:[#allocation24 + $0x30] sm:$0xff]
    %v3522 = vld [vmem:[#allocation24 + $0x38] sm:$0xff]
    %v3523 = vld [vmem:[#allocation24 + $0x40] sm:$0xff]
    %v3524 = vld [vmem:[#allocation24 + $0x48] sm:$0xff]
    %v3525 = vld [vmem:[#allocation24 + $0x50] sm:$0xff]
    %v3526 = vld [vmem:[#allocation24 + $0x58] sm:$0xff]
    %v3527 = vld [vmem:[#allocation24 + $0x60] sm:$0xff]
    %v3528 = vld [vmem:[#allocation24 + $0x68] sm:$0xff]
    %v3529 = vld [vmem:[#allocation24 + $0x70] sm:$0xff]
    %v3530 = vld [vmem:[#allocation24 + $0x78] sm:$0xff]
    %v3531 = vld [vmem:[#allocation24 + $0x80] sm:$0xff]
    %v3532 = vld [vmem:[#allocation24 + $0x88] sm:$0xff]
    %v3533 = vld [vmem:[#allocation24 + $0x90] sm:$0xff]
    %v3534 = vld [vmem:[#allocation24 + $0x98] sm:$0xff]
    %v3535 = vld [vmem:[#allocation24 + $0xa0] sm:$0xff]
    %v3536 = vld [vmem:[#allocation24 + $0xa8] sm:$0xff]
    %v3537 = vld [vmem:[#allocation24 + $0xb0] sm:$0xff]
    %v3538 = vld [vmem:[#allocation24 + $0xb8] sm:$0xff]
    %v3539 = vld [vmem:[#allocation24 + $0xc0] sm:$0xff]
    %v3540 = vld [vmem:[#allocation24 + $0xc8] sm:$0xff]
    %v3541 = vld [vmem:[#allocation24 + $0xd0] sm:$0xff]
    %v3542 = vld [vmem:[#allocation24 + $0xd8] sm:$0xff]
    %v3543 = vld [vmem:[#allocation24 + $0xe0] sm:$0xff]
    %v3544 = vld [vmem:[#allocation24 + $0xe8] sm:$0xff]
    %v3545 = vld [vmem:[#allocation24 + $0xf0] sm:$0xff]
    %v3546 = vld [vmem:[#allocation24 + $0xf8] sm:$0xff]
    %v3547 = vld [vmem:[#allocation24 + $0x100] sm:$0xff]
    %v3548 = vld [vmem:[#allocation24 + $0x108] sm:$0xff]
    %v3549 = vld [vmem:[#allocation24 + $0x110] sm:$0xff]
    %v3550 = vld [vmem:[#allocation24 + $0x118] sm:$0xff]
    %v3551 = vld [vmem:[#allocation24 + $0x120] sm:$0xff]
    %v3552 = vld [vmem:[#allocation24 + $0x128] sm:$0xff]
    %v3553 = vld [vmem:[#allocation24 + $0x130] sm:$0xff]
    %v3554 = vld [vmem:[#allocation24 + $0x138] sm:$0xff]
    %v3555 = vld [vmem:[#allocation24 + $0x140] sm:$0xff]
    %v3556 = vld [vmem:[#allocation24 + $0x148] sm:$0xff]
    %v3557 = vld [vmem:[#allocation24 + $0x150] sm:$0xff]
    %v3558 = vld [vmem:[#allocation24 + $0x158] sm:$0xff]
    %v3559 = vld [vmem:[#allocation24 + $0x160] sm:$0xff]
    %v3560 = vld [vmem:[#allocation24 + $0x168] sm:$0xff]
    %v3561 = vld [vmem:[#allocation24 + $0x170] sm:$0xff]
    %v3562 = vld [vmem:[#allocation24 + $0x178] sm:$0xff]
    %v3563 = vld [vmem:[#allocation24 + $0x180] sm:$0xff]
    %v3564 = vld [vmem:[#allocation24 + $0x188] sm:$0xff]
    %v3565 = vld [vmem:[#allocation24 + $0x190] sm:$0xff]
    %v3566 = vld [vmem:[#allocation24 + $0x198] sm:$0xff]
    %v3567 = vld [vmem:[#allocation24 + $0x1a0] sm:$0xff]
    %v3568 = vld [vmem:[#allocation24 + $0x1a8] sm:$0xff]
    %v3569 = vld [vmem:[#allocation24 + $0x1b0] sm:$0xff]
    %v3570 = vld [vmem:[#allocation24 + $0x1b8] sm:$0xff]
    %v3571 = vld [vmem:[#allocation24 + $0x1c0] sm:$0xff]
    %v3572 = vld [vmem:[#allocation24 + $0x1c8] sm:$0xff]
    %v3573 = vld [vmem:[#allocation24 + $0x1d0] sm:$0xff]
    %v3574 = vld [vmem:[#allocation24 + $0x1d8] sm:$0xff]
    %v3575 = vld [vmem:[#allocation24 + $0x1e0] sm:$0xff]
    %v3576 = vld [vmem:[#allocation24 + $0x1e8] sm:$0xff]
    %v3577 = vld [vmem:[#allocation24 + $0x1f0] sm:$0xff]
    %v3578 = vld [vmem:[#allocation24 + $0x1f8] sm:$0xff]
    %v3579 = vmul.f32 %v3451, %v3515
    %v3580 = vmul.f32 %v3452, %v3516
    %v3581 = vmul.f32 %v3453, %v3517
    %v3582 = vmul.f32 %v3454, %v3518
    %v3583 = vmul.f32 %v3455, %v3519
    %v3584 = vmul.f32 %v3456, %v3520
    %v3585 = vmul.f32 %v3457, %v3521
    %v3586 = vmul.f32 %v3458, %v3522
    %v3587 = vmul.f32 %v3459, %v3523
    %v3588 = vmul.f32 %v3460, %v3524
    %v3589 = vmul.f32 %v3461, %v3525
    %v3590 = vmul.f32 %v3462, %v3526
    %v3591 = vmul.f32 %v3463, %v3527
    %v3592 = vmul.f32 %v3464, %v3528
    %v3593 = vmul.f32 %v3465, %v3529
    %v3594 = vmul.f32 %v3466, %v3530
    %v3595 = vmul.f32 %v3467, %v3531
    %v3596 = vmul.f32 %v3468, %v3532
    %v3597 = vmul.f32 %v3469, %v3533
    %v3598 = vmul.f32 %v3470, %v3534
    %v3599 = vmul.f32 %v3471, %v3535
    %v3600 = vmul.f32 %v3472, %v3536
    %v3601 = vmul.f32 %v3473, %v3537
    %v3602 = vmul.f32 %v3474, %v3538
    %v3603 = vmul.f32 %v3475, %v3539
    %v3604 = vmul.f32 %v3476, %v3540
    %v3605 = vmul.f32 %v3477, %v3541
    %v3606 = vmul.f32 %v3478, %v3542
    %v3607 = vmul.f32 %v3479, %v3543
    %v3608 = vmul.f32 %v3480, %v3544
    %v3609 = vmul.f32 %v3481, %v3545
    %v3610 = vmul.f32 %v3482, %v3546
    %v3611 = vmul.f32 %v3483, %v3547
    %v3612 = vmul.f32 %v3484, %v3548
    %v3613 = vmul.f32 %v3485, %v3549
    %v3614 = vmul.f32 %v3486, %v3550
    %v3615 = vmul.f32 %v3487, %v3551
    %v3616 = vmul.f32 %v3488, %v3552
    %v3617 = vmul.f32 %v3489, %v3553
    %v3618 = vmul.f32 %v3490, %v3554
    %v3619 = vmul.f32 %v3491, %v3555
    %v3620 = vmul.f32 %v3492, %v3556
    %v3621 = vmul.f32 %v3493, %v3557
    %v3622 = vmul.f32 %v3494, %v3558
    %v3623 = vmul.f32 %v3495, %v3559
    %v3624 = vmul.f32 %v3496, %v3560
    %v3625 = vmul.f32 %v3497, %v3561
    %v3626 = vmul.f32 %v3498, %v3562
    %v3627 = vmul.f32 %v3499, %v3563
    %v3628 = vmul.f32 %v3500, %v3564
    %v3629 = vmul.f32 %v3501, %v3565
    %v3630 = vmul.f32 %v3502, %v3566
    %v3631 = vmul.f32 %v3503, %v3567
    %v3632 = vmul.f32 %v3504, %v3568
    %v3633 = vmul.f32 %v3505, %v3569
    %v3634 = vmul.f32 %v3506, %v3570
    %v3635 = vmul.f32 %v3507, %v3571
    %v3636 = vmul.f32 %v3508, %v3572
    %v3637 = vmul.f32 %v3509, %v3573
    %v3638 = vmul.f32 %v3510, %v3574
    %v3639 = vmul.f32 %v3511, %v3575
    %v3640 = vmul.f32 %v3512, %v3576
    %v3641 = vmul.f32 %v3513, %v3577
    %v3642 = vmul.f32 %v3514, %v3578
    %v3643 = vpack.c.bf16 %v3580, %v3579
    %v3644 = vpack.c.bf16 %v3582, %v3581
    %v3645 = vpack.c.bf16 %v3584, %v3583
    %v3646 = vpack.c.bf16 %v3586, %v3585
    %v3647 = vpack.c.bf16 %v3588, %v3587
    %v3648 = vpack.c.bf16 %v3590, %v3589
    %v3649 = vpack.c.bf16 %v3592, %v3591
    %v3650 = vpack.c.bf16 %v3594, %v3593
    %v3651 = vpack.c.bf16 %v3596, %v3595
    %v3652 = vpack.c.bf16 %v3598, %v3597
    %v3653 = vpack.c.bf16 %v3600, %v3599
    %v3654 = vpack.c.bf16 %v3602, %v3601
    %v3655 = vpack.c.bf16 %v3604, %v3603
    %v3656 = vpack.c.bf16 %v3606, %v3605
    %v3657 = vpack.c.bf16 %v3608, %v3607
    %v3658 = vpack.c.bf16 %v3610, %v3609
    %v3659 = vpack.c.bf16 %v3612, %v3611
    %v3660 = vpack.c.bf16 %v3614, %v3613
    %v3661 = vpack.c.bf16 %v3616, %v3615
    %v3662 = vpack.c.bf16 %v3618, %v3617
    %v3663 = vpack.c.bf16 %v3620, %v3619
    %v3664 = vpack.c.bf16 %v3622, %v3621
    %v3665 = vpack.c.bf16 %v3624, %v3623
    %v3666 = vpack.c.bf16 %v3626, %v3625
    %v3667 = vpack.c.bf16 %v3628, %v3627
    %v3668 = vpack.c.bf16 %v3630, %v3629
    %v3669 = vpack.c.bf16 %v3632, %v3631
    %v3670 = vpack.c.bf16 %v3634, %v3633
    %v3671 = vpack.c.bf16 %v3636, %v3635
    %v3672 = vpack.c.bf16 %v3638, %v3637
    %v3673 = vpack.c.bf16 %v3640, %v3639
    %v3674 = vpack.c.bf16 %v3642, %v3641
    %v3675 = vld [vmem:[#allocation12] sm:$0xf]
    %v3676 = vld [vmem:[#allocation12 + $0x4] sm:$0x1]
    %v3679 = vunpack.c.l.b16 %v3675
    %v3680 = vunpack.c.l.b16 %v3676
    %v3681 = vpack.c.b16 %v3680, %v3679
    %vm3682 = vcmask 72704
    %v3684 = vsel %vm3682, %v3643, 0
    %v3687 = vsel %vm3682, %v3644, 0
    %v3690 = vsel %vm3682, %v3645, 0
    %v3693 = vsel %vm3682, %v3646, 0
    %v3696 = vsel %vm3682, %v3647, 0
    %v3699 = vsel %vm3682, %v3648, 0
    %v3702 = vsel %vm3682, %v3649, 0
    %v3705 = vsel %vm3682, %v3650, 0
    %v3708 = vsel %vm3682, %v3651, 0
    %v3711 = vsel %vm3682, %v3652, 0
    %v3714 = vsel %vm3682, %v3653, 0
    %v3717 = vsel %vm3682, %v3654, 0
    %v3720 = vsel %vm3682, %v3655, 0
    %v3723 = vsel %vm3682, %v3656, 0
    %v3726 = vsel %vm3682, %v3657, 0
    %v3729 = vsel %vm3682, %v3658, 0
    %v3732 = vsel %vm3682, %v3659, 0
    %v3735 = vsel %vm3682, %v3660, 0
    %v3738 = vsel %vm3682, %v3661, 0
    %v3741 = vsel %vm3682, %v3662, 0
    %v3744 = vsel %vm3682, %v3663, 0
    %v3747 = vsel %vm3682, %v3664, 0
    %v3750 = vsel %vm3682, %v3665, 0
    %v3753 = vsel %vm3682, %v3666, 0
    %v3756 = vsel %vm3682, %v3667, 0
    %v3759 = vsel %vm3682, %v3668, 0
    %v3762 = vsel %vm3682, %v3669, 0
    %v3765 = vsel %vm3682, %v3670, 0
    %v3768 = vsel %vm3682, %v3671, 0
    %v3771 = vsel %vm3682, %v3672, 0
    %v3774 = vsel %vm3682, %v3673, 0
    %v3777 = vsel %vm3682, %v3674, 0
    %vm3779 = vcmask 1043456
    %vm3780 = vcmask 1044480
    %v3781 = vsel %vm3779, 4294967295, 65535
    %v3782 = vsel %vm3780, %v3781, 0
    %v3784 = vand.u32 %v3681, %v3782
    %3786 = vmatprep.subr.bf16.mxu0 0
    %3787 = vmatpush1.bf16.msra.mxu0 %v3784
    %3788 = vmatprep.subr.bf16.mxu0 0
    %3789 = vmatpush1.bf16.msra.mxu0 0
    %3790 = vmatprep.subr.bf16.mxu0 0
    %3791 = vmatpush1.bf16.msra.mxu0 0
    %3792 = vmatprep.subr.bf16.mxu0 0
    %3793 = vmatpush1.bf16.msra.mxu0 0
    %3794 = vmatprep.subr.bf16.mxu0 0
    %3795 = vmatpush1.bf16.msra.mxu0 0
    %3796 = vmatprep.subr.bf16.mxu0 0
    %3797 = vmatpush1.bf16.msra.mxu0 0
    %3798 = vmatprep.subr.bf16.mxu0 0
    %3799 = vmatpush1.bf16.msra.mxu0 0
    %3800 = vmatprep.subr.bf16.mxu0 0
    %3801 = vmatpush1.bf16.msra.mxu0 0
    %3802 = vmatprep.subr.bf16.mxu0 0
    %3803 = vmatpush1.bf16.msra.mxu0 0
    %3804 = vmatprep.subr.bf16.mxu0 0
    %3805 = vmatpush1.bf16.msra.mxu0 0
    %3806 = vmatprep.subr.bf16.mxu0 0
    %3807 = vmatpush1.bf16.msra.mxu0 0
    %3808 = vmatprep.subr.bf16.mxu0 0
    %3809 = vmatpush1.bf16.msra.mxu0 0
    %3810 = vmatprep.subr.bf16.mxu0 0
    %3811 = vmatpush1.bf16.msra.mxu0 0
    %3812 = vmatprep.subr.bf16.mxu0 0
    %3813 = vmatpush1.bf16.msra.mxu0 0
    %3814 = vmatprep.subr.bf16.mxu0 0
    %3815 = vmatpush1.bf16.msra.mxu0 0
    %3816 = vmatprep.subr.bf16.mxu0 0
    %3817 = vmatpush1.bf16.msra.mxu0 0
    %3818 = vmatprep.mubr.bf16.mxu0 0
    %3819 = vmatmul.mubr.bf16.gmra.mrb[0].mxu0 %v3684
    %v3820 = vpop.f32.mrb[0].mxu0
    %v3821 = vadd.f32 0.0, %v3820
    %v3822 = vpop.f32.mrb[0].mxu0
    %v3823 = vpop.f32.mrb[0].mxu0
    %v3824 = vadd.f32 0.0, %v3823
    %v3825 = vpop.f32.mrb[0].mxu0
    %3826 = vmatprep.mubr.bf16.mxu0 0
    %3827 = vmatmul.mubr.bf16.gmra.mrb[0].mxu0 %v3687
    %v3828 = vpop.f32.mrb[0].mxu0
    %v3829 = vadd.f32 0.0, %v3828
    %v3830 = vpop.f32.mrb[0].mxu0
    %v3831 = vpop.f32.mrb[0].mxu0
    %v3832 = vadd.f32 0.0, %v3831
    %v3833 = vpop.f32.mrb[0].mxu0
    %3834 = vmatprep.mubr.bf16.mxu0 0
    %3835 = vmatmul.mubr.bf16.gmra.mrb[0].mxu0 %v3690
    %v3836 = vpop.f32.mrb[0].mxu0
    %v3837 = vadd.f32 0.0, %v3836
    %v3838 = vpop.f32.mrb[0].mxu0
    %v3839 = vpop.f32.mrb[0].mxu0
    %v3840 = vadd.f32 0.0, %v3839
    %v3841 = vpop.f32.mrb[0].mxu0
    %3842 = vmatprep.mubr.bf16.mxu0 0
    %3843 = vmatmul.mubr.bf16.gmra.mrb[0].mxu0 %v3693
    %v3844 = vpop.f32.mrb[0].mxu0
    %v3845 = vadd.f32 0.0, %v3844
    %v3846 = vpop.f32.mrb[0].mxu0
    %v3847 = vpop.f32.mrb[0].mxu0
    %v3848 = vadd.f32 0.0, %v3847
    %v3849 = vpop.f32.mrb[0].mxu0
    %3850 = vmatprep.mubr.bf16.mxu0 0
    %3851 = vmatmul.mubr.bf16.gmra.mrb[0].mxu0 %v3696
    %v3852 = vpop.f32.mrb[0].mxu0
    %v3853 = vadd.f32 0.0, %v3852
    %v3854 = vpop.f32.mrb[0].mxu0
    %v3855 = vpop.f32.mrb[0].mxu0
    %v3856 = vadd.f32 0.0, %v3855
    %v3857 = vpop.f32.mrb[0].mxu0
    %3858 = vmatprep.mubr.bf16.mxu0 0
    %3859 = vmatmul.mubr.bf16.gmra.mrb[0].mxu0 %v3699
    %v3860 = vpop.f32.mrb[0].mxu0
    %v3861 = vadd.f32 0.0, %v3860
    %v3862 = vpop.f32.mrb[0].mxu0
    %v3863 = vpop.f32.mrb[0].mxu0
    %v3864 = vadd.f32 0.0, %v3863
    %v3865 = vpop.f32.mrb[0].mxu0
    %3866 = vmatprep.mubr.bf16.mxu0 0
    %3867 = vmatmul.mubr.bf16.gmra.mrb[0].mxu0 %v3702
    %v3868 = vpop.f32.mrb[0].mxu0
    %v3869 = vadd.f32 0.0, %v3868
    %v3870 = vpop.f32.mrb[0].mxu0
    %v3871 = vpop.f32.mrb[0].mxu0
    %v3872 = vadd.f32 0.0, %v3871
    %v3873 = vpop.f32.mrb[0].mxu0
    %3874 = vmatprep.mubr.bf16.mxu0 0
    %3875 = vmatmul.mubr.bf16.gmra.mrb[0].mxu0 %v3705
    %v3876 = vpop.f32.mrb[0].mxu0
    %v3877 = vadd.f32 0.0, %v3876
    %v3878 = vpop.f32.mrb[0].mxu0
    %v3879 = vpop.f32.mrb[0].mxu0
    %v3880 = vadd.f32 0.0, %v3879
    %v3881 = vpop.f32.mrb[0].mxu0
    %3882 = vmatprep.mubr.bf16.mxu0 0
    %3883 = vmatmul.mubr.bf16.gmra.mrb[0].mxu0 %v3708
    %v3884 = vpop.f32.mrb[0].mxu0
    %v3885 = vadd.f32 0.0, %v3884
    %v3886 = vpop.f32.mrb[0].mxu0
    %v3887 = vpop.f32.mrb[0].mxu0
    %v3888 = vadd.f32 0.0, %v3887
    %v3889 = vpop.f32.mrb[0].mxu0
    %3890 = vmatprep.mubr.bf16.mxu0 0
    %3891 = vmatmul.mubr.bf16.gmra.mrb[0].mxu0 %v3711
    %v3892 = vpop.f32.mrb[0].mxu0
    %v3893 = vadd.f32 0.0, %v3892
    %v3894 = vpop.f32.mrb[0].mxu0
    %v3895 = vpop.f32.mrb[0].mxu0
    %v3896 = vadd.f32 0.0, %v3895
    %v3897 = vpop.f32.mrb[0].mxu0
    %3898 = vmatprep.mubr.bf16.mxu0 0
    %3899 = vmatmul.mubr.bf16.gmra.mrb[0].mxu0 %v3714
    %v3900 = vpop.f32.mrb[0].mxu0
    %v3901 = vadd.f32 0.0, %v3900
    %v3902 = vpop.f32.mrb[0].mxu0
    %v3903 = vpop.f32.mrb[0].mxu0
    %v3904 = vadd.f32 0.0, %v3903
    %v3905 = vpop.f32.mrb[0].mxu0
    %3906 = vmatprep.mubr.bf16.mxu0 0
    %3907 = vmatmul.mubr.bf16.gmra.mrb[0].mxu0 %v3717
    %v3908 = vpop.f32.mrb[0].mxu0
    %v3909 = vadd.f32 0.0, %v3908
    %v3910 = vpop.f32.mrb[0].mxu0
    %v3911 = vpop.f32.mrb[0].mxu0
    %v3912 = vadd.f32 0.0, %v3911
    %v3913 = vpop.f32.mrb[0].mxu0
    %3914 = vmatprep.mubr.bf16.mxu0 0
    %3915 = vmatmul.mubr.bf16.gmra.mrb[0].mxu0 %v3720
    %v3916 = vpop.f32.mrb[0].mxu0
    %v3917 = vadd.f32 0.0, %v3916
    %v3918 = vpop.f32.mrb[0].mxu0
    %v3919 = vpop.f32.mrb[0].mxu0
    %v3920 = vadd.f32 0.0, %v3919
    %v3921 = vpop.f32.mrb[0].mxu0
    %3922 = vmatprep.mubr.bf16.mxu0 0
    %3923 = vmatmul.mubr.bf16.gmra.mrb[0].mxu0 %v3723
    %v3924 = vpop.f32.mrb[0].mxu0
    %v3925 = vadd.f32 0.0, %v3924
    %v3926 = vpop.f32.mrb[0].mxu0
    %v3927 = vpop.f32.mrb[0].mxu0
    %v3928 = vadd.f32 0.0, %v3927
    %v3929 = vpop.f32.mrb[0].mxu0
    %3930 = vmatprep.mubr.bf16.mxu0 0
    %3931 = vmatmul.mubr.bf16.gmra.mrb[0].mxu0 %v3726
    %v3932 = vpop.f32.mrb[0].mxu0
    %v3933 = vadd.f32 0.0, %v3932
    %v3934 = vpop.f32.mrb[0].mxu0
    %v3935 = vpop.f32.mrb[0].mxu0
    %v3936 = vadd.f32 0.0, %v3935
    %v3937 = vpop.f32.mrb[0].mxu0
    %3938 = vmatprep.mubr.bf16.mxu0 0
    %3939 = vmatmul.mubr.bf16.gmra.mrb[0].mxu0 %v3729
    %v3940 = vpop.f32.mrb[0].mxu0
    %v3941 = vadd.f32 0.0, %v3940
    %v3942 = vpop.f32.mrb[0].mxu0
    %v3943 = vpop.f32.mrb[0].mxu0
    %v3944 = vadd.f32 0.0, %v3943
    %v3945 = vpop.f32.mrb[0].mxu0
    %3946 = vmatprep.mubr.bf16.mxu0 0
    %3947 = vmatmul.mubr.bf16.gmra.mrb[0].mxu0 %v3732
    %v3948 = vpop.f32.mrb[0].mxu0
    %v3949 = vadd.f32 0.0, %v3948
    %v3950 = vpop.f32.mrb[0].mxu0
    %v3951 = vpop.f32.mrb[0].mxu0
    %v3952 = vadd.f32 0.0, %v3951
    %v3953 = vpop.f32.mrb[0].mxu0
    %3954 = vmatprep.mubr.bf16.mxu0 0
    %3955 = vmatmul.mubr.bf16.gmra.mrb[0].mxu0 %v3735
    %v3956 = vpop.f32.mrb[0].mxu0
    %v3957 = vadd.f32 0.0, %v3956
    %v3958 = vpop.f32.mrb[0].mxu0
    %v3959 = vpop.f32.mrb[0].mxu0
    %v3960 = vadd.f32 0.0, %v3959
    %v3961 = vpop.f32.mrb[0].mxu0
    %3962 = vmatprep.mubr.bf16.mxu0 0
    %3963 = vmatmul.mubr.bf16.gmra.mrb[0].mxu0 %v3738
    %v3964 = vpop.f32.mrb[0].mxu0
    %v3965 = vadd.f32 0.0, %v3964
    %v3966 = vpop.f32.mrb[0].mxu0
    %v3967 = vpop.f32.mrb[0].mxu0
    %v3968 = vadd.f32 0.0, %v3967
    %v3969 = vpop.f32.mrb[0].mxu0
    %3970 = vmatprep.mubr.bf16.mxu0 0
    %3971 = vmatmul.mubr.bf16.gmra.mrb[0].mxu0 %v3741
    %v3972 = vpop.f32.mrb[0].mxu0
    %v3973 = vadd.f32 0.0, %v3972
    %v3974 = vpop.f32.mrb[0].mxu0
    %v3975 = vpop.f32.mrb[0].mxu0
    %v3976 = vadd.f32 0.0, %v3975
    %v3977 = vpop.f32.mrb[0].mxu0
    %3978 = vmatprep.mubr.bf16.mxu0 0
    %3979 = vmatmul.mubr.bf16.gmra.mrb[0].mxu0 %v3744
    %v3980 = vpop.f32.mrb[0].mxu0
    %v3981 = vadd.f32 0.0, %v3980
    %v3982 = vpop.f32.mrb[0].mxu0
    %v3983 = vpop.f32.mrb[0].mxu0
    %v3984 = vadd.f32 0.0, %v3983
    %v3985 = vpop.f32.mrb[0].mxu0
    %3986 = vmatprep.mubr.bf16.mxu0 0
    %3987 = vmatmul.mubr.bf16.gmra.mrb[0].mxu0 %v3747
    %v3988 = vpop.f32.mrb[0].mxu0
    %v3989 = vadd.f32 0.0, %v3988
    %v3990 = vpop.f32.mrb[0].mxu0
    %v3991 = vpop.f32.mrb[0].mxu0
    %v3992 = vadd.f32 0.0, %v3991
    %v3993 = vpop.f32.mrb[0].mxu0
    %3994 = vmatprep.mubr.bf16.mxu0 0
    %3995 = vmatmul.mubr.bf16.gmra.mrb[0].mxu0 %v3750
    %v3996 = vpop.f32.mrb[0].mxu0
    %v3997 = vadd.f32 0.0, %v3996
    %v3998 = vpop.f32.mrb[0].mxu0
    %v3999 = vpop.f32.mrb[0].mxu0
    %v4000 = vadd.f32 0.0, %v3999
    %v4001 = vpop.f32.mrb[0].mxu0
    %4002 = vmatprep.mubr.bf16.mxu0 0
    %4003 = vmatmul.mubr.bf16.gmra.mrb[0].mxu0 %v3753
    %v4004 = vpop.f32.mrb[0].mxu0
    %v4005 = vadd.f32 0.0, %v4004
    %v4006 = vpop.f32.mrb[0].mxu0
    %v4007 = vpop.f32.mrb[0].mxu0
    %v4008 = vadd.f32 0.0, %v4007
    %v4009 = vpop.f32.mrb[0].mxu0
    %4010 = vmatprep.mubr.bf16.mxu0 0
    %4011 = vmatmul.mubr.bf16.gmra.mrb[0].mxu0 %v3756
    %v4012 = vpop.f32.mrb[0].mxu0
    %v4013 = vadd.f32 0.0, %v4012
    %v4014 = vpop.f32.mrb[0].mxu0
    %v4015 = vpop.f32.mrb[0].mxu0
    %v4016 = vadd.f32 0.0, %v4015
    %v4017 = vpop.f32.mrb[0].mxu0
    %4018 = vmatprep.mubr.bf16.mxu0 0
    %4019 = vmatmul.mubr.bf16.gmra.mrb[0].mxu0 %v3759
    %v4020 = vpop.f32.mrb[0].mxu0
    %v4021 = vadd.f32 0.0, %v4020
    %v4022 = vpop.f32.mrb[0].mxu0
    %v4023 = vpop.f32.mrb[0].mxu0
    %v4024 = vadd.f32 0.0, %v4023
    %v4025 = vpop.f32.mrb[0].mxu0
    %4026 = vmatprep.mubr.bf16.mxu0 0
    %4027 = vmatmul.mubr.bf16.gmra.mrb[0].mxu0 %v3762
    %v4028 = vpop.f32.mrb[0].mxu0
    %v4029 = vadd.f32 0.0, %v4028
    %v4030 = vpop.f32.mrb[0].mxu0
    %v4031 = vpop.f32.mrb[0].mxu0
    %v4032 = vadd.f32 0.0, %v4031
    %v4033 = vpop.f32.mrb[0].mxu0
    %4034 = vmatprep.mubr.bf16.mxu0 0
    %4035 = vmatmul.mubr.bf16.gmra.mrb[0].mxu0 %v3765
    %v4036 = vpop.f32.mrb[0].mxu0
    %v4037 = vadd.f32 0.0, %v4036
    %v4038 = vpop.f32.mrb[0].mxu0
    %v4039 = vpop.f32.mrb[0].mxu0
    %v4040 = vadd.f32 0.0, %v4039
    %v4041 = vpop.f32.mrb[0].mxu0
    %4042 = vmatprep.mubr.bf16.mxu0 0
    %4043 = vmatmul.mubr.bf16.gmra.mrb[0].mxu0 %v3768
    %v4044 = vpop.f32.mrb[0].mxu0
    %v4045 = vadd.f32 0.0, %v4044
    %v4046 = vpop.f32.mrb[0].mxu0
    %v4047 = vpop.f32.mrb[0].mxu0
    %v4048 = vadd.f32 0.0, %v4047
    %v4049 = vpop.f32.mrb[0].mxu0
    %4050 = vmatprep.mubr.bf16.mxu0 0
    %4051 = vmatmul.mubr.bf16.gmra.mrb[0].mxu0 %v3771
    %v4052 = vpop.f32.mrb[0].mxu0
    %v4053 = vadd.f32 0.0, %v4052
    %v4054 = vpop.f32.mrb[0].mxu0
    %v4055 = vpop.f32.mrb[0].mxu0
    %v4056 = vadd.f32 0.0, %v4055
    %v4057 = vpop.f32.mrb[0].mxu0
    %4058 = vmatprep.mubr.bf16.mxu0 0
    %4059 = vmatmul.mubr.bf16.gmra.mrb[0].mxu0 %v3774
    %v4060 = vpop.f32.mrb[0].mxu0
    %v4061 = vadd.f32 0.0, %v4060
    %v4062 = vpop.f32.mrb[0].mxu0
    %v4063 = vpop.f32.mrb[0].mxu0
    %v4064 = vadd.f32 0.0, %v4063
    %v4065 = vpop.f32.mrb[0].mxu0
    %4066 = vmatprep.mubr.bf16.mxu0 0
    %4067 = vmatmul.mubr.bf16.gmra.mrb[0].mxu0 %v3777
    %v4068 = vpop.f32.mrb[0].mxu0
    %v4069 = vadd.f32 0.0, %v4068
    %v4070 = vpop.f32.mrb[0].mxu0
    %v4071 = vpop.f32.mrb[0].mxu0
    %v4072 = vadd.f32 0.0, %v4071
    %v4073 = vpop.f32.mrb[0].mxu0
    %4074 = vdwg.mxu0
    %v4075 = vsel %vm212, %v3821, 0.0
    %v4076 = vsel %vm212, %v3824, 0.0
    %v4077 = vadd.f32 %v4075, %v4076
    %v4078 = vsel %vm212, %v3829, 0.0
    %v4079 = vadd.f32 %v4077, %v4078
    %v4080 = vsel %vm212, %v3832, 0.0
    %v4081 = vadd.f32 %v4079, %v4080
    %v4082 = vsel %vm212, %v3837, 0.0
    %v4083 = vadd.f32 %v4081, %v4082
    %v4084 = vsel %vm212, %v3840, 0.0
    %v4085 = vadd.f32 %v4083, %v4084
    %v4086 = vsel %vm212, %v3845, 0.0
    %v4087 = vadd.f32 %v4085, %v4086
    %v4088 = vsel %vm212, %v3848, 0.0
    %v4089 = vadd.f32 %v4087, %v4088
    %v4090 = vsel %vm212, %v3853, 0.0
    %v4091 = vadd.f32 %v4089, %v4090
    %v4092 = vsel %vm212, %v3856, 0.0
    %v4093 = vadd.f32 %v4091, %v4092
    %v4094 = vsel %vm212, %v3861, 0.0
    %v4095 = vadd.f32 %v4093, %v4094
    %v4096 = vsel %vm212, %v3864, 0.0
    %v4097 = vadd.f32 %v4095, %v4096
    %v4098 = vsel %vm212, %v3869, 0.0
    %v4099 = vadd.f32 %v4097, %v4098
    %v4100 = vsel %vm212, %v3872, 0.0
    %v4101 = vadd.f32 %v4099, %v4100
    %v4102 = vsel %vm212, %v3877, 0.0
    %v4103 = vadd.f32 %v4101, %v4102
    %v4104 = vsel %vm212, %v3880, 0.0
    %v4105 = vadd.f32 %v4103, %v4104
    %v4106 = vsel %vm212, %v3885, 0.0
    %v4107 = vadd.f32 %v4105, %v4106
    %v4108 = vsel %vm212, %v3888, 0.0
    %v4109 = vadd.f32 %v4107, %v4108
    %v4110 = vsel %vm212, %v3893, 0.0
    %v4111 = vadd.f32 %v4109, %v4110
    %v4112 = vsel %vm212, %v3896, 0.0
    %v4113 = vadd.f32 %v4111, %v4112
    %v4114 = vsel %vm212, %v3901, 0.0
    %v4115 = vadd.f32 %v4113, %v4114
    %v4116 = vsel %vm212, %v3904, 0.0
    %v4117 = vadd.f32 %v4115, %v4116
    %v4118 = vsel %vm212, %v3909, 0.0
    %v4119 = vadd.f32 %v4117, %v4118
    %v4120 = vsel %vm212, %v3912, 0.0
    %v4121 = vadd.f32 %v4119, %v4120
    %v4122 = vsel %vm212, %v3917, 0.0
    %v4123 = vadd.f32 %v4121, %v4122
    %v4124 = vsel %vm212, %v3920, 0.0
    %v4125 = vadd.f32 %v4123, %v4124
    %v4126 = vsel %vm212, %v3925, 0.0
    %v4127 = vadd.f32 %v4125, %v4126
    %v4128 = vsel %vm212, %v3928, 0.0
    %v4129 = vadd.f32 %v4127, %v4128
    %v4130 = vsel %vm212, %v3933, 0.0
    %v4131 = vadd.f32 %v4129, %v4130
    %v4132 = vsel %vm212, %v3936, 0.0
    %v4133 = vadd.f32 %v4131, %v4132
    %v4134 = vsel %vm212, %v3941, 0.0
    %v4135 = vadd.f32 %v4133, %v4134
    %v4136 = vsel %vm212, %v3944, 0.0
    %v4137 = vadd.f32 %v4135, %v4136
    %v4138 = vsel %vm212, %v3949, 0.0
    %v4139 = vadd.f32 %v4137, %v4138
    %v4140 = vsel %vm212, %v3952, 0.0
    %v4141 = vadd.f32 %v4139, %v4140
    %v4142 = vsel %vm212, %v3957, 0.0
    %v4143 = vadd.f32 %v4141, %v4142
    %v4144 = vsel %vm212, %v3960, 0.0
    %v4145 = vadd.f32 %v4143, %v4144
    %v4146 = vsel %vm212, %v3965, 0.0
    %v4147 = vadd.f32 %v4145, %v4146
    %v4148 = vsel %vm212, %v3968, 0.0
    %v4149 = vadd.f32 %v4147, %v4148
    %v4150 = vsel %vm212, %v3973, 0.0
    %v4151 = vadd.f32 %v4149, %v4150
    %v4152 = vsel %vm212, %v3976, 0.0
    %v4153 = vadd.f32 %v4151, %v4152
    %v4154 = vsel %vm212, %v3981, 0.0
    %v4155 = vadd.f32 %v4153, %v4154
    %v4156 = vsel %vm212, %v3984, 0.0
    %v4157 = vadd.f32 %v4155, %v4156
    %v4158 = vsel %vm212, %v3989, 0.0
    %v4159 = vadd.f32 %v4157, %v4158
    %v4160 = vsel %vm212, %v3992, 0.0
    %v4161 = vadd.f32 %v4159, %v4160
    %v4162 = vsel %vm212, %v3997, 0.0
    %v4163 = vadd.f32 %v4161, %v4162
    %v4164 = vsel %vm212, %v4000, 0.0
    %v4165 = vadd.f32 %v4163, %v4164
    %v4166 = vsel %vm212, %v4005, 0.0
    %v4167 = vadd.f32 %v4165, %v4166
    %v4168 = vsel %vm212, %v4008, 0.0
    %v4169 = vadd.f32 %v4167, %v4168
    %v4170 = vsel %vm212, %v4013, 0.0
    %v4171 = vadd.f32 %v4169, %v4170
    %v4172 = vsel %vm212, %v4016, 0.0
    %v4173 = vadd.f32 %v4171, %v4172
    %v4174 = vsel %vm212, %v4021, 0.0
    %v4175 = vadd.f32 %v4173, %v4174
    %v4176 = vsel %vm212, %v4024, 0.0
    %v4177 = vadd.f32 %v4175, %v4176
    %v4178 = vsel %vm212, %v4029, 0.0
    %v4179 = vadd.f32 %v4177, %v4178
    %v4180 = vsel %vm212, %v4032, 0.0
    %v4181 = vadd.f32 %v4179, %v4180
    %v4182 = vsel %vm212, %v4037, 0.0
    %v4183 = vadd.f32 %v4181, %v4182
    %v4184 = vsel %vm212, %v4040, 0.0
    %v4185 = vadd.f32 %v4183, %v4184
    %v4186 = vsel %vm212, %v4045, 0.0
    %v4187 = vadd.f32 %v4185, %v4186
    %v4188 = vsel %vm212, %v4048, 0.0
    %v4189 = vadd.f32 %v4187, %v4188
    %v4190 = vsel %vm212, %v4053, 0.0
    %v4191 = vadd.f32 %v4189, %v4190
    %v4192 = vsel %vm212, %v4056, 0.0
    %v4193 = vadd.f32 %v4191, %v4192
    %v4194 = vsel %vm212, %v4061, 0.0
    %v4195 = vadd.f32 %v4193, %v4194
    %v4196 = vsel %vm212, %v4064, 0.0
    %v4197 = vadd.f32 %v4195, %v4196
    %v4198 = vsel %vm212, %v4069, 0.0
    %v4199 = vadd.f32 %v4197, %v4198
    %v4200 = vsel %vm212, %v4072, 0.0
    %v4201 = vadd.f32 %v4199, %v4200
    %v4202 = vrot.slane %v4201, 4
    %v4203 = vadd.f32 %v4201, %v4202
    %v4204 = vrot.slane %v4203, 2
    %v4205 = vadd.f32 %v4203, %v4204
    %v4206 = vrot.slane %v4205, 1
    %v4207 = vadd.f32 %v4205, %v4206
    %v4208 = vmul.f32 %v4207, 0.001953125
    %v4209 = vsub.f32 %v3821, %v4208
    %v4210 = vsub.f32 %v3824, %v4208
    %v4211 = vsub.f32 %v3829, %v4208
    %v4212 = vsub.f32 %v3832, %v4208
    %v4213 = vsub.f32 %v3837, %v4208
    %v4214 = vsub.f32 %v3840, %v4208
    %v4215 = vsub.f32 %v3845, %v4208
    %v4216 = vsub.f32 %v3848, %v4208
    %v4217 = vsub.f32 %v3853, %v4208
    %v4218 = vsub.f32 %v3856, %v4208
    %v4219 = vsub.f32 %v3861, %v4208
    %v4220 = vsub.f32 %v3864, %v4208
    %v4221 = vsub.f32 %v3869, %v4208
    %v4222 = vsub.f32 %v3872, %v4208
    %v4223 = vsub.f32 %v3877, %v4208
    %v4224 = vsub.f32 %v3880, %v4208
    %v4225 = vsub.f32 %v3885, %v4208
    %v4226 = vsub.f32 %v3888, %v4208
    %v4227 = vsub.f32 %v3893, %v4208
    %v4228 = vsub.f32 %v3896, %v4208
    %v4229 = vsub.f32 %v3901, %v4208
    %v4230 = vsub.f32 %v3904, %v4208
    %v4231 = vsub.f32 %v3909, %v4208
    %v4232 = vsub.f32 %v3912, %v4208
    %v4233 = vsub.f32 %v3917, %v4208
    %v4234 = vsub.f32 %v3920, %v4208
    %v4235 = vsub.f32 %v3925, %v4208
    %v4236 = vsub.f32 %v3928, %v4208
    %v4237 = vsub.f32 %v3933, %v4208
    %v4238 = vsub.f32 %v3936, %v4208
    %v4239 = vsub.f32 %v3941, %v4208
    %v4240 = vsub.f32 %v3944, %v4208
    %v4241 = vsub.f32 %v3949, %v4208
    %v4242 = vsub.f32 %v3952, %v4208
    %v4243 = vsub.f32 %v3957, %v4208
    %v4244 = vsub.f32 %v3960, %v4208
    %v4245 = vsub.f32 %v3965, %v4208
    %v4246 = vsub.f32 %v3968, %v4208
    %v4247 = vsub.f32 %v3973, %v4208
    %v4248 = vsub.f32 %v3976, %v4208
    %v4249 = vsub.f32 %v3981, %v4208
    %v4250 = vsub.f32 %v3984, %v4208
    %v4251 = vsub.f32 %v3989, %v4208
    %v4252 = vsub.f32 %v3992, %v4208
    %v4253 = vsub.f32 %v3997, %v4208
    %v4254 = vsub.f32 %v4000, %v4208
    %v4255 = vsub.f32 %v4005, %v4208
    %v4256 = vsub.f32 %v4008, %v4208
    %v4257 = vsub.f32 %v4013, %v4208
    %v4258 = vsub.f32 %v4016, %v4208
    %v4259 = vsub.f32 %v4021, %v4208
    %v4260 = vsub.f32 %v4024, %v4208
    %v4261 = vsub.f32 %v4029, %v4208
    %v4262 = vsub.f32 %v4032, %v4208
    %v4263 = vsub.f32 %v4037, %v4208
    %v4264 = vsub.f32 %v4040, %v4208
    %v4265 = vsub.f32 %v4045, %v4208
    %v4266 = vsub.f32 %v4048, %v4208
    %v4267 = vsub.f32 %v4053, %v4208
    %v4268 = vsub.f32 %v4056, %v4208
    %v4269 = vsub.f32 %v4061, %v4208
    %v4270 = vsub.f32 %v4064, %v4208
    %v4271 = vsub.f32 %v4069, %v4208
    %v4272 = vsub.f32 %v4072, %v4208
    %v4273 = vmul.f32 %v4209, %v4209
    %v4274 = vmul.f32 %v4210, %v4210
    %v4275 = vmul.f32 %v4211, %v4211
    %v4276 = vmul.f32 %v4212, %v4212
    %v4277 = vmul.f32 %v4213, %v4213
    %v4278 = vmul.f32 %v4214, %v4214
    %v4279 = vmul.f32 %v4215, %v4215
    %v4280 = vmul.f32 %v4216, %v4216
    %v4281 = vmul.f32 %v4217, %v4217
    %v4282 = vmul.f32 %v4218, %v4218
    %v4283 = vmul.f32 %v4219, %v4219
    %v4284 = vmul.f32 %v4220, %v4220
    %v4285 = vmul.f32 %v4221, %v4221
    %v4286 = vmul.f32 %v4222, %v4222
    %v4287 = vmul.f32 %v4223, %v4223
    %v4288 = vmul.f32 %v4224, %v4224
    %v4289 = vmul.f32 %v4225, %v4225
    %v4290 = vmul.f32 %v4226, %v4226
    %v4291 = vmul.f32 %v4227, %v4227
    %v4292 = vmul.f32 %v4228, %v4228
    %v4293 = vmul.f32 %v4229, %v4229
    %v4294 = vmul.f32 %v4230, %v4230
    %v4295 = vmul.f32 %v4231, %v4231
    %v4296 = vmul.f32 %v4232, %v4232
    %v4297 = vmul.f32 %v4233, %v4233
    %v4298 = vmul.f32 %v4234, %v4234
    %v4299 = vmul.f32 %v4235, %v4235
    %v4300 = vmul.f32 %v4236, %v4236
    %v4301 = vmul.f32 %v4237, %v4237
    %v4302 = vmul.f32 %v4238, %v4238
    %v4303 = vmul.f32 %v4239, %v4239
    %v4304 = vmul.f32 %v4240, %v4240
    %v4305 = vmul.f32 %v4241, %v4241
    %v4306 = vmul.f32 %v4242, %v4242
    %v4307 = vmul.f32 %v4243, %v4243
    %v4308 = vmul.f32 %v4244, %v4244
    %v4309 = vmul.f32 %v4245, %v4245
    %v4310 = vmul.f32 %v4246, %v4246
    %v4311 = vmul.f32 %v4247, %v4247
    %v4312 = vmul.f32 %v4248, %v4248
    %v4313 = vmul.f32 %v4249, %v4249
    %v4314 = vmul.f32 %v4250, %v4250
    %v4315 = vmul.f32 %v4251, %v4251
    %v4316 = vmul.f32 %v4252, %v4252
    %v4317 = vmul.f32 %v4253, %v4253
    %v4318 = vmul.f32 %v4254, %v4254
    %v4319 = vmul.f32 %v4255, %v4255
    %v4320 = vmul.f32 %v4256, %v4256
    %v4321 = vmul.f32 %v4257, %v4257
    %v4322 = vmul.f32 %v4258, %v4258
    %v4323 = vmul.f32 %v4259, %v4259
    %v4324 = vmul.f32 %v4260, %v4260
    %v4325 = vmul.f32 %v4261, %v4261
    %v4326 = vmul.f32 %v4262, %v4262
    %v4327 = vmul.f32 %v4263, %v4263
    %v4328 = vmul.f32 %v4264, %v4264
    %v4329 = vmul.f32 %v4265, %v4265
    %v4330 = vmul.f32 %v4266, %v4266
    %v4331 = vmul.f32 %v4267, %v4267
    %v4332 = vmul.f32 %v4268, %v4268
    %v4333 = vmul.f32 %v4269, %v4269
    %v4334 = vmul.f32 %v4270, %v4270
    %v4335 = vmul.f32 %v4271, %v4271
    %v4336 = vmul.f32 %v4272, %v4272
    %v4337 = vsel %vm212, %v4273, 0.0
    %v4338 = vsel %vm212, %v4274, 0.0
    %v4339 = vadd.f32 %v4337, %v4338
    %v4340 = vsel %vm212, %v4275, 0.0
    %v4341 = vadd.f32 %v4339, %v4340
    %v4342 = vsel %vm212, %v4276, 0.0
    %v4343 = vadd.f32 %v4341, %v4342
    %v4344 = vsel %vm212, %v4277, 0.0
    %v4345 = vadd.f32 %v4343, %v4344
    %v4346 = vsel %vm212, %v4278, 0.0
    %v4347 = vadd.f32 %v4345, %v4346
    %v4348 = vsel %vm212, %v4279, 0.0
    %v4349 = vadd.f32 %v4347, %v4348
    %v4350 = vsel %vm212, %v4280, 0.0
    %v4351 = vadd.f32 %v4349, %v4350
    %v4352 = vsel %vm212, %v4281, 0.0
    %v4353 = vadd.f32 %v4351, %v4352
    %v4354 = vsel %vm212, %v4282, 0.0
    %v4355 = vadd.f32 %v4353, %v4354
    %v4356 = vsel %vm212, %v4283, 0.0
    %v4357 = vadd.f32 %v4355, %v4356
    %v4358 = vsel %vm212, %v4284, 0.0
    %v4359 = vadd.f32 %v4357, %v4358
    %v4360 = vsel %vm212, %v4285, 0.0
    %v4361 = vadd.f32 %v4359, %v4360
    %v4362 = vsel %vm212, %v4286, 0.0
    %v4363 = vadd.f32 %v4361, %v4362
    %v4364 = vsel %vm212, %v4287, 0.0
    %v4365 = vadd.f32 %v4363, %v4364
    %v4366 = vsel %vm212, %v4288, 0.0
    %v4367 = vadd.f32 %v4365, %v4366
    %v4368 = vsel %vm212, %v4289, 0.0
    %v4369 = vadd.f32 %v4367, %v4368
    %v4370 = vsel %vm212, %v4290, 0.0
    %v4371 = vadd.f32 %v4369, %v4370
    %v4372 = vsel %vm212, %v4291, 0.0
    %v4373 = vadd.f32 %v4371, %v4372
    %v4374 = vsel %vm212, %v4292, 0.0
    %v4375 = vadd.f32 %v4373, %v4374
    %v4376 = vsel %vm212, %v4293, 0.0
    %v4377 = vadd.f32 %v4375, %v4376
    %v4378 = vsel %vm212, %v4294, 0.0
    %v4379 = vadd.f32 %v4377, %v4378
    %v4380 = vsel %vm212, %v4295, 0.0
    %v4381 = vadd.f32 %v4379, %v4380
    %v4382 = vsel %vm212, %v4296, 0.0
    %v4383 = vadd.f32 %v4381, %v4382
    %v4384 = vsel %vm212, %v4297, 0.0
    %v4385 = vadd.f32 %v4383, %v4384
    %v4386 = vsel %vm212, %v4298, 0.0
    %v4387 = vadd.f32 %v4385, %v4386
    %v4388 = vsel %vm212, %v4299, 0.0
    %v4389 = vadd.f32 %v4387, %v4388
    %v4390 = vsel %vm212, %v4300, 0.0
    %v4391 = vadd.f32 %v4389, %v4390
    %v4392 = vsel %vm212, %v4301, 0.0
    %v4393 = vadd.f32 %v4391, %v4392
    %v4394 = vsel %vm212, %v4302, 0.0
    %v4395 = vadd.f32 %v4393, %v4394
    %v4396 = vsel %vm212, %v4303, 0.0
    %v4397 = vadd.f32 %v4395, %v4396
    %v4398 = vsel %vm212, %v4304, 0.0
    %v4399 = vadd.f32 %v4397, %v4398
    %v4400 = vsel %vm212, %v4305, 0.0
    %v4401 = vadd.f32 %v4399, %v4400
    %v4402 = vsel %vm212, %v4306, 0.0
    %v4403 = vadd.f32 %v4401, %v4402
    %v4404 = vsel %vm212, %v4307, 0.0
    %v4405 = vadd.f32 %v4403, %v4404
    %v4406 = vsel %vm212, %v4308, 0.0
    %v4407 = vadd.f32 %v4405, %v4406
    %v4408 = vsel %vm212, %v4309, 0.0
    %v4409 = vadd.f32 %v4407, %v4408
    %v4410 = vsel %vm212, %v4310, 0.0
    %v4411 = vadd.f32 %v4409, %v4410
    %v4412 = vsel %vm212, %v4311, 0.0
    %v4413 = vadd.f32 %v4411, %v4412
    %v4414 = vsel %vm212, %v4312, 0.0
    %v4415 = vadd.f32 %v4413, %v4414
    %v4416 = vsel %vm212, %v4313, 0.0
    %v4417 = vadd.f32 %v4415, %v4416
    %v4418 = vsel %vm212, %v4314, 0.0
    %v4419 = vadd.f32 %v4417, %v4418
    %v4420 = vsel %vm212, %v4315, 0.0
    %v4421 = vadd.f32 %v4419, %v4420
    %v4422 = vsel %vm212, %v4316, 0.0
    %v4423 = vadd.f32 %v4421, %v4422
    %v4424 = vsel %vm212, %v4317, 0.0
    %v4425 = vadd.f32 %v4423, %v4424
    %v4426 = vsel %vm212, %v4318, 0.0
    %v4427 = vadd.f32 %v4425, %v4426
    %v4428 = vsel %vm212, %v4319, 0.0
    %v4429 = vadd.f32 %v4427, %v4428
    %v4430 = vsel %vm212, %v4320, 0.0
    %v4431 = vadd.f32 %v4429, %v4430
    %v4432 = vsel %vm212, %v4321, 0.0
    %v4433 = vadd.f32 %v4431, %v4432
    %v4434 = vsel %vm212, %v4322, 0.0
    %v4435 = vadd.f32 %v4433, %v4434
    %v4436 = vsel %vm212, %v4323, 0.0
    %v4437 = vadd.f32 %v4435, %v4436
    %v4438 = vsel %vm212, %v4324, 0.0
    %v4439 = vadd.f32 %v4437, %v4438
    %v4440 = vsel %vm212, %v4325, 0.0
    %v4441 = vadd.f32 %v4439, %v4440
    %v4442 = vsel %vm212, %v4326, 0.0
    %v4443 = vadd.f32 %v4441, %v4442
    %v4444 = vsel %vm212, %v4327, 0.0
    %v4445 = vadd.f32 %v4443, %v4444
    %v4446 = vsel %vm212, %v4328, 0.0
    %v4447 = vadd.f32 %v4445, %v4446
    %v4448 = vsel %vm212, %v4329, 0.0
    %v4449 = vadd.f32 %v4447, %v4448
    %v4450 = vsel %vm212, %v4330, 0.0
    %v4451 = vadd.f32 %v4449, %v4450
    %v4452 = vsel %vm212, %v4331, 0.0
    %v4453 = vadd.f32 %v4451, %v4452
    %v4454 = vsel %vm212, %v4332, 0.0
    %v4455 = vadd.f32 %v4453, %v4454
    %v4456 = vsel %vm212, %v4333, 0.0
    %v4457 = vadd.f32 %v4455, %v4456
    %v4458 = vsel %vm212, %v4334, 0.0
    %v4459 = vadd.f32 %v4457, %v4458
    %v4460 = vsel %vm212, %v4335, 0.0
    %v4461 = vadd.f32 %v4459, %v4460
    %v4462 = vsel %vm212, %v4336, 0.0
    %v4463 = vadd.f32 %v4461, %v4462
    %v4464 = vrot.slane %v4463, 4
    %v4465 = vadd.f32 %v4463, %v4464
    %v4466 = vrot.slane %v4465, 2
    %v4467 = vadd.f32 %v4465, %v4466
    %v4468 = vrot.slane %v4467, 1
    %v4469 = vadd.f32 %v4467, %v4468
    %v4470 = vmul.f32 %v4469, 0.001953125
    %v4471 = vld [vmem:[#allocation18] sm:$0x1]
    %v4472 = vadd.f32 %v4470, 1e-05
    %v4473 = vrsqrt.pop %v4472
    %v4474 = vmul.f32 %v4471, %v4473
    %v4475 = vlaneseq
    %v4476 = vshrl.u32 %v4475, 7
    %v4477 = vsub.s32 0, %v4476
    %v4478 = vrot.slane %v4474, %v4477
    %v4479 = vmul.f32 %v4209, %v4478
    %v4480 = vmul.f32 %v4210, %v4478
    %v4481 = vmul.f32 %v4211, %v4478
    %v4482 = vmul.f32 %v4212, %v4478
    %v4483 = vmul.f32 %v4213, %v4478
    %v4484 = vmul.f32 %v4214, %v4478
    %v4485 = vmul.f32 %v4215, %v4478
    %v4486 = vmul.f32 %v4216, %v4478
    %v4487 = vmul.f32 %v4217, %v4478
    %v4488 = vmul.f32 %v4218, %v4478
    %v4489 = vmul.f32 %v4219, %v4478
    %v4490 = vmul.f32 %v4220, %v4478
    %v4491 = vmul.f32 %v4221, %v4478
    %v4492 = vmul.f32 %v4222, %v4478
    %v4493 = vmul.f32 %v4223, %v4478
    %v4494 = vmul.f32 %v4224, %v4478
    %v4495 = vmul.f32 %v4225, %v4478
    %v4496 = vmul.f32 %v4226, %v4478
    %v4497 = vmul.f32 %v4227, %v4478
    %v4498 = vmul.f32 %v4228, %v4478
    %v4499 = vmul.f32 %v4229, %v4478
    %v4500 = vmul.f32 %v4230, %v4478
    %v4501 = vmul.f32 %v4231, %v4478
    %v4502 = vmul.f32 %v4232, %v4478
    %v4503 = vmul.f32 %v4233, %v4478
    %v4504 = vmul.f32 %v4234, %v4478
    %v4505 = vmul.f32 %v4235, %v4478
    %v4506 = vmul.f32 %v4236, %v4478
    %v4507 = vmul.f32 %v4237, %v4478
    %v4508 = vmul.f32 %v4238, %v4478
    %v4509 = vmul.f32 %v4239, %v4478
    %v4510 = vmul.f32 %v4240, %v4478
    %v4511 = vmul.f32 %v4241, %v4478
    %v4512 = vmul.f32 %v4242, %v4478
    %v4513 = vmul.f32 %v4243, %v4478
    %v4514 = vmul.f32 %v4244, %v4478
    %v4515 = vmul.f32 %v4245, %v4478
    %v4516 = vmul.f32 %v4246, %v4478
    %v4517 = vmul.f32 %v4247, %v4478
    %v4518 = vmul.f32 %v4248, %v4478
    %v4519 = vmul.f32 %v4249, %v4478
    %v4520 = vmul.f32 %v4250, %v4478
    %v4521 = vmul.f32 %v4251, %v4478
    %v4522 = vmul.f32 %v4252, %v4478
    %v4523 = vmul.f32 %v4253, %v4478
    %v4524 = vmul.f32 %v4254, %v4478
    %v4525 = vmul.f32 %v4255, %v4478
    %v4526 = vmul.f32 %v4256, %v4478
    %v4527 = vmul.f32 %v4257, %v4478
    %v4528 = vmul.f32 %v4258, %v4478
    %v4529 = vmul.f32 %v4259, %v4478
    %v4530 = vmul.f32 %v4260, %v4478
    %v4531 = vmul.f32 %v4261, %v4478
    %v4532 = vmul.f32 %v4262, %v4478
    %v4533 = vmul.f32 %v4263, %v4478
    %v4534 = vmul.f32 %v4264, %v4478
    %v4535 = vmul.f32 %v4265, %v4478
    %v4536 = vmul.f32 %v4266, %v4478
    %v4537 = vmul.f32 %v4267, %v4478
    %v4538 = vmul.f32 %v4268, %v4478
    %v4539 = vmul.f32 %v4269, %v4478
    %v4540 = vmul.f32 %v4270, %v4478
    %v4541 = vmul.f32 %v4271, %v4478
    %v4542 = vmul.f32 %v4272, %v4478
    %v4543 = vld [vmem:[#allocation18 + $0x1] sm:$0x1]
    %v4544 = vlaneseq
    %v4545 = vshrl.u32 %v4544, 7
    %v4546 = vsub.s32 0, %v4545
    %v4547 = vrot.slane %v4543, %v4546
    %v4548 = vadd.f32 %v4479, %v4547
    %v4549 = vadd.f32 %v4480, %v4547
    %v4550 = vadd.f32 %v4481, %v4547
    %v4551 = vadd.f32 %v4482, %v4547
    %v4552 = vadd.f32 %v4483, %v4547
    %v4553 = vadd.f32 %v4484, %v4547
    %v4554 = vadd.f32 %v4485, %v4547
    %v4555 = vadd.f32 %v4486, %v4547
    %v4556 = vadd.f32 %v4487, %v4547
    %v4557 = vadd.f32 %v4488, %v4547
    %v4558 = vadd.f32 %v4489, %v4547
    %v4559 = vadd.f32 %v4490, %v4547
    %v4560 = vadd.f32 %v4491, %v4547
    %v4561 = vadd.f32 %v4492, %v4547
    %v4562 = vadd.f32 %v4493, %v4547
    %v4563 = vadd.f32 %v4494, %v4547
    %v4564 = vadd.f32 %v4495, %v4547
    %v4565 = vadd.f32 %v4496, %v4547
    %v4566 = vadd.f32 %v4497, %v4547
    %v4567 = vadd.f32 %v4498, %v4547
    %v4568 = vadd.f32 %v4499, %v4547
    %v4569 = vadd.f32 %v4500, %v4547
    %v4570 = vadd.f32 %v4501, %v4547
    %v4571 = vadd.f32 %v4502, %v4547
    %v4572 = vadd.f32 %v4503, %v4547
    %v4573 = vadd.f32 %v4504, %v4547
    %v4574 = vadd.f32 %v4505, %v4547
    %v4575 = vadd.f32 %v4506, %v4547
    %v4576 = vadd.f32 %v4507, %v4547
    %v4577 = vadd.f32 %v4508, %v4547
    %v4578 = vadd.f32 %v4509, %v4547
    %v4579 = vadd.f32 %v4510, %v4547
    %v4580 = vadd.f32 %v4511, %v4547
    %v4581 = vadd.f32 %v4512, %v4547
    %v4582 = vadd.f32 %v4513, %v4547
    %v4583 = vadd.f32 %v4514, %v4547
    %v4584 = vadd.f32 %v4515, %v4547
    %v4585 = vadd.f32 %v4516, %v4547
    %v4586 = vadd.f32 %v4517, %v4547
    %v4587 = vadd.f32 %v4518, %v4547
    %v4588 = vadd.f32 %v4519, %v4547
    %v4589 = vadd.f32 %v4520, %v4547
    %v4590 = vadd.f32 %v4521, %v4547
    %v4591 = vadd.f32 %v4522, %v4547
    %v4592 = vadd.f32 %v4523, %v4547
    %v4593 = vadd.f32 %v4524, %v4547
    %v4594 = vadd.f32 %v4525, %v4547
    %v4595 = vadd.f32 %v4526, %v4547
    %v4596 = vadd.f32 %v4527, %v4547
    %v4597 = vadd.f32 %v4528, %v4547
    %v4598 = vadd.f32 %v4529, %v4547
    %v4599 = vadd.f32 %v4530, %v4547
    %v4600 = vadd.f32 %v4531, %v4547
    %v4601 = vadd.f32 %v4532, %v4547
    %v4602 = vadd.f32 %v4533, %v4547
    %v4603 = vadd.f32 %v4534, %v4547
    %v4604 = vadd.f32 %v4535, %v4547
    %v4605 = vadd.f32 %v4536, %v4547
    %v4606 = vadd.f32 %v4537, %v4547
    %v4607 = vadd.f32 %v4538, %v4547
    %v4608 = vadd.f32 %v4539, %v4547
    %v4609 = vadd.f32 %v4540, %v4547
    %v4610 = vadd.f32 %v4541, %v4547
    %v4611 = vadd.f32 %v4542, %v4547
    %v4612 = vmax.f32 %v4548, 0.0
    %v4613 = vmax.f32 %v4549, 0.0
    %v4614 = vmax.f32 %v4550, 0.0
    %v4615 = vmax.f32 %v4551, 0.0
    %v4616 = vmax.f32 %v4552, 0.0
    %v4617 = vmax.f32 %v4553, 0.0
    %v4618 = vmax.f32 %v4554, 0.0
    %v4619 = vmax.f32 %v4555, 0.0
    %v4620 = vmax.f32 %v4556, 0.0
    %v4621 = vmax.f32 %v4557, 0.0
    %v4622 = vmax.f32 %v4558, 0.0
    %v4623 = vmax.f32 %v4559, 0.0
    %v4624 = vmax.f32 %v4560, 0.0
    %v4625 = vmax.f32 %v4561, 0.0
    %v4626 = vmax.f32 %v4562, 0.0
    %v4627 = vmax.f32 %v4563, 0.0
    %v4628 = vmax.f32 %v4564, 0.0
    %v4629 = vmax.f32 %v4565, 0.0
    %v4630 = vmax.f32 %v4566, 0.0
    %v4631 = vmax.f32 %v4567, 0.0
    %v4632 = vmax.f32 %v4568, 0.0
    %v4633 = vmax.f32 %v4569, 0.0
    %v4634 = vmax.f32 %v4570, 0.0
    %v4635 = vmax.f32 %v4571, 0.0
    %v4636 = vmax.f32 %v4572, 0.0
    %v4637 = vmax.f32 %v4573, 0.0
    %v4638 = vmax.f32 %v4574, 0.0
    %v4639 = vmax.f32 %v4575, 0.0
    %v4640 = vmax.f32 %v4576, 0.0
    %v4641 = vmax.f32 %v4577, 0.0
    %v4642 = vmax.f32 %v4578, 0.0
    %v4643 = vmax.f32 %v4579, 0.0
    %v4644 = vmax.f32 %v4580, 0.0
    %v4645 = vmax.f32 %v4581, 0.0
    %v4646 = vmax.f32 %v4582, 0.0
    %v4647 = vmax.f32 %v4583, 0.0
    %v4648 = vmax.f32 %v4584, 0.0
    %v4649 = vmax.f32 %v4585, 0.0
    %v4650 = vmax.f32 %v4586, 0.0
    %v4651 = vmax.f32 %v4587, 0.0
    %v4652 = vmax.f32 %v4588, 0.0
    %v4653 = vmax.f32 %v4589, 0.0
    %v4654 = vmax.f32 %v4590, 0.0
    %v4655 = vmax.f32 %v4591, 0.0
    %v4656 = vmax.f32 %v4592, 0.0
    %v4657 = vmax.f32 %v4593, 0.0
    %v4658 = vmax.f32 %v4594, 0.0
    %v4659 = vmax.f32 %v4595, 0.0
    %v4660 = vmax.f32 %v4596, 0.0
    %v4661 = vmax.f32 %v4597, 0.0
    %v4662 = vmax.f32 %v4598, 0.0
    %v4663 = vmax.f32 %v4599, 0.0
    %v4664 = vmax.f32 %v4600, 0.0
    %v4665 = vmax.f32 %v4601, 0.0
    %v4666 = vmax.f32 %v4602, 0.0
    %v4667 = vmax.f32 %v4603, 0.0
    %v4668 = vmax.f32 %v4604, 0.0
    %v4669 = vmax.f32 %v4605, 0.0
    %v4670 = vmax.f32 %v4606, 0.0
    %v4671 = vmax.f32 %v4607, 0.0
    %v4672 = vmax.f32 %v4608, 0.0
    %v4673 = vmax.f32 %v4609, 0.0
    %v4674 = vmax.f32 %v4610, 0.0
    %v4675 = vmax.f32 %v4611, 0.0
    %4676 = vst.msk [vmem:[#allocation4] sm:$0xff] %vm212, %v4612
    %4677 = vst.msk [vmem:[#allocation4 + $0x8] sm:$0xff] %vm212, %v4613
    %4678 = vst.msk [vmem:[#allocation4 + $0x10] sm:$0xff] %vm212, %v4614
    %4679 = vst.msk [vmem:[#allocation4 + $0x18] sm:$0xff] %vm212, %v4615
    %4680 = vst.msk [vmem:[#allocation4 + $0x20] sm:$0xff] %vm212, %v4616
    %4681 = vst.msk [vmem:[#allocation4 + $0x28] sm:$0xff] %vm212, %v4617
    %4682 = vst.msk [vmem:[#allocation4 + $0x30] sm:$0xff] %vm212, %v4618
    %4683 = vst.msk [vmem:[#allocation4 + $0x38] sm:$0xff] %vm212, %v4619
    %4684 = vst.msk [vmem:[#allocation4 + $0x40] sm:$0xff] %vm212, %v4620
    %4685 = vst.msk [vmem:[#allocation4 + $0x48] sm:$0xff] %vm212, %v4621
    %4686 = vst.msk [vmem:[#allocation4 + $0x50] sm:$0xff] %vm212, %v4622
    %4687 = vst.msk [vmem:[#allocation4 + $0x58] sm:$0xff] %vm212, %v4623
    %4688 = vst.msk [vmem:[#allocation4 + $0x60] sm:$0xff] %vm212, %v4624
    %4689 = vst.msk [vmem:[#allocation4 + $0x68] sm:$0xff] %vm212, %v4625
    %4690 = vst.msk [vmem:[#allocation4 + $0x70] sm:$0xff] %vm212, %v4626
    %4691 = vst.msk [vmem:[#allocation4 + $0x78] sm:$0xff] %vm212, %v4627
    %4692 = vst.msk [vmem:[#allocation4 + $0x80] sm:$0xff] %vm212, %v4628
    %4693 = vst.msk [vmem:[#allocation4 + $0x88] sm:$0xff] %vm212, %v4629
    %4694 = vst.msk [vmem:[#allocation4 + $0x90] sm:$0xff] %vm212, %v4630
    %4695 = vst.msk [vmem:[#allocation4 + $0x98] sm:$0xff] %vm212, %v4631
    %4696 = vst.msk [vmem:[#allocation4 + $0xa0] sm:$0xff] %vm212, %v4632
    %4697 = vst.msk [vmem:[#allocation4 + $0xa8] sm:$0xff] %vm212, %v4633
    %4698 = vst.msk [vmem:[#allocation4 + $0xb0] sm:$0xff] %vm212, %v4634
    %4699 = vst.msk [vmem:[#allocation4 + $0xb8] sm:$0xff] %vm212, %v4635
    %4700 = vst.msk [vmem:[#allocation4 + $0xc0] sm:$0xff] %vm212, %v4636
    %4701 = vst.msk [vmem:[#allocation4 + $0xc8] sm:$0xff] %vm212, %v4637
    %4702 = vst.msk [vmem:[#allocation4 + $0xd0] sm:$0xff] %vm212, %v4638
    %4703 = vst.msk [vmem:[#allocation4 + $0xd8] sm:$0xff] %vm212, %v4639
    %4704 = vst.msk [vmem:[#allocation4 + $0xe0] sm:$0xff] %vm212, %v4640
    %4705 = vst.msk [vmem:[#allocation4 + $0xe8] sm:$0xff] %vm212, %v4641
    %4706 = vst.msk [vmem:[#allocation4 + $0xf0] sm:$0xff] %vm212, %v4642
    %4707 = vst.msk [vmem:[#allocation4 + $0xf8] sm:$0xff] %vm212, %v4643
    %4708 = vst.msk [vmem:[#allocation4 + $0x100] sm:$0xff] %vm212, %v4644
    %4709 = vst.msk [vmem:[#allocation4 + $0x108] sm:$0xff] %vm212, %v4645
    %4710 = vst.msk [vmem:[#allocation4 + $0x110] sm:$0xff] %vm212, %v4646
    %4711 = vst.msk [vmem:[#allocation4 + $0x118] sm:$0xff] %vm212, %v4647
    %4712 = vst.msk [vmem:[#allocation4 + $0x120] sm:$0xff] %vm212, %v4648
    %4713 = vst.msk [vmem:[#allocation4 + $0x128] sm:$0xff] %vm212, %v4649
    %4714 = vst.msk [vmem:[#allocation4 + $0x130] sm:$0xff] %vm212, %v4650
    %4715 = vst.msk [vmem:[#allocation4 + $0x138] sm:$0xff] %vm212, %v4651
    %4716 = vst.msk [vmem:[#allocation4 + $0x140] sm:$0xff] %vm212, %v4652
    %4717 = vst.msk [vmem:[#allocation4 + $0x148] sm:$0xff] %vm212, %v4653
    %4718 = vst.msk [vmem:[#allocation4 + $0x150] sm:$0xff] %vm212, %v4654
    %4719 = vst.msk [vmem:[#allocation4 + $0x158] sm:$0xff] %vm212, %v4655
    %4720 = vst.msk [vmem:[#allocation4 + $0x160] sm:$0xff] %vm212, %v4656
    %4721 = vst.msk [vmem:[#allocation4 + $0x168] sm:$0xff] %vm212, %v4657
    %4722 = vst.msk [vmem:[#allocation4 + $0x170] sm:$0xff] %vm212, %v4658
    %4723 = vst.msk [vmem:[#allocation4 + $0x178] sm:$0xff] %vm212, %v4659
    %4724 = vst.msk [vmem:[#allocation4 + $0x180] sm:$0xff] %vm212, %v4660
    %4725 = vst.msk [vmem:[#allocation4 + $0x188] sm:$0xff] %vm212, %v4661
    %4726 = vst.msk [vmem:[#allocation4 + $0x190] sm:$0xff] %vm212, %v4662
    %4727 = vst.msk [vmem:[#allocation4 + $0x198] sm:$0xff] %vm212, %v4663
    %4728 = vst.msk [vmem:[#allocation4 + $0x1a0] sm:$0xff] %vm212, %v4664
    %4729 = vst.msk [vmem:[#allocation4 + $0x1a8] sm:$0xff] %vm212, %v4665
    %4730 = vst.msk [vmem:[#allocation4 + $0x1b0] sm:$0xff] %vm212, %v4666
    %4731 = vst.msk [vmem:[#allocation4 + $0x1b8] sm:$0xff] %vm212, %v4667
    %4732 = vst.msk [vmem:[#allocation4 + $0x1c0] sm:$0xff] %vm212, %v4668
    %4733 = vst.msk [vmem:[#allocation4 + $0x1c8] sm:$0xff] %vm212, %v4669
    %4734 = vst.msk [vmem:[#allocation4 + $0x1d0] sm:$0xff] %vm212, %v4670
    %4735 = vst.msk [vmem:[#allocation4 + $0x1d8] sm:$0xff] %vm212, %v4671
    %4736 = vst.msk [vmem:[#allocation4 + $0x1e0] sm:$0xff] %vm212, %v4672
    %4737 = vst.msk [vmem:[#allocation4 + $0x1e8] sm:$0xff] %vm212, %v4673
    %4738 = vst.msk [vmem:[#allocation4 + $0x1f0] sm:$0xff] %vm212, %v4674
    %4739 = vst.msk [vmem:[#allocation4 + $0x1f8] sm:$0xff] %vm212, %v4675
    %v4740 = vld [vmem:[#allocation4] ss:$2 sm:$0xff]
    %s4741 = scalar_lea.vmem [#allocation4], 16
    %v4742 = vld [vmem:[%s4741] ss:$2 sm:$0xff]
    %s4743 = scalar_lea.vmem [#allocation4], 32
    %v4744 = vld [vmem:[%s4743] ss:$2 sm:$0xff]
    %s4745 = scalar_lea.vmem [#allocation4], 48
    %v4746 = vld [vmem:[%s4745] ss:$2 sm:$0xff]
    %s4747 = scalar_lea.vmem [#allocation4], 64
    %v4748 = vld [vmem:[%s4747] ss:$2 sm:$0xff]
    %s4749 = scalar_lea.vmem [#allocation4], 80
    %v4750 = vld [vmem:[%s4749] ss:$2 sm:$0xff]
    %s4751 = scalar_lea.vmem [#allocation4], 96
    %v4752 = vld [vmem:[%s4751] ss:$2 sm:$0xff]
    %s4753 = scalar_lea.vmem [#allocation4], 112
    %v4754 = vld [vmem:[%s4753] ss:$2 sm:$0xff]
    %s4755 = scalar_lea.vmem [#allocation4], 128
    %v4756 = vld [vmem:[%s4755] ss:$2 sm:$0xff]
    %s4757 = scalar_lea.vmem [#allocation4], 144
    %v4758 = vld [vmem:[%s4757] ss:$2 sm:$0xff]
    %s4759 = scalar_lea.vmem [#allocation4], 160
    %v4760 = vld [vmem:[%s4759] ss:$2 sm:$0xff]
    %s4761 = scalar_lea.vmem [#allocation4], 176
    %v4762 = vld [vmem:[%s4761] ss:$2 sm:$0xff]
    %s4763 = scalar_lea.vmem [#allocation4], 192
    %v4764 = vld [vmem:[%s4763] ss:$2 sm:$0xff]
    %s4765 = scalar_lea.vmem [#allocation4], 208
    %v4766 = vld [vmem:[%s4765] ss:$2 sm:$0xff]
    %s4767 = scalar_lea.vmem [#allocation4], 224
    %v4768 = vld [vmem:[%s4767] ss:$2 sm:$0xff]
    %s4769 = scalar_lea.vmem [#allocation4], 240
    %v4770 = vld [vmem:[%s4769] ss:$2 sm:$0xff]
    %s4771 = scalar_lea.vmem [#allocation4], 256
    %v4772 = vld [vmem:[%s4771] ss:$2 sm:$0xff]
    %s4773 = scalar_lea.vmem [#allocation4], 272
    %v4774 = vld [vmem:[%s4773] ss:$2 sm:$0xff]
    %s4775 = scalar_lea.vmem [#allocation4], 288
    %v4776 = vld [vmem:[%s4775] ss:$2 sm:$0xff]
    %s4777 = scalar_lea.vmem [#allocation4], 304
    %v4778 = vld [vmem:[%s4777] ss:$2 sm:$0xff]
    %s4779 = scalar_lea.vmem [#allocation4], 320
    %v4780 = vld [vmem:[%s4779] ss:$2 sm:$0xff]
    %s4781 = scalar_lea.vmem [#allocation4], 336
    %v4782 = vld [vmem:[%s4781] ss:$2 sm:$0xff]
    %s4783 = scalar_lea.vmem [#allocation4], 352
    %v4784 = vld [vmem:[%s4783] ss:$2 sm:$0xff]
    %s4785 = scalar_lea.vmem [#allocation4], 368
    %v4786 = vld [vmem:[%s4785] ss:$2 sm:$0xff]
    %s4787 = scalar_lea.vmem [#allocation4], 384
    %v4788 = vld [vmem:[%s4787] ss:$2 sm:$0xff]
    %s4789 = scalar_lea.vmem [#allocation4], 400
    %v4790 = vld [vmem:[%s4789] ss:$2 sm:$0xff]
    %s4791 = scalar_lea.vmem [#allocation4], 416
    %v4792 = vld [vmem:[%s4791] ss:$2 sm:$0xff]
    %s4793 = scalar_lea.vmem [#allocation4], 432
    %v4794 = vld [vmem:[%s4793] ss:$2 sm:$0xff]
    %s4795 = scalar_lea.vmem [#allocation4], 448
    %v4796 = vld [vmem:[%s4795] ss:$2 sm:$0xff]
    %s4797 = scalar_lea.vmem [#allocation4], 464
    %v4798 = vld [vmem:[%s4797] ss:$2 sm:$0xff]
    %s4799 = scalar_lea.vmem [#allocation4], 480
    %v4800 = vld [vmem:[%s4799] ss:$2 sm:$0xff]
    %s4801 = scalar_lea.vmem [#allocation4], 496
    %v4802 = vld [vmem:[%s4801] ss:$2 sm:$0xff]
    %s4803 = scalar_lea.vmem [#allocation4], 1
    %v4804 = vld [vmem:[%s4803] ss:$2 sm:$0xff]
    %s4805 = scalar_lea.vmem [#allocation4], 17
    %v4806 = vld [vmem:[%s4805] ss:$2 sm:$0xff]
    %s4807 = scalar_lea.vmem [#allocation4], 33
    %v4808 = vld [vmem:[%s4807] ss:$2 sm:$0xff]
    %s4809 = scalar_lea.vmem [#allocation4], 49
    %v4810 = vld [vmem:[%s4809] ss:$2 sm:$0xff]
    %s4811 = scalar_lea.vmem [#allocation4], 65
    %v4812 = vld [vmem:[%s4811] ss:$2 sm:$0xff]
    %s4813 = scalar_lea.vmem [#allocation4], 81
    %v4814 = vld [vmem:[%s4813] ss:$2 sm:$0xff]
    %s4815 = scalar_lea.vmem [#allocation4], 97
    %v4816 = vld [vmem:[%s4815] ss:$2 sm:$0xff]
    %s4817 = scalar_lea.vmem [#allocation4], 113
    %v4818 = vld [vmem:[%s4817] ss:$2 sm:$0xff]
    %s4819 = scalar_lea.vmem [#allocation4], 129
    %v4820 = vld [vmem:[%s4819] ss:$2 sm:$0xff]
    %s4821 = scalar_lea.vmem [#allocation4], 145
    %v4822 = vld [vmem:[%s4821] ss:$2 sm:$0xff]
    %s4823 = scalar_lea.vmem [#allocation4], 161
    %v4824 = vld [vmem:[%s4823] ss:$2 sm:$0xff]
    %s4825 = scalar_lea.vmem [#allocation4], 177
    %v4826 = vld [vmem:[%s4825] ss:$2 sm:$0xff]
    %s4827 = scalar_lea.vmem [#allocation4], 193
    %v4828 = vld [vmem:[%s4827] ss:$2 sm:$0xff]
    %s4829 = scalar_lea.vmem [#allocation4], 209
    %v4830 = vld [vmem:[%s4829] ss:$2 sm:$0xff]
    %s4831 = scalar_lea.vmem [#allocation4], 225
    %v4832 = vld [vmem:[%s4831] ss:$2 sm:$0xff]
    %s4833 = scalar_lea.vmem [#allocation4], 241
    %v4834 = vld [vmem:[%s4833] ss:$2 sm:$0xff]
    %s4835 = scalar_lea.vmem [#allocation4], 257
    %v4836 = vld [vmem:[%s4835] ss:$2 sm:$0xff]
    %s4837 = scalar_lea.vmem [#allocation4], 273
    %v4838 = vld [vmem:[%s4837] ss:$2 sm:$0xff]
    %s4839 = scalar_lea.vmem [#allocation4], 289
    %v4840 = vld [vmem:[%s4839] ss:$2 sm:$0xff]
    %s4841 = scalar_lea.vmem [#allocation4], 305
    %v4842 = vld [vmem:[%s4841] ss:$2 sm:$0xff]
    %s4843 = scalar_lea.vmem [#allocation4], 321
    %v4844 = vld [vmem:[%s4843] ss:$2 sm:$0xff]
    %s4845 = scalar_lea.vmem [#allocation4], 337
    %v4846 = vld [vmem:[%s4845] ss:$2 sm:$0xff]
    %s4847 = scalar_lea.vmem [#allocation4], 353
    %v4848 = vld [vmem:[%s4847] ss:$2 sm:$0xff]
    %s4849 = scalar_lea.vmem [#allocation4], 369
    %v4850 = vld [vmem:[%s4849] ss:$2 sm:$0xff]
    %s4851 = scalar_lea.vmem [#allocation4], 385
    %v4852 = vld [vmem:[%s4851] ss:$2 sm:$0xff]
    %s4853 = scalar_lea.vmem [#allocation4], 401
    %v4854 = vld [vmem:[%s4853] ss:$2 sm:$0xff]
    %s4855 = scalar_lea.vmem [#allocation4], 417
    %v4856 = vld [vmem:[%s4855] ss:$2 sm:$0xff]
    %s4857 = scalar_lea.vmem [#allocation4], 433
    %v4858 = vld [vmem:[%s4857] ss:$2 sm:$0xff]
    %s4859 = scalar_lea.vmem [#allocation4], 449
    %v4860 = vld [vmem:[%s4859] ss:$2 sm:$0xff]
    %s4861 = scalar_lea.vmem [#allocation4], 465
    %v4862 = vld [vmem:[%s4861] ss:$2 sm:$0xff]
    %s4863 = scalar_lea.vmem [#allocation4], 481
    %v4864 = vld [vmem:[%s4863] ss:$2 sm:$0xff]
    %s4865 = scalar_lea.vmem [#allocation4], 497
    %v4866 = vld [vmem:[%s4865] ss:$2 sm:$0xff]
    %v4867 = vmax.f32 %v4740, %v4804
    %v4868 = vmax.f32 %v4742, %v4806
    %v4869 = vmax.f32 %v4744, %v4808
    %v4870 = vmax.f32 %v4746, %v4810
    %v4871 = vmax.f32 %v4748, %v4812
    %v4872 = vmax.f32 %v4750, %v4814
    %v4873 = vmax.f32 %v4752, %v4816
    %v4874 = vmax.f32 %v4754, %v4818
    %v4875 = vmax.f32 %v4756, %v4820
    %v4876 = vmax.f32 %v4758, %v4822
    %v4877 = vmax.f32 %v4760, %v4824
    %v4878 = vmax.f32 %v4762, %v4826
    %v4879 = vmax.f32 %v4764, %v4828
    %v4880 = vmax.f32 %v4766, %v4830
    %v4881 = vmax.f32 %v4768, %v4832
    %v4882 = vmax.f32 %v4770, %v4834
    %v4883 = vmax.f32 %v4772, %v4836
    %v4884 = vmax.f32 %v4774, %v4838
    %v4885 = vmax.f32 %v4776, %v4840
    %v4886 = vmax.f32 %v4778, %v4842
    %v4887 = vmax.f32 %v4780, %v4844
    %v4888 = vmax.f32 %v4782, %v4846
    %v4889 = vmax.f32 %v4784, %v4848
    %v4890 = vmax.f32 %v4786, %v4850
    %v4891 = vmax.f32 %v4788, %v4852
    %v4892 = vmax.f32 %v4790, %v4854
    %v4893 = vmax.f32 %v4792, %v4856
    %v4894 = vmax.f32 %v4794, %v4858
    %v4895 = vmax.f32 %v4796, %v4860
    %v4896 = vmax.f32 %v4798, %v4862
    %v4897 = vmax.f32 %v4800, %v4864
    %v4898 = vmax.f32 %v4802, %v4866
    %4899 = vst.msk [vmem:[#allocation5] sm:$0xff] %vm212, %v4867
    %4900 = vst.msk [vmem:[#allocation5 + $0x8] sm:$0xff] %vm212, %v4868
    %4901 = vst.msk [vmem:[#allocation5 + $0x10] sm:$0xff] %vm212, %v4869
    %4902 = vst.msk [vmem:[#allocation5 + $0x18] sm:$0xff] %vm212, %v4870
    %4903 = vst.msk [vmem:[#allocation5 + $0x20] sm:$0xff] %vm212, %v4871
    %4904 = vst.msk [vmem:[#allocation5 + $0x28] sm:$0xff] %vm212, %v4872
    %4905 = vst.msk [vmem:[#allocation5 + $0x30] sm:$0xff] %vm212, %v4873
    %4906 = vst.msk [vmem:[#allocation5 + $0x38] sm:$0xff] %vm212, %v4874
    %4907 = vst.msk [vmem:[#allocation5 + $0x40] sm:$0xff] %vm212, %v4875
    %4908 = vst.msk [vmem:[#allocation5 + $0x48] sm:$0xff] %vm212, %v4876
    %4909 = vst.msk [vmem:[#allocation5 + $0x50] sm:$0xff] %vm212, %v4877
    %4910 = vst.msk [vmem:[#allocation5 + $0x58] sm:$0xff] %vm212, %v4878
    %4911 = vst.msk [vmem:[#allocation5 + $0x60] sm:$0xff] %vm212, %v4879
    %4912 = vst.msk [vmem:[#allocation5 + $0x68] sm:$0xff] %vm212, %v4880
    %4913 = vst.msk [vmem:[#allocation5 + $0x70] sm:$0xff] %vm212, %v4881
    %4914 = vst.msk [vmem:[#allocation5 + $0x78] sm:$0xff] %vm212, %v4882
    %4915 = vst.msk [vmem:[#allocation5 + $0x80] sm:$0xff] %vm212, %v4883
    %4916 = vst.msk [vmem:[#allocation5 + $0x88] sm:$0xff] %vm212, %v4884
    %4917 = vst.msk [vmem:[#allocation5 + $0x90] sm:$0xff] %vm212, %v4885
    %4918 = vst.msk [vmem:[#allocation5 + $0x98] sm:$0xff] %vm212, %v4886
    %4919 = vst.msk [vmem:[#allocation5 + $0xa0] sm:$0xff] %vm212, %v4887
    %4920 = vst.msk [vmem:[#allocation5 + $0xa8] sm:$0xff] %vm212, %v4888
    %4921 = vst.msk [vmem:[#allocation5 + $0xb0] sm:$0xff] %vm212, %v4889
    %4922 = vst.msk [vmem:[#allocation5 + $0xb8] sm:$0xff] %vm212, %v4890
    %4923 = vst.msk [vmem:[#allocation5 + $0xc0] sm:$0xff] %vm212, %v4891
    %4924 = vst.msk [vmem:[#allocation5 + $0xc8] sm:$0xff] %vm212, %v4892
    %4925 = vst.msk [vmem:[#allocation5 + $0xd0] sm:$0xff] %vm212, %v4893
    %4926 = vst.msk [vmem:[#allocation5 + $0xd8] sm:$0xff] %vm212, %v4894
    %4927 = vst.msk [vmem:[#allocation5 + $0xe0] sm:$0xff] %vm212, %v4895
    %4928 = vst.msk [vmem:[#allocation5 + $0xe8] sm:$0xff] %vm212, %v4896
    %4929 = vst.msk [vmem:[#allocation5 + $0xf0] sm:$0xff] %vm212, %v4897
    %4930 = vst.msk [vmem:[#allocation5 + $0xf8] sm:$0xff] %vm212, %v4898
    %v4931 = vld [vmem:[#allocation5] sm:$0xff]
    %v4932 = vld [vmem:[#allocation5 + $0x8] sm:$0xff]
    %v4933 = vmax.f32 %v4931, %v4932
    %4934 = vst.msk [vmem:[#allocation6 + $0x10] sm:$0xff] %vm212, %v4933
    %v4935 = vld [vmem:[#allocation5 + $0x10] sm:$0xff]
    %v4936 = vld [vmem:[#allocation5 + $0x18] sm:$0xff]
    %v4937 = vmax.f32 %v4935, %v4936
    %4938 = vst.msk [vmem:[#allocation6 + $0x18] sm:$0xff] %vm212, %v4937
    %v4939 = vld [vmem:[#allocation5 + $0x20] sm:$0xff]
    %v4940 = vld [vmem:[#allocation5 + $0x28] sm:$0xff]
    %v4941 = vmax.f32 %v4939, %v4940
    %4942 = vst.msk [vmem:[#allocation6 + $0x20] sm:$0xff] %vm212, %v4941
    %v4943 = vld [vmem:[#allocation5 + $0x30] sm:$0xff]
    %v4944 = vld [vmem:[#allocation5 + $0x38] sm:$0xff]
    %v4945 = vmax.f32 %v4943, %v4944
    %4946 = vst.msk [vmem:[#allocation6 + $0x28] sm:$0xff] %vm212, %v4945
    %v4947 = vld [vmem:[#allocation5 + $0x40] sm:$0xff]
    %v4948 = vld [vmem:[#allocation5 + $0x48] sm:$0xff]
    %v4949 = vmax.f32 %v4947, %v4948
    %4950 = vst.msk [vmem:[#allocation6 + $0x30] sm:$0xff] %vm212, %v4949
    %v4951 = vld [vmem:[#allocation5 + $0x50] sm:$0xff]
    %v4952 = vld [vmem:[#allocation5 + $0x58] sm:$0xff]
    %v4953 = vmax.f32 %v4951, %v4952
    %4954 = vst.msk [vmem:[#allocation6 + $0x38] sm:$0xff] %vm212, %v4953
    %v4955 = vld [vmem:[#allocation5 + $0x60] sm:$0xff]
    %v4956 = vld [vmem:[#allocation5 + $0x68] sm:$0xff]
    %v4957 = vmax.f32 %v4955, %v4956
    %4958 = vst.msk [vmem:[#allocation6 + $0x40] sm:$0xff] %vm212, %v4957
    %v4959 = vld [vmem:[#allocation5 + $0x70] sm:$0xff]
    %v4960 = vld [vmem:[#allocation5 + $0x78] sm:$0xff]
    %v4961 = vmax.f32 %v4959, %v4960
    %4962 = vst.msk [vmem:[#allocation6 + $0x48] sm:$0xff] %vm212, %v4961
    %v4963 = vld [vmem:[#allocation5 + $0x80] sm:$0xff]
    %v4964 = vld [vmem:[#allocation5 + $0x88] sm:$0xff]
    %v4965 = vmax.f32 %v4963, %v4964
    %4966 = vst.msk [vmem:[#allocation6 + $0x50] sm:$0xff] %vm212, %v4965
    %v4967 = vld [vmem:[#allocation5 + $0x90] sm:$0xff]
    %v4968 = vld [vmem:[#allocation5 + $0x98] sm:$0xff]
    %v4969 = vmax.f32 %v4967, %v4968
    %4970 = vst.msk [vmem:[#allocation6 + $0x58] sm:$0xff] %vm212, %v4969
    %v4971 = vld [vmem:[#allocation5 + $0xa0] sm:$0xff]
    %v4972 = vld [vmem:[#allocation5 + $0xa8] sm:$0xff]
    %v4973 = vmax.f32 %v4971, %v4972
    %4974 = vst.msk [vmem:[#allocation6 + $0x60] sm:$0xff] %vm212, %v4973
    %v4975 = vld [vmem:[#allocation5 + $0xb0] sm:$0xff]
    %v4976 = vld [vmem:[#allocation5 + $0xb8] sm:$0xff]
    %v4977 = vmax.f32 %v4975, %v4976
    %4978 = vst.msk [vmem:[#allocation6 + $0x68] sm:$0xff] %vm212, %v4977
    %v4979 = vld [vmem:[#allocation5 + $0xc0] sm:$0xff]
    %v4980 = vld [vmem:[#allocation5 + $0xc8] sm:$0xff]
    %v4981 = vmax.f32 %v4979, %v4980
    %4982 = vst.msk [vmem:[#allocation6 + $0x70] sm:$0xff] %vm212, %v4981
    %v4983 = vld [vmem:[#allocation5 + $0xd0] sm:$0xff]
    %v4984 = vld [vmem:[#allocation5 + $0xd8] sm:$0xff]
    %v4985 = vmax.f32 %v4983, %v4984
    %4986 = vst.msk [vmem:[#allocation6 + $0x78] sm:$0xff] %vm212, %v4985
    %v4987 = vld [vmem:[#allocation5 + $0xe0] sm:$0xff]
    %v4988 = vld [vmem:[#allocation5 + $0xe8] sm:$0xff]
    %v4989 = vmax.f32 %v4987, %v4988
    %4990 = vst.msk [vmem:[#allocation6 + $0x80] sm:$0xff] %vm212, %v4989
    %v4991 = vld [vmem:[#allocation5 + $0xf0] sm:$0xff]
    %v4992 = vld [vmem:[#allocation5 + $0xf8] sm:$0xff]
    %v4993 = vmax.f32 %v4991, %v4992
    %4994 = vst.msk [vmem:[#allocation6 + $0x88] sm:$0xff] %vm212, %v4993
    %v4995 = vld [vmem:[#allocation6 + $0x7] sm:$0xff]
    %v4996 = vld [vmem:[#allocation6 + $0xf] sm:$0xff]
    %v4997 = vld [vmem:[#allocation6 + $0x17] sm:$0xff]
    %v4998 = vld [vmem:[#allocation6 + $0x1f] sm:$0xff]
    %v4999 = vld [vmem:[#allocation6 + $0x27] sm:$0xff]
    %v5000 = vld [vmem:[#allocation6 + $0x2f] sm:$0xff]
    %v5001 = vld [vmem:[#allocation6 + $0x37] sm:$0xff]
    %v5002 = vld [vmem:[#allocation6 + $0x3f] sm:$0xff]
    %v5003 = vld [vmem:[#allocation6 + $0x47] sm:$0xff]
    %v5004 = vld [vmem:[#allocation6 + $0x4f] sm:$0xff]
    %v5005 = vld [vmem:[#allocation6 + $0x57] sm:$0xff]
    %v5006 = vld [vmem:[#allocation6 + $0x5f] sm:$0xff]
    %v5007 = vld [vmem:[#allocation6 + $0x67] sm:$0xff]
    %v5008 = vld [vmem:[#allocation6 + $0x6f] sm:$0xff]
    %v5009 = vld [vmem:[#allocation6 + $0x77] sm:$0xff]
    %v5010 = vld [vmem:[#allocation6 + $0x7f] sm:$0xff]
    %v5011 = vld [vmem:[#allocation26] sm:$0xff]
    %v5012 = vld [vmem:[#allocation26 + $0x8] sm:$0xff]
    %v5013 = vld [vmem:[#allocation26 + $0x10] sm:$0xff]
    %v5014 = vld [vmem:[#allocation26 + $0x18] sm:$0xff]
    %v5015 = vld [vmem:[#allocation26 + $0x20] sm:$0xff]
    %v5016 = vld [vmem:[#allocation26 + $0x28] sm:$0xff]
    %v5017 = vld [vmem:[#allocation26 + $0x30] sm:$0xff]
    %v5018 = vld [vmem:[#allocation26 + $0x38] sm:$0xff]
    %v5019 = vld [vmem:[#allocation26 + $0x40] sm:$0xff]
    %v5020 = vld [vmem:[#allocation26 + $0x48] sm:$0xff]
    %v5021 = vld [vmem:[#allocation26 + $0x50] sm:$0xff]
    %v5022 = vld [vmem:[#allocation26 + $0x58] sm:$0xff]
    %v5023 = vld [vmem:[#allocation26 + $0x60] sm:$0xff]
    %v5024 = vld [vmem:[#allocation26 + $0x68] sm:$0xff]
    %v5025 = vld [vmem:[#allocation26 + $0x70] sm:$0xff]
    %v5026 = vld [vmem:[#allocation26 + $0x78] sm:$0xff]
    %5028 = vset.pattern.permute.xlu0 0
    %5029 = vperm.xlu0 %5028, %v5011
    %v5030 = vpop.permute.xlu0 %5029
    %5033 = vset.pattern.permute.xlu0 0
    %5034 = vperm.xlu0 %5033, %v5012
    %v5035 = vpop.permute.xlu0 %5034
    %5038 = vset.pattern.permute.xlu0 0
    %5039 = vperm.xlu0 %5038, %v5013
    %v5040 = vpop.permute.xlu0 %5039
    %5043 = vset.pattern.permute.xlu0 0
    %5044 = vperm.xlu0 %5043, %v5014
    %v5045 = vpop.permute.xlu0 %5044
    %5048 = vset.pattern.permute.xlu0 0
    %5049 = vperm.xlu0 %5048, %v5015
    %v5050 = vpop.permute.xlu0 %5049
    %5053 = vset.pattern.permute.xlu0 0
    %5054 = vperm.xlu0 %5053, %v5016
    %v5055 = vpop.permute.xlu0 %5054
    %5058 = vset.pattern.permute.xlu0 0
    %5059 = vperm.xlu0 %5058, %v5017
    %v5060 = vpop.permute.xlu0 %5059
    %5063 = vset.pattern.permute.xlu0 0
    %5064 = vperm.xlu0 %5063, %v5018
    %v5065 = vpop.permute.xlu0 %5064
    %5068 = vset.pattern.permute.xlu0 0
    %5069 = vperm.xlu0 %5068, %v5019
    %v5070 = vpop.permute.xlu0 %5069
    %5073 = vset.pattern.permute.xlu0 0
    %5074 = vperm.xlu0 %5073, %v5020
    %v5075 = vpop.permute.xlu0 %5074
    %5078 = vset.pattern.permute.xlu0 0
    %5079 = vperm.xlu0 %5078, %v5021
    %v5080 = vpop.permute.xlu0 %5079
    %5083 = vset.pattern.permute.xlu0 0
    %5084 = vperm.xlu0 %5083, %v5022
    %v5085 = vpop.permute.xlu0 %5084
    %5088 = vset.pattern.permute.xlu0 0
    %5089 = vperm.xlu0 %5088, %v5023
    %v5090 = vpop.permute.xlu0 %5089
    %5093 = vset.pattern.permute.xlu0 0
    %5094 = vperm.xlu0 %5093, %v5024
    %v5095 = vpop.permute.xlu0 %5094
    %5098 = vset.pattern.permute.xlu0 0
    %5099 = vperm.xlu0 %5098, %v5025
    %v5100 = vpop.permute.xlu0 %5099
    %5103 = vset.pattern.permute.xlu0 0
    %5104 = vperm.xlu0 %5103, %v5026
    %v5105 = vpop.permute.xlu0 %5104
    %v5107 = vmul.f32 %v4995, %v5030
    %v5108 = vmul.f32 %v4996, %v5035
    %v5109 = vmul.f32 %v4997, %v5040
    %v5110 = vmul.f32 %v4998, %v5045
    %v5111 = vmul.f32 %v4999, %v5050
    %v5112 = vmul.f32 %v5000, %v5055
    %v5113 = vmul.f32 %v5001, %v5060
    %v5114 = vmul.f32 %v5002, %v5065
    %v5115 = vmul.f32 %v5003, %v5070
    %v5116 = vmul.f32 %v5004, %v5075
    %v5117 = vmul.f32 %v5005, %v5080
    %v5118 = vmul.f32 %v5006, %v5085
    %v5119 = vmul.f32 %v5007, %v5090
    %v5120 = vmul.f32 %v5008, %v5095
    %v5121 = vmul.f32 %v5009, %v5100
    %v5122 = vmul.f32 %v5010, %v5105
    %v5123 = vpack.c.bf16 %v5108, %v5107
    %v5124 = vpack.c.bf16 %v5110, %v5109
    %v5125 = vpack.c.bf16 %v5112, %v5111
    %v5126 = vpack.c.bf16 %v5114, %v5113
    %v5127 = vpack.c.bf16 %v5116, %v5115
    %v5128 = vpack.c.bf16 %v5118, %v5117
    %v5129 = vpack.c.bf16 %v5120, %v5119
    %v5130 = vpack.c.bf16 %v5122, %v5121
    %5131 = vst.msk [vmem:[#allocation3] sm:$0xff] %vm212, %v5123
    %5132 = vst.msk [vmem:[#allocation3 + $0x28] sm:$0xff] %vm212, %v5124
    %5133 = vst.msk [vmem:[#allocation3 + $0x50] sm:$0xff] %vm212, %v5125
    %5134 = vst.msk [vmem:[#allocation3 + $0x78] sm:$0xff] %vm212, %v5126
    %5135 = vst.msk [vmem:[#allocation3 + $0xa0] sm:$0xff] %vm212, %v5127
    %5136 = vst.msk [vmem:[#allocation3 + $0xc8] sm:$0xff] %vm212, %v5128
    %5137 = vst.msk [vmem:[#allocation3 + $0xf0] sm:$0xff] %vm212, %v5129
    %5138 = vst.msk [vmem:[#allocation3 + $0x118] sm:$0xff] %vm212, %v5130
    %v5139 = vld [vmem:[#allocation6 + $0x8] sm:$0xff]
    %v5140 = vld [vmem:[#allocation6 + $0x10] sm:$0xff]
    %v5141 = vld [vmem:[#allocation6 + $0x18] sm:$0xff]
    %v5142 = vld [vmem:[#allocation6 + $0x20] sm:$0xff]
    %v5143 = vld [vmem:[#allocation6 + $0x28] sm:$0xff]
    %v5144 = vld [vmem:[#allocation6 + $0x30] sm:$0xff]
    %v5145 = vld [vmem:[#allocation6 + $0x38] sm:$0xff]
    %v5146 = vld [vmem:[#allocation6 + $0x40] sm:$0xff]
    %v5147 = vld [vmem:[#allocation6 + $0x48] sm:$0xff]
    %v5148 = vld [vmem:[#allocation6 + $0x50] sm:$0xff]
    %v5149 = vld [vmem:[#allocation6 + $0x58] sm:$0xff]
    %v5150 = vld [vmem:[#allocation6 + $0x60] sm:$0xff]
    %v5151 = vld [vmem:[#allocation6 + $0x68] sm:$0xff]
    %v5152 = vld [vmem:[#allocation6 + $0x70] sm:$0xff]
    %v5153 = vld [vmem:[#allocation6 + $0x78] sm:$0xff]
    %v5154 = vld [vmem:[#allocation6 + $0x80] sm:$0xff]
    %v5155 = vld [vmem:[#allocation26] sm:$0xff]
    %v5156 = vld [vmem:[#allocation26 + $0x8] sm:$0xff]
    %v5157 = vld [vmem:[#allocation26 + $0x10] sm:$0xff]
    %v5158 = vld [vmem:[#allocation26 + $0x18] sm:$0xff]
    %v5159 = vld [vmem:[#allocation26 + $0x20] sm:$0xff]
    %v5160 = vld [vmem:[#allocation26 + $0x28] sm:$0xff]
    %v5161 = vld [vmem:[#allocation26 + $0x30] sm:$0xff]
    %v5162 = vld [vmem:[#allocation26 + $0x38] sm:$0xff]
    %v5163 = vld [vmem:[#allocation26 + $0x40] sm:$0xff]
    %v5164 = vld [vmem:[#allocation26 + $0x48] sm:$0xff]
    %v5165 = vld [vmem:[#allocation26 + $0x50] sm:$0xff]
    %v5166 = vld [vmem:[#allocation26 + $0x58] sm:$0xff]
    %v5167 = vld [vmem:[#allocation26 + $0x60] sm:$0xff]
    %v5168 = vld [vmem:[#allocation26 + $0x68] sm:$0xff]
    %v5169 = vld [vmem:[#allocation26 + $0x70] sm:$0xff]
    %v5170 = vld [vmem:[#allocation26 + $0x78] sm:$0xff]
    %5172 = vset.pattern.permute.xlu0 1
    %5173 = vperm.xlu0 %5172, %v5155
    %v5174 = vpop.permute.xlu0 %5173
    %5177 = vset.pattern.permute.xlu0 1
    %5178 = vperm.xlu0 %5177, %v5156
    %v5179 = vpop.permute.xlu0 %5178
    %5182 = vset.pattern.permute.xlu0 1
    %5183 = vperm.xlu0 %5182, %v5157
    %v5184 = vpop.permute.xlu0 %5183
    %5187 = vset.pattern.permute.xlu0 1
    %5188 = vperm.xlu0 %5187, %v5158
    %v5189 = vpop.permute.xlu0 %5188
    %5192 = vset.pattern.permute.xlu0 1
    %5193 = vperm.xlu0 %5192, %v5159
    %v5194 = vpop.permute.xlu0 %5193
    %5197 = vset.pattern.permute.xlu0 1
    %5198 = vperm.xlu0 %5197, %v5160
    %v5199 = vpop.permute.xlu0 %5198
    %5202 = vset.pattern.permute.xlu0 1
    %5203 = vperm.xlu0 %5202, %v5161
    %v5204 = vpop.permute.xlu0 %5203
    %5207 = vset.pattern.permute.xlu0 1
    %5208 = vperm.xlu0 %5207, %v5162
    %v5209 = vpop.permute.xlu0 %5208
    %5212 = vset.pattern.permute.xlu0 1
    %5213 = vperm.xlu0 %5212, %v5163
    %v5214 = vpop.permute.xlu0 %5213
    %5217 = vset.pattern.permute.xlu0 1
    %5218 = vperm.xlu0 %5217, %v5164
    %v5219 = vpop.permute.xlu0 %5218
    %5222 = vset.pattern.permute.xlu0 1
    %5223 = vperm.xlu0 %5222, %v5165
    %v5224 = vpop.permute.xlu0 %5223
    %5227 = vset.pattern.permute.xlu0 1
    %5228 = vperm.xlu0 %5227, %v5166
    %v5229 = vpop.permute.xlu0 %5228
    %5232 = vset.pattern.permute.xlu0 1
    %5233 = vperm.xlu0 %5232, %v5167
    %v5234 = vpop.permute.xlu0 %5233
    %5237 = vset.pattern.permute.xlu0 1
    %5238 = vperm.xlu0 %5237, %v5168
    %v5239 = vpop.permute.xlu0 %5238
    %5242 = vset.pattern.permute.xlu0 1
    %5243 = vperm.xlu0 %5242, %v5169
    %v5244 = vpop.permute.xlu0 %5243
    %5247 = vset.pattern.permute.xlu0 1
    %5248 = vperm.xlu0 %5247, %v5170
    %v5249 = vpop.permute.xlu0 %5248
    %v5251 = vmul.f32 %v5139, %v5174
    %v5252 = vmul.f32 %v5140, %v5179
    %v5253 = vmul.f32 %v5141, %v5184
    %v5254 = vmul.f32 %v5142, %v5189
    %v5255 = vmul.f32 %v5143, %v5194
    %v5256 = vmul.f32 %v5144, %v5199
    %v5257 = vmul.f32 %v5145, %v5204
    %v5258 = vmul.f32 %v5146, %v5209
    %v5259 = vmul.f32 %v5147, %v5214
    %v5260 = vmul.f32 %v5148, %v5219
    %v5261 = vmul.f32 %v5149, %v5224
    %v5262 = vmul.f32 %v5150, %v5229
    %v5263 = vmul.f32 %v5151, %v5234
    %v5264 = vmul.f32 %v5152, %v5239
    %v5265 = vmul.f32 %v5153, %v5244
    %v5266 = vmul.f32 %v5154, %v5249
    %v5267 = vpack.c.bf16 %v5252, %v5251
    %v5268 = vpack.c.bf16 %v5254, %v5253
    %v5269 = vpack.c.bf16 %v5256, %v5255
    %v5270 = vpack.c.bf16 %v5258, %v5257
    %v5271 = vpack.c.bf16 %v5260, %v5259
    %v5272 = vpack.c.bf16 %v5262, %v5261
    %v5273 = vpack.c.bf16 %v5264, %v5263
    %v5274 = vpack.c.bf16 %v5266, %v5265
    %5283 = vrot.lane.b32.xlu0 %v5267, 64
    %v5284 = vpop.permute.xlu0 %5283
    %5285 = vrot.lane.b32.xlu0 %v5268, 64
    %v5286 = vpop.permute.xlu0 %5285
    %5287 = vrot.lane.b32.xlu0 %v5269, 64
    %v5288 = vpop.permute.xlu0 %5287
    %5289 = vrot.lane.b32.xlu0 %v5270, 64
    %v5290 = vpop.permute.xlu0 %5289
    %5291 = vrot.lane.b32.xlu0 %v5271, 64
    %v5292 = vpop.permute.xlu0 %5291
    %5293 = vrot.lane.b32.xlu0 %v5272, 64
    %v5294 = vpop.permute.xlu0 %5293
    %5295 = vrot.lane.b32.xlu0 %v5273, 64
    %v5296 = vpop.permute.xlu0 %5295
    %5297 = vrot.lane.b32.xlu0 %v5274, 64
    %v5298 = vpop.permute.xlu0 %5297
    %vm5307 = vcmask 1048064
    %5308 = vst.msk [vmem:[#allocation3] sm:$0xff] %vm5307, %v5284
    %5309 = vst.msk [vmem:[#allocation3 + $0x28] sm:$0xff] %vm5307, %v5286
    %5310 = vst.msk [vmem:[#allocation3 + $0x50] sm:$0xff] %vm5307, %v5288
    %5311 = vst.msk [vmem:[#allocation3 + $0x78] sm:$0xff] %vm5307, %v5290
    %5312 = vst.msk [vmem:[#allocation3 + $0xa0] sm:$0xff] %vm5307, %v5292
    %5313 = vst.msk [vmem:[#allocation3 + $0xc8] sm:$0xff] %vm5307, %v5294
    %5314 = vst.msk [vmem:[#allocation3 + $0xf0] sm:$0xff] %vm5307, %v5296
    %5315 = vst.msk [vmem:[#allocation3 + $0x118] sm:$0xff] %vm5307, %v5298
    %v5316 = vld [vmem:[#allocation6 + $0x9] sm:$0xff]
    %v5317 = vld [vmem:[#allocation6 + $0x11] sm:$0xff]
    %v5318 = vld [vmem:[#allocation6 + $0x19] sm:$0xff]
    %v5319 = vld [vmem:[#allocation6 + $0x21] sm:$0xff]
    %v5320 = vld [vmem:[#allocation6 + $0x29] sm:$0xff]
    %v5321 = vld [vmem:[#allocation6 + $0x31] sm:$0xff]
    %v5322 = vld [vmem:[#allocation6 + $0x39] sm:$0xff]
    %v5323 = vld [vmem:[#allocation6 + $0x41] sm:$0xff]
    %v5324 = vld [vmem:[#allocation6 + $0x49] sm:$0xff]
    %v5325 = vld [vmem:[#allocation6 + $0x51] sm:$0xff]
    %v5326 = vld [vmem:[#allocation6 + $0x59] sm:$0xff]
    %v5327 = vld [vmem:[#allocation6 + $0x61] sm:$0xff]
    %v5328 = vld [vmem:[#allocation6 + $0x69] sm:$0xff]
    %v5329 = vld [vmem:[#allocation6 + $0x71] sm:$0xff]
    %v5330 = vld [vmem:[#allocation6 + $0x79] sm:$0xff]
    %v5331 = vld [vmem:[#allocation6 + $0x81] sm:$0xff]
    %v5332 = vld [vmem:[#allocation26] sm:$0xff]
    %v5333 = vld [vmem:[#allocation26 + $0x8] sm:$0xff]
    %v5334 = vld [vmem:[#allocation26 + $0x10] sm:$0xff]
    %v5335 = vld [vmem:[#allocation26 + $0x18] sm:$0xff]
    %v5336 = vld [vmem:[#allocation26 + $0x20] sm:$0xff]
    %v5337 = vld [vmem:[#allocation26 + $0x28] sm:$0xff]
    %v5338 = vld [vmem:[#allocation26 + $0x30] sm:$0xff]
    %v5339 = vld [vmem:[#allocation26 + $0x38] sm:$0xff]
    %v5340 = vld [vmem:[#allocation26 + $0x40] sm:$0xff]
    %v5341 = vld [vmem:[#allocation26 + $0x48] sm:$0xff]
    %v5342 = vld [vmem:[#allocation26 + $0x50] sm:$0xff]
    %v5343 = vld [vmem:[#allocation26 + $0x58] sm:$0xff]
    %v5344 = vld [vmem:[#allocation26 + $0x60] sm:$0xff]
    %v5345 = vld [vmem:[#allocation26 + $0x68] sm:$0xff]
    %v5346 = vld [vmem:[#allocation26 + $0x70] sm:$0xff]
    %v5347 = vld [vmem:[#allocation26 + $0x78] sm:$0xff]
    %5349 = vset.pattern.permute.xlu0 2
    %5350 = vperm.xlu0 %5349, %v5332
    %v5351 = vpop.permute.xlu0 %5350
    %5354 = vset.pattern.permute.xlu0 2
    %5355 = vperm.xlu0 %5354, %v5333
    %v5356 = vpop.permute.xlu0 %5355
    %5359 = vset.pattern.permute.xlu0 2
    %5360 = vperm.xlu0 %5359, %v5334
    %v5361 = vpop.permute.xlu0 %5360
    %5364 = vset.pattern.permute.xlu0 2
    %5365 = vperm.xlu0 %5364, %v5335
    %v5366 = vpop.permute.xlu0 %5365
    %5369 = vset.pattern.permute.xlu0 2
    %5370 = vperm.xlu0 %5369, %v5336
    %v5371 = vpop.permute.xlu0 %5370
    %5374 = vset.pattern.permute.xlu0 2
    %5375 = vperm.xlu0 %5374, %v5337
    %v5376 = vpop.permute.xlu0 %5375
    %5379 = vset.pattern.permute.xlu0 2
    %5380 = vperm.xlu0 %5379, %v5338
    %v5381 = vpop.permute.xlu0 %5380
    %5384 = vset.pattern.permute.xlu0 2
    %5385 = vperm.xlu0 %5384, %v5339
    %v5386 = vpop.permute.xlu0 %5385
    %5389 = vset.pattern.permute.xlu0 2
    %5390 = vperm.xlu0 %5389, %v5340
    %v5391 = vpop.permute.xlu0 %5390
    %5394 = vset.pattern.permute.xlu0 2
    %5395 = vperm.xlu0 %5394, %v5341
    %v5396 = vpop.permute.xlu0 %5395
    %5399 = vset.pattern.permute.xlu0 2
    %5400 = vperm.xlu0 %5399, %v5342
    %v5401 = vpop.permute.xlu0 %5400
    %5404 = vset.pattern.permute.xlu0 2
    %5405 = vperm.xlu0 %5404, %v5343
    %v5406 = vpop.permute.xlu0 %5405
    %5409 = vset.pattern.permute.xlu0 2
    %5410 = vperm.xlu0 %5409, %v5344
    %v5411 = vpop.permute.xlu0 %5410
    %5414 = vset.pattern.permute.xlu0 2
    %5415 = vperm.xlu0 %5414, %v5345
    %v5416 = vpop.permute.xlu0 %5415
    %5419 = vset.pattern.permute.xlu0 2
    %5420 = vperm.xlu0 %5419, %v5346
    %v5421 = vpop.permute.xlu0 %5420
    %5424 = vset.pattern.permute.xlu0 2
    %5425 = vperm.xlu0 %5424, %v5347
    %v5426 = vpop.permute.xlu0 %5425
    %v5428 = vmul.f32 %v5316, %v5351
    %v5429 = vmul.f32 %v5317, %v5356
    %v5430 = vmul.f32 %v5318, %v5361
    %v5431 = vmul.f32 %v5319, %v5366
    %v5432 = vmul.f32 %v5320, %v5371
    %v5433 = vmul.f32 %v5321, %v5376
    %v5434 = vmul.f32 %v5322, %v5381
    %v5435 = vmul.f32 %v5323, %v5386
    %v5436 = vmul.f32 %v5324, %v5391
    %v5437 = vmul.f32 %v5325, %v5396
    %v5438 = vmul.f32 %v5326, %v5401
    %v5439 = vmul.f32 %v5327, %v5406
    %v5440 = vmul.f32 %v5328, %v5411
    %v5441 = vmul.f32 %v5329, %v5416
    %v5442 = vmul.f32 %v5330, %v5421
    %v5443 = vmul.f32 %v5331, %v5426
    %v5444 = vpack.c.bf16 %v5429, %v5428
    %v5445 = vpack.c.bf16 %v5431, %v5430
    %v5446 = vpack.c.bf16 %v5433, %v5432
    %v5447 = vpack.c.bf16 %v5435, %v5434
    %v5448 = vpack.c.bf16 %v5437, %v5436
    %v5449 = vpack.c.bf16 %v5439, %v5438
    %v5450 = vpack.c.bf16 %v5441, %v5440
    %v5451 = vpack.c.bf16 %v5443, %v5442
    %5452 = vst.msk [vmem:[#allocation3 + $0x8] sm:$0xff] %vm212, %v5444
    %5453 = vst.msk [vmem:[#allocation3 + $0x30] sm:$0xff] %vm212, %v5445
    %5454 = vst.msk [vmem:[#allocation3 + $0x58] sm:$0xff] %vm212, %v5446
    %5455 = vst.msk [vmem:[#allocation3 + $0x80] sm:$0xff] %vm212, %v5447
    %5456 = vst.msk [vmem:[#allocation3 + $0xa8] sm:$0xff] %vm212, %v5448
    %5457 = vst.msk [vmem:[#allocation3 + $0xd0] sm:$0xff] %vm212, %v5449
    %5458 = vst.msk [vmem:[#allocation3 + $0xf8] sm:$0xff] %vm212, %v5450
    %5459 = vst.msk [vmem:[#allocation3 + $0x120] sm:$0xff] %vm212, %v5451
    %v5460 = vld [vmem:[#allocation6 + $0xf] sm:$0xff]
    %v5461 = vld [vmem:[#allocation6 + $0x17] sm:$0xff]
    %v5462 = vld [vmem:[#allocation6 + $0x1f] sm:$0xff]
    %v5463 = vld [vmem:[#allocation6 + $0x27] sm:$0xff]
    %v5464 = vld [vmem:[#allocation6 + $0x2f] sm:$0xff]
    %v5465 = vld [vmem:[#allocation6 + $0x37] sm:$0xff]
    %v5466 = vld [vmem:[#allocation6 + $0x3f] sm:$0xff]
    %v5467 = vld [vmem:[#allocation6 + $0x47] sm:$0xff]
    %v5468 = vld [vmem:[#allocation6 + $0x4f] sm:$0xff]
    %v5469 = vld [vmem:[#allocation6 + $0x57] sm:$0xff]
    %v5470 = vld [vmem:[#allocation6 + $0x5f] sm:$0xff]
    %v5471 = vld [vmem:[#allocation6 + $0x67] sm:$0xff]
    %v5472 = vld [vmem:[#allocation6 + $0x6f] sm:$0xff]
    %v5473 = vld [vmem:[#allocation6 + $0x77] sm:$0xff]
    %v5474 = vld [vmem:[#allocation6 + $0x7f] sm:$0xff]
    %v5475 = vld [vmem:[#allocation6 + $0x87] sm:$0xff]
    %v5476 = vld [vmem:[#allocation26] sm:$0xff]
    %v5477 = vld [vmem:[#allocation26 + $0x8] sm:$0xff]
    %v5478 = vld [vmem:[#allocation26 + $0x10] sm:$0xff]
    %v5479 = vld [vmem:[#allocation26 + $0x18] sm:$0xff]
    %v5480 = vld [vmem:[#allocation26 + $0x20] sm:$0xff]
    %v5481 = vld [vmem:[#allocation26 + $0x28] sm:$0xff]
    %v5482 = vld [vmem:[#allocation26 + $0x30] sm:$0xff]
    %v5483 = vld [vmem:[#allocation26 + $0x38] sm:$0xff]
    %v5484 = vld [vmem:[#allocation26 + $0x40] sm:$0xff]
    %v5485 = vld [vmem:[#allocation26 + $0x48] sm:$0xff]
    %v5486 = vld [vmem:[#allocation26 + $0x50] sm:$0xff]
    %v5487 = vld [vmem:[#allocation26 + $0x58] sm:$0xff]
    %v5488 = vld [vmem:[#allocation26 + $0x60] sm:$0xff]
    %v5489 = vld [vmem:[#allocation26 + $0x68] sm:$0xff]
    %v5490 = vld [vmem:[#allocation26 + $0x70] sm:$0xff]
    %v5491 = vld [vmem:[#allocation26 + $0x78] sm:$0xff]
    %5493 = vset.pattern.permute.xlu0 3
    %5494 = vperm.xlu0 %5493, %v5476
    %v5495 = vpop.permute.xlu0 %5494
    %5498 = vset.pattern.permute.xlu0 3
    %5499 = vperm.xlu0 %5498, %v5477
    %v5500 = vpop.permute.xlu0 %5499
    %5503 = vset.pattern.permute.xlu0 3
    %5504 = vperm.xlu0 %5503, %v5478
    %v5505 = vpop.permute.xlu0 %5504
    %5508 = vset.pattern.permute.xlu0 3
    %5509 = vperm.xlu0 %5508, %v5479
    %v5510 = vpop.permute.xlu0 %5509
    %5513 = vset.pattern.permute.xlu0 3
    %5514 = vperm.xlu0 %5513, %v5480
    %v5515 = vpop.permute.xlu0 %5514
    %5518 = vset.pattern.permute.xlu0 3
    %5519 = vperm.xlu0 %5518, %v5481
    %v5520 = vpop.permute.xlu0 %5519
    %5523 = vset.pattern.permute.xlu0 3
    %5524 = vperm.xlu0 %5523, %v5482
    %v5525 = vpop.permute.xlu0 %5524
    %5528 = vset.pattern.permute.xlu0 3
    %5529 = vperm.xlu0 %5528, %v5483
    %v5530 = vpop.permute.xlu0 %5529
    %5533 = vset.pattern.permute.xlu0 3
    %5534 = vperm.xlu0 %5533, %v5484
    %v5535 = vpop.permute.xlu0 %5534
    %5538 = vset.pattern.permute.xlu0 3
    %5539 = vperm.xlu0 %5538, %v5485
    %v5540 = vpop.permute.xlu0 %5539
    %5543 = vset.pattern.permute.xlu0 3
    %5544 = vperm.xlu0 %5543, %v5486
    %v5545 = vpop.permute.xlu0 %5544
    %5548 = vset.pattern.permute.xlu0 3
    %5549 = vperm.xlu0 %5548, %v5487
    %v5550 = vpop.permute.xlu0 %5549
    %5553 = vset.pattern.permute.xlu0 3
    %5554 = vperm.xlu0 %5553, %v5488
    %v5555 = vpop.permute.xlu0 %5554
    %5558 = vset.pattern.permute.xlu0 3
    %5559 = vperm.xlu0 %5558, %v5489
    %v5560 = vpop.permute.xlu0 %5559
    %5563 = vset.pattern.permute.xlu0 3
    %5564 = vperm.xlu0 %5563, %v5490
    %v5565 = vpop.permute.xlu0 %5564
    %5568 = vset.pattern.permute.xlu0 3
    %5569 = vperm.xlu0 %5568, %v5491
    %v5570 = vpop.permute.xlu0 %5569
    %v5572 = vmul.f32 %v5460, %v5495
    %v5573 = vmul.f32 %v5461, %v5500
    %v5574 = vmul.f32 %v5462, %v5505
    %v5575 = vmul.f32 %v5463, %v5510
    %v5576 = vmul.f32 %v5464, %v5515
    %v5577 = vmul.f32 %v5465, %v5520
    %v5578 = vmul.f32 %v5466, %v5525
    %v5579 = vmul.f32 %v5467, %v5530
    %v5580 = vmul.f32 %v5468, %v5535
    %v5581 = vmul.f32 %v5469, %v5540
    %v5582 = vmul.f32 %v5470, %v5545
    %v5583 = vmul.f32 %v5471, %v5550
    %v5584 = vmul.f32 %v5472, %v5555
    %v5585 = vmul.f32 %v5473, %v5560
    %v5586 = vmul.f32 %v5474, %v5565
    %v5587 = vmul.f32 %v5475, %v5570
    %v5588 = vpack.c.bf16 %v5573, %v5572
    %v5589 = vpack.c.bf16 %v5575, %v5574
    %v5590 = vpack.c.bf16 %v5577, %v5576
    %v5591 = vpack.c.bf16 %v5579, %v5578
    %v5592 = vpack.c.bf16 %v5581, %v5580
    %v5593 = vpack.c.bf16 %v5583, %v5582
    %v5594 = vpack.c.bf16 %v5585, %v5584
    %v5595 = vpack.c.bf16 %v5587, %v5586
    %5604 = vrot.lane.b32.xlu0 %v5588, 64
    %v5605 = vpop.permute.xlu0 %5604
    %5606 = vrot.lane.b32.xlu0 %v5589, 64
    %v5607 = vpop.permute.xlu0 %5606
    %5608 = vrot.lane.b32.xlu0 %v5590, 64
    %v5609 = vpop.permute.xlu0 %5608
    %5610 = vrot.lane.b32.xlu0 %v5591, 64
    %v5611 = vpop.permute.xlu0 %5610
    %5612 = vrot.lane.b32.xlu0 %v5592, 64
    %v5613 = vpop.permute.xlu0 %5612
    %5614 = vrot.lane.b32.xlu0 %v5593, 64
    %v5615 = vpop.permute.xlu0 %5614
    %5616 = vrot.lane.b32.xlu0 %v5594, 64
    %v5617 = vpop.permute.xlu0 %5616
    %5618 = vrot.lane.b32.xlu0 %v5595, 64
    %v5619 = vpop.permute.xlu0 %5618
    %5628 = vst.msk [vmem:[#allocation3 + $0x8] sm:$0xff] %vm5307, %v5605
    %5629 = vst.msk [vmem:[#allocation3 + $0x30] sm:$0xff] %vm5307, %v5607
    %5630 = vst.msk [vmem:[#allocation3 + $0x58] sm:$0xff] %vm5307, %v5609
    %5631 = vst.msk [vmem:[#allocation3 + $0x80] sm:$0xff] %vm5307, %v5611
    %5632 = vst.msk [vmem:[#allocation3 + $0xa8] sm:$0xff] %vm5307, %v5613
    %5633 = vst.msk [vmem:[#allocation3 + $0xd0] sm:$0xff] %vm5307, %v5615
    %5634 = vst.msk [vmem:[#allocation3 + $0xf8] sm:$0xff] %vm5307, %v5617
    %5635 = vst.msk [vmem:[#allocation3 + $0x120] sm:$0xff] %vm5307, %v5619
    %v5636 = vld [vmem:[#allocation6 + $0x10] sm:$0xff]
    %v5637 = vld [vmem:[#allocation6 + $0x18] sm:$0xff]
    %v5638 = vld [vmem:[#allocation6 + $0x20] sm:$0xff]
    %v5639 = vld [vmem:[#allocation6 + $0x28] sm:$0xff]
    %v5640 = vld [vmem:[#allocation6 + $0x30] sm:$0xff]
    %v5641 = vld [vmem:[#allocation6 + $0x38] sm:$0xff]
    %v5642 = vld [vmem:[#allocation6 + $0x40] sm:$0xff]
    %v5643 = vld [vmem:[#allocation6 + $0x48] sm:$0xff]
    %v5644 = vld [vmem:[#allocation6 + $0x50] sm:$0xff]
    %v5645 = vld [vmem:[#allocation6 + $0x58] sm:$0xff]
    %v5646 = vld [vmem:[#allocation6 + $0x60] sm:$0xff]
    %v5647 = vld [vmem:[#allocation6 + $0x68] sm:$0xff]
    %v5648 = vld [vmem:[#allocation6 + $0x70] sm:$0xff]
    %v5649 = vld [vmem:[#allocation6 + $0x78] sm:$0xff]
    %v5650 = vld [vmem:[#allocation6 + $0x80] sm:$0xff]
    %v5651 = vld [vmem:[#allocation6 + $0x88] sm:$0xff]
    %v5652 = vpack.c.bf16 %v5637, %v5636
    %v5653 = vpack.c.bf16 %v5639, %v5638
    %v5654 = vpack.c.bf16 %v5641, %v5640
    %v5655 = vpack.c.bf16 %v5643, %v5642
    %v5656 = vpack.c.bf16 %v5645, %v5644
    %v5657 = vpack.c.bf16 %v5647, %v5646
    %v5658 = vpack.c.bf16 %v5649, %v5648
    %v5659 = vpack.c.bf16 %v5651, %v5650
    %5660 = vst.msk [vmem:[#allocation3 + $0x10] sm:$0xff] %vm212, %v5652
    %5661 = vst.msk [vmem:[#allocation3 + $0x38] sm:$0xff] %vm212, %v5653
    %5662 = vst.msk [vmem:[#allocation3 + $0x60] sm:$0xff] %vm212, %v5654
    %5663 = vst.msk [vmem:[#allocation3 + $0x88] sm:$0xff] %vm212, %v5655
    %5664 = vst.msk [vmem:[#allocation3 + $0xb0] sm:$0xff] %vm212, %v5656
    %5665 = vst.msk [vmem:[#allocation3 + $0xd8] sm:$0xff] %vm212, %v5657
    %5666 = vst.msk [vmem:[#allocation3 + $0x100] sm:$0xff] %vm212, %v5658
    %5667 = vst.msk [vmem:[#allocation3 + $0x128] sm:$0xff] %vm212, %v5659
    %v5668 = vld [vmem:[#allocation6 + $0x11] sm:$0xff]
    %v5669 = vld [vmem:[#allocation6 + $0x19] sm:$0xff]
    %v5670 = vld [vmem:[#allocation6 + $0x21] sm:$0xff]
    %v5671 = vld [vmem:[#allocation6 + $0x29] sm:$0xff]
    %v5672 = vld [vmem:[#allocation6 + $0x31] sm:$0xff]
    %v5673 = vld [vmem:[#allocation6 + $0x39] sm:$0xff]
    %v5674 = vld [vmem:[#allocation6 + $0x41] sm:$0xff]
    %v5675 = vld [vmem:[#allocation6 + $0x49] sm:$0xff]
    %v5676 = vld [vmem:[#allocation6 + $0x51] sm:$0xff]
    %v5677 = vld [vmem:[#allocation6 + $0x59] sm:$0xff]
    %v5678 = vld [vmem:[#allocation6 + $0x61] sm:$0xff]
    %v5679 = vld [vmem:[#allocation6 + $0x69] sm:$0xff]
    %v5680 = vld [vmem:[#allocation6 + $0x71] sm:$0xff]
    %v5681 = vld [vmem:[#allocation6 + $0x79] sm:$0xff]
    %v5682 = vld [vmem:[#allocation6 + $0x81] sm:$0xff]
    %v5683 = vld [vmem:[#allocation6 + $0x89] sm:$0xff]
    %v5684 = vld [vmem:[#allocation26] sm:$0xff]
    %v5685 = vld [vmem:[#allocation26 + $0x8] sm:$0xff]
    %v5686 = vld [vmem:[#allocation26 + $0x10] sm:$0xff]
    %v5687 = vld [vmem:[#allocation26 + $0x18] sm:$0xff]
    %v5688 = vld [vmem:[#allocation26 + $0x20] sm:$0xff]
    %v5689 = vld [vmem:[#allocation26 + $0x28] sm:$0xff]
    %v5690 = vld [vmem:[#allocation26 + $0x30] sm:$0xff]
    %v5691 = vld [vmem:[#allocation26 + $0x38] sm:$0xff]
    %v5692 = vld [vmem:[#allocation26 + $0x40] sm:$0xff]
    %v5693 = vld [vmem:[#allocation26 + $0x48] sm:$0xff]
    %v5694 = vld [vmem:[#allocation26 + $0x50] sm:$0xff]
    %v5695 = vld [vmem:[#allocation26 + $0x58] sm:$0xff]
    %v5696 = vld [vmem:[#allocation26 + $0x60] sm:$0xff]
    %v5697 = vld [vmem:[#allocation26 + $0x68] sm:$0xff]
    %v5698 = vld [vmem:[#allocation26 + $0x70] sm:$0xff]
    %v5699 = vld [vmem:[#allocation26 + $0x78] sm:$0xff]
    %5701 = vset.pattern.permute.xlu0 5
    %5702 = vperm.xlu0 %5701, %v5684
    %v5703 = vpop.permute.xlu0 %5702
    %5706 = vset.pattern.permute.xlu0 5
    %5707 = vperm.xlu0 %5706, %v5685
    %v5708 = vpop.permute.xlu0 %5707
    %5711 = vset.pattern.permute.xlu0 5
    %5712 = vperm.xlu0 %5711, %v5686
    %v5713 = vpop.permute.xlu0 %5712
    %5716 = vset.pattern.permute.xlu0 5
    %5717 = vperm.xlu0 %5716, %v5687
    %v5718 = vpop.permute.xlu0 %5717
    %5721 = vset.pattern.permute.xlu0 5
    %5722 = vperm.xlu0 %5721, %v5688
    %v5723 = vpop.permute.xlu0 %5722
    %5726 = vset.pattern.permute.xlu0 5
    %5727 = vperm.xlu0 %5726, %v5689
    %v5728 = vpop.permute.xlu0 %5727
    %5731 = vset.pattern.permute.xlu0 5
    %5732 = vperm.xlu0 %5731, %v5690
    %v5733 = vpop.permute.xlu0 %5732
    %5736 = vset.pattern.permute.xlu0 5
    %5737 = vperm.xlu0 %5736, %v5691
    %v5738 = vpop.permute.xlu0 %5737
    %5741 = vset.pattern.permute.xlu0 5
    %5742 = vperm.xlu0 %5741, %v5692
    %v5743 = vpop.permute.xlu0 %5742
    %5746 = vset.pattern.permute.xlu0 5
    %5747 = vperm.xlu0 %5746, %v5693
    %v5748 = vpop.permute.xlu0 %5747
    %5751 = vset.pattern.permute.xlu0 5
    %5752 = vperm.xlu0 %5751, %v5694
    %v5753 = vpop.permute.xlu0 %5752
    %5756 = vset.pattern.permute.xlu0 5
    %5757 = vperm.xlu0 %5756, %v5695
    %v5758 = vpop.permute.xlu0 %5757
    %5761 = vset.pattern.permute.xlu0 5
    %5762 = vperm.xlu0 %5761, %v5696
    %v5763 = vpop.permute.xlu0 %5762
    %5766 = vset.pattern.permute.xlu0 5
    %5767 = vperm.xlu0 %5766, %v5697
    %v5768 = vpop.permute.xlu0 %5767
    %5771 = vset.pattern.permute.xlu0 5
    %5772 = vperm.xlu0 %5771, %v5698
    %v5773 = vpop.permute.xlu0 %5772
    %5776 = vset.pattern.permute.xlu0 5
    %5777 = vperm.xlu0 %5776, %v5699
    %v5778 = vpop.permute.xlu0 %5777
    %v5780 = vmul.f32 %v5668, %v5703
    %v5781 = vmul.f32 %v5669, %v5708
    %v5782 = vmul.f32 %v5670, %v5713
    %v5783 = vmul.f32 %v5671, %v5718
    %v5784 = vmul.f32 %v5672, %v5723
    %v5785 = vmul.f32 %v5673, %v5728
    %v5786 = vmul.f32 %v5674, %v5733
    %v5787 = vmul.f32 %v5675, %v5738
    %v5788 = vmul.f32 %v5676, %v5743
    %v5789 = vmul.f32 %v5677, %v5748
    %v5790 = vmul.f32 %v5678, %v5753
    %v5791 = vmul.f32 %v5679, %v5758
    %v5792 = vmul.f32 %v5680, %v5763
    %v5793 = vmul.f32 %v5681, %v5768
    %v5794 = vmul.f32 %v5682, %v5773
    %v5795 = vmul.f32 %v5683, %v5778
    %v5796 = vpack.c.bf16 %v5781, %v5780
    %v5797 = vpack.c.bf16 %v5783, %v5782
    %v5798 = vpack.c.bf16 %v5785, %v5784
    %v5799 = vpack.c.bf16 %v5787, %v5786
    %v5800 = vpack.c.bf16 %v5789, %v5788
    %v5801 = vpack.c.bf16 %v5791, %v5790
    %v5802 = vpack.c.bf16 %v5793, %v5792
    %v5803 = vpack.c.bf16 %v5795, %v5794
    %5812 = vrot.lane.b32.xlu0 %v5796, 64
    %v5813 = vpop.permute.xlu0 %5812
    %5814 = vrot.lane.b32.xlu0 %v5797, 64
    %v5815 = vpop.permute.xlu0 %5814
    %5816 = vrot.lane.b32.xlu0 %v5798, 64
    %v5817 = vpop.permute.xlu0 %5816
    %5818 = vrot.lane.b32.xlu0 %v5799, 64
    %v5819 = vpop.permute.xlu0 %5818
    %5820 = vrot.lane.b32.xlu0 %v5800, 64
    %v5821 = vpop.permute.xlu0 %5820
    %5822 = vrot.lane.b32.xlu0 %v5801, 64
    %v5823 = vpop.permute.xlu0 %5822
    %5824 = vrot.lane.b32.xlu0 %v5802, 64
    %v5825 = vpop.permute.xlu0 %5824
    %5826 = vrot.lane.b32.xlu0 %v5803, 64
    %v5827 = vpop.permute.xlu0 %5826
    %5836 = vst.msk [vmem:[#allocation3 + $0x10] sm:$0xff] %vm5307, %v5813
    %5837 = vst.msk [vmem:[#allocation3 + $0x38] sm:$0xff] %vm5307, %v5815
    %5838 = vst.msk [vmem:[#allocation3 + $0x60] sm:$0xff] %vm5307, %v5817
    %5839 = vst.msk [vmem:[#allocation3 + $0x88] sm:$0xff] %vm5307, %v5819
    %5840 = vst.msk [vmem:[#allocation3 + $0xb0] sm:$0xff] %vm5307, %v5821
    %5841 = vst.msk [vmem:[#allocation3 + $0xd8] sm:$0xff] %vm5307, %v5823
    %5842 = vst.msk [vmem:[#allocation3 + $0x100] sm:$0xff] %vm5307, %v5825
    %5843 = vst.msk [vmem:[#allocation3 + $0x128] sm:$0xff] %vm5307, %v5827
    %v5844 = vld [vmem:[#allocation6 + $0x17] sm:$0xff]
    %v5845 = vld [vmem:[#allocation6 + $0x1f] sm:$0xff]
    %v5846 = vld [vmem:[#allocation6 + $0x27] sm:$0xff]
    %v5847 = vld [vmem:[#allocation6 + $0x2f] sm:$0xff]
    %v5848 = vld [vmem:[#allocation6 + $0x37] sm:$0xff]
    %v5849 = vld [vmem:[#allocation6 + $0x3f] sm:$0xff]
    %v5850 = vld [vmem:[#allocation6 + $0x47] sm:$0xff]
    %v5851 = vld [vmem:[#allocation6 + $0x4f] sm:$0xff]
    %v5852 = vld [vmem:[#allocation6 + $0x57] sm:$0xff]
    %v5853 = vld [vmem:[#allocation6 + $0x5f] sm:$0xff]
    %v5854 = vld [vmem:[#allocation6 + $0x67] sm:$0xff]
    %v5855 = vld [vmem:[#allocation6 + $0x6f] sm:$0xff]
    %v5856 = vld [vmem:[#allocation6 + $0x77] sm:$0xff]
    %v5857 = vld [vmem:[#allocation6 + $0x7f] sm:$0xff]
    %v5858 = vld [vmem:[#allocation6 + $0x87] sm:$0xff]
    %v5859 = vld [vmem:[#allocation6 + $0x8f] sm:$0xff]
    %v5860 = vld [vmem:[#allocation26] sm:$0xff]
    %v5861 = vld [vmem:[#allocation26 + $0x8] sm:$0xff]
    %v5862 = vld [vmem:[#allocation26 + $0x10] sm:$0xff]
    %v5863 = vld [vmem:[#allocation26 + $0x18] sm:$0xff]
    %v5864 = vld [vmem:[#allocation26 + $0x20] sm:$0xff]
    %v5865 = vld [vmem:[#allocation26 + $0x28] sm:$0xff]
    %v5866 = vld [vmem:[#allocation26 + $0x30] sm:$0xff]
    %v5867 = vld [vmem:[#allocation26 + $0x38] sm:$0xff]
    %v5868 = vld [vmem:[#allocation26 + $0x40] sm:$0xff]
    %v5869 = vld [vmem:[#allocation26 + $0x48] sm:$0xff]
    %v5870 = vld [vmem:[#allocation26 + $0x50] sm:$0xff]
    %v5871 = vld [vmem:[#allocation26 + $0x58] sm:$0xff]
    %v5872 = vld [vmem:[#allocation26 + $0x60] sm:$0xff]
    %v5873 = vld [vmem:[#allocation26 + $0x68] sm:$0xff]
    %v5874 = vld [vmem:[#allocation26 + $0x70] sm:$0xff]
    %v5875 = vld [vmem:[#allocation26 + $0x78] sm:$0xff]
    %5877 = vset.pattern.permute.xlu0 6
    %5878 = vperm.xlu0 %5877, %v5860
    %v5879 = vpop.permute.xlu0 %5878
    %5882 = vset.pattern.permute.xlu0 6
    %5883 = vperm.xlu0 %5882, %v5861
    %v5884 = vpop.permute.xlu0 %5883
    %5887 = vset.pattern.permute.xlu0 6
    %5888 = vperm.xlu0 %5887, %v5862
    %v5889 = vpop.permute.xlu0 %5888
    %5892 = vset.pattern.permute.xlu0 6
    %5893 = vperm.xlu0 %5892, %v5863
    %v5894 = vpop.permute.xlu0 %5893
    %5897 = vset.pattern.permute.xlu0 6
    %5898 = vperm.xlu0 %5897, %v5864
    %v5899 = vpop.permute.xlu0 %5898
    %5902 = vset.pattern.permute.xlu0 6
    %5903 = vperm.xlu0 %5902, %v5865
    %v5904 = vpop.permute.xlu0 %5903
    %5907 = vset.pattern.permute.xlu0 6
    %5908 = vperm.xlu0 %5907, %v5866
    %v5909 = vpop.permute.xlu0 %5908
    %5912 = vset.pattern.permute.xlu0 6
    %5913 = vperm.xlu0 %5912, %v5867
    %v5914 = vpop.permute.xlu0 %5913
    %5917 = vset.pattern.permute.xlu0 6
    %5918 = vperm.xlu0 %5917, %v5868
    %v5919 = vpop.permute.xlu0 %5918
    %5922 = vset.pattern.permute.xlu0 6
    %5923 = vperm.xlu0 %5922, %v5869
    %v5924 = vpop.permute.xlu0 %5923
    %5927 = vset.pattern.permute.xlu0 6
    %5928 = vperm.xlu0 %5927, %v5870
    %v5929 = vpop.permute.xlu0 %5928
    %5932 = vset.pattern.permute.xlu0 6
    %5933 = vperm.xlu0 %5932, %v5871
    %v5934 = vpop.permute.xlu0 %5933
    %5937 = vset.pattern.permute.xlu0 6
    %5938 = vperm.xlu0 %5937, %v5872
    %v5939 = vpop.permute.xlu0 %5938
    %5942 = vset.pattern.permute.xlu0 6
    %5943 = vperm.xlu0 %5942, %v5873
    %v5944 = vpop.permute.xlu0 %5943
    %5947 = vset.pattern.permute.xlu0 6
    %5948 = vperm.xlu0 %5947, %v5874
    %v5949 = vpop.permute.xlu0 %5948
    %5952 = vset.pattern.permute.xlu0 6
    %5953 = vperm.xlu0 %5952, %v5875
    %v5954 = vpop.permute.xlu0 %5953
    %v5956 = vmul.f32 %v5844, %v5879
    %v5957 = vmul.f32 %v5845, %v5884
    %v5958 = vmul.f32 %v5846, %v5889
    %v5959 = vmul.f32 %v5847, %v5894
    %v5960 = vmul.f32 %v5848, %v5899
    %v5961 = vmul.f32 %v5849, %v5904
    %v5962 = vmul.f32 %v5850, %v5909
    %v5963 = vmul.f32 %v5851, %v5914
    %v5964 = vmul.f32 %v5852, %v5919
    %v5965 = vmul.f32 %v5853, %v5924
    %v5966 = vmul.f32 %v5854, %v5929
    %v5967 = vmul.f32 %v5855, %v5934
    %v5968 = vmul.f32 %v5856, %v5939
    %v5969 = vmul.f32 %v5857, %v5944
    %v5970 = vmul.f32 %v5858, %v5949
    %v5971 = vmul.f32 %v5859, %v5954
    %v5972 = vpack.c.bf16 %v5957, %v5956
    %v5973 = vpack.c.bf16 %v5959, %v5958
    %v5974 = vpack.c.bf16 %v5961, %v5960
    %v5975 = vpack.c.bf16 %v5963, %v5962
    %v5976 = vpack.c.bf16 %v5965, %v5964
    %v5977 = vpack.c.bf16 %v5967, %v5966
    %v5978 = vpack.c.bf16 %v5969, %v5968
    %v5979 = vpack.c.bf16 %v5971, %v5970
    %5980 = vst.msk [vmem:[#allocation3 + $0x18] sm:$0xff] %vm212, %v5972
    %5981 = vst.msk [vmem:[#allocation3 + $0x40] sm:$0xff] %vm212, %v5973
    %5982 = vst.msk [vmem:[#allocation3 + $0x68] sm:$0xff] %vm212, %v5974
    %5983 = vst.msk [vmem:[#allocation3 + $0x90] sm:$0xff] %vm212, %v5975
    %5984 = vst.msk [vmem:[#allocation3 + $0xb8] sm:$0xff] %vm212, %v5976
    %5985 = vst.msk [vmem:[#allocation3 + $0xe0] sm:$0xff] %vm212, %v5977
    %5986 = vst.msk [vmem:[#allocation3 + $0x108] sm:$0xff] %vm212, %v5978
    %5987 = vst.msk [vmem:[#allocation3 + $0x130] sm:$0xff] %vm212, %v5979
    %v5988 = vld [vmem:[#allocation6 + $0x18] sm:$0xff]
    %v5989 = vld [vmem:[#allocation6 + $0x20] sm:$0xff]
    %v5990 = vld [vmem:[#allocation6 + $0x28] sm:$0xff]
    %v5991 = vld [vmem:[#allocation6 + $0x30] sm:$0xff]
    %v5992 = vld [vmem:[#allocation6 + $0x38] sm:$0xff]
    %v5993 = vld [vmem:[#allocation6 + $0x40] sm:$0xff]
    %v5994 = vld [vmem:[#allocation6 + $0x48] sm:$0xff]
    %v5995 = vld [vmem:[#allocation6 + $0x50] sm:$0xff]
    %v5996 = vld [vmem:[#allocation6 + $0x58] sm:$0xff]
    %v5997 = vld [vmem:[#allocation6 + $0x60] sm:$0xff]
    %v5998 = vld [vmem:[#allocation6 + $0x68] sm:$0xff]
    %v5999 = vld [vmem:[#allocation6 + $0x70] sm:$0xff]
    %v6000 = vld [vmem:[#allocation6 + $0x78] sm:$0xff]
    %v6001 = vld [vmem:[#allocation6 + $0x80] sm:$0xff]
    %v6002 = vld [vmem:[#allocation6 + $0x88] sm:$0xff]
    %v6003 = vld [vmem:[#allocation6 + $0x90] sm:$0xff]
    %v6004 = vld [vmem:[#allocation26] sm:$0xff]
    %v6005 = vld [vmem:[#allocation26 + $0x8] sm:$0xff]
    %v6006 = vld [vmem:[#allocation26 + $0x10] sm:$0xff]
    %v6007 = vld [vmem:[#allocation26 + $0x18] sm:$0xff]
    %v6008 = vld [vmem:[#allocation26 + $0x20] sm:$0xff]
    %v6009 = vld [vmem:[#allocation26 + $0x28] sm:$0xff]
    %v6010 = vld [vmem:[#allocation26 + $0x30] sm:$0xff]
    %v6011 = vld [vmem:[#allocation26 + $0x38] sm:$0xff]
    %v6012 = vld [vmem:[#allocation26 + $0x40] sm:$0xff]
    %v6013 = vld [vmem:[#allocation26 + $0x48] sm:$0xff]
    %v6014 = vld [vmem:[#allocation26 + $0x50] sm:$0xff]
    %v6015 = vld [vmem:[#allocation26 + $0x58] sm:$0xff]
    %v6016 = vld [vmem:[#allocation26 + $0x60] sm:$0xff]
    %v6017 = vld [vmem:[#allocation26 + $0x68] sm:$0xff]
    %v6018 = vld [vmem:[#allocation26 + $0x70] sm:$0xff]
    %v6019 = vld [vmem:[#allocation26 + $0x78] sm:$0xff]
    %6021 = vset.pattern.permute.xlu0 7
    %6022 = vperm.xlu0 %6021, %v6004
    %v6023 = vpop.permute.xlu0 %6022
    %6026 = vset.pattern.permute.xlu0 7
    %6027 = vperm.xlu0 %6026, %v6005
    %v6028 = vpop.permute.xlu0 %6027
    %6031 = vset.pattern.permute.xlu0 7
    %6032 = vperm.xlu0 %6031, %v6006
    %v6033 = vpop.permute.xlu0 %6032
    %6036 = vset.pattern.permute.xlu0 7
    %6037 = vperm.xlu0 %6036, %v6007
    %v6038 = vpop.permute.xlu0 %6037
    %6041 = vset.pattern.permute.xlu0 7
    %6042 = vperm.xlu0 %6041, %v6008
    %v6043 = vpop.permute.xlu0 %6042
    %6046 = vset.pattern.permute.xlu0 7
    %6047 = vperm.xlu0 %6046, %v6009
    %v6048 = vpop.permute.xlu0 %6047
    %6051 = vset.pattern.permute.xlu0 7
    %6052 = vperm.xlu0 %6051, %v6010
    %v6053 = vpop.permute.xlu0 %6052
    %6056 = vset.pattern.permute.xlu0 7
    %6057 = vperm.xlu0 %6056, %v6011
    %v6058 = vpop.permute.xlu0 %6057
    %6061 = vset.pattern.permute.xlu0 7
    %6062 = vperm.xlu0 %6061, %v6012
    %v6063 = vpop.permute.xlu0 %6062
    %6066 = vset.pattern.permute.xlu0 7
    %6067 = vperm.xlu0 %6066, %v6013
    %v6068 = vpop.permute.xlu0 %6067
    %6071 = vset.pattern.permute.xlu0 7
    %6072 = vperm.xlu0 %6071, %v6014
    %v6073 = vpop.permute.xlu0 %6072
    %6076 = vset.pattern.permute.xlu0 7
    %6077 = vperm.xlu0 %6076, %v6015
    %v6078 = vpop.permute.xlu0 %6077
    %6081 = vset.pattern.permute.xlu0 7
    %6082 = vperm.xlu0 %6081, %v6016
    %v6083 = vpop.permute.xlu0 %6082
    %6086 = vset.pattern.permute.xlu0 7
    %6087 = vperm.xlu0 %6086, %v6017
    %v6088 = vpop.permute.xlu0 %6087
    %6091 = vset.pattern.permute.xlu0 7
    %6092 = vperm.xlu0 %6091, %v6018
    %v6093 = vpop.permute.xlu0 %6092
    %6096 = vset.pattern.permute.xlu0 7
    %6097 = vperm.xlu0 %6096, %v6019
    %v6098 = vpop.permute.xlu0 %6097
    %v6100 = vmul.f32 %v5988, %v6023
    %v6101 = vmul.f32 %v5989, %v6028
    %v6102 = vmul.f32 %v5990, %v6033
    %v6103 = vmul.f32 %v5991, %v6038
    %v6104 = vmul.f32 %v5992, %v6043
    %v6105 = vmul.f32 %v5993, %v6048
    %v6106 = vmul.f32 %v5994, %v6053
    %v6107 = vmul.f32 %v5995, %v6058
    %v6108 = vmul.f32 %v5996, %v6063
    %v6109 = vmul.f32 %v5997, %v6068
    %v6110 = vmul.f32 %v5998, %v6073
    %v6111 = vmul.f32 %v5999, %v6078
    %v6112 = vmul.f32 %v6000, %v6083
    %v6113 = vmul.f32 %v6001, %v6088
    %v6114 = vmul.f32 %v6002, %v6093
    %v6115 = vmul.f32 %v6003, %v6098
    %v6116 = vpack.c.bf16 %v6101, %v6100
    %v6117 = vpack.c.bf16 %v6103, %v6102
    %v6118 = vpack.c.bf16 %v6105, %v6104
    %v6119 = vpack.c.bf16 %v6107, %v6106
    %v6120 = vpack.c.bf16 %v6109, %v6108
    %v6121 = vpack.c.bf16 %v6111, %v6110
    %v6122 = vpack.c.bf16 %v6113, %v6112
    %v6123 = vpack.c.bf16 %v6115, %v6114
    %6132 = vrot.lane.b32.xlu0 %v6116, 64
    %v6133 = vpop.permute.xlu0 %6132
    %6134 = vrot.lane.b32.xlu0 %v6117, 64
    %v6135 = vpop.permute.xlu0 %6134
    %6136 = vrot.lane.b32.xlu0 %v6118, 64
    %v6137 = vpop.permute.xlu0 %6136
    %6138 = vrot.lane.b32.xlu0 %v6119, 64
    %v6139 = vpop.permute.xlu0 %6138
    %6140 = vrot.lane.b32.xlu0 %v6120, 64
    %v6141 = vpop.permute.xlu0 %6140
    %6142 = vrot.lane.b32.xlu0 %v6121, 64
    %v6143 = vpop.permute.xlu0 %6142
    %6144 = vrot.lane.b32.xlu0 %v6122, 64
    %v6145 = vpop.permute.xlu0 %6144
    %6146 = vrot.lane.b32.xlu0 %v6123, 64
    %v6147 = vpop.permute.xlu0 %6146
    %6156 = vst.msk [vmem:[#allocation3 + $0x18] sm:$0xff] %vm5307, %v6133
    %6157 = vst.msk [vmem:[#allocation3 + $0x40] sm:$0xff] %vm5307, %v6135
    %6158 = vst.msk [vmem:[#allocation3 + $0x68] sm:$0xff] %vm5307, %v6137
    %6159 = vst.msk [vmem:[#allocation3 + $0x90] sm:$0xff] %vm5307, %v6139
    %6160 = vst.msk [vmem:[#allocation3 + $0xb8] sm:$0xff] %vm5307, %v6141
    %6161 = vst.msk [vmem:[#allocation3 + $0xe0] sm:$0xff] %vm5307, %v6143
    %6162 = vst.msk [vmem:[#allocation3 + $0x108] sm:$0xff] %vm5307, %v6145
    %6163 = vst.msk [vmem:[#allocation3 + $0x130] sm:$0xff] %vm5307, %v6147
    %v6164 = vld [vmem:[#allocation6 + $0x19] sm:$0xff]
    %v6165 = vld [vmem:[#allocation6 + $0x21] sm:$0xff]
    %v6166 = vld [vmem:[#allocation6 + $0x29] sm:$0xff]
    %v6167 = vld [vmem:[#allocation6 + $0x31] sm:$0xff]
    %v6168 = vld [vmem:[#allocation6 + $0x39] sm:$0xff]
    %v6169 = vld [vmem:[#allocation6 + $0x41] sm:$0xff]
    %v6170 = vld [vmem:[#allocation6 + $0x49] sm:$0xff]
    %v6171 = vld [vmem:[#allocation6 + $0x51] sm:$0xff]
    %v6172 = vld [vmem:[#allocation6 + $0x59] sm:$0xff]
    %v6173 = vld [vmem:[#allocation6 + $0x61] sm:$0xff]
    %v6174 = vld [vmem:[#allocation6 + $0x69] sm:$0xff]
    %v6175 = vld [vmem:[#allocation6 + $0x71] sm:$0xff]
    %v6176 = vld [vmem:[#allocation6 + $0x79] sm:$0xff]
    %v6177 = vld [vmem:[#allocation6 + $0x81] sm:$0xff]
    %v6178 = vld [vmem:[#allocation6 + $0x89] sm:$0xff]
    %v6179 = vld [vmem:[#allocation6 + $0x91] sm:$0xff]
    %v6180 = vld [vmem:[#allocation26] sm:$0xff]
    %v6181 = vld [vmem:[#allocation26 + $0x8] sm:$0xff]
    %v6182 = vld [vmem:[#allocation26 + $0x10] sm:$0xff]
    %v6183 = vld [vmem:[#allocation26 + $0x18] sm:$0xff]
    %v6184 = vld [vmem:[#allocation26 + $0x20] sm:$0xff]
    %v6185 = vld [vmem:[#allocation26 + $0x28] sm:$0xff]
    %v6186 = vld [vmem:[#allocation26 + $0x30] sm:$0xff]
    %v6187 = vld [vmem:[#allocation26 + $0x38] sm:$0xff]
    %v6188 = vld [vmem:[#allocation26 + $0x40] sm:$0xff]
    %v6189 = vld [vmem:[#allocation26 + $0x48] sm:$0xff]
    %v6190 = vld [vmem:[#allocation26 + $0x50] sm:$0xff]
    %v6191 = vld [vmem:[#allocation26 + $0x58] sm:$0xff]
    %v6192 = vld [vmem:[#allocation26 + $0x60] sm:$0xff]
    %v6193 = vld [vmem:[#allocation26 + $0x68] sm:$0xff]
    %v6194 = vld [vmem:[#allocation26 + $0x70] sm:$0xff]
    %v6195 = vld [vmem:[#allocation26 + $0x78] sm:$0xff]
    %6197 = vset.pattern.permute.xlu0 8
    %6198 = vperm.xlu0 %6197, %v6180
    %v6199 = vpop.permute.xlu0 %6198
    %6202 = vset.pattern.permute.xlu0 8
    %6203 = vperm.xlu0 %6202, %v6181
    %v6204 = vpop.permute.xlu0 %6203
    %6207 = vset.pattern.permute.xlu0 8
    %6208 = vperm.xlu0 %6207, %v6182
    %v6209 = vpop.permute.xlu0 %6208
    %6212 = vset.pattern.permute.xlu0 8
    %6213 = vperm.xlu0 %6212, %v6183
    %v6214 = vpop.permute.xlu0 %6213
    %6217 = vset.pattern.permute.xlu0 8
    %6218 = vperm.xlu0 %6217, %v6184
    %v6219 = vpop.permute.xlu0 %6218
    %6222 = vset.pattern.permute.xlu0 8
    %6223 = vperm.xlu0 %6222, %v6185
    %v6224 = vpop.permute.xlu0 %6223
    %6227 = vset.pattern.permute.xlu0 8
    %6228 = vperm.xlu0 %6227, %v6186
    %v6229 = vpop.permute.xlu0 %6228
    %6232 = vset.pattern.permute.xlu0 8
    %6233 = vperm.xlu0 %6232, %v6187
    %v6234 = vpop.permute.xlu0 %6233
    %6237 = vset.pattern.permute.xlu0 8
    %6238 = vperm.xlu0 %6237, %v6188
    %v6239 = vpop.permute.xlu0 %6238
    %6242 = vset.pattern.permute.xlu0 8
    %6243 = vperm.xlu0 %6242, %v6189
    %v6244 = vpop.permute.xlu0 %6243
    %6247 = vset.pattern.permute.xlu0 8
    %6248 = vperm.xlu0 %6247, %v6190
    %v6249 = vpop.permute.xlu0 %6248
    %6252 = vset.pattern.permute.xlu0 8
    %6253 = vperm.xlu0 %6252, %v6191
    %v6254 = vpop.permute.xlu0 %6253
    %6257 = vset.pattern.permute.xlu0 8
    %6258 = vperm.xlu0 %6257, %v6192
    %v6259 = vpop.permute.xlu0 %6258
    %6262 = vset.pattern.permute.xlu0 8
    %6263 = vperm.xlu0 %6262, %v6193
    %v6264 = vpop.permute.xlu0 %6263
    %6267 = vset.pattern.permute.xlu0 8
    %6268 = vperm.xlu0 %6267, %v6194
    %v6269 = vpop.permute.xlu0 %6268
    %6272 = vset.pattern.permute.xlu0 8
    %6273 = vperm.xlu0 %6272, %v6195
    %v6274 = vpop.permute.xlu0 %6273
    %v6276 = vmul.f32 %v6164, %v6199
    %v6277 = vmul.f32 %v6165, %v6204
    %v6278 = vmul.f32 %v6166, %v6209
    %v6279 = vmul.f32 %v6167, %v6214
    %v6280 = vmul.f32 %v6168, %v6219
    %v6281 = vmul.f32 %v6169, %v6224
    %v6282 = vmul.f32 %v6170, %v6229
    %v6283 = vmul.f32 %v6171, %v6234
    %v6284 = vmul.f32 %v6172, %v6239
    %v6285 = vmul.f32 %v6173, %v6244
    %v6286 = vmul.f32 %v6174, %v6249
    %v6287 = vmul.f32 %v6175, %v6254
    %v6288 = vmul.f32 %v6176, %v6259
    %v6289 = vmul.f32 %v6177, %v6264
    %v6290 = vmul.f32 %v6178, %v6269
    %v6291 = vmul.f32 %v6179, %v6274
    %v6292 = vpack.c.bf16 %v6277, %v6276
    %v6293 = vpack.c.bf16 %v6279, %v6278
    %v6294 = vpack.c.bf16 %v6281, %v6280
    %v6295 = vpack.c.bf16 %v6283, %v6282
    %v6296 = vpack.c.bf16 %v6285, %v6284
    %v6297 = vpack.c.bf16 %v6287, %v6286
    %v6298 = vpack.c.bf16 %v6289, %v6288
    %v6299 = vpack.c.bf16 %v6291, %v6290
    %6300 = vst.msk [vmem:[#allocation3 + $0x20] sm:$0xff] %vm212, %v6292
    %6301 = vst.msk [vmem:[#allocation3 + $0x48] sm:$0xff] %vm212, %v6293
    %6302 = vst.msk [vmem:[#allocation3 + $0x70] sm:$0xff] %vm212, %v6294
    %6303 = vst.msk [vmem:[#allocation3 + $0x98] sm:$0xff] %vm212, %v6295
    %6304 = vst.msk [vmem:[#allocation3 + $0xc0] sm:$0xff] %vm212, %v6296
    %6305 = vst.msk [vmem:[#allocation3 + $0xe8] sm:$0xff] %vm212, %v6297
    %6306 = vst.msk [vmem:[#allocation3 + $0x110] sm:$0xff] %vm212, %v6298
    %6307 = vst.msk [vmem:[#allocation3 + $0x138] sm:$0xff] %vm212, %v6299
    %v6308 = vld [vmem:[#allocation3] sm:$0xff]
    %v6309 = vld [vmem:[#allocation3 + $0x8] sm:$0xff]
    %v6310 = vld [vmem:[#allocation3 + $0x10] sm:$0xff]
    %v6311 = vld [vmem:[#allocation3 + $0x18] sm:$0xff]
    %v6312 = vld [vmem:[#allocation3 + $0x20] sm:$0xff]
    %v6313 = vld [vmem:[#allocation3 + $0x28] sm:$0xff]
    %v6314 = vld [vmem:[#allocation3 + $0x30] sm:$0xff]
    %v6315 = vld [vmem:[#allocation3 + $0x38] sm:$0xff]
    %v6316 = vld [vmem:[#allocation3 + $0x40] sm:$0xff]
    %v6317 = vld [vmem:[#allocation3 + $0x48] sm:$0xff]
    %v6318 = vld [vmem:[#allocation3 + $0x50] sm:$0xff]
    %v6319 = vld [vmem:[#allocation3 + $0x58] sm:$0xff]
    %v6320 = vld [vmem:[#allocation3 + $0x60] sm:$0xff]
    %v6321 = vld [vmem:[#allocation3 + $0x68] sm:$0xff]
    %v6322 = vld [vmem:[#allocation3 + $0x70] sm:$0xff]
    %v6323 = vld [vmem:[#allocation3 + $0x78] sm:$0xff]
    %v6324 = vld [vmem:[#allocation3 + $0x80] sm:$0xff]
    %v6325 = vld [vmem:[#allocation3 + $0x88] sm:$0xff]
    %v6326 = vld [vmem:[#allocation3 + $0x90] sm:$0xff]
    %v6327 = vld [vmem:[#allocation3 + $0x98] sm:$0xff]
    %v6328 = vld [vmem:[#allocation3 + $0xa0] sm:$0xff]
    %v6329 = vld [vmem:[#allocation3 + $0xa8] sm:$0xff]
    %v6330 = vld [vmem:[#allocation3 + $0xb0] sm:$0xff]
    %v6331 = vld [vmem:[#allocation3 + $0xb8] sm:$0xff]
    %v6332 = vld [vmem:[#allocation3 + $0xc0] sm:$0xff]
    %v6333 = vld [vmem:[#allocation3 + $0xc8] sm:$0xff]
    %v6334 = vld [vmem:[#allocation3 + $0xd0] sm:$0xff]
    %v6335 = vld [vmem:[#allocation3 + $0xd8] sm:$0xff]
    %v6336 = vld [vmem:[#allocation3 + $0xe0] sm:$0xff]
    %v6337 = vld [vmem:[#allocation3 + $0xe8] sm:$0xff]
    %v6338 = vld [vmem:[#allocation3 + $0xf0] sm:$0xff]
    %v6339 = vld [vmem:[#allocation3 + $0xf8] sm:$0xff]
    %v6340 = vld [vmem:[#allocation3 + $0x100] sm:$0xff]
    %v6341 = vld [vmem:[#allocation3 + $0x108] sm:$0xff]
    %v6342 = vld [vmem:[#allocation3 + $0x110] sm:$0xff]
    %v6343 = vld [vmem:[#allocation3 + $0x118] sm:$0xff]
    %v6344 = vld [vmem:[#allocation3 + $0x120] sm:$0xff]
    %v6345 = vld [vmem:[#allocation3 + $0x128] sm:$0xff]
    %v6346 = vld [vmem:[#allocation3 + $0x130] sm:$0xff]
    %v6347 = vld [vmem:[#allocation3 + $0x138] sm:$0xff]
    %v6348 = vld [vmem:[#allocation14] sm:$0xf]
    %v6349 = vld [vmem:[#allocation14 + $0x4] sm:$0xf]
    %v6350 = vld [vmem:[#allocation14 + $0x8] sm:$0xf]
    %v6351 = vld [vmem:[#allocation14 + $0xc] sm:$0xf]
    %v6352 = vld [vmem:[#allocation14 + $0x10] sm:$0xf]
    %v6353 = vld [vmem:[#allocation14 + $0x14] sm:$0xf]
    %v6354 = vld [vmem:[#allocation14 + $0x18] sm:$0xf]
    %v6355 = vld [vmem:[#allocation14 + $0x1c] sm:$0xf]
    %v6356 = vld [vmem:[#allocation14 + $0x20] sm:$0xf]
    %v6357 = vld [vmem:[#allocation14 + $0x24] sm:$0xf]
    %v6358 = vld [vmem:[#allocation14 + $0x28] sm:$0xf]
    %v6359 = vld [vmem:[#allocation14 + $0x2c] sm:$0xf]
    %v6360 = vld [vmem:[#allocation14 + $0x30] sm:$0xf]
    %v6361 = vld [vmem:[#allocation14 + $0x34] sm:$0xf]
    %v6362 = vld [vmem:[#allocation14 + $0x38] sm:$0xf]
    %v6363 = vld [vmem:[#allocation14 + $0x3c] sm:$0xf]
    %v6364 = vld [vmem:[#allocation14 + $0x40] sm:$0xf]
    %v6365 = vld [vmem:[#allocation14 + $0x44] sm:$0xf]
    %v6366 = vld [vmem:[#allocation14 + $0x48] sm:$0xf]
    %v6367 = vld [vmem:[#allocation14 + $0x4c] sm:$0xf]
    %v6368 = vld [vmem:[#allocation14 + $0x50] sm:$0xf]
    %v6369 = vld [vmem:[#allocation14 + $0x54] sm:$0xf]
    %v6370 = vld [vmem:[#allocation14 + $0x58] sm:$0xf]
    %v6371 = vld [vmem:[#allocation14 + $0x5c] sm:$0xf]
    %v6372 = vld [vmem:[#allocation14 + $0x60] sm:$0xf]
    %v6373 = vld [vmem:[#allocation14 + $0x64] sm:$0xf]
    %v6374 = vld [vmem:[#allocation14 + $0x68] sm:$0xf]
    %v6375 = vld [vmem:[#allocation14 + $0x6c] sm:$0xf]
    %v6376 = vld [vmem:[#allocation14 + $0x70] sm:$0xf]
    %v6377 = vld [vmem:[#allocation14 + $0x74] sm:$0xf]
    %v6378 = vld [vmem:[#allocation14 + $0x78] sm:$0xf]
    %v6379 = vld [vmem:[#allocation14 + $0x7c] sm:$0xf]
    %v6380 = vld [vmem:[#allocation14 + $0x80] sm:$0xf]
    %v6381 = vld [vmem:[#allocation14 + $0x84] sm:$0xf]
    %v6382 = vld [vmem:[#allocation14 + $0x88] sm:$0xf]
    %v6383 = vld [vmem:[#allocation14 + $0x8c] sm:$0xf]
    %v6384 = vld [vmem:[#allocation14 + $0x90] sm:$0xf]
    %v6385 = vld [vmem:[#allocation14 + $0x94] sm:$0xf]
    %v6386 = vld [vmem:[#allocation14 + $0x98] sm:$0xf]
    %v6387 = vld [vmem:[#allocation14 + $0x9c] sm:$0xf]
    %v6388 = vld [vmem:[#allocation14 + $0xa0] sm:$0xf]
    %v6389 = vld [vmem:[#allocation14 + $0xa4] sm:$0xf]
    %v6390 = vld [vmem:[#allocation14 + $0xa8] sm:$0xf]
    %v6391 = vld [vmem:[#allocation14 + $0xac] sm:$0xf]
    %v6392 = vld [vmem:[#allocation14 + $0xb0] sm:$0xf]
    %v6393 = vld [vmem:[#allocation14 + $0xb4] sm:$0xf]
    %v6394 = vld [vmem:[#allocation14 + $0xb8] sm:$0xf]
    %v6395 = vld [vmem:[#allocation14 + $0xbc] sm:$0xf]
    %v6396 = vld [vmem:[#allocation14 + $0xc0] sm:$0xf]
    %v6397 = vld [vmem:[#allocation14 + $0xc4] sm:$0xf]
    %v6398 = vld [vmem:[#allocation14 + $0xc8] sm:$0xf]
    %v6399 = vld [vmem:[#allocation14 + $0xcc] sm:$0xf]
    %v6400 = vld [vmem:[#allocation14 + $0xd0] sm:$0xf]
    %v6401 = vld [vmem:[#allocation14 + $0xd4] sm:$0xf]
    %v6402 = vld [vmem:[#allocation14 + $0xd8] sm:$0xf]
    %v6403 = vld [vmem:[#allocation14 + $0xdc] sm:$0xf]
    %v6404 = vld [vmem:[#allocation14 + $0xe0] sm:$0xf]
    %v6405 = vld [vmem:[#allocation14 + $0xe4] sm:$0xf]
    %v6406 = vld [vmem:[#allocation14 + $0xe8] sm:$0xf]
    %v6407 = vld [vmem:[#allocation14 + $0xec] sm:$0xf]
    %v6408 = vld [vmem:[#allocation14 + $0xf0] sm:$0xf]
    %v6409 = vld [vmem:[#allocation14 + $0xf4] sm:$0xf]
    %v6410 = vld [vmem:[#allocation14 + $0xf8] sm:$0xf]
    %v6411 = vld [vmem:[#allocation14 + $0xfc] sm:$0xf]
    %v6412 = vld [vmem:[#allocation14 + $0x100] sm:$0xf]
    %v6413 = vld [vmem:[#allocation14 + $0x104] sm:$0xf]
    %v6414 = vld [vmem:[#allocation14 + $0x108] sm:$0xf]
    %v6415 = vld [vmem:[#allocation14 + $0x10c] sm:$0xf]
    %v6416 = vld [vmem:[#allocation14 + $0x110] sm:$0xf]
    %v6417 = vld [vmem:[#allocation14 + $0x114] sm:$0xf]
    %v6418 = vld [vmem:[#allocation14 + $0x118] sm:$0xf]
    %v6419 = vld [vmem:[#allocation14 + $0x11c] sm:$0xf]
    %v6492 = vunpack.c.l.b16 %v6348
    %v6493 = vunpack.c.l.b16 %v6349
    %v6494 = vunpack.c.l.b16 %v6350
    %v6495 = vunpack.c.l.b16 %v6351
    %v6496 = vunpack.c.l.b16 %v6352
    %v6497 = vunpack.c.l.b16 %v6353
    %v6498 = vunpack.c.l.b16 %v6354
    %v6499 = vunpack.c.l.b16 %v6355
    %v6500 = vunpack.c.l.b16 %v6356
    %v6501 = vunpack.c.l.b16 %v6357
    %v6502 = vunpack.c.l.b16 %v6358
    %v6503 = vunpack.c.l.b16 %v6359
    %v6504 = vunpack.c.l.b16 %v6360
    %v6505 = vunpack.c.l.b16 %v6361
    %v6506 = vunpack.c.l.b16 %v6362
    %v6507 = vunpack.c.l.b16 %v6363
    %v6508 = vunpack.c.l.b16 %v6364
    %v6509 = vunpack.c.l.b16 %v6365
    %v6510 = vunpack.c.l.b16 %v6366
    %v6511 = vunpack.c.l.b16 %v6367
    %v6512 = vunpack.c.l.b16 %v6368
    %v6513 = vunpack.c.l.b16 %v6369
    %v6514 = vunpack.c.l.b16 %v6370
    %v6515 = vunpack.c.l.b16 %v6371
    %v6516 = vunpack.c.l.b16 %v6372
    %v6517 = vunpack.c.l.b16 %v6373
    %v6518 = vunpack.c.l.b16 %v6374
    %v6519 = vunpack.c.l.b16 %v6375
    %v6520 = vunpack.c.l.b16 %v6376
    %v6521 = vunpack.c.l.b16 %v6377
    %v6522 = vunpack.c.l.b16 %v6378
    %v6523 = vunpack.c.l.b16 %v6379
    %v6524 = vunpack.c.l.b16 %v6380
    %v6525 = vunpack.c.l.b16 %v6381
    %v6526 = vunpack.c.l.b16 %v6382
    %v6527 = vunpack.c.l.b16 %v6383
    %v6528 = vunpack.c.l.b16 %v6384
    %v6529 = vunpack.c.l.b16 %v6385
    %v6530 = vunpack.c.l.b16 %v6386
    %v6531 = vunpack.c.l.b16 %v6387
    %v6532 = vunpack.c.l.b16 %v6388
    %v6533 = vunpack.c.l.b16 %v6389
    %v6534 = vunpack.c.l.b16 %v6390
    %v6535 = vunpack.c.l.b16 %v6391
    %v6536 = vunpack.c.l.b16 %v6392
    %v6537 = vunpack.c.l.b16 %v6393
    %v6538 = vunpack.c.l.b16 %v6394
    %v6539 = vunpack.c.l.b16 %v6395
    %v6540 = vunpack.c.l.b16 %v6396
    %v6541 = vunpack.c.l.b16 %v6397
    %v6542 = vunpack.c.l.b16 %v6398
    %v6543 = vunpack.c.l.b16 %v6399
    %v6544 = vunpack.c.l.b16 %v6400
    %v6545 = vunpack.c.l.b16 %v6401
    %v6546 = vunpack.c.l.b16 %v6402
    %v6547 = vunpack.c.l.b16 %v6403
    %v6548 = vunpack.c.l.b16 %v6404
    %v6549 = vunpack.c.l.b16 %v6405
    %v6550 = vunpack.c.l.b16 %v6406
    %v6551 = vunpack.c.l.b16 %v6407
    %v6552 = vunpack.c.l.b16 %v6408
    %v6553 = vunpack.c.l.b16 %v6409
    %v6554 = vunpack.c.l.b16 %v6410
    %v6555 = vunpack.c.l.b16 %v6411
    %v6556 = vunpack.c.l.b16 %v6412
    %v6557 = vunpack.c.l.b16 %v6413
    %v6558 = vunpack.c.l.b16 %v6414
    %v6559 = vunpack.c.l.b16 %v6415
    %v6560 = vunpack.c.l.b16 %v6416
    %v6561 = vunpack.c.l.b16 %v6417
    %v6562 = vunpack.c.l.b16 %v6418
    %v6563 = vunpack.c.l.b16 %v6419
    %v6564 = vpack.c.b16 %v6493, %v6492
    %v6565 = vpack.c.b16 %v6495, %v6494
    %v6566 = vpack.c.b16 %v6497, %v6496
    %v6567 = vpack.c.b16 %v6499, %v6498
    %v6568 = vpack.c.b16 %v6501, %v6500
    %v6569 = vpack.c.b16 %v6503, %v6502
    %v6570 = vpack.c.b16 %v6505, %v6504
    %v6571 = vpack.c.b16 %v6507, %v6506
    %v6572 = vpack.c.b16 %v6509, %v6508
    %v6573 = vpack.c.b16 %v6511, %v6510
    %v6574 = vpack.c.b16 %v6513, %v6512
    %v6575 = vpack.c.b16 %v6515, %v6514
    %v6576 = vpack.c.b16 %v6517, %v6516
    %v6577 = vpack.c.b16 %v6519, %v6518
    %v6578 = vpack.c.b16 %v6521, %v6520
    %v6579 = vpack.c.b16 %v6523, %v6522
    %v6580 = vpack.c.b16 %v6525, %v6524
    %v6581 = vpack.c.b16 %v6527, %v6526
    %v6582 = vpack.c.b16 %v6529, %v6528
    %v6583 = vpack.c.b16 %v6531, %v6530
    %v6584 = vpack.c.b16 %v6533, %v6532
    %v6585 = vpack.c.b16 %v6535, %v6534
    %v6586 = vpack.c.b16 %v6537, %v6536
    %v6587 = vpack.c.b16 %v6539, %v6538
    %v6588 = vpack.c.b16 %v6541, %v6540
    %v6589 = vpack.c.b16 %v6543, %v6542
    %v6590 = vpack.c.b16 %v6545, %v6544
    %v6591 = vpack.c.b16 %v6547, %v6546
    %v6592 = vpack.c.b16 %v6549, %v6548
    %v6593 = vpack.c.b16 %v6551, %v6550
    %v6594 = vpack.c.b16 %v6553, %v6552
    %v6595 = vpack.c.b16 %v6555, %v6554
    %v6596 = vpack.c.b16 %v6557, %v6556
    %v6597 = vpack.c.b16 %v6559, %v6558
    %v6598 = vpack.c.b16 %v6561, %v6560
    %v6599 = vpack.c.b16 %v6563, %v6562
    %v6637 = vsel %vm212, %v6312, 0
    %v6640 = vsel %vm212, %v6317, 0
    %v6643 = vsel %vm212, %v6322, 0
    %v6646 = vsel %vm212, %v6327, 0
    %v6649 = vsel %vm212, %v6332, 0
    %v6652 = vsel %vm212, %v6337, 0
    %v6655 = vsel %vm212, %v6342, 0
    %v6658 = vsel %vm212, %v6347, 0
    %6660 = vmatprep.subr.bf16.mxu0 0
    %6661 = vmatpush1.bf16.msra.mxu0 %v6564
    %6662 = vmatprep.subr.bf16.mxu0 0
    %6663 = vmatpush1.bf16.msra.mxu0 %v6565
    %6664 = vmatprep.subr.bf16.mxu0 0
    %6665 = vmatpush1.bf16.msra.mxu0 %v6566
    %6666 = vmatprep.subr.bf16.mxu0 0
    %6667 = vmatpush1.bf16.msra.mxu0 %v6567
    %6668 = vmatprep.subr.bf16.mxu0 0
    %6669 = vmatpush1.bf16.msra.mxu0 %v6568
    %6670 = vmatprep.subr.bf16.mxu0 0
    %6671 = vmatpush1.bf16.msra.mxu0 %v6569
    %6672 = vmatprep.subr.bf16.mxu0 0
    %6673 = vmatpush1.bf16.msra.mxu0 %v6570
    %6674 = vmatprep.subr.bf16.mxu0 0
    %6675 = vmatpush1.bf16.msra.mxu0 %v6571
    %6676 = vmatprep.subr.bf16.mxu0 0
    %6677 = vmatpush1.bf16.msra.mxu0 %v6572
    %6678 = vmatprep.subr.bf16.mxu0 0
    %6679 = vmatpush1.bf16.msra.mxu0 %v6573
    %6680 = vmatprep.subr.bf16.mxu0 0
    %6681 = vmatpush1.bf16.msra.mxu0 %v6574
    %6682 = vmatprep.subr.bf16.mxu0 0
    %6683 = vmatpush1.bf16.msra.mxu0 %v6575
    %6684 = vmatprep.subr.bf16.mxu0 0
    %6685 = vmatpush1.bf16.msra.mxu0 %v6576
    %6686 = vmatprep.subr.bf16.mxu0 0
    %6687 = vmatpush1.bf16.msra.mxu0 %v6577
    %6688 = vmatprep.subr.bf16.mxu0 0
    %6689 = vmatpush1.bf16.msra.mxu0 %v6578
    %6690 = vmatprep.subr.bf16.mxu0 0
    %6691 = vmatpush1.bf16.msra.mxu0 %v6579
    %6692 = vmatprep.mubr.bf16.mxu0 %v6309
    %6693 = vmatmul.mubr.bf16.gmra.mrb[0].mxu0 %v6308
    %v6694 = vpop.f32.mrb[0].mxu0
    %v6695 = vadd.f32 0.0, %v6694
    %v6696 = vpop.f32.mrb[0].mxu0
    %v6697 = vpop.f32.mrb[0].mxu0
    %v6698 = vadd.f32 0.0, %v6697
    %v6699 = vpop.f32.mrb[0].mxu0
    %6700 = vmatprep.mubr.bf16.mxu0 %v6314
    %6701 = vmatmul.mubr.bf16.gmra.mrb[0].mxu0 %v6313
    %v6702 = vpop.f32.mrb[0].mxu0
    %v6703 = vadd.f32 0.0, %v6702
    %v6704 = vpop.f32.mrb[0].mxu0
    %v6705 = vpop.f32.mrb[0].mxu0
    %v6706 = vadd.f32 0.0, %v6705
    %v6707 = vpop.f32.mrb[0].mxu0
    %6708 = vmatprep.mubr.bf16.mxu0 %v6319
    %6709 = vmatmul.mubr.bf16.gmra.mrb[0].mxu0 %v6318
    %v6710 = vpop.f32.mrb[0].mxu0
    %v6711 = vadd.f32 0.0, %v6710
    %v6712 = vpop.f32.mrb[0].mxu0
    %v6713 = vpop.f32.mrb[0].mxu0
    %v6714 = vadd.f32 0.0, %v6713
    %v6715 = vpop.f32.mrb[0].mxu0
    %6716 = vmatprep.mubr.bf16.mxu0 %v6324
    %6717 = vmatmul.mubr.bf16.gmra.mrb[0].mxu0 %v6323
    %v6718 = vpop.f32.mrb[0].mxu0
    %v6719 = vadd.f32 0.0, %v6718
    %v6720 = vpop.f32.mrb[0].mxu0
    %v6721 = vpop.f32.mrb[0].mxu0
    %v6722 = vadd.f32 0.0, %v6721
    %v6723 = vpop.f32.mrb[0].mxu0
    %6724 = vmatprep.mubr.bf16.mxu0 %v6329
    %6725 = vmatmul.mubr.bf16.gmra.mrb[0].mxu0 %v6328
    %v6726 = vpop.f32.mrb[0].mxu0
    %v6727 = vadd.f32 0.0, %v6726
    %v6728 = vpop.f32.mrb[0].mxu0
    %v6729 = vpop.f32.mrb[0].mxu0
    %v6730 = vadd.f32 0.0, %v6729
    %v6731 = vpop.f32.mrb[0].mxu0
    %6732 = vmatprep.mubr.bf16.mxu0 %v6334
    %6733 = vmatmul.mubr.bf16.gmra.mrb[0].mxu0 %v6333
    %v6734 = vpop.f32.mrb[0].mxu0
    %v6735 = vadd.f32 0.0, %v6734
    %v6736 = vpop.f32.mrb[0].mxu0
    %v6737 = vpop.f32.mrb[0].mxu0
    %v6738 = vadd.f32 0.0, %v6737
    %v6739 = vpop.f32.mrb[0].mxu0
    %6740 = vmatprep.mubr.bf16.mxu0 %v6339
    %6741 = vmatmul.mubr.bf16.gmra.mrb[0].mxu0 %v6338
    %v6742 = vpop.f32.mrb[0].mxu0
    %v6743 = vadd.f32 0.0, %v6742
    %v6744 = vpop.f32.mrb[0].mxu0
    %v6745 = vpop.f32.mrb[0].mxu0
    %v6746 = vadd.f32 0.0, %v6745
    %v6747 = vpop.f32.mrb[0].mxu0
    %6748 = vmatprep.mubr.bf16.mxu0 %v6344
    %6749 = vmatmul.mubr.bf16.gmra.mrb[0].mxu0 %v6343
    %v6750 = vpop.f32.mrb[0].mxu0
    %v6751 = vadd.f32 0.0, %v6750
    %v6752 = vpop.f32.mrb[0].mxu0
    %v6753 = vpop.f32.mrb[0].mxu0
    %v6754 = vadd.f32 0.0, %v6753
    %v6755 = vpop.f32.mrb[0].mxu0
    %6756 = vdwg.mxu0
    %6757 = vmatprep.subr.bf16.mxu0 0
    %6758 = vmatpush1.bf16.msra.mxu0 %v6580
    %6759 = vmatprep.subr.bf16.mxu0 0
    %6760 = vmatpush1.bf16.msra.mxu0 %v6581
    %6761 = vmatprep.subr.bf16.mxu0 0
    %6762 = vmatpush1.bf16.msra.mxu0 %v6582
    %6763 = vmatprep.subr.bf16.mxu0 0
    %6764 = vmatpush1.bf16.msra.mxu0 %v6583
    %6765 = vmatprep.subr.bf16.mxu0 0
    %6766 = vmatpush1.bf16.msra.mxu0 %v6584
    %6767 = vmatprep.subr.bf16.mxu0 0
    %6768 = vmatpush1.bf16.msra.mxu0 %v6585
    %6769 = vmatprep.subr.bf16.mxu0 0
    %6770 = vmatpush1.bf16.msra.mxu0 %v6586
    %6771 = vmatprep.subr.bf16.mxu0 0
    %6772 = vmatpush1.bf16.msra.mxu0 %v6587
    %6773 = vmatprep.subr.bf16.mxu0 0
    %6774 = vmatpush1.bf16.msra.mxu0 %v6588
    %6775 = vmatprep.subr.bf16.mxu0 0
    %6776 = vmatpush1.bf16.msra.mxu0 %v6589
    %6777 = vmatprep.subr.bf16.mxu0 0
    %6778 = vmatpush1.bf16.msra.mxu0 %v6590
    %6779 = vmatprep.subr.bf16.mxu0 0
    %6780 = vmatpush1.bf16.msra.mxu0 %v6591
    %6781 = vmatprep.subr.bf16.mxu0 0
    %6782 = vmatpush1.bf16.msra.mxu0 %v6592
    %6783 = vmatprep.subr.bf16.mxu0 0
    %6784 = vmatpush1.bf16.msra.mxu0 %v6593
    %6785 = vmatprep.subr.bf16.mxu0 0
    %6786 = vmatpush1.bf16.msra.mxu0 %v6594
    %6787 = vmatprep.subr.bf16.mxu0 0
    %6788 = vmatpush1.bf16.msra.mxu0 %v6595
    %6789 = vmatprep.mubr.bf16.mxu0 %v6311
    %6790 = vmatmul.mubr.bf16.gmra.mrb[0].mxu0 %v6310
    %v6791 = vpop.f32.mrb[0].mxu0
    %v6792 = vadd.f32 %v6695, %v6791
    %v6793 = vpop.f32.mrb[0].mxu0
    %v6794 = vpop.f32.mrb[0].mxu0
    %v6795 = vadd.f32 %v6698, %v6794
    %v6796 = vpop.f32.mrb[0].mxu0
    %6797 = vmatprep.mubr.bf16.mxu0 %v6316
    %6798 = vmatmul.mubr.bf16.gmra.mrb[0].mxu0 %v6315
    %v6799 = vpop.f32.mrb[0].mxu0
    %v6800 = vadd.f32 %v6703, %v6799
    %v6801 = vpop.f32.mrb[0].mxu0
    %v6802 = vpop.f32.mrb[0].mxu0
    %v6803 = vadd.f32 %v6706, %v6802
    %v6804 = vpop.f32.mrb[0].mxu0
    %6805 = vmatprep.mubr.bf16.mxu0 %v6321
    %6806 = vmatmul.mubr.bf16.gmra.mrb[0].mxu0 %v6320
    %v6807 = vpop.f32.mrb[0].mxu0
    %v6808 = vadd.f32 %v6711, %v6807
    %v6809 = vpop.f32.mrb[0].mxu0
    %v6810 = vpop.f32.mrb[0].mxu0
    %v6811 = vadd.f32 %v6714, %v6810
    %v6812 = vpop.f32.mrb[0].mxu0
    %6813 = vmatprep.mubr.bf16.mxu0 %v6326
    %6814 = vmatmul.mubr.bf16.gmra.mrb[0].mxu0 %v6325
    %v6815 = vpop.f32.mrb[0].mxu0
    %v6816 = vadd.f32 %v6719, %v6815
    %v6817 = vpop.f32.mrb[0].mxu0
    %v6818 = vpop.f32.mrb[0].mxu0
    %v6819 = vadd.f32 %v6722, %v6818
    %v6820 = vpop.f32.mrb[0].mxu0
    %6821 = vmatprep.mubr.bf16.mxu0 %v6331
    %6822 = vmatmul.mubr.bf16.gmra.mrb[0].mxu0 %v6330
    %v6823 = vpop.f32.mrb[0].mxu0
    %v6824 = vadd.f32 %v6727, %v6823
    %v6825 = vpop.f32.mrb[0].mxu0
    %v6826 = vpop.f32.mrb[0].mxu0
    %v6827 = vadd.f32 %v6730, %v6826
    %v6828 = vpop.f32.mrb[0].mxu0
    %6829 = vmatprep.mubr.bf16.mxu0 %v6336
    %6830 = vmatmul.mubr.bf16.gmra.mrb[0].mxu0 %v6335
    %v6831 = vpop.f32.mrb[0].mxu0
    %v6832 = vadd.f32 %v6735, %v6831
    %v6833 = vpop.f32.mrb[0].mxu0
    %v6834 = vpop.f32.mrb[0].mxu0
    %v6835 = vadd.f32 %v6738, %v6834
    %v6836 = vpop.f32.mrb[0].mxu0
    %6837 = vmatprep.mubr.bf16.mxu0 %v6341
    %6838 = vmatmul.mubr.bf16.gmra.mrb[0].mxu0 %v6340
    %v6839 = vpop.f32.mrb[0].mxu0
    %v6840 = vadd.f32 %v6743, %v6839
    %v6841 = vpop.f32.mrb[0].mxu0
    %v6842 = vpop.f32.mrb[0].mxu0
    %v6843 = vadd.f32 %v6746, %v6842
    %v6844 = vpop.f32.mrb[0].mxu0
    %6845 = vmatprep.mubr.bf16.mxu0 %v6346
    %6846 = vmatmul.mubr.bf16.gmra.mrb[0].mxu0 %v6345
    %v6847 = vpop.f32.mrb[0].mxu0
    %v6848 = vadd.f32 %v6751, %v6847
    %v6849 = vpop.f32.mrb[0].mxu0
    %v6850 = vpop.f32.mrb[0].mxu0
    %v6851 = vadd.f32 %v6754, %v6850
    %v6852 = vpop.f32.mrb[0].mxu0
    %6853 = vdwg.mxu0
    %6854 = vmatprep.subr.bf16.mxu0 0
    %6855 = vmatpush1.bf16.msra.mxu0 %v6596
    %6856 = vmatprep.subr.bf16.mxu0 0
    %6857 = vmatpush1.bf16.msra.mxu0 %v6597
    %6858 = vmatprep.subr.bf16.mxu0 0
    %6859 = vmatpush1.bf16.msra.mxu0 %v6598
    %6860 = vmatprep.subr.bf16.mxu0 0
    %6861 = vmatpush1.bf16.msra.mxu0 %v6599
    %6862 = vmatprep.subr.bf16.mxu0 0
    %6863 = vmatpush1.bf16.msra.mxu0 0
    %6864 = vmatprep.subr.bf16.mxu0 0
    %6865 = vmatpush1.bf16.msra.mxu0 0
    %6866 = vmatprep.subr.bf16.mxu0 0
    %6867 = vmatpush1.bf16.msra.mxu0 0
    %6868 = vmatprep.subr.bf16.mxu0 0
    %6869 = vmatpush1.bf16.msra.mxu0 0
    %6870 = vmatprep.subr.bf16.mxu0 0
    %6871 = vmatpush1.bf16.msra.mxu0 0
    %6872 = vmatprep.subr.bf16.mxu0 0
    %6873 = vmatpush1.bf16.msra.mxu0 0
    %6874 = vmatprep.subr.bf16.mxu0 0
    %6875 = vmatpush1.bf16.msra.mxu0 0
    %6876 = vmatprep.subr.bf16.mxu0 0
    %6877 = vmatpush1.bf16.msra.mxu0 0
    %6878 = vmatprep.subr.bf16.mxu0 0
    %6879 = vmatpush1.bf16.msra.mxu0 0
    %6880 = vmatprep.subr.bf16.mxu0 0
    %6881 = vmatpush1.bf16.msra.mxu0 0
    %6882 = vmatprep.subr.bf16.mxu0 0
    %6883 = vmatpush1.bf16.msra.mxu0 0
    %6884 = vmatprep.subr.bf16.mxu0 0
    %6885 = vmatpush1.bf16.msra.mxu0 0
    %6886 = vmatprep.mubr.bf16.mxu0 0
    %6887 = vmatmul.mubr.bf16.gmra.mrb[0].mxu0 %v6637
    %v6888 = vpop.f32.mrb[0].mxu0
    %v6889 = vadd.f32 %v6792, %v6888
    %v6890 = vpop.f32.mrb[0].mxu0
    %v6891 = vpop.f32.mrb[0].mxu0
    %v6892 = vadd.f32 %v6795, %v6891
    %v6893 = vpop.f32.mrb[0].mxu0
    %6894 = vmatprep.mubr.bf16.mxu0 0
    %6895 = vmatmul.mubr.bf16.gmra.mrb[0].mxu0 %v6640
    %v6896 = vpop.f32.mrb[0].mxu0
    %v6897 = vadd.f32 %v6800, %v6896
    %v6898 = vpop.f32.mrb[0].mxu0
    %v6899 = vpop.f32.mrb[0].mxu0
    %v6900 = vadd.f32 %v6803, %v6899
    %v6901 = vpop.f32.mrb[0].mxu0
    %6902 = vmatprep.mubr.bf16.mxu0 0
    %6903 = vmatmul.mubr.bf16.gmra.mrb[0].mxu0 %v6643
    %v6904 = vpop.f32.mrb[0].mxu0
    %v6905 = vadd.f32 %v6808, %v6904
    %v6906 = vpop.f32.mrb[0].mxu0
    %v6907 = vpop.f32.mrb[0].mxu0
    %v6908 = vadd.f32 %v6811, %v6907
    %v6909 = vpop.f32.mrb[0].mxu0
    %6910 = vmatprep.mubr.bf16.mxu0 0
    %6911 = vmatmul.mubr.bf16.gmra.mrb[0].mxu0 %v6646
    %v6912 = vpop.f32.mrb[0].mxu0
    %v6913 = vadd.f32 %v6816, %v6912
    %v6914 = vpop.f32.mrb[0].mxu0
    %v6915 = vpop.f32.mrb[0].mxu0
    %v6916 = vadd.f32 %v6819, %v6915
    %v6917 = vpop.f32.mrb[0].mxu0
    %6918 = vmatprep.mubr.bf16.mxu0 0
    %6919 = vmatmul.mubr.bf16.gmra.mrb[0].mxu0 %v6649
    %v6920 = vpop.f32.mrb[0].mxu0
    %v6921 = vadd.f32 %v6824, %v6920
    %v6922 = vpop.f32.mrb[0].mxu0
    %v6923 = vpop.f32.mrb[0].mxu0
    %v6924 = vadd.f32 %v6827, %v6923
    %v6925 = vpop.f32.mrb[0].mxu0
    %6926 = vmatprep.mubr.bf16.mxu0 0
    %6927 = vmatmul.mubr.bf16.gmra.mrb[0].mxu0 %v6652
    %v6928 = vpop.f32.mrb[0].mxu0
    %v6929 = vadd.f32 %v6832, %v6928
    %v6930 = vpop.f32.mrb[0].mxu0
    %v6931 = vpop.f32.mrb[0].mxu0
    %v6932 = vadd.f32 %v6835, %v6931
    %v6933 = vpop.f32.mrb[0].mxu0
    %6934 = vmatprep.mubr.bf16.mxu0 0
    %6935 = vmatmul.mubr.bf16.gmra.mrb[0].mxu0 %v6655
    %v6936 = vpop.f32.mrb[0].mxu0
    %v6937 = vadd.f32 %v6840, %v6936
    %v6938 = vpop.f32.mrb[0].mxu0
    %v6939 = vpop.f32.mrb[0].mxu0
    %v6940 = vadd.f32 %v6843, %v6939
    %v6941 = vpop.f32.mrb[0].mxu0
    %6942 = vmatprep.mubr.bf16.mxu0 0
    %6943 = vmatmul.mubr.bf16.gmra.mrb[0].mxu0 %v6658
    %v6944 = vpop.f32.mrb[0].mxu0
    %v6945 = vadd.f32 %v6848, %v6944
    %v6946 = vpop.f32.mrb[0].mxu0
    %v6947 = vpop.f32.mrb[0].mxu0
    %v6948 = vadd.f32 %v6851, %v6947
    %v6949 = vpop.f32.mrb[0].mxu0
    %6950 = vdwg.mxu0
    %v6951 = vsel %vm212, %v6889, 0.0
    %v6952 = vsel %vm212, %v6892, 0.0
    %v6953 = vadd.f32 %v6951, %v6952
    %v6954 = vsel %vm212, %v6897, 0.0
    %v6955 = vadd.f32 %v6953, %v6954
    %v6956 = vsel %vm212, %v6900, 0.0
    %v6957 = vadd.f32 %v6955, %v6956
    %v6958 = vsel %vm212, %v6905, 0.0
    %v6959 = vadd.f32 %v6957, %v6958
    %v6960 = vsel %vm212, %v6908, 0.0
    %v6961 = vadd.f32 %v6959, %v6960
    %v6962 = vsel %vm212, %v6913, 0.0
    %v6963 = vadd.f32 %v6961, %v6962
    %v6964 = vsel %vm212, %v6916, 0.0
    %v6965 = vadd.f32 %v6963, %v6964
    %v6966 = vsel %vm212, %v6921, 0.0
    %v6967 = vadd.f32 %v6965, %v6966
    %v6968 = vsel %vm212, %v6924, 0.0
    %v6969 = vadd.f32 %v6967, %v6968
    %v6970 = vsel %vm212, %v6929, 0.0
    %v6971 = vadd.f32 %v6969, %v6970
    %v6972 = vsel %vm212, %v6932, 0.0
    %v6973 = vadd.f32 %v6971, %v6972
    %v6974 = vsel %vm212, %v6937, 0.0
    %v6975 = vadd.f32 %v6973, %v6974
    %v6976 = vsel %vm212, %v6940, 0.0
    %v6977 = vadd.f32 %v6975, %v6976
    %v6978 = vsel %vm212, %v6945, 0.0
    %v6979 = vadd.f32 %v6977, %v6978
    %v6980 = vsel %vm212, %v6948, 0.0
    %v6981 = vadd.f32 %v6979, %v6980
    %v6982 = vrot.slane %v6981, 4
    %v6983 = vadd.f32 %v6981, %v6982
    %v6984 = vrot.slane %v6983, 2
    %v6985 = vadd.f32 %v6983, %v6984
    %v6986 = vrot.slane %v6985, 1
    %v6987 = vadd.f32 %v6985, %v6986
    %v6988 = vmul.f32 %v6987, 0.0078125
    %v6989 = vsub.f32 %v6889, %v6988
    %v6990 = vsub.f32 %v6892, %v6988
    %v6991 = vsub.f32 %v6897, %v6988
    %v6992 = vsub.f32 %v6900, %v6988
    %v6993 = vsub.f32 %v6905, %v6988
    %v6994 = vsub.f32 %v6908, %v6988
    %v6995 = vsub.f32 %v6913, %v6988
    %v6996 = vsub.f32 %v6916, %v6988
    %v6997 = vsub.f32 %v6921, %v6988
    %v6998 = vsub.f32 %v6924, %v6988
    %v6999 = vsub.f32 %v6929, %v6988
    %v7000 = vsub.f32 %v6932, %v6988
    %v7001 = vsub.f32 %v6937, %v6988
    %v7002 = vsub.f32 %v6940, %v6988
    %v7003 = vsub.f32 %v6945, %v6988
    %v7004 = vsub.f32 %v6948, %v6988
    %v7005 = vmul.f32 %v6989, %v6989
    %v7006 = vmul.f32 %v6990, %v6990
    %v7007 = vmul.f32 %v6991, %v6991
    %v7008 = vmul.f32 %v6992, %v6992
    %v7009 = vmul.f32 %v6993, %v6993
    %v7010 = vmul.f32 %v6994, %v6994
    %v7011 = vmul.f32 %v6995, %v6995
    %v7012 = vmul.f32 %v6996, %v6996
    %v7013 = vmul.f32 %v6997, %v6997
    %v7014 = vmul.f32 %v6998, %v6998
    %v7015 = vmul.f32 %v6999, %v6999
    %v7016 = vmul.f32 %v7000, %v7000
    %v7017 = vmul.f32 %v7001, %v7001
    %v7018 = vmul.f32 %v7002, %v7002
    %v7019 = vmul.f32 %v7003, %v7003
    %v7020 = vmul.f32 %v7004, %v7004
    %v7021 = vsel %vm212, %v7005, 0.0
    %v7022 = vsel %vm212, %v7006, 0.0
    %v7023 = vadd.f32 %v7021, %v7022
    %v7024 = vsel %vm212, %v7007, 0.0
    %v7025 = vadd.f32 %v7023, %v7024
    %v7026 = vsel %vm212, %v7008, 0.0
    %v7027 = vadd.f32 %v7025, %v7026
    %v7028 = vsel %vm212, %v7009, 0.0
    %v7029 = vadd.f32 %v7027, %v7028
    %v7030 = vsel %vm212, %v7010, 0.0
    %v7031 = vadd.f32 %v7029, %v7030
    %v7032 = vsel %vm212, %v7011, 0.0
    %v7033 = vadd.f32 %v7031, %v7032
    %v7034 = vsel %vm212, %v7012, 0.0
    %v7035 = vadd.f32 %v7033, %v7034
    %v7036 = vsel %vm212, %v7013, 0.0
    %v7037 = vadd.f32 %v7035, %v7036
    %v7038 = vsel %vm212, %v7014, 0.0
    %v7039 = vadd.f32 %v7037, %v7038
    %v7040 = vsel %vm212, %v7015, 0.0
    %v7041 = vadd.f32 %v7039, %v7040
    %v7042 = vsel %vm212, %v7016, 0.0
    %v7043 = vadd.f32 %v7041, %v7042
    %v7044 = vsel %vm212, %v7017, 0.0
    %v7045 = vadd.f32 %v7043, %v7044
    %v7046 = vsel %vm212, %v7018, 0.0
    %v7047 = vadd.f32 %v7045, %v7046
    %v7048 = vsel %vm212, %v7019, 0.0
    %v7049 = vadd.f32 %v7047, %v7048
    %v7050 = vsel %vm212, %v7020, 0.0
    %v7051 = vadd.f32 %v7049, %v7050
    %v7052 = vrot.slane %v7051, 4
    %v7053 = vadd.f32 %v7051, %v7052
    %v7054 = vrot.slane %v7053, 2
    %v7055 = vadd.f32 %v7053, %v7054
    %v7056 = vrot.slane %v7055, 1
    %v7057 = vadd.f32 %v7055, %v7056
    %v7058 = vmul.f32 %v7057, 0.0078125
    %v7059 = vld [vmem:[#allocation20] sm:$0x1]
    %v7060 = vadd.f32 %v7058, 1e-05
    %v7061 = vrsqrt.pop %v7060
    %v7062 = vmul.f32 %v7059, %v7061
    %v7063 = vlaneseq
    %v7064 = vshrl.u32 %v7063, 7
    %v7065 = vsub.s32 0, %v7064
    %v7066 = vrot.slane %v7062, %v7065
    %v7067 = vmul.f32 %v6989, %v7066
    %v7068 = vmul.f32 %v6990, %v7066
    %v7069 = vmul.f32 %v6991, %v7066
    %v7070 = vmul.f32 %v6992, %v7066
    %v7071 = vmul.f32 %v6993, %v7066
    %v7072 = vmul.f32 %v6994, %v7066
    %v7073 = vmul.f32 %v6995, %v7066
    %v7074 = vmul.f32 %v6996, %v7066
    %v7075 = vmul.f32 %v6997, %v7066
    %v7076 = vmul.f32 %v6998, %v7066
    %v7077 = vmul.f32 %v6999, %v7066
    %v7078 = vmul.f32 %v7000, %v7066
    %v7079 = vmul.f32 %v7001, %v7066
    %v7080 = vmul.f32 %v7002, %v7066
    %v7081 = vmul.f32 %v7003, %v7066
    %v7082 = vmul.f32 %v7004, %v7066
    %v7083 = vld [vmem:[#allocation20 + $0x1] sm:$0x1]
    %v7084 = vlaneseq
    %v7085 = vshrl.u32 %v7084, 7
    %v7086 = vsub.s32 0, %v7085
    %v7087 = vrot.slane %v7083, %v7086
    %v7088 = vadd.f32 %v7067, %v7087
    %v7089 = vadd.f32 %v7068, %v7087
    %v7090 = vadd.f32 %v7069, %v7087
    %v7091 = vadd.f32 %v7070, %v7087
    %v7092 = vadd.f32 %v7071, %v7087
    %v7093 = vadd.f32 %v7072, %v7087
    %v7094 = vadd.f32 %v7073, %v7087
    %v7095 = vadd.f32 %v7074, %v7087
    %v7096 = vadd.f32 %v7075, %v7087
    %v7097 = vadd.f32 %v7076, %v7087
    %v7098 = vadd.f32 %v7077, %v7087
    %v7099 = vadd.f32 %v7078, %v7087
    %v7100 = vadd.f32 %v7079, %v7087
    %v7101 = vadd.f32 %v7080, %v7087
    %v7102 = vadd.f32 %v7081, %v7087
    %v7103 = vadd.f32 %v7082, %v7087
    %v7104 = vmax.f32 %v7088, 0.0
    %v7105 = vmax.f32 %v7089, 0.0
    %v7106 = vmax.f32 %v7090, 0.0
    %v7107 = vmax.f32 %v7091, 0.0
    %v7108 = vmax.f32 %v7092, 0.0
    %v7109 = vmax.f32 %v7093, 0.0
    %v7110 = vmax.f32 %v7094, 0.0
    %v7111 = vmax.f32 %v7095, 0.0
    %v7112 = vmax.f32 %v7096, 0.0
    %v7113 = vmax.f32 %v7097, 0.0
    %v7114 = vmax.f32 %v7098, 0.0
    %v7115 = vmax.f32 %v7099, 0.0
    %v7116 = vmax.f32 %v7100, 0.0
    %v7117 = vmax.f32 %v7101, 0.0
    %v7118 = vmax.f32 %v7102, 0.0
    %v7119 = vmax.f32 %v7103, 0.0
    %7120 = vst.msk [vmem:[#allocation4] sm:$0xff] %vm212, %v7104
    %7121 = vst.msk [vmem:[#allocation4 + $0x8] sm:$0xff] %vm212, %v7105
    %7122 = vst.msk [vmem:[#allocation4 + $0x10] sm:$0xff] %vm212, %v7106
    %7123 = vst.msk [vmem:[#allocation4 + $0x18] sm:$0xff] %vm212, %v7107
    %7124 = vst.msk [vmem:[#allocation4 + $0x20] sm:$0xff] %vm212, %v7108
    %7125 = vst.msk [vmem:[#allocation4 + $0x28] sm:$0xff] %vm212, %v7109
    %7126 = vst.msk [vmem:[#allocation4 + $0x30] sm:$0xff] %vm212, %v7110
    %7127 = vst.msk [vmem:[#allocation4 + $0x38] sm:$0xff] %vm212, %v7111
    %7128 = vst.msk [vmem:[#allocation4 + $0x40] sm:$0xff] %vm212, %v7112
    %7129 = vst.msk [vmem:[#allocation4 + $0x48] sm:$0xff] %vm212, %v7113
    %7130 = vst.msk [vmem:[#allocation4 + $0x50] sm:$0xff] %vm212, %v7114
    %7131 = vst.msk [vmem:[#allocation4 + $0x58] sm:$0xff] %vm212, %v7115
    %7132 = vst.msk [vmem:[#allocation4 + $0x60] sm:$0xff] %vm212, %v7116
    %7133 = vst.msk [vmem:[#allocation4 + $0x68] sm:$0xff] %vm212, %v7117
    %7134 = vst.msk [vmem:[#allocation4 + $0x70] sm:$0xff] %vm212, %v7118
    %7135 = vst.msk [vmem:[#allocation4 + $0x78] sm:$0xff] %vm212, %v7119
    %v7136 = vld [vmem:[#allocation4] ss:$2 sm:$0xff]
    %v7137 = vld [vmem:[%s4741] ss:$2 sm:$0xff]
    %v7138 = vld [vmem:[%s4743] ss:$2 sm:$0xff]
    %v7139 = vld [vmem:[%s4745] ss:$2 sm:$0xff]
    %v7140 = vld [vmem:[%s4747] ss:$2 sm:$0xff]
    %v7141 = vld [vmem:[%s4749] ss:$2 sm:$0xff]
    %v7142 = vld [vmem:[%s4751] ss:$2 sm:$0xff]
    %v7143 = vld [vmem:[%s4753] ss:$2 sm:$0xff]
    %v7144 = vld [vmem:[%s4803] ss:$2 sm:$0xff]
    %v7145 = vld [vmem:[%s4805] ss:$2 sm:$0xff]
    %v7146 = vld [vmem:[%s4807] ss:$2 sm:$0xff]
    %v7147 = vld [vmem:[%s4809] ss:$2 sm:$0xff]
    %v7148 = vld [vmem:[%s4811] ss:$2 sm:$0xff]
    %v7149 = vld [vmem:[%s4813] ss:$2 sm:$0xff]
    %v7150 = vld [vmem:[%s4815] ss:$2 sm:$0xff]
    %v7151 = vld [vmem:[%s4817] ss:$2 sm:$0xff]
    %v7152 = vmax.f32 %v7136, %v7144
    %v7153 = vmax.f32 %v7137, %v7145
    %v7154 = vmax.f32 %v7138, %v7146
    %v7155 = vmax.f32 %v7139, %v7147
    %v7156 = vmax.f32 %v7140, %v7148
    %v7157 = vmax.f32 %v7141, %v7149
    %v7158 = vmax.f32 %v7142, %v7150
    %v7159 = vmax.f32 %v7143, %v7151
    %7160 = vst.msk [vmem:[#allocation5] sm:$0xff] %vm212, %v7152
    %7161 = vst.msk [vmem:[#allocation5 + $0x8] sm:$0xff] %vm212, %v7153
    %7162 = vst.msk [vmem:[#allocation5 + $0x10] sm:$0xff] %vm212, %v7154
    %7163 = vst.msk [vmem:[#allocation5 + $0x18] sm:$0xff] %vm212, %v7155
    %7164 = vst.msk [vmem:[#allocation5 + $0x20] sm:$0xff] %vm212, %v7156
    %7165 = vst.msk [vmem:[#allocation5 + $0x28] sm:$0xff] %vm212, %v7157
    %7166 = vst.msk [vmem:[#allocation5 + $0x30] sm:$0xff] %vm212, %v7158
    %7167 = vst.msk [vmem:[#allocation5 + $0x38] sm:$0xff] %vm212, %v7159
    %v7168 = vld [vmem:[#allocation5] sm:$0xf]
    %v7169 = vld [vmem:[#allocation5 + $0x4] sm:$0xf]
    %v7170 = vmax.f32 %v7168, %v7169
    %vm7171 = vcmask 519168
    %7172 = vst.msk [vmem:[#allocation7 + $0x8] sm:$0xf] %vm7171, %v7170
    %v7173 = vld [vmem:[#allocation5 + $0x8] sm:$0xf]
    %v7174 = vld [vmem:[#allocation5 + $0xc] sm:$0xf]
    %v7175 = vmax.f32 %v7173, %v7174
    %7176 = vst.msk [vmem:[#allocation7 + $0xc] sm:$0xf] %vm7171, %v7175
    %v7177 = vld [vmem:[#allocation5 + $0x10] sm:$0xf]
    %v7178 = vld [vmem:[#allocation5 + $0x14] sm:$0xf]
    %v7179 = vmax.f32 %v7177, %v7178
    %7180 = vst.msk [vmem:[#allocation7 + $0x10] sm:$0xf] %vm7171, %v7179
    %v7181 = vld [vmem:[#allocation5 + $0x18] sm:$0xf]
    %v7182 = vld [vmem:[#allocation5 + $0x1c] sm:$0xf]
    %v7183 = vmax.f32 %v7181, %v7182
    %7184 = vst.msk [vmem:[#allocation7 + $0x14] sm:$0xf] %vm7171, %v7183
    %v7185 = vld [vmem:[#allocation5 + $0x20] sm:$0xf]
    %v7186 = vld [vmem:[#allocation5 + $0x24] sm:$0xf]
    %v7187 = vmax.f32 %v7185, %v7186
    %7188 = vst.msk [vmem:[#allocation7 + $0x18] sm:$0xf] %vm7171, %v7187
    %v7189 = vld [vmem:[#allocation5 + $0x28] sm:$0xf]
    %v7190 = vld [vmem:[#allocation5 + $0x2c] sm:$0xf]
    %v7191 = vmax.f32 %v7189, %v7190
    %7192 = vst.msk [vmem:[#allocation7 + $0x1c] sm:$0xf] %vm7171, %v7191
    %v7193 = vld [vmem:[#allocation5 + $0x30] sm:$0xf]
    %v7194 = vld [vmem:[#allocation5 + $0x34] sm:$0xf]
    %v7195 = vmax.f32 %v7193, %v7194
    %7196 = vst.msk [vmem:[#allocation7 + $0x20] sm:$0xf] %vm7171, %v7195
    %v7197 = vld [vmem:[#allocation5 + $0x38] sm:$0xf]
    %v7198 = vld [vmem:[#allocation5 + $0x3c] sm:$0xf]
    %v7199 = vmax.f32 %v7197, %v7198
    %7200 = vst.msk [vmem:[#allocation7 + $0x24] sm:$0xf] %vm7171, %v7199
    %v7201 = vld [vmem:[#allocation7 + $0x3] sm:$0xff]
    %v7202 = vld [vmem:[#allocation7 + $0xb] sm:$0xff]
    %v7203 = vld [vmem:[#allocation7 + $0x13] sm:$0xff]
    %v7204 = vld [vmem:[#allocation7 + $0x1b] sm:$0xff]
    %v7205 = vld [vmem:[#allocation27] sm:$0xff]
    %v7206 = vld [vmem:[#allocation27 + $0x8] sm:$0xff]
    %v7207 = vld [vmem:[#allocation27 + $0x10] sm:$0xff]
    %v7208 = vld [vmem:[#allocation27 + $0x18] sm:$0xff]
    %7210 = vset.pattern.permute.xlu0 0
    %7211 = vperm.xlu0 %7210, %v7205
    %v7212 = vpop.permute.xlu0 %7211
    %7215 = vset.pattern.permute.xlu0 0
    %7216 = vperm.xlu0 %7215, %v7206
    %v7217 = vpop.permute.xlu0 %7216
    %7220 = vset.pattern.permute.xlu0 0
    %7221 = vperm.xlu0 %7220, %v7207
    %v7222 = vpop.permute.xlu0 %7221
    %7225 = vset.pattern.permute.xlu0 0
    %7226 = vperm.xlu0 %7225, %v7208
    %v7227 = vpop.permute.xlu0 %7226
    %v7229 = vmul.f32 %v7201, %v7212
    %v7230 = vmul.f32 %v7202, %v7217
    %v7231 = vmul.f32 %v7203, %v7222
    %v7232 = vmul.f32 %v7204, %v7227
    %v7233 = vpack.c.bf16 %v7230, %v7229
    %v7234 = vpack.c.bf16 %v7232, %v7231
    %7235 = vst.msk [vmem:[#allocation3] sm:$0xff] %vm212, %v7233
    %7236 = vst.msk [vmem:[#allocation3 + $0x28] sm:$0xff] %vm212, %v7234
    %v7237 = vld [vmem:[#allocation7 + $0x4] sm:$0xff]
    %v7238 = vld [vmem:[#allocation7 + $0xc] sm:$0xff]
    %v7239 = vld [vmem:[#allocation7 + $0x14] sm:$0xff]
    %v7240 = vld [vmem:[#allocation7 + $0x1c] sm:$0xff]
    %v7241 = vld [vmem:[#allocation27] sm:$0xff]
    %v7242 = vld [vmem:[#allocation27 + $0x8] sm:$0xff]
    %v7243 = vld [vmem:[#allocation27 + $0x10] sm:$0xff]
    %v7244 = vld [vmem:[#allocation27 + $0x18] sm:$0xff]
    %7246 = vset.pattern.permute.xlu0 1
    %7247 = vperm.xlu0 %7246, %v7241
    %v7248 = vpop.permute.xlu0 %7247
    %7251 = vset.pattern.permute.xlu0 1
    %7252 = vperm.xlu0 %7251, %v7242
    %v7253 = vpop.permute.xlu0 %7252
    %7256 = vset.pattern.permute.xlu0 1
    %7257 = vperm.xlu0 %7256, %v7243
    %v7258 = vpop.permute.xlu0 %7257
    %7261 = vset.pattern.permute.xlu0 1
    %7262 = vperm.xlu0 %7261, %v7244
    %v7263 = vpop.permute.xlu0 %7262
    %v7265 = vmul.f32 %v7237, %v7248
    %v7266 = vmul.f32 %v7238, %v7253
    %v7267 = vmul.f32 %v7239, %v7258
    %v7268 = vmul.f32 %v7240, %v7263
    %v7269 = vpack.c.bf16 %v7266, %v7265
    %v7270 = vpack.c.bf16 %v7268, %v7267
    %7273 = vrot.lane.b32.xlu0 %v7269, 64
    %v7274 = vpop.permute.xlu0 %7273
    %7275 = vrot.lane.b32.xlu0 %v7270, 64
    %v7276 = vpop.permute.xlu0 %7275
    %7279 = vst.msk [vmem:[#allocation3] sm:$0xff] %vm5307, %v7274
    %7280 = vst.msk [vmem:[#allocation3 + $0x28] sm:$0xff] %vm5307, %v7276
    %v7281 = vld [vmem:[#allocation7 + $0x5] sm:$0xff]
    %v7282 = vld [vmem:[#allocation7 + $0xd] sm:$0xff]
    %v7283 = vld [vmem:[#allocation7 + $0x15] sm:$0xff]
    %v7284 = vld [vmem:[#allocation7 + $0x1d] sm:$0xff]
    %v7285 = vld [vmem:[#allocation27] sm:$0xff]
    %v7286 = vld [vmem:[#allocation27 + $0x8] sm:$0xff]
    %v7287 = vld [vmem:[#allocation27 + $0x10] sm:$0xff]
    %v7288 = vld [vmem:[#allocation27 + $0x18] sm:$0xff]
    %7290 = vset.pattern.permute.xlu0 2
    %7291 = vperm.xlu0 %7290, %v7285
    %v7292 = vpop.permute.xlu0 %7291
    %7295 = vset.pattern.permute.xlu0 2
    %7296 = vperm.xlu0 %7295, %v7286
    %v7297 = vpop.permute.xlu0 %7296
    %7300 = vset.pattern.permute.xlu0 2
    %7301 = vperm.xlu0 %7300, %v7287
    %v7302 = vpop.permute.xlu0 %7301
    %7305 = vset.pattern.permute.xlu0 2
    %7306 = vperm.xlu0 %7305, %v7288
    %v7307 = vpop.permute.xlu0 %7306
    %v7309 = vmul.f32 %v7281, %v7292
    %v7310 = vmul.f32 %v7282, %v7297
    %v7311 = vmul.f32 %v7283, %v7302
    %v7312 = vmul.f32 %v7284, %v7307
    %v7313 = vpack.c.bf16 %v7310, %v7309
    %v7314 = vpack.c.bf16 %v7312, %v7311
    %7315 = vst.msk [vmem:[#allocation3 + $0x8] sm:$0xff] %vm212, %v7313
    %7316 = vst.msk [vmem:[#allocation3 + $0x30] sm:$0xff] %vm212, %v7314
    %v7317 = vld [vmem:[#allocation7 + $0x7] sm:$0xff]
    %v7318 = vld [vmem:[#allocation7 + $0xf] sm:$0xff]
    %v7319 = vld [vmem:[#allocation7 + $0x17] sm:$0xff]
    %v7320 = vld [vmem:[#allocation7 + $0x1f] sm:$0xff]
    %v7321 = vld [vmem:[#allocation27] sm:$0xff]
    %v7322 = vld [vmem:[#allocation27 + $0x8] sm:$0xff]
    %v7323 = vld [vmem:[#allocation27 + $0x10] sm:$0xff]
    %v7324 = vld [vmem:[#allocation27 + $0x18] sm:$0xff]
    %7326 = vset.pattern.permute.xlu0 3
    %7327 = vperm.xlu0 %7326, %v7321
    %v7328 = vpop.permute.xlu0 %7327
    %7331 = vset.pattern.permute.xlu0 3
    %7332 = vperm.xlu0 %7331, %v7322
    %v7333 = vpop.permute.xlu0 %7332
    %7336 = vset.pattern.permute.xlu0 3
    %7337 = vperm.xlu0 %7336, %v7323
    %v7338 = vpop.permute.xlu0 %7337
    %7341 = vset.pattern.permute.xlu0 3
    %7342 = vperm.xlu0 %7341, %v7324
    %v7343 = vpop.permute.xlu0 %7342
    %v7345 = vmul.f32 %v7317, %v7328
    %v7346 = vmul.f32 %v7318, %v7333
    %v7347 = vmul.f32 %v7319, %v7338
    %v7348 = vmul.f32 %v7320, %v7343
    %v7349 = vpack.c.bf16 %v7346, %v7345
    %v7350 = vpack.c.bf16 %v7348, %v7347
    %7353 = vrot.lane.b32.xlu0 %v7349, 64
    %v7354 = vpop.permute.xlu0 %7353
    %7355 = vrot.lane.b32.xlu0 %v7350, 64
    %v7356 = vpop.permute.xlu0 %7355
    %7359 = vst.msk [vmem:[#allocation3 + $0x8] sm:$0xff] %vm5307, %v7354
    %7360 = vst.msk [vmem:[#allocation3 + $0x30] sm:$0xff] %vm5307, %v7356
    %v7361 = vld [vmem:[#allocation7 + $0x8] sm:$0xff]
    %v7362 = vld [vmem:[#allocation7 + $0x10] sm:$0xff]
    %v7363 = vld [vmem:[#allocation7 + $0x18] sm:$0xff]
    %v7364 = vld [vmem:[#allocation7 + $0x20] sm:$0xff]
    %v7365 = vpack.c.bf16 %v7362, %v7361
    %v7366 = vpack.c.bf16 %v7364, %v7363
    %7367 = vst.msk [vmem:[#allocation3 + $0x10] sm:$0xff] %vm212, %v7365
    %7368 = vst.msk [vmem:[#allocation3 + $0x38] sm:$0xff] %vm212, %v7366
    %v7369 = vld [vmem:[#allocation7 + $0x9] sm:$0xff]
    %v7370 = vld [vmem:[#allocation7 + $0x11] sm:$0xff]
    %v7371 = vld [vmem:[#allocation7 + $0x19] sm:$0xff]
    %v7372 = vld [vmem:[#allocation7 + $0x21] sm:$0xff]
    %v7373 = vld [vmem:[#allocation27] sm:$0xff]
    %v7374 = vld [vmem:[#allocation27 + $0x8] sm:$0xff]
    %v7375 = vld [vmem:[#allocation27 + $0x10] sm:$0xff]
    %v7376 = vld [vmem:[#allocation27 + $0x18] sm:$0xff]
    %7378 = vset.pattern.permute.xlu0 5
    %7379 = vperm.xlu0 %7378, %v7373
    %v7380 = vpop.permute.xlu0 %7379
    %7383 = vset.pattern.permute.xlu0 5
    %7384 = vperm.xlu0 %7383, %v7374
    %v7385 = vpop.permute.xlu0 %7384
    %7388 = vset.pattern.permute.xlu0 5
    %7389 = vperm.xlu0 %7388, %v7375
    %v7390 = vpop.permute.xlu0 %7389
    %7393 = vset.pattern.permute.xlu0 5
    %7394 = vperm.xlu0 %7393, %v7376
    %v7395 = vpop.permute.xlu0 %7394
    %v7397 = vmul.f32 %v7369, %v7380
    %v7398 = vmul.f32 %v7370, %v7385
    %v7399 = vmul.f32 %v7371, %v7390
    %v7400 = vmul.f32 %v7372, %v7395
    %v7401 = vpack.c.bf16 %v7398, %v7397
    %v7402 = vpack.c.bf16 %v7400, %v7399
    %7405 = vrot.lane.b32.xlu0 %v7401, 64
    %v7406 = vpop.permute.xlu0 %7405
    %7407 = vrot.lane.b32.xlu0 %v7402, 64
    %v7408 = vpop.permute.xlu0 %7407
    %7411 = vst.msk [vmem:[#allocation3 + $0x10] sm:$0xff] %vm5307, %v7406
    %7412 = vst.msk [vmem:[#allocation3 + $0x38] sm:$0xff] %vm5307, %v7408
    %v7413 = vld [vmem:[#allocation7 + $0xb] sm:$0xff]
    %v7414 = vld [vmem:[#allocation7 + $0x13] sm:$0xff]
    %v7415 = vld [vmem:[#allocation7 + $0x1b] sm:$0xff]
    %v7416 = vld [vmem:[#allocation7 + $0x23] sm:$0xff]
    %v7417 = vld [vmem:[#allocation27] sm:$0xff]
    %v7418 = vld [vmem:[#allocation27 + $0x8] sm:$0xff]
    %v7419 = vld [vmem:[#allocation27 + $0x10] sm:$0xff]
    %v7420 = vld [vmem:[#allocation27 + $0x18] sm:$0xff]
    %7422 = vset.pattern.permute.xlu0 6
    %7423 = vperm.xlu0 %7422, %v7417
    %v7424 = vpop.permute.xlu0 %7423
    %7427 = vset.pattern.permute.xlu0 6
    %7428 = vperm.xlu0 %7427, %v7418
    %v7429 = vpop.permute.xlu0 %7428
    %7432 = vset.pattern.permute.xlu0 6
    %7433 = vperm.xlu0 %7432, %v7419
    %v7434 = vpop.permute.xlu0 %7433
    %7437 = vset.pattern.permute.xlu0 6
    %7438 = vperm.xlu0 %7437, %v7420
    %v7439 = vpop.permute.xlu0 %7438
    %v7441 = vmul.f32 %v7413, %v7424
    %v7442 = vmul.f32 %v7414, %v7429
    %v7443 = vmul.f32 %v7415, %v7434
    %v7444 = vmul.f32 %v7416, %v7439
    %v7445 = vpack.c.bf16 %v7442, %v7441
    %v7446 = vpack.c.bf16 %v7444, %v7443
    %7447 = vst.msk [vmem:[#allocation3 + $0x18] sm:$0xff] %vm212, %v7445
    %7448 = vst.msk [vmem:[#allocation3 + $0x40] sm:$0xff] %vm212, %v7446
    %v7449 = vld [vmem:[#allocation7 + $0xc] sm:$0xff]
    %v7450 = vld [vmem:[#allocation7 + $0x14] sm:$0xff]
    %v7451 = vld [vmem:[#allocation7 + $0x1c] sm:$0xff]
    %v7452 = vld [vmem:[#allocation7 + $0x24] sm:$0xff]
    %v7453 = vld [vmem:[#allocation27] sm:$0xff]
    %v7454 = vld [vmem:[#allocation27 + $0x8] sm:$0xff]
    %v7455 = vld [vmem:[#allocation27 + $0x10] sm:$0xff]
    %v7456 = vld [vmem:[#allocation27 + $0x18] sm:$0xff]
    %7458 = vset.pattern.permute.xlu0 7
    %7459 = vperm.xlu0 %7458, %v7453
    %v7460 = vpop.permute.xlu0 %7459
    %7463 = vset.pattern.permute.xlu0 7
    %7464 = vperm.xlu0 %7463, %v7454
    %v7465 = vpop.permute.xlu0 %7464
    %7468 = vset.pattern.permute.xlu0 7
    %7469 = vperm.xlu0 %7468, %v7455
    %v7470 = vpop.permute.xlu0 %7469
    %7473 = vset.pattern.permute.xlu0 7
    %7474 = vperm.xlu0 %7473, %v7456
    %v7475 = vpop.permute.xlu0 %7474
    %v7477 = vmul.f32 %v7449, %v7460
    %v7478 = vmul.f32 %v7450, %v7465
    %v7479 = vmul.f32 %v7451, %v7470
    %v7480 = vmul.f32 %v7452, %v7475
    %v7481 = vpack.c.bf16 %v7478, %v7477
    %v7482 = vpack.c.bf16 %v7480, %v7479
    %7485 = vrot.lane.b32.xlu0 %v7481, 64
    %v7486 = vpop.permute.xlu0 %7485
    %7487 = vrot.lane.b32.xlu0 %v7482, 64
    %v7488 = vpop.permute.xlu0 %7487
    %7491 = vst.msk [vmem:[#allocation3 + $0x18] sm:$0xff] %vm5307, %v7486
    %7492 = vst.msk [vmem:[#allocation3 + $0x40] sm:$0xff] %vm5307, %v7488
    %v7493 = vld [vmem:[#allocation7 + $0xd] sm:$0xff]
    %v7494 = vld [vmem:[#allocation7 + $0x15] sm:$0xff]
    %v7495 = vld [vmem:[#allocation7 + $0x1d] sm:$0xff]
    %v7496 = vld [vmem:[#allocation7 + $0x25] sm:$0xff]
    %v7497 = vld [vmem:[#allocation27] sm:$0xff]
    %v7498 = vld [vmem:[#allocation27 + $0x8] sm:$0xff]
    %v7499 = vld [vmem:[#allocation27 + $0x10] sm:$0xff]
    %v7500 = vld [vmem:[#allocation27 + $0x18] sm:$0xff]
    %7502 = vset.pattern.permute.xlu0 8
    %7503 = vperm.xlu0 %7502, %v7497
    %v7504 = vpop.permute.xlu0 %7503
    %7507 = vset.pattern.permute.xlu0 8
    %7508 = vperm.xlu0 %7507, %v7498
    %v7509 = vpop.permute.xlu0 %7508
    %7512 = vset.pattern.permute.xlu0 8
    %7513 = vperm.xlu0 %7512, %v7499
    %v7514 = vpop.permute.xlu0 %7513
    %7517 = vset.pattern.permute.xlu0 8
    %7518 = vperm.xlu0 %7517, %v7500
    %v7519 = vpop.permute.xlu0 %7518
    %v7521 = vmul.f32 %v7493, %v7504
    %v7522 = vmul.f32 %v7494, %v7509
    %v7523 = vmul.f32 %v7495, %v7514
    %v7524 = vmul.f32 %v7496, %v7519
    %v7525 = vpack.c.bf16 %v7522, %v7521
    %v7526 = vpack.c.bf16 %v7524, %v7523
    %7527 = vst.msk [vmem:[#allocation3 + $0x20] sm:$0xff] %vm212, %v7525
    %7528 = vst.msk [vmem:[#allocation3 + $0x48] sm:$0xff] %vm212, %v7526
    %v7529 = vld [vmem:[#allocation3] sm:$0xff]
    %v7530 = vld [vmem:[#allocation3 + $0x8] sm:$0xff]
    %v7531 = vld [vmem:[#allocation3 + $0x10] sm:$0xff]
    %v7532 = vld [vmem:[#allocation3 + $0x18] sm:$0xff]
    %v7533 = vld [vmem:[#allocation3 + $0x20] sm:$0xff]
    %v7534 = vld [vmem:[#allocation3 + $0x28] sm:$0xff]
    %v7535 = vld [vmem:[#allocation3 + $0x30] sm:$0xff]
    %v7536 = vld [vmem:[#allocation3 + $0x38] sm:$0xff]
    %v7537 = vld [vmem:[#allocation3 + $0x40] sm:$0xff]
    %v7538 = vld [vmem:[#allocation3 + $0x48] sm:$0xff]
    %v7539 = vld [vmem:[#allocation15] sm:$0xf]
    %v7540 = vld [vmem:[#allocation15 + $0x4] sm:$0xf]
    %v7541 = vld [vmem:[#allocation15 + $0x8] sm:$0xf]
    %v7542 = vld [vmem:[#allocation15 + $0xc] sm:$0xf]
    %v7543 = vld [vmem:[#allocation15 + $0x10] sm:$0xf]
    %v7544 = vld [vmem:[#allocation15 + $0x14] sm:$0xf]
    %v7545 = vld [vmem:[#allocation15 + $0x18] sm:$0xf]
    %v7546 = vld [vmem:[#allocation15 + $0x1c] sm:$0xf]
    %v7547 = vld [vmem:[#allocation15 + $0x20] sm:$0xf]
    %v7548 = vld [vmem:[#allocation15 + $0x24] sm:$0xf]
    %v7549 = vld [vmem:[#allocation15 + $0x28] sm:$0xf]
    %v7550 = vld [vmem:[#allocation15 + $0x2c] sm:$0xf]
    %v7551 = vld [vmem:[#allocation15 + $0x30] sm:$0xf]
    %v7552 = vld [vmem:[#allocation15 + $0x34] sm:$0xf]
    %v7553 = vld [vmem:[#allocation15 + $0x38] sm:$0xf]
    %v7554 = vld [vmem:[#allocation15 + $0x3c] sm:$0xf]
    %v7555 = vld [vmem:[#allocation15 + $0x40] sm:$0xf]
    %v7556 = vld [vmem:[#allocation15 + $0x44] sm:$0xf]
    %v7557 = vld [vmem:[#allocation15 + $0x48] sm:$0xf]
    %v7558 = vld [vmem:[#allocation15 + $0x4c] sm:$0xf]
    %v7559 = vld [vmem:[#allocation15 + $0x50] sm:$0xf]
    %v7560 = vld [vmem:[#allocation15 + $0x54] sm:$0xf]
    %v7561 = vld [vmem:[#allocation15 + $0x58] sm:$0xf]
    %v7562 = vld [vmem:[#allocation15 + $0x5c] sm:$0xf]
    %v7563 = vld [vmem:[#allocation15 + $0x60] sm:$0xf]
    %v7564 = vld [vmem:[#allocation15 + $0x64] sm:$0xf]
    %v7565 = vld [vmem:[#allocation15 + $0x68] sm:$0xf]
    %v7566 = vld [vmem:[#allocation15 + $0x6c] sm:$0xf]
    %v7567 = vld [vmem:[#allocation15 + $0x70] sm:$0xf]
    %v7568 = vld [vmem:[#allocation15 + $0x74] sm:$0xf]
    %v7569 = vld [vmem:[#allocation15 + $0x78] sm:$0xf]
    %v7570 = vld [vmem:[#allocation15 + $0x7c] sm:$0xf]
    %v7571 = vld [vmem:[#allocation15 + $0x80] sm:$0xf]
    %v7572 = vld [vmem:[#allocation15 + $0x84] sm:$0xf]
    %v7573 = vld [vmem:[#allocation15 + $0x88] sm:$0xf]
    %v7574 = vld [vmem:[#allocation15 + $0x8c] sm:$0xf]
    %v7575 = vld [vmem:[#allocation15 + $0x90] sm:$0xf]
    %v7576 = vld [vmem:[#allocation15 + $0x94] sm:$0xf]
    %v7577 = vld [vmem:[#allocation15 + $0x98] sm:$0xf]
    %v7578 = vld [vmem:[#allocation15 + $0x9c] sm:$0xf]
    %v7579 = vld [vmem:[#allocation15 + $0xa0] sm:$0xf]
    %v7580 = vld [vmem:[#allocation15 + $0xa4] sm:$0xf]
    %v7581 = vld [vmem:[#allocation15 + $0xa8] sm:$0xf]
    %v7582 = vld [vmem:[#allocation15 + $0xac] sm:$0xf]
    %v7583 = vld [vmem:[#allocation15 + $0xb0] sm:$0xf]
    %v7584 = vld [vmem:[#allocation15 + $0xb4] sm:$0xf]
    %v7585 = vld [vmem:[#allocation15 + $0xb8] sm:$0xf]
    %v7586 = vld [vmem:[#allocation15 + $0xbc] sm:$0xf]
    %v7587 = vld [vmem:[#allocation15 + $0xc0] sm:$0xf]
    %v7588 = vld [vmem:[#allocation15 + $0xc4] sm:$0xf]
    %v7589 = vld [vmem:[#allocation15 + $0xc8] sm:$0xf]
    %v7590 = vld [vmem:[#allocation15 + $0xcc] sm:$0xf]
    %v7591 = vld [vmem:[#allocation15 + $0xd0] sm:$0xf]
    %v7592 = vld [vmem:[#allocation15 + $0xd4] sm:$0xf]
    %v7593 = vld [vmem:[#allocation15 + $0xd8] sm:$0xf]
    %v7594 = vld [vmem:[#allocation15 + $0xdc] sm:$0xf]
    %v7595 = vld [vmem:[#allocation15 + $0xe0] sm:$0xf]
    %v7596 = vld [vmem:[#allocation15 + $0xe4] sm:$0xf]
    %v7597 = vld [vmem:[#allocation15 + $0xe8] sm:$0xf]
    %v7598 = vld [vmem:[#allocation15 + $0xec] sm:$0xf]
    %v7599 = vld [vmem:[#allocation15 + $0xf0] sm:$0xf]
    %v7600 = vld [vmem:[#allocation15 + $0xf4] sm:$0xf]
    %v7601 = vld [vmem:[#allocation15 + $0xf8] sm:$0xf]
    %v7602 = vld [vmem:[#allocation15 + $0xfc] sm:$0xf]
    %v7603 = vld [vmem:[#allocation15 + $0x100] sm:$0xf]
    %v7604 = vld [vmem:[#allocation15 + $0x104] sm:$0xf]
    %v7605 = vld [vmem:[#allocation15 + $0x108] sm:$0xf]
    %v7606 = vld [vmem:[#allocation15 + $0x10c] sm:$0xf]
    %v7607 = vld [vmem:[#allocation15 + $0x110] sm:$0xf]
    %v7608 = vld [vmem:[#allocation15 + $0x114] sm:$0xf]
    %v7609 = vld [vmem:[#allocation15 + $0x118] sm:$0xf]
    %v7610 = vld [vmem:[#allocation15 + $0x11c] sm:$0xf]
    %v7683 = vunpack.c.l.b16 %v7539
    %v7684 = vunpack.c.l.b16 %v7540
    %v7685 = vunpack.c.l.b16 %v7541
    %v7686 = vunpack.c.l.b16 %v7542
    %v7687 = vunpack.c.l.b16 %v7543
    %v7688 = vunpack.c.l.b16 %v7544
    %v7689 = vunpack.c.l.b16 %v7545
    %v7690 = vunpack.c.l.b16 %v7546
    %v7691 = vunpack.c.l.b16 %v7547
    %v7692 = vunpack.c.l.b16 %v7548
    %v7693 = vunpack.c.l.b16 %v7549
    %v7694 = vunpack.c.l.b16 %v7550
    %v7695 = vunpack.c.l.b16 %v7551
    %v7696 = vunpack.c.l.b16 %v7552
    %v7697 = vunpack.c.l.b16 %v7553
    %v7698 = vunpack.c.l.b16 %v7554
    %v7699 = vunpack.c.l.b16 %v7555
    %v7700 = vunpack.c.l.b16 %v7556
    %v7701 = vunpack.c.l.b16 %v7557
    %v7702 = vunpack.c.l.b16 %v7558
    %v7703 = vunpack.c.l.b16 %v7559
    %v7704 = vunpack.c.l.b16 %v7560
    %v7705 = vunpack.c.l.b16 %v7561
    %v7706 = vunpack.c.l.b16 %v7562
    %v7707 = vunpack.c.l.b16 %v7563
    %v7708 = vunpack.c.l.b16 %v7564
    %v7709 = vunpack.c.l.b16 %v7565
    %v7710 = vunpack.c.l.b16 %v7566
    %v7711 = vunpack.c.l.b16 %v7567
    %v7712 = vunpack.c.l.b16 %v7568
    %v7713 = vunpack.c.l.b16 %v7569
    %v7714 = vunpack.c.l.b16 %v7570
    %v7715 = vunpack.c.l.b16 %v7571
    %v7716 = vunpack.c.l.b16 %v7572
    %v7717 = vunpack.c.l.b16 %v7573
    %v7718 = vunpack.c.l.b16 %v7574
    %v7719 = vunpack.c.l.b16 %v7575
    %v7720 = vunpack.c.l.b16 %v7576
    %v7721 = vunpack.c.l.b16 %v7577
    %v7722 = vunpack.c.l.b16 %v7578
    %v7723 = vunpack.c.l.b16 %v7579
    %v7724 = vunpack.c.l.b16 %v7580
    %v7725 = vunpack.c.l.b16 %v7581
    %v7726 = vunpack.c.l.b16 %v7582
    %v7727 = vunpack.c.l.b16 %v7583
    %v7728 = vunpack.c.l.b16 %v7584
    %v7729 = vunpack.c.l.b16 %v7585
    %v7730 = vunpack.c.l.b16 %v7586
    %v7731 = vunpack.c.l.b16 %v7587
    %v7732 = vunpack.c.l.b16 %v7588
    %v7733 = vunpack.c.l.b16 %v7589
    %v7734 = vunpack.c.l.b16 %v7590
    %v7735 = vunpack.c.l.b16 %v7591
    %v7736 = vunpack.c.l.b16 %v7592
    %v7737 = vunpack.c.l.b16 %v7593
    %v7738 = vunpack.c.l.b16 %v7594
    %v7739 = vunpack.c.l.b16 %v7595
    %v7740 = vunpack.c.l.b16 %v7596
    %v7741 = vunpack.c.l.b16 %v7597
    %v7742 = vunpack.c.l.b16 %v7598
    %v7743 = vunpack.c.l.b16 %v7599
    %v7744 = vunpack.c.l.b16 %v7600
    %v7745 = vunpack.c.l.b16 %v7601
    %v7746 = vunpack.c.l.b16 %v7602
    %v7747 = vunpack.c.l.b16 %v7603
    %v7748 = vunpack.c.l.b16 %v7604
    %v7749 = vunpack.c.l.b16 %v7605
    %v7750 = vunpack.c.l.b16 %v7606
    %v7751 = vunpack.c.l.b16 %v7607
    %v7752 = vunpack.c.l.b16 %v7608
    %v7753 = vunpack.c.l.b16 %v7609
    %v7754 = vunpack.c.l.b16 %v7610
    %v7755 = vpack.c.b16 %v7684, %v7683
    %v7756 = vpack.c.b16 %v7686, %v7685
    %v7757 = vpack.c.b16 %v7688, %v7687
    %v7758 = vpack.c.b16 %v7690, %v7689
    %v7759 = vpack.c.b16 %v7692, %v7691
    %v7760 = vpack.c.b16 %v7694, %v7693
    %v7761 = vpack.c.b16 %v7696, %v7695
    %v7762 = vpack.c.b16 %v7698, %v7697
    %v7763 = vpack.c.b16 %v7700, %v7699
    %v7764 = vpack.c.b16 %v7702, %v7701
    %v7765 = vpack.c.b16 %v7704, %v7703
    %v7766 = vpack.c.b16 %v7706, %v7705
    %v7767 = vpack.c.b16 %v7708, %v7707
    %v7768 = vpack.c.b16 %v7710, %v7709
    %v7769 = vpack.c.b16 %v7712, %v7711
    %v7770 = vpack.c.b16 %v7714, %v7713
    %v7771 = vpack.c.b16 %v7716, %v7715
    %v7772 = vpack.c.b16 %v7718, %v7717
    %v7773 = vpack.c.b16 %v7720, %v7719
    %v7774 = vpack.c.b16 %v7722, %v7721
    %v7775 = vpack.c.b16 %v7724, %v7723
    %v7776 = vpack.c.b16 %v7726, %v7725
    %v7777 = vpack.c.b16 %v7728, %v7727
    %v7778 = vpack.c.b16 %v7730, %v7729
    %v7779 = vpack.c.b16 %v7732, %v7731
    %v7780 = vpack.c.b16 %v7734, %v7733
    %v7781 = vpack.c.b16 %v7736, %v7735
    %v7782 = vpack.c.b16 %v7738, %v7737
    %v7783 = vpack.c.b16 %v7740, %v7739
    %v7784 = vpack.c.b16 %v7742, %v7741
    %v7785 = vpack.c.b16 %v7744, %v7743
    %v7786 = vpack.c.b16 %v7746, %v7745
    %v7787 = vpack.c.b16 %v7748, %v7747
    %v7788 = vpack.c.b16 %v7750, %v7749
    %v7789 = vpack.c.b16 %v7752, %v7751
    %v7790 = vpack.c.b16 %v7754, %v7753
    %v7828 = vsel %vm212, %v7533, 0
    %v7831 = vsel %vm212, %v7538, 0
    %7833 = vmatprep.subr.bf16.mxu0 0
    %7834 = vmatpush1.bf16.msra.mxu0 %v7755
    %7835 = vmatprep.subr.bf16.mxu0 0
    %7836 = vmatpush1.bf16.msra.mxu0 %v7756
    %7837 = vmatprep.subr.bf16.mxu0 0
    %7838 = vmatpush1.bf16.msra.mxu0 %v7757
    %7839 = vmatprep.subr.bf16.mxu0 0
    %7840 = vmatpush1.bf16.msra.mxu0 %v7758
    %7841 = vmatprep.subr.bf16.mxu0 0
    %7842 = vmatpush1.bf16.msra.mxu0 %v7759
    %7843 = vmatprep.subr.bf16.mxu0 0
    %7844 = vmatpush1.bf16.msra.mxu0 %v7760
    %7845 = vmatprep.subr.bf16.mxu0 0
    %7846 = vmatpush1.bf16.msra.mxu0 %v7761
    %7847 = vmatprep.subr.bf16.mxu0 0
    %7848 = vmatpush1.bf16.msra.mxu0 %v7762
    %7849 = vmatprep.subr.bf16.mxu0 0
    %7850 = vmatpush1.bf16.msra.mxu0 %v7763
    %7851 = vmatprep.subr.bf16.mxu0 0
    %7852 = vmatpush1.bf16.msra.mxu0 %v7764
    %7853 = vmatprep.subr.bf16.mxu0 0
    %7854 = vmatpush1.bf16.msra.mxu0 %v7765
    %7855 = vmatprep.subr.bf16.mxu0 0
    %7856 = vmatpush1.bf16.msra.mxu0 %v7766
    %7857 = vmatprep.subr.bf16.mxu0 0
    %7858 = vmatpush1.bf16.msra.mxu0 %v7767
    %7859 = vmatprep.subr.bf16.mxu0 0
    %7860 = vmatpush1.bf16.msra.mxu0 %v7768
    %7861 = vmatprep.subr.bf16.mxu0 0
    %7862 = vmatpush1.bf16.msra.mxu0 %v7769
    %7863 = vmatprep.subr.bf16.mxu0 0
    %7864 = vmatpush1.bf16.msra.mxu0 %v7770
    %7865 = vmatprep.mubr.bf16.mxu0 %v7530
    %7866 = vmatmul.mubr.bf16.gmra.mrb[0].mxu0 %v7529
    %v7867 = vpop.f32.mrb[0].mxu0
    %v7868 = vadd.f32 0.0, %v7867
    %v7869 = vpop.f32.mrb[0].mxu0
    %v7870 = vpop.f32.mrb[0].mxu0
    %v7871 = vadd.f32 0.0, %v7870
    %v7872 = vpop.f32.mrb[0].mxu0
    %7873 = vmatprep.mubr.bf16.mxu0 %v7535
    %7874 = vmatmul.mubr.bf16.gmra.mrb[0].mxu0 %v7534
    %v7875 = vpop.f32.mrb[0].mxu0
    %v7876 = vadd.f32 0.0, %v7875
    %v7877 = vpop.f32.mrb[0].mxu0
    %v7878 = vpop.f32.mrb[0].mxu0
    %v7879 = vadd.f32 0.0, %v7878
    %v7880 = vpop.f32.mrb[0].mxu0
    %7881 = vdwg.mxu0
    %7882 = vmatprep.subr.bf16.mxu0 0
    %7883 = vmatpush1.bf16.msra.mxu0 %v7771
    %7884 = vmatprep.subr.bf16.mxu0 0
    %7885 = vmatpush1.bf16.msra.mxu0 %v7772
    %7886 = vmatprep.subr.bf16.mxu0 0
    %7887 = vmatpush1.bf16.msra.mxu0 %v7773
    %7888 = vmatprep.subr.bf16.mxu0 0
    %7889 = vmatpush1.bf16.msra.mxu0 %v7774
    %7890 = vmatprep.subr.bf16.mxu0 0
    %7891 = vmatpush1.bf16.msra.mxu0 %v7775
    %7892 = vmatprep.subr.bf16.mxu0 0
    %7893 = vmatpush1.bf16.msra.mxu0 %v7776
    %7894 = vmatprep.subr.bf16.mxu0 0
    %7895 = vmatpush1.bf16.msra.mxu0 %v7777
    %7896 = vmatprep.subr.bf16.mxu0 0
    %7897 = vmatpush1.bf16.msra.mxu0 %v7778
    %7898 = vmatprep.subr.bf16.mxu0 0
    %7899 = vmatpush1.bf16.msra.mxu0 %v7779
    %7900 = vmatprep.subr.bf16.mxu0 0
    %7901 = vmatpush1.bf16.msra.mxu0 %v7780
    %7902 = vmatprep.subr.bf16.mxu0 0
    %7903 = vmatpush1.bf16.msra.mxu0 %v7781
    %7904 = vmatprep.subr.bf16.mxu0 0
    %7905 = vmatpush1.bf16.msra.mxu0 %v7782
    %7906 = vmatprep.subr.bf16.mxu0 0
    %7907 = vmatpush1.bf16.msra.mxu0 %v7783
    %7908 = vmatprep.subr.bf16.mxu0 0
    %7909 = vmatpush1.bf16.msra.mxu0 %v7784
    %7910 = vmatprep.subr.bf16.mxu0 0
    %7911 = vmatpush1.bf16.msra.mxu0 %v7785
    %7912 = vmatprep.subr.bf16.mxu0 0
    %7913 = vmatpush1.bf16.msra.mxu0 %v7786
    %7914 = vmatprep.mubr.bf16.mxu0 %v7532
    %7915 = vmatmul.mubr.bf16.gmra.mrb[0].mxu0 %v7531
    %v7916 = vpop.f32.mrb[0].mxu0
    %v7917 = vadd.f32 %v7868, %v7916
    %v7918 = vpop.f32.mrb[0].mxu0
    %v7919 = vpop.f32.mrb[0].mxu0
    %v7920 = vadd.f32 %v7871, %v7919
    %v7921 = vpop.f32.mrb[0].mxu0
    %7922 = vmatprep.mubr.bf16.mxu0 %v7537
    %7923 = vmatmul.mubr.bf16.gmra.mrb[0].mxu0 %v7536
    %v7924 = vpop.f32.mrb[0].mxu0
    %v7925 = vadd.f32 %v7876, %v7924
    %v7926 = vpop.f32.mrb[0].mxu0
    %v7927 = vpop.f32.mrb[0].mxu0
    %v7928 = vadd.f32 %v7879, %v7927
    %v7929 = vpop.f32.mrb[0].mxu0
    %7930 = vdwg.mxu0
    %7931 = vmatprep.subr.bf16.mxu0 0
    %7932 = vmatpush1.bf16.msra.mxu0 %v7787
    %7933 = vmatprep.subr.bf16.mxu0 0
    %7934 = vmatpush1.bf16.msra.mxu0 %v7788
    %7935 = vmatprep.subr.bf16.mxu0 0
    %7936 = vmatpush1.bf16.msra.mxu0 %v7789
    %7937 = vmatprep.subr.bf16.mxu0 0
    %7938 = vmatpush1.bf16.msra.mxu0 %v7790
    %7939 = vmatprep.subr.bf16.mxu0 0
    %7940 = vmatpush1.bf16.msra.mxu0 0
    %7941 = vmatprep.subr.bf16.mxu0 0
    %7942 = vmatpush1.bf16.msra.mxu0 0
    %7943 = vmatprep.subr.bf16.mxu0 0
    %7944 = vmatpush1.bf16.msra.mxu0 0
    %7945 = vmatprep.subr.bf16.mxu0 0
    %7946 = vmatpush1.bf16.msra.mxu0 0
    %7947 = vmatprep.subr.bf16.mxu0 0
    %7948 = vmatpush1.bf16.msra.mxu0 0
    %7949 = vmatprep.subr.bf16.mxu0 0
    %7950 = vmatpush1.bf16.msra.mxu0 0
    %7951 = vmatprep.subr.bf16.mxu0 0
    %7952 = vmatpush1.bf16.msra.mxu0 0
    %7953 = vmatprep.subr.bf16.mxu0 0
    %7954 = vmatpush1.bf16.msra.mxu0 0
    %7955 = vmatprep.subr.bf16.mxu0 0
    %7956 = vmatpush1.bf16.msra.mxu0 0
    %7957 = vmatprep.subr.bf16.mxu0 0
    %7958 = vmatpush1.bf16.msra.mxu0 0
    %7959 = vmatprep.subr.bf16.mxu0 0
    %7960 = vmatpush1.bf16.msra.mxu0 0
    %7961 = vmatprep.subr.bf16.mxu0 0
    %7962 = vmatpush1.bf16.msra.mxu0 0
    %7963 = vmatprep.mubr.bf16.mxu0 0
    %7964 = vmatmul.mubr.bf16.gmra.mrb[0].mxu0 %v7828
    %v7965 = vpop.f32.mrb[0].mxu0
    %v7966 = vadd.f32 %v7917, %v7965
    %v7967 = vpop.f32.mrb[0].mxu0
    %v7968 = vpop.f32.mrb[0].mxu0
    %v7969 = vadd.f32 %v7920, %v7968
    %v7970 = vpop.f32.mrb[0].mxu0
    %7971 = vmatprep.mubr.bf16.mxu0 0
    %7972 = vmatmul.mubr.bf16.gmra.mrb[0].mxu0 %v7831
    %v7973 = vpop.f32.mrb[0].mxu0
    %v7974 = vadd.f32 %v7925, %v7973
    %v7975 = vpop.f32.mrb[0].mxu0
    %v7976 = vpop.f32.mrb[0].mxu0
    %v7977 = vadd.f32 %v7928, %v7976
    %v7978 = vpop.f32.mrb[0].mxu0
    %7979 = vdwg.mxu0
    %v7980 = vsel %vm212, %v7966, 0.0
    %v7981 = vsel %vm212, %v7969, 0.0
    %v7982 = vadd.f32 %v7980, %v7981
    %v7983 = vsel %vm212, %v7974, 0.0
    %v7984 = vadd.f32 %v7982, %v7983
    %v7985 = vsel %vm212, %v7977, 0.0
    %v7986 = vadd.f32 %v7984, %v7985
    %v7987 = vrot.slane %v7986, 4
    %v7988 = vadd.f32 %v7986, %v7987
    %v7989 = vrot.slane %v7988, 2
    %v7990 = vadd.f32 %v7988, %v7989
    %v7991 = vrot.slane %v7990, 1
    %v7992 = vadd.f32 %v7990, %v7991
    %v7993 = vmul.f32 %v7992, 0.03125
    %v7994 = vsub.f32 %v7966, %v7993
    %v7995 = vsub.f32 %v7969, %v7993
    %v7996 = vsub.f32 %v7974, %v7993
    %v7997 = vsub.f32 %v7977, %v7993
    %v7998 = vmul.f32 %v7994, %v7994
    %v7999 = vmul.f32 %v7995, %v7995
    %v8000 = vmul.f32 %v7996, %v7996
    %v8001 = vmul.f32 %v7997, %v7997
    %v8002 = vsel %vm212, %v7998, 0.0
    %v8003 = vsel %vm212, %v7999, 0.0
    %v8004 = vadd.f32 %v8002, %v8003
    %v8005 = vsel %vm212, %v8000, 0.0
    %v8006 = vadd.f32 %v8004, %v8005
    %v8007 = vsel %vm212, %v8001, 0.0
    %v8008 = vadd.f32 %v8006, %v8007
    %v8009 = vrot.slane %v8008, 4
    %v8010 = vadd.f32 %v8008, %v8009
    %v8011 = vrot.slane %v8010, 2
    %v8012 = vadd.f32 %v8010, %v8011
    %v8013 = vrot.slane %v8012, 1
    %v8014 = vadd.f32 %v8012, %v8013
    %v8015 = vmul.f32 %v8014, 0.03125
    %v8016 = vld [vmem:[#allocation21] sm:$0x1]
    %v8017 = vadd.f32 %v8015, 1e-05
    %v8018 = vrsqrt.pop %v8017
    %v8019 = vmul.f32 %v8016, %v8018
    %v8020 = vlaneseq
    %v8021 = vshrl.u32 %v8020, 7
    %v8022 = vsub.s32 0, %v8021
    %v8023 = vrot.slane %v8019, %v8022
    %v8024 = vmul.f32 %v7994, %v8023
    %v8025 = vmul.f32 %v7995, %v8023
    %v8026 = vmul.f32 %v7996, %v8023
    %v8027 = vmul.f32 %v7997, %v8023
    %v8028 = vld [vmem:[#allocation21 + $0x1] sm:$0x1]
    %v8029 = vlaneseq
    %v8030 = vshrl.u32 %v8029, 7
    %v8031 = vsub.s32 0, %v8030
    %v8032 = vrot.slane %v8028, %v8031
    %v8033 = vadd.f32 %v8024, %v8032
    %v8034 = vadd.f32 %v8025, %v8032
    %v8035 = vadd.f32 %v8026, %v8032
    %v8036 = vadd.f32 %v8027, %v8032
    %v8037 = vmax.f32 %v8033, 0.0
    %v8038 = vmax.f32 %v8034, 0.0
    %v8039 = vmax.f32 %v8035, 0.0
    %v8040 = vmax.f32 %v8036, 0.0
    %8041 = vst.msk [vmem:[#allocation4] sm:$0xff] %vm212, %v8037
    %8042 = vst.msk [vmem:[#allocation4 + $0x8] sm:$0xff] %vm212, %v8038
    %8043 = vst.msk [vmem:[#allocation4 + $0x10] sm:$0xff] %vm212, %v8039
    %8044 = vst.msk [vmem:[#allocation4 + $0x18] sm:$0xff] %vm212, %v8040
    %v8045 = vld [vmem:[#allocation4] ss:$2 sm:$0xff]
    %v8046 = vld [vmem:[%s4741] ss:$2 sm:$0xff]
    %v8047 = vld [vmem:[%s4803] ss:$2 sm:$0xff]
    %v8048 = vld [vmem:[%s4805] ss:$2 sm:$0xff]
    %v8049 = vmax.f32 %v8045, %v8047
    %v8050 = vmax.f32 %v8046, %v8048
    %8051 = vst.msk [vmem:[#allocation5] sm:$0xff] %vm212, %v8049
    %8052 = vst.msk [vmem:[#allocation5 + $0x8] sm:$0xff] %vm212, %v8050
    %v8053 = vld [vmem:[#allocation5] sm:$0x3]
    %v8054 = vld [vmem:[#allocation5 + $0x2] sm:$0x3]
    %v8055 = vmax.f32 %v8053, %v8054
    %vm8056 = vcmask 517120
    %8057 = vst.msk [vmem:[#allocation8 + $0x8] sm:$0x3] %vm8056, %v8055
    %v8058 = vld [vmem:[#allocation5 + $0x4] sm:$0x3]
    %v8059 = vld [vmem:[#allocation5 + $0x6] sm:$0x3]
    %v8060 = vmax.f32 %v8058, %v8059
    %8061 = vst.msk [vmem:[#allocation8 + $0xa] sm:$0x3] %vm8056, %v8060
    %v8062 = vld [vmem:[#allocation5 + $0x8] sm:$0x3]
    %v8063 = vld [vmem:[#allocation5 + $0xa] sm:$0x3]
    %v8064 = vmax.f32 %v8062, %v8063
    %8065 = vst.msk [vmem:[#allocation8 + $0xc] sm:$0x3] %vm8056, %v8064
    %v8066 = vld [vmem:[#allocation5 + $0xc] sm:$0x3]
    %v8067 = vld [vmem:[#allocation5 + $0xe] sm:$0x3]
    %v8068 = vmax.f32 %v8066, %v8067
    %8069 = vst.msk [vmem:[#allocation8 + $0xe] sm:$0x3] %vm8056, %v8068
    %v8070 = vld [vmem:[#allocation8 + $0x5] sm:$0xff]
    %v8071 = vld [vmem:[#allocation29] sm:$0xff]
    %8073 = vset.pattern.permute.xlu0 0
    %8074 = vperm.xlu0 %8073, %v8071
    %v8075 = vpop.permute.xlu0 %8074
    %v8077 = vmul.f32 %v8070, %v8075
    %v8078 = vpack.c.bf16 %v8077, %v8077
    %8079 = vst.msk [vmem:[#allocation3] sm:$0xf] %vm7171, %v8078
    %v8080 = vld [vmem:[#allocation8 + $0x6] sm:$0xff]
    %v8081 = vld [vmem:[#allocation29] sm:$0xff]
    %8083 = vset.pattern.permute.xlu0 1
    %8084 = vperm.xlu0 %8083, %v8081
    %v8085 = vpop.permute.xlu0 %8084
    %v8087 = vmul.f32 %v8080, %v8085
    %v8088 = vpack.c.bf16 %v8087, %v8087
    %8090 = vrot.lane.b32.xlu0 %v8088, 64
    %v8091 = vpop.permute.xlu0 %8090
    %vm8093 = vcmask 1043968
    %8094 = vst.msk [vmem:[#allocation3] sm:$0xf] %vm8093, %v8091
    %v8095 = vld [vmem:[#allocation8 + $0x7] sm:$0xff]
    %v8096 = vld [vmem:[#allocation29] sm:$0xff]
    %8098 = vset.pattern.permute.xlu0 2
    %8099 = vperm.xlu0 %8098, %v8096
    %v8100 = vpop.permute.xlu0 %8099
    %v8102 = vmul.f32 %v8095, %v8100
    %v8103 = vpack.c.bf16 %v8102, %v8102
    %8104 = vst.msk [vmem:[#allocation3 + $0x8] sm:$0xf] %vm7171, %v8103
    %v8105 = vld [vmem:[#allocation8 + $0x7] sm:$0xff]
    %v8106 = vld [vmem:[#allocation29] sm:$0xff]
    %8108 = vset.pattern.permute.xlu0 3
    %8109 = vperm.xlu0 %8108, %v8106
    %v8110 = vpop.permute.xlu0 %8109
    %v8112 = vmul.f32 %v8105, %v8110
    %v8113 = vpack.c.bf16 %v8112, %v8112
    %8115 = vrot.lane.b32.xlu0 %v8113, 64
    %v8116 = vpop.permute.xlu0 %8115
    %8118 = vst.msk [vmem:[#allocation3 + $0x8] sm:$0xf] %vm8093, %v8116
    %v8119 = vld [vmem:[#allocation8 + $0x8] sm:$0xff]
    %v8120 = vpack.c.bf16 %v8119, %v8119
    %8121 = vst.msk [vmem:[#allocation3 + $0x10] sm:$0xf] %vm7171, %v8120
    %v8122 = vld [vmem:[#allocation8 + $0x9] sm:$0xff]
    %v8123 = vld [vmem:[#allocation29] sm:$0xff]
    %8125 = vset.pattern.permute.xlu0 5
    %8126 = vperm.xlu0 %8125, %v8123
    %v8127 = vpop.permute.xlu0 %8126
    %v8129 = vmul.f32 %v8122, %v8127
    %v8130 = vpack.c.bf16 %v8129, %v8129
    %8132 = vrot.lane.b32.xlu0 %v8130, 64
    %v8133 = vpop.permute.xlu0 %8132
    %8135 = vst.msk [vmem:[#allocation3 + $0x10] sm:$0xf] %vm8093, %v8133
    %v8136 = vld [vmem:[#allocation8 + $0x9] sm:$0xff]
    %v8137 = vld [vmem:[#allocation29] sm:$0xff]
    %8139 = vset.pattern.permute.xlu0 6
    %8140 = vperm.xlu0 %8139, %v8137
    %v8141 = vpop.permute.xlu0 %8140
    %v8143 = vmul.f32 %v8136, %v8141
    %v8144 = vpack.c.bf16 %v8143, %v8143
    %8145 = vst.msk [vmem:[#allocation3 + $0x18] sm:$0xf] %vm7171, %v8144
    %v8146 = vld [vmem:[#allocation8 + $0xa] sm:$0xff]
    %v8147 = vld [vmem:[#allocation29] sm:$0xff]
    %8149 = vset.pattern.permute.xlu0 7
    %8150 = vperm.xlu0 %8149, %v8147
    %v8151 = vpop.permute.xlu0 %8150
    %v8153 = vmul.f32 %v8146, %v8151
    %v8154 = vpack.c.bf16 %v8153, %v8153
    %8156 = vrot.lane.b32.xlu0 %v8154, 64
    %v8157 = vpop.permute.xlu0 %8156
    %8159 = vst.msk [vmem:[#allocation3 + $0x18] sm:$0xf] %vm8093, %v8157
    %v8160 = vld [vmem:[#allocation8 + $0xb] sm:$0xff]
    %v8161 = vld [vmem:[#allocation29] sm:$0xff]
    %8163 = vset.pattern.permute.xlu0 8
    %8164 = vperm.xlu0 %8163, %v8161
    %v8165 = vpop.permute.xlu0 %8164
    %v8167 = vmul.f32 %v8160, %v8165
    %v8168 = vpack.c.bf16 %v8167, %v8167
    %8169 = vst.msk [vmem:[#allocation3 + $0x20] sm:$0xf] %vm7171, %v8168
    %v8170 = vld [vmem:[#allocation3] sm:$0xf]
    %v8171 = vld [vmem:[#allocation3 + $0x8] sm:$0xf]
    %v8172 = vld [vmem:[#allocation3 + $0x10] sm:$0xf]
    %v8173 = vld [vmem:[#allocation3 + $0x18] sm:$0xf]
    %v8174 = vld [vmem:[#allocation3 + $0x20] sm:$0xf]
    %v8175 = vld [vmem:[#allocation17] sm:$0xf]
    %v8176 = vld [vmem:[#allocation17 + $0x4] sm:$0xf]
    %v8177 = vld [vmem:[#allocation17 + $0x8] sm:$0xf]
    %v8178 = vld [vmem:[#allocation17 + $0xc] sm:$0xf]
    %v8179 = vld [vmem:[#allocation17 + $0x10] sm:$0xf]
    %v8180 = vld [vmem:[#allocation17 + $0x14] sm:$0xf]
    %v8181 = vld [vmem:[#allocation17 + $0x18] sm:$0xf]
    %v8182 = vld [vmem:[#allocation17 + $0x1c] sm:$0xf]
    %v8183 = vld [vmem:[#allocation17 + $0x20] sm:$0xf]
    %v8184 = vld [vmem:[#allocation17 + $0x24] sm:$0xf]
    %v8185 = vld [vmem:[#allocation17 + $0x28] sm:$0xf]
    %v8186 = vld [vmem:[#allocation17 + $0x2c] sm:$0xf]
    %v8187 = vld [vmem:[#allocation17 + $0x30] sm:$0xf]
    %v8188 = vld [vmem:[#allocation17 + $0x34] sm:$0xf]
    %v8189 = vld [vmem:[#allocation17 + $0x38] sm:$0xf]
    %v8190 = vld [vmem:[#allocation17 + $0x3c] sm:$0xf]
    %v8191 = vld [vmem:[#allocation17 + $0x40] sm:$0xf]
    %v8192 = vld [vmem:[#allocation17 + $0x44] sm:$0xf]
    %v8193 = vld [vmem:[#allocation17 + $0x48] sm:$0xf]
    %v8194 = vld [vmem:[#allocation17 + $0x4c] sm:$0xf]
    %v8195 = vld [vmem:[#allocation17 + $0x50] sm:$0xf]
    %v8196 = vld [vmem:[#allocation17 + $0x54] sm:$0xf]
    %v8197 = vld [vmem:[#allocation17 + $0x58] sm:$0xf]
    %v8198 = vld [vmem:[#allocation17 + $0x5c] sm:$0xf]
    %v8199 = vld [vmem:[#allocation17 + $0x60] sm:$0xf]
    %v8200 = vld [vmem:[#allocation17 + $0x64] sm:$0xf]
    %v8201 = vld [vmem:[#allocation17 + $0x68] sm:$0xf]
    %v8202 = vld [vmem:[#allocation17 + $0x6c] sm:$0xf]
    %v8203 = vld [vmem:[#allocation17 + $0x70] sm:$0xf]
    %v8204 = vld [vmem:[#allocation17 + $0x74] sm:$0xf]
    %v8205 = vld [vmem:[#allocation17 + $0x78] sm:$0xf]
    %v8206 = vld [vmem:[#allocation17 + $0x7c] sm:$0xf]
    %v8207 = vld [vmem:[#allocation17 + $0x80] sm:$0xf]
    %v8208 = vld [vmem:[#allocation17 + $0x84] sm:$0xf]
    %v8209 = vld [vmem:[#allocation17 + $0x88] sm:$0xf]
    %v8210 = vld [vmem:[#allocation17 + $0x8c] sm:$0xf]
    %v8211 = vld [vmem:[#allocation17 + $0x90] sm:$0xf]
    %v8212 = vld [vmem:[#allocation17 + $0x94] sm:$0xf]
    %v8213 = vld [vmem:[#allocation17 + $0x98] sm:$0xf]
    %v8214 = vld [vmem:[#allocation17 + $0x9c] sm:$0xf]
    %v8215 = vld [vmem:[#allocation17 + $0xa0] sm:$0xf]
    %v8216 = vld [vmem:[#allocation17 + $0xa4] sm:$0xf]
    %v8217 = vld [vmem:[#allocation17 + $0xa8] sm:$0xf]
    %v8218 = vld [vmem:[#allocation17 + $0xac] sm:$0xf]
    %v8219 = vld [vmem:[#allocation17 + $0xb0] sm:$0xf]
    %v8220 = vld [vmem:[#allocation17 + $0xb4] sm:$0xf]
    %v8221 = vld [vmem:[#allocation17 + $0xb8] sm:$0xf]
    %v8222 = vld [vmem:[#allocation17 + $0xbc] sm:$0xf]
    %v8223 = vld [vmem:[#allocation17 + $0xc0] sm:$0xf]
    %v8224 = vld [vmem:[#allocation17 + $0xc4] sm:$0xf]
    %v8225 = vld [vmem:[#allocation17 + $0xc8] sm:$0xf]
    %v8226 = vld [vmem:[#allocation17 + $0xcc] sm:$0xf]
    %v8227 = vld [vmem:[#allocation17 + $0xd0] sm:$0xf]
    %v8228 = vld [vmem:[#allocation17 + $0xd4] sm:$0xf]
    %v8229 = vld [vmem:[#allocation17 + $0xd8] sm:$0xf]
    %v8230 = vld [vmem:[#allocation17 + $0xdc] sm:$0xf]
    %v8231 = vld [vmem:[#allocation17 + $0xe0] sm:$0xf]
    %v8232 = vld [vmem:[#allocation17 + $0xe4] sm:$0xf]
    %v8233 = vld [vmem:[#allocation17 + $0xe8] sm:$0xf]
    %v8234 = vld [vmem:[#allocation17 + $0xec] sm:$0xf]
    %v8235 = vld [vmem:[#allocation17 + $0xf0] sm:$0xf]
    %v8236 = vld [vmem:[#allocation17 + $0xf4] sm:$0xf]
    %v8237 = vld [vmem:[#allocation17 + $0xf8] sm:$0xf]
    %v8238 = vld [vmem:[#allocation17 + $0xfc] sm:$0xf]
    %v8239 = vld [vmem:[#allocation17 + $0x100] sm:$0xf]
    %v8240 = vld [vmem:[#allocation17 + $0x104] sm:$0xf]
    %v8241 = vld [vmem:[#allocation17 + $0x108] sm:$0xf]
    %v8242 = vld [vmem:[#allocation17 + $0x10c] sm:$0xf]
    %v8243 = vld [vmem:[#allocation17 + $0x110] sm:$0xf]
    %v8244 = vld [vmem:[#allocation17 + $0x114] sm:$0xf]
    %v8245 = vld [vmem:[#allocation17 + $0x118] sm:$0xf]
    %v8246 = vld [vmem:[#allocation17 + $0x11c] sm:$0xf]
    %v8319 = vunpack.c.l.b16 %v8175
    %v8320 = vunpack.c.l.b16 %v8176
    %v8321 = vunpack.c.l.b16 %v8177
    %v8322 = vunpack.c.l.b16 %v8178
    %v8323 = vunpack.c.l.b16 %v8179
    %v8324 = vunpack.c.l.b16 %v8180
    %v8325 = vunpack.c.l.b16 %v8181
    %v8326 = vunpack.c.l.b16 %v8182
    %v8327 = vunpack.c.l.b16 %v8183
    %v8328 = vunpack.c.l.b16 %v8184
    %v8329 = vunpack.c.l.b16 %v8185
    %v8330 = vunpack.c.l.b16 %v8186
    %v8331 = vunpack.c.l.b16 %v8187
    %v8332 = vunpack.c.l.b16 %v8188
    %v8333 = vunpack.c.l.b16 %v8189
    %v8334 = vunpack.c.l.b16 %v8190
    %v8335 = vunpack.c.l.b16 %v8191
    %v8336 = vunpack.c.l.b16 %v8192
    %v8337 = vunpack.c.l.b16 %v8193
    %v8338 = vunpack.c.l.b16 %v8194
    %v8339 = vunpack.c.l.b16 %v8195
    %v8340 = vunpack.c.l.b16 %v8196
    %v8341 = vunpack.c.l.b16 %v8197
    %v8342 = vunpack.c.l.b16 %v8198
    %v8343 = vunpack.c.l.b16 %v8199
    %v8344 = vunpack.c.l.b16 %v8200
    %v8345 = vunpack.c.l.b16 %v8201
    %v8346 = vunpack.c.l.b16 %v8202
    %v8347 = vunpack.c.l.b16 %v8203
    %v8348 = vunpack.c.l.b16 %v8204
    %v8349 = vunpack.c.l.b16 %v8205
    %v8350 = vunpack.c.l.b16 %v8206
    %v8351 = vunpack.c.l.b16 %v8207
    %v8352 = vunpack.c.l.b16 %v8208
    %v8353 = vunpack.c.l.b16 %v8209
    %v8354 = vunpack.c.l.b16 %v8210
    %v8355 = vunpack.c.l.b16 %v8211
    %v8356 = vunpack.c.l.b16 %v8212
    %v8357 = vunpack.c.l.b16 %v8213
    %v8358 = vunpack.c.l.b16 %v8214
    %v8359 = vunpack.c.l.b16 %v8215
    %v8360 = vunpack.c.l.b16 %v8216
    %v8361 = vunpack.c.l.b16 %v8217
    %v8362 = vunpack.c.l.b16 %v8218
    %v8363 = vunpack.c.l.b16 %v8219
    %v8364 = vunpack.c.l.b16 %v8220
    %v8365 = vunpack.c.l.b16 %v8221
    %v8366 = vunpack.c.l.b16 %v8222
    %v8367 = vunpack.c.l.b16 %v8223
    %v8368 = vunpack.c.l.b16 %v8224
    %v8369 = vunpack.c.l.b16 %v8225
    %v8370 = vunpack.c.l.b16 %v8226
    %v8371 = vunpack.c.l.b16 %v8227
    %v8372 = vunpack.c.l.b16 %v8228
    %v8373 = vunpack.c.l.b16 %v8229
    %v8374 = vunpack.c.l.b16 %v8230
    %v8375 = vunpack.c.l.b16 %v8231
    %v8376 = vunpack.c.l.b16 %v8232
    %v8377 = vunpack.c.l.b16 %v8233
    %v8378 = vunpack.c.l.b16 %v8234
    %v8379 = vunpack.c.l.b16 %v8235
    %v8380 = vunpack.c.l.b16 %v8236
    %v8381 = vunpack.c.l.b16 %v8237
    %v8382 = vunpack.c.l.b16 %v8238
    %v8383 = vunpack.c.l.b16 %v8239
    %v8384 = vunpack.c.l.b16 %v8240
    %v8385 = vunpack.c.l.b16 %v8241
    %v8386 = vunpack.c.l.b16 %v8242
    %v8387 = vunpack.c.l.b16 %v8243
    %v8388 = vunpack.c.l.b16 %v8244
    %v8389 = vunpack.c.l.b16 %v8245
    %v8390 = vunpack.c.l.b16 %v8246
    %v8391 = vpack.c.b16 %v8320, %v8319
    %v8392 = vpack.c.b16 %v8322, %v8321
    %v8393 = vpack.c.b16 %v8324, %v8323
    %v8394 = vpack.c.b16 %v8326, %v8325
    %v8395 = vpack.c.b16 %v8328, %v8327
    %v8396 = vpack.c.b16 %v8330, %v8329
    %v8397 = vpack.c.b16 %v8332, %v8331
    %v8398 = vpack.c.b16 %v8334, %v8333
    %v8399 = vpack.c.b16 %v8336, %v8335
    %v8400 = vpack.c.b16 %v8338, %v8337
    %v8401 = vpack.c.b16 %v8340, %v8339
    %v8402 = vpack.c.b16 %v8342, %v8341
    %v8403 = vpack.c.b16 %v8344, %v8343
    %v8404 = vpack.c.b16 %v8346, %v8345
    %v8405 = vpack.c.b16 %v8348, %v8347
    %v8406 = vpack.c.b16 %v8350, %v8349
    %v8407 = vpack.c.b16 %v8352, %v8351
    %v8408 = vpack.c.b16 %v8354, %v8353
    %v8409 = vpack.c.b16 %v8356, %v8355
    %v8410 = vpack.c.b16 %v8358, %v8357
    %v8411 = vpack.c.b16 %v8360, %v8359
    %v8412 = vpack.c.b16 %v8362, %v8361
    %v8413 = vpack.c.b16 %v8364, %v8363
    %v8414 = vpack.c.b16 %v8366, %v8365
    %v8415 = vpack.c.b16 %v8368, %v8367
    %v8416 = vpack.c.b16 %v8370, %v8369
    %v8417 = vpack.c.b16 %v8372, %v8371
    %v8418 = vpack.c.b16 %v8374, %v8373
    %v8419 = vpack.c.b16 %v8376, %v8375
    %v8420 = vpack.c.b16 %v8378, %v8377
    %v8421 = vpack.c.b16 %v8380, %v8379
    %v8422 = vpack.c.b16 %v8382, %v8381
    %v8423 = vpack.c.b16 %v8384, %v8383
    %v8424 = vpack.c.b16 %v8386, %v8385
    %v8425 = vpack.c.b16 %v8388, %v8387
    %v8426 = vpack.c.b16 %v8390, %v8389
    %v8464 = vsel %vm212, %v8174, 0
    %8466 = vmatprep.subr.bf16.mxu0 0
    %8467 = vmatpush1.bf16.msra.mxu0 %v8391
    %8468 = vmatprep.subr.bf16.mxu0 0
    %8469 = vmatpush1.bf16.msra.mxu0 %v8392
    %8470 = vmatprep.subr.bf16.mxu0 0
    %8471 = vmatpush1.bf16.msra.mxu0 %v8393
    %8472 = vmatprep.subr.bf16.mxu0 0
    %8473 = vmatpush1.bf16.msra.mxu0 %v8394
    %8474 = vmatprep.subr.bf16.mxu0 0
    %8475 = vmatpush1.bf16.msra.mxu0 %v8395
    %8476 = vmatprep.subr.bf16.mxu0 0
    %8477 = vmatpush1.bf16.msra.mxu0 %v8396
    %8478 = vmatprep.subr.bf16.mxu0 0
    %8479 = vmatpush1.bf16.msra.mxu0 %v8397
    %8480 = vmatprep.subr.bf16.mxu0 0
    %8481 = vmatpush1.bf16.msra.mxu0 %v8398
    %8482 = vmatprep.subr.bf16.mxu0 0
    %8483 = vmatpush1.bf16.msra.mxu0 %v8399
    %8484 = vmatprep.subr.bf16.mxu0 0
    %8485 = vmatpush1.bf16.msra.mxu0 %v8400
    %8486 = vmatprep.subr.bf16.mxu0 0
    %8487 = vmatpush1.bf16.msra.mxu0 %v8401
    %8488 = vmatprep.subr.bf16.mxu0 0
    %8489 = vmatpush1.bf16.msra.mxu0 %v8402
    %8490 = vmatprep.subr.bf16.mxu0 0
    %8491 = vmatpush1.bf16.msra.mxu0 %v8403
    %8492 = vmatprep.subr.bf16.mxu0 0
    %8493 = vmatpush1.bf16.msra.mxu0 %v8404
    %8494 = vmatprep.subr.bf16.mxu0 0
    %8495 = vmatpush1.bf16.msra.mxu0 %v8405
    %8496 = vmatprep.subr.bf16.mxu0 0
    %8497 = vmatpush1.bf16.msra.mxu0 %v8406
    %8498 = vmatprep.mubr.bf16.mxu0 %v8171
    %8499 = vmatmul.mubr.bf16.gmra.mrb[0].mxu0 %v8170
    %v8500 = vpop.f32.mrb[0].mxu0
    %v8501 = vadd.f32 0.0, %v8500
    %v8502 = vpop.f32.mrb[0].mxu0
    %v8503 = vpop.f32.mrb[0].mxu0
    %v8504 = vpop.f32.mrb[0].mxu0
    %8505 = vdwg.mxu0
    %8506 = vmatprep.subr.bf16.mxu0 0
    %8507 = vmatpush1.bf16.msra.mxu0 %v8407
    %8508 = vmatprep.subr.bf16.mxu0 0
    %8509 = vmatpush1.bf16.msra.mxu0 %v8408
    %8510 = vmatprep.subr.bf16.mxu0 0
    %8511 = vmatpush1.bf16.msra.mxu0 %v8409
    %8512 = vmatprep.subr.bf16.mxu0 0
    %8513 = vmatpush1.bf16.msra.mxu0 %v8410
    %8514 = vmatprep.subr.bf16.mxu0 0
    %8515 = vmatpush1.bf16.msra.mxu0 %v8411
    %8516 = vmatprep.subr.bf16.mxu0 0
    %8517 = vmatpush1.bf16.msra.mxu0 %v8412
    %8518 = vmatprep.subr.bf16.mxu0 0
    %8519 = vmatpush1.bf16.msra.mxu0 %v8413
    %8520 = vmatprep.subr.bf16.mxu0 0
    %8521 = vmatpush1.bf16.msra.mxu0 %v8414
    %8522 = vmatprep.subr.bf16.mxu0 0
    %8523 = vmatpush1.bf16.msra.mxu0 %v8415
    %8524 = vmatprep.subr.bf16.mxu0 0
    %8525 = vmatpush1.bf16.msra.mxu0 %v8416
    %8526 = vmatprep.subr.bf16.mxu0 0
    %8527 = vmatpush1.bf16.msra.mxu0 %v8417
    %8528 = vmatprep.subr.bf16.mxu0 0
    %8529 = vmatpush1.bf16.msra.mxu0 %v8418
    %8530 = vmatprep.subr.bf16.mxu0 0
    %8531 = vmatpush1.bf16.msra.mxu0 %v8419
    %8532 = vmatprep.subr.bf16.mxu0 0
    %8533 = vmatpush1.bf16.msra.mxu0 %v8420
    %8534 = vmatprep.subr.bf16.mxu0 0
    %8535 = vmatpush1.bf16.msra.mxu0 %v8421
    %8536 = vmatprep.subr.bf16.mxu0 0
    %8537 = vmatpush1.bf16.msra.mxu0 %v8422
    %8538 = vmatprep.mubr.bf16.mxu0 %v8173
    %8539 = vmatmul.mubr.bf16.gmra.mrb[0].mxu0 %v8172
    %v8540 = vpop.f32.mrb[0].mxu0
    %v8541 = vadd.f32 %v8501, %v8540
    %v8542 = vpop.f32.mrb[0].mxu0
    %v8543 = vpop.f32.mrb[0].mxu0
    %v8544 = vpop.f32.mrb[0].mxu0
    %8545 = vdwg.mxu0
    %8546 = vmatprep.subr.bf16.mxu0 0
    %8547 = vmatpush1.bf16.msra.mxu0 %v8423
    %8548 = vmatprep.subr.bf16.mxu0 0
    %8549 = vmatpush1.bf16.msra.mxu0 %v8424
    %8550 = vmatprep.subr.bf16.mxu0 0
    %8551 = vmatpush1.bf16.msra.mxu0 %v8425
    %8552 = vmatprep.subr.bf16.mxu0 0
    %8553 = vmatpush1.bf16.msra.mxu0 %v8426
    %8554 = vmatprep.subr.bf16.mxu0 0
    %8555 = vmatpush1.bf16.msra.mxu0 0
    %8556 = vmatprep.subr.bf16.mxu0 0
    %8557 = vmatpush1.bf16.msra.mxu0 0
    %8558 = vmatprep.subr.bf16.mxu0 0
    %8559 = vmatpush1.bf16.msra.mxu0 0
    %8560 = vmatprep.subr.bf16.mxu0 0
    %8561 = vmatpush1.bf16.msra.mxu0 0
    %8562 = vmatprep.subr.bf16.mxu0 0
    %8563 = vmatpush1.bf16.msra.mxu0 0
    %8564 = vmatprep.subr.bf16.mxu0 0
    %8565 = vmatpush1.bf16.msra.mxu0 0
    %8566 = vmatprep.subr.bf16.mxu0 0
    %8567 = vmatpush1.bf16.msra.mxu0 0
    %8568 = vmatprep.subr.bf16.mxu0 0
    %8569 = vmatpush1.bf16.msra.mxu0 0
    %8570 = vmatprep.subr.bf16.mxu0 0
    %8571 = vmatpush1.bf16.msra.mxu0 0
    %8572 = vmatprep.subr.bf16.mxu0 0
    %8573 = vmatpush1.bf16.msra.mxu0 0
    %8574 = vmatprep.subr.bf16.mxu0 0
    %8575 = vmatpush1.bf16.msra.mxu0 0
    %8576 = vmatprep.subr.bf16.mxu0 0
    %8577 = vmatpush1.bf16.msra.mxu0 0
    %8578 = vmatprep.mubr.bf16.mxu0 0
    %8579 = vmatmul.mubr.bf16.gmra.mrb[0].mxu0 %v8464
    %v8580 = vpop.f32.mrb[0].mxu0
    %v8581 = vadd.f32 %v8541, %v8580
    %v8582 = vpop.f32.mrb[0].mxu0
    %v8583 = vpop.f32.mrb[0].mxu0
    %v8584 = vpop.f32.mrb[0].mxu0
    %8585 = vdwg.mxu0
    %v8586 = vsel %vm212, %v8581, 0.0
    %v8587 = vrot.slane %v8586, 4
    %v8588 = vadd.f32 %v8586, %v8587
    %v8589 = vrot.slane %v8588, 2
    %v8590 = vadd.f32 %v8588, %v8589
    %v8591 = vrot.slane %v8590, 1
    %v8592 = vadd.f32 %v8590, %v8591
    %v8593 = vmul.f32 %v8592, 0.125
    %v8594 = vsub.f32 %v8581, %v8593
    %v8595 = vmul.f32 %v8594, %v8594
    %v8596 = vsel %vm212, %v8595, 0.0
    %v8597 = vrot.slane %v8596, 4
    %v8598 = vadd.f32 %v8596, %v8597
    %v8599 = vrot.slane %v8598, 2
    %v8600 = vadd.f32 %v8598, %v8599
    %v8601 = vrot.slane %v8600, 1
    %v8602 = vadd.f32 %v8600, %v8601
    %v8603 = vmul.f32 %v8602, 0.125
    %v8604 = vld [vmem:[#allocation23] sm:$0x1]
    %v8605 = vadd.f32 %v8603, 1e-05
    %v8606 = vrsqrt.pop %v8605
    %v8607 = vmul.f32 %v8604, %v8606
    %v8608 = vlaneseq
    %v8609 = vshrl.u32 %v8608, 7
    %v8610 = vsub.s32 0, %v8609
    %v8611 = vrot.slane %v8607, %v8610
    %v8612 = vmul.f32 %v8594, %v8611
    %v8613 = vld [vmem:[#allocation23 + $0x1] sm:$0x1]
    %v8614 = vlaneseq
    %v8615 = vshrl.u32 %v8614, 7
    %v8616 = vsub.s32 0, %v8615
    %v8617 = vrot.slane %v8613, %v8616
    %v8618 = vadd.f32 %v8612, %v8617
    %v8619 = vmax.f32 %v8618, 0.0
    %8620 = vst.msk [vmem:[#allocation4] sm:$0xff] %vm212, %v8619
    %v8621 = vld [vmem:[#allocation4] ss:$2 sm:$0xf]
    %v8622 = vld [vmem:[%s4803] ss:$2 sm:$0xf]
    %v8623 = vmax.f32 %v8621, %v8622
    %8624 = vst.msk [vmem:[#allocation5] sm:$0xf] %vm7171, %v8623
    %v8625 = vld [vmem:[#allocation5] sm:$0x1]
    %v8626 = vld [vmem:[#allocation5 + $0x1] sm:$0x1]
    %v8627 = vmax.f32 %v8625, %v8626
    %vm8628 = vcmask 516096
    %8629 = vst.msk [vmem:[#allocation30] sm:$0x1] %vm8628, %v8627
    %v8630 = vld [vmem:[#allocation5 + $0x2] sm:$0x1]
    %v8631 = vld [vmem:[#allocation5 + $0x3] sm:$0x1]
    %v8632 = vmax.f32 %v8630, %v8631
    %8633 = vst.msk [vmem:[#allocation30 + $0x1] sm:$0x1] %vm8628, %v8632
    // Predicated region
    $region106: #{protonet_forward.1} parent=1 // pred_check
      _
    $region107: #{protonet_forward.1} parent=1 // pred_check_branch
      %8635 = sbr.rel (0) target = $region109
    $region108: #{protonet_forward.1} parent=1 // pred_region
      %s8637 = ssub.s32 32, 32
      %8638 = vsyncadd [#allocation11], %s8637
      %s8640 = sshll.u32 [#allocation30], 4
      %s8641 = int_to_ptr.vmem [resolvable:$true] %s8640
      %8643 = dma.vmem_to_hbm [thread:$0]  %s8641, 32, %s13, [#allocation11]
    $region109: #{protonet_forward.1} parent=1 // pred_fallthru
      _
    // Predicated region
    $region110: #{protonet_forward.1} parent=1 // pred_check
      _
    $region111: #{protonet_forward.1} parent=1 // pred_check_branch
      %8645 = sbr.rel (0) target = $region113
    $region112: #{protonet_forward.1} parent=1 // pred_region
      %8646 = dma.done [#allocation11], 32
    $region113: #{protonet_forward.1} parent=1 // pred_fallthru
      _
    %8647 = vsyncpa [#allocation10], 1
    %8648 = vsyncpa [#allocation13], 1
    %8649 = vsyncpa [#allocation16], 1
    %8650 = vsyncpa [#allocation19], 1
    %8651 = vsyncpa [#allocation22], 1
    %8652 = vsyncpa [#allocation25], 1
    %8653 = vsyncpa [#allocation28], 1
    %8654 = vsyncpa [#allocation11], 1

</llo_original>
